<compile_context>
chip_gen: v7x
topology: tpu7x:2x2x1
jax: 0.10.0
libtpu: 0.0.40
codegen_flags: <defaults>
</compile_context>

<pallas_src>
import jax
import jax.numpy as jnp
from jax import lax
from jax.experimental import pallas as pl
from jax.experimental.pallas import tpu as pltpu

# ---------------- config (mirrors mLSTMVisionBlockConfig defaults) ------------
EMBED_DIM = 32
NUM_HEADS = 2
QK_DIM_FACTOR = 0.5
V_DIM_FACTOR = 1.0
GATE_SOFT_CAP = 15.0
NORM_EPS = 1e-6          # config.norm_eps
BACKEND_EPS = 1e-6       # config.eps (mLSTM backend)
SEQLENS = (8, 8)         # (H, W) of the token grid -> S = 64

QK_DIM = int(EMBED_DIM * QK_DIM_FACTOR)   # 16
V_DIM = int(EMBED_DIM * V_DIM_FACTOR)     # 32  (== EMBED_DIM, required by conv)
DQK = QK_DIM // NUM_HEADS                 # 8   (qk head dim)
DHV = V_DIM // NUM_HEADS                  # 16  (v head dim)
H_GRID, W_GRID = SEQLENS
SEQ = H_GRID * W_GRID                     # 64 tokens per image
GATE_ROWS = 8                             # 2*NUM_HEADS padded up to 8 sublanes
MAX_TB = 8                                # max batch elements fused per grid step

assert V_DIM == EMBED_DIM                 # SequenceConv2d(v_dim, v_dim) on x


def _choose_tb(batch):
    """Largest divisor of `batch` <= MAX_TB, preferring grid length >= 2 (v7x TCs)."""
    divs = [d for d in range(1, batch + 1) if batch % d == 0 and d <= MAX_TB]
    pref = [d for d in divs if batch // d >= 2]
    return max(pref) if pref else max(divs)


def _conv_tap_mask(tb):
    """(tb*SEQ, 9*V_DIM) f32 validity mask for the 9 conv taps, hoisted out of the
    kernel.  A tap is valid iff its source pixel lies inside the HxW grid; this
    also zeroes anything a roll would wrap across batch/image boundaries."""
    n = tb * SEQ
    t = jnp.arange(n, dtype=jnp.int32) % SEQ
    hh = t // W_GRID
    ww = t % W_GRID
    pieces = []
    for ky in range(3):
        for kx in range(3):
            ok = ((hh + (ky - 1) >= 0) & (hh + (ky - 1) < H_GRID) &
                  (ww + (kx - 1) >= 0) & (ww + (kx - 1) < W_GRID))
            pieces.append(jnp.broadcast_to(ok[:, None].astype(jnp.float32),
                                           (n, V_DIM)))
    return jnp.concatenate(pieces, axis=1)


def _tri_constants():
    """Hoisted (S,S) constants: lower-tri ones (cumsum matmuls) and additive
    causal mask (0 on/below diag, -1e30 above)."""
    r = jnp.arange(SEQ, dtype=jnp.int32)[:, None]
    c = jnp.arange(SEQ, dtype=jnp.int32)[None, :]
    ltr = c <= r
    l_ones = ltr.astype(jnp.float32)
    neg_mask = jnp.where(ltr, 0.0, -1e30).astype(jnp.float32)
    return l_ones, neg_mask


# ------------------------------ fused kernel ----------------------------------
def _fused_kernel(x_ref, cmask_ref, lones_ref, negm_ref,
                  wc_ref, bc_ref, wqk_ref, wvo_ref,
                  wif_ref, bif_ref, wn_ref, wout_ref, y_ref):
    n, _ = x_ref.shape                     # n = TB * SEQ  (token-flattened)
    tb = n // SEQ
    x = x_ref[...]                         # (n, D) f32

    # ---- SequenceConv2d(3x3, pad=1): in-register rolls + hoisted validity mask,
    #      one K = 9*V_DIM matmul (im2col never touches HBM or a VMEM scratch).
    pieces = []
    for ky in range(3):
        for kx in range(3):
            off = (ky - 1) * W_GRID + (kx - 1)          # token offset of this tap
            pieces.append(x if off == 0 else pltpu.roll(x, (-off) % n, axis=0))
    cols = jnp.concatenate(pieces, axis=1) * cmask_ref[...]            # (n, 9*D)
    conv = jnp.dot(cols, wc_ref[...],
                   preferred_element_type=jnp.float32) + bc_ref[...]   # (n, V)
    act = conv * jax.nn.sigmoid(conv)                                  # SiLU

    # ---- fused token-parallel projections (M = TB*SEQ) -------------------------
    qk = jnp.dot(act, wqk_ref[...], preferred_element_type=jnp.float32)  # (n, 2QK)
    vo = jnp.dot(x, wvo_ref[...], preferred_element_type=jnp.float32)    # (n, 2V)

    # ---- i/f gate preacts directly in ROW orientation (NT matmul, no transposes)
    g_pre = lax.dot_general(wif_ref[...], x, (((1,), (1,)), ((), ())),
                            preferred_element_type=jnp.float32) + bif_ref[...]
    g_rows = GATE_SOFT_CAP * jnp.tanh(g_pre * (1.0 / GATE_SOFT_CAP))     # (8, n)
    logf_all = jnp.minimum(g_rows, 0.0) - jnp.log(1.0 + jnp.exp(-jnp.abs(g_rows)))

    l_ones = lones_ref[...]                # (S, S) lower-tri ones (hoisted)
    neg_mask = negm_ref[...]               # (S, S) additive causal mask (hoisted)
    wn = wn_ref[...]                       # (NH, DHV) multihead-LN weight
    sm_scale = DQK ** -0.5

    y_parts = []
    for b in range(tb):                    # per-element SxS attention, scoped temps
        lo = b * SEQ
        qk_b = qk[lo:lo + SEQ, :]
        vo_b = vo[lo:lo + SEQ, :]
        g_b = g_rows[:, lo:lo + SEQ]                     # (8, S)
        logf_b = logf_all[:, lo:lo + SEQ]                # (8, S)
        # inclusive cumsum of logsigmoid(f) in both orientations via tri-ones matmuls
        cs_cols = lax.dot_general(l_ones, logf_b, (((1,), (1,)), ((), ())),
                                  preferred_element_type=jnp.float32)   # (S, 8)
        cs_rows = lax.dot_general(logf_b, l_ones, (((1,), (1,)), ((), ())),
                                  preferred_element_type=jnp.float32)   # (8, S)

        y_b = jnp.zeros((SEQ, EMBED_DIM), jnp.float32)
        for h in range(NUM_HEADS):
            q_h = qk_b[:, h * DQK:(h + 1) * DQK]                      # (S, DQK)
            k_h = qk_b[:, QK_DIM + h * DQK:QK_DIM + (h + 1) * DQK]    # (S, DQK)
            v_h = vo_b[:, h * DHV:(h + 1) * DHV]                      # (S, DHV)
            o_h = vo_b[:, V_DIM + h * DHV:V_DIM + (h + 1) * DHV]      # (S, DHV)

            i_row = g_b[h:h + 1, :]                      # (1, S)  i-gate preact
            fr = NUM_HEADS + h                           # f-gate row index
            cs_c = cs_cols[:, fr:fr + 1]                 # (S, 1)  cs[r]
            cs_r = cs_rows[fr:fr + 1, :]                 # (1, S)  cs[c]

            # log decay matrix: cs[r] - cs[c] + i[c] on/below diag, ~-inf above
            log_d = cs_c + (i_row - cs_r) + neg_mask
            m = jnp.max(log_d, axis=-1, keepdims=True)   # (S, 1) stabilizer
            d_mat = jnp.exp(log_d - m)

            s_mat = lax.dot_general(q_h, k_h, (((1,), (1,)), ((), ())),
                                    preferred_element_type=jnp.float32) * sm_scale
            c_mat = s_mat * d_mat
            norm = jnp.maximum(jnp.abs(jnp.sum(c_mat, axis=-1, keepdims=True)),
                               jnp.exp(-m))
            # exact divide, applied after the (S,DHV) matmul (4x fewer divides
            # than scaling the (S,S) matrix)
            h_h = jnp.dot(c_mat, v_h,
                          preferred_element_type=jnp.float32) / (norm + BACKEND_EPS)

            # MultiHeadLayerNorm: per-head LN (biased var) + per-feature weight
            mean = jnp.mean(h_h, axis=-1, keepdims=True)
            cent = h_h - mean
            var = jnp.mean(cent * cent, axis=-1, keepdims=True)
            hn = cent * lax.rsqrt(var + NORM_EPS) * wn[h:h + 1, :]

            # output gate + this head's slice of out_proj, accumulated in-register
            gated = jax.nn.sigmoid(o_h) * hn
            y_b = y_b + jnp.dot(gated, wout_ref[h * DHV:(h + 1) * DHV, :],
                                preferred_element_type=jnp.float32)
        y_parts.append(y_b)

    # lane-dense output slab (S, TB*D); wrapper un-slabs (layout plumbing only)
    y_ref[...] = y_parts[0] if tb == 1 else jnp.concatenate(y_parts, axis=1)


# ------------------------------ wrapper ---------------------------------------
def mlstm_layer_vision_forward(x, params):
    B, S, D = x.shape
    assert S == SEQ and D == EMBED_DIM

    tb = _choose_tb(B)                 # batch elements fused per grid step
    g = B // tb                        # grid length (>= 2 when B allows -> v7x TCs)
    n = tb * SEQ

    x2d = x.reshape(B * SEQ, D)        # free reshape: token-flattened input
    cmask = _conv_tap_mask(tb)         # hoisted conv validity mask
    l_ones, neg_mask = _tri_constants()

    def _const(a):
        return pl.BlockSpec(a.shape, lambda i, _nd=a.ndim: (0,) * _nd)

    consts = (cmask, l_ones, neg_mask,
              params['wc'], params['bc'], params['wqk'], params['wvo'],
              params['wif'], params['bif'], params['wn'], params['wout'])

    y_slab = pl.pallas_call(
        _fused_kernel,
        grid=(g,),
        in_specs=[pl.BlockSpec((n, D), lambda i: (i, 0))]
                 + [_const(a) for a in consts],
        out_specs=pl.BlockSpec((None, SEQ, tb * D), lambda i: (i, 0, 0)),
        out_shape=jax.ShapeDtypeStruct((g, SEQ, tb * D), jnp.float32),
        compiler_params=pltpu.CompilerParams(
            dimension_semantics=("parallel",)),
    )(x2d, *consts)

    # un-slab: (g, S, tb*D) -> (B, S, D)  (wrapper-side layout plumbing only)
    return (y_slab.reshape(g, SEQ, tb, EMBED_DIM)
                  .transpose(0, 2, 1, 3)
                  .reshape(B, SEQ, EMBED_DIM))


# ------------------------------ params ----------------------------------------
def init_params(key):
    ks = jax.random.split(key, 12)

    def init(k, shape, scale=0.02):
        return scale * jax.random.normal(k, shape, dtype=jnp.float32)

    # individual torch-equivalent weights (stored (in, out); torch Linear is (out, in))
    wq = init(ks[2], (EMBED_DIM, QK_DIM))
    wk = init(ks[3], (EMBED_DIM, QK_DIM))
    wv = init(ks[4], (EMBED_DIM, V_DIM))
    wo = init(ks[5], (EMBED_DIM, V_DIM))
    wi = init(ks[6], (EMBED_DIM, NUM_HEADS))
    bi = init(ks[7], (NUM_HEADS, 1))
    wf = init(ks[8], (EMBED_DIM, NUM_HEADS))
    bf = init(ks[9], (NUM_HEADS, 1))

    # fused / kernel-friendly layouts (built once at init time, no per-call glue)
    wif = jnp.zeros((GATE_ROWS, EMBED_DIM), jnp.float32)
    wif = wif.at[:NUM_HEADS, :].set(wi.T).at[NUM_HEADS:2 * NUM_HEADS, :].set(wf.T)
    bif = jnp.zeros((GATE_ROWS, 1), jnp.float32)
    bif = bif.at[:NUM_HEADS, :].set(bi).at[NUM_HEADS:2 * NUM_HEADS, :].set(bf)

    return {
        # conv weight pre-flattened as [(ky,kx,ci), co]
        # (== torch_weight.permute(2, 3, 1, 0).reshape(9*Cin, Cout), kidx = ky*3+kx)
        'wc': init(ks[0], (9 * V_DIM, V_DIM)),
        'bc': init(ks[1], (1, V_DIM)),
        'wqk': jnp.concatenate([wq, wk], axis=1),        # (D, 2*QK_DIM)
        'wvo': jnp.concatenate([wv, wo], axis=1),        # (D, 2*V_DIM)
        'wif': wif,                                      # (8, D): rows [Wi; Wf; 0-pad]
        'bif': bif,                                      # (8, 1)
        'wn': jnp.ones((NUM_HEADS, DHV), jnp.float32),   # MultiHeadLayerNorm weight
        'wout': init(ks[10], (V_DIM, EMBED_DIM)),
    }


if __name__ == "__main__":
    key = jax.random.PRNGKey(0)
    pkey, xkey = jax.random.split(key)
    params = init_params(pkey)

    B = 8                                 # -> TB = 4 per step, grid = (2,)
    S = SEQLENS[0] * SEQLENS[1]           # 64
    x = jax.random.normal(xkey, (B, S, EMBED_DIM), dtype=jnp.float32)

    fwd = jax.jit(mlstm_layer_vision_forward)
    y = jax.block_until_ready(fwd(x, params))

    assert y.shape == (B, S, EMBED_DIM), y.shape
    assert bool(jnp.all(jnp.isfinite(y)))
    print("KERNEL_OK")
</pallas_src>

<mosaic_0001>
module attributes {stable_mosaic.version = 11 : i64} {
  func.func @_fused_kernel(%arg0: i32, %arg1: memref<256x32xf32, #tpu.memory_space<vmem>>, %arg2: memref<256x288xf32, #tpu.memory_space<vmem>>, %arg3: memref<64x64xf32, #tpu.memory_space<vmem>>, %arg4: memref<64x64xf32, #tpu.memory_space<vmem>>, %arg5: memref<288x32xf32, #tpu.memory_space<vmem>>, %arg6: memref<1x32xf32, #tpu.memory_space<vmem>>, %arg7: memref<32x32xf32, #tpu.memory_space<vmem>>, %arg8: memref<32x64xf32, #tpu.memory_space<vmem>>, %arg9: memref<8x32xf32, #tpu.memory_space<vmem>>, %arg10: memref<8x1xf32, #tpu.memory_space<vmem>>, %arg11: memref<2x16xf32, #tpu.memory_space<vmem>>, %arg12: memref<32x32xf32, #tpu.memory_space<vmem>>, %arg13: memref<1x64x128xf32, #tpu.memory_space<vmem>>) attributes {dimension_semantics = [#tpu.dimension_semantics<parallel>], iteration_bounds = array<i64: 2>, scalar_prefetch = 0 : i64, scratch_operands = 0 : i64, tpu.core_type = #tpu.core_type<tc>, window_params = [{transform_indices = @transform_0, window_bounds = array<i64: 256, 32>}, {pipeline_mode = #tpu.pipeline_mode<synchronous>, transform_indices = @transform_1, window_bounds = array<i64: 256, 288>}, {pipeline_mode = #tpu.pipeline_mode<synchronous>, transform_indices = @transform_2, window_bounds = array<i64: 64, 64>}, {pipeline_mode = #tpu.pipeline_mode<synchronous>, transform_indices = @transform_3, window_bounds = array<i64: 64, 64>}, {pipeline_mode = #tpu.pipeline_mode<synchronous>, transform_indices = @transform_4, window_bounds = array<i64: 288, 32>}, {pipeline_mode = #tpu.pipeline_mode<synchronous>, transform_indices = @transform_5, window_bounds = array<i64: 1, 32>}, {pipeline_mode = #tpu.pipeline_mode<synchronous>, transform_indices = @transform_6, window_bounds = array<i64: 32, 32>}, {pipeline_mode = #tpu.pipeline_mode<synchronous>, transform_indices = @transform_7, window_bounds = array<i64: 32, 64>}, {pipeline_mode = #tpu.pipeline_mode<synchronous>, transform_indices = @transform_8, window_bounds = array<i64: 8, 32>}, {pipeline_mode = #tpu.pipeline_mode<synchronous>, transform_indices = @transform_9, window_bounds = array<i64: 8, 1>}, {pipeline_mode = #tpu.pipeline_mode<synchronous>, transform_indices = @transform_10, window_bounds = array<i64: 2, 16>}, {pipeline_mode = #tpu.pipeline_mode<synchronous>, transform_indices = @transform_11, window_bounds = array<i64: 32, 32>}, {transform_indices = @transform_12, window_bounds = array<i64: 1, 64, 128>}]} {
    %c0 = arith.constant 0 : index
    %c0_0 = arith.constant 0 : index
    %0 = vector.load %arg1[%c0, %c0_0] : memref<256x32xf32, #tpu.memory_space<vmem>>, vector<256x32xf32>
    %c9_i32 = arith.constant 9 : i32
    %1 = tpu.dynamic_rotate %0 by %c9_i32 dim 0 : vector<256x32xf32>, i32 -> vector<256x32xf32>
    %c8_i32 = arith.constant 8 : i32
    %2 = tpu.dynamic_rotate %0 by %c8_i32 dim 0 : vector<256x32xf32>, i32 -> vector<256x32xf32>
    %c7_i32 = arith.constant 7 : i32
    %3 = tpu.dynamic_rotate %0 by %c7_i32 dim 0 : vector<256x32xf32>, i32 -> vector<256x32xf32>
    %c1_i32 = arith.constant 1 : i32
    %4 = tpu.dynamic_rotate %0 by %c1_i32 dim 0 : vector<256x32xf32>, i32 -> vector<256x32xf32>
    %c255_i32 = arith.constant 255 : i32
    %5 = tpu.dynamic_rotate %0 by %c255_i32 dim 0 : vector<256x32xf32>, i32 -> vector<256x32xf32>
    %c249_i32 = arith.constant 249 : i32
    %6 = tpu.dynamic_rotate %0 by %c249_i32 dim 0 : vector<256x32xf32>, i32 -> vector<256x32xf32>
    %c248_i32 = arith.constant 248 : i32
    %7 = tpu.dynamic_rotate %0 by %c248_i32 dim 0 : vector<256x32xf32>, i32 -> vector<256x32xf32>
    %c247_i32 = arith.constant 247 : i32
    %8 = tpu.dynamic_rotate %0 by %c247_i32 dim 0 : vector<256x32xf32>, i32 -> vector<256x32xf32>
    %9 = tpu.concatenate %1, %2, %3, %4, %0, %5, %6, %7, %8 in 1 : vector<256x32xf32>, vector<256x32xf32>, vector<256x32xf32>, vector<256x32xf32>, vector<256x32xf32>, vector<256x32xf32>, vector<256x32xf32>, vector<256x32xf32>, vector<256x32xf32> -> vector<256x288xf32>
    %c0_1 = arith.constant 0 : index
    %c0_2 = arith.constant 0 : index
    %10 = vector.load %arg2[%c0_1, %c0_2] : memref<256x288xf32, #tpu.memory_space<vmem>>, vector<256x288xf32>
    %11 = arith.mulf %9, %10 : vector<256x288xf32>
    %c0_3 = arith.constant 0 : index
    %c0_4 = arith.constant 0 : index
    %12 = vector.load %arg5[%c0_3, %c0_4] : memref<288x32xf32, #tpu.memory_space<vmem>>, vector<288x32xf32>
    %cst = arith.constant dense<0.000000e+00> : vector<256x32xf32>
    %13 = tpu.matmul %11, %12, %cst {dimension_numbers = #tpu.dot_dimension_numbers<[1], [0], [0], [1], [0, 0, 1, 1], [], []>} : vector<256x288xf32>, vector<288x32xf32>, vector<256x32xf32> -> vector<256x32xf32>
    %c0_5 = arith.constant 0 : index
    %c0_6 = arith.constant 0 : index
    %14 = vector.load %arg6[%c0_5, %c0_6] : memref<1x32xf32, #tpu.memory_space<vmem>>, vector<1x32xf32>
    %15 = vector.broadcast %14 : vector<1x32xf32> to vector<256x32xf32>
    %16 = arith.addf %13, %15 : vector<256x32xf32>
    %17 = arith.negf %16 : vector<256x32xf32>
    %18 = math.exp %17 : vector<256x32xf32>
    %cst_7 = arith.constant 1.000000e+00 : f32
    %19 = vector.broadcast %cst_7 : f32 to vector<256x32xf32>
    %20 = arith.addf %19, %18 : vector<256x32xf32>
    %21 = arith.divf %19, %20 : vector<256x32xf32>
    %22 = arith.mulf %16, %21 : vector<256x32xf32>
    %c0_8 = arith.constant 0 : index
    %c0_9 = arith.constant 0 : index
    %23 = vector.load %arg7[%c0_8, %c0_9] : memref<32x32xf32, #tpu.memory_space<vmem>>, vector<32x32xf32>
    %cst_10 = arith.constant dense<0.000000e+00> : vector<256x32xf32>
    %24 = tpu.matmul %22, %23, %cst_10 {dimension_numbers = #tpu.dot_dimension_numbers<[1], [0], [0], [1], [0, 0, 1, 1], [], []>} : vector<256x32xf32>, vector<32x32xf32>, vector<256x32xf32> -> vector<256x32xf32>
    %c0_11 = arith.constant 0 : index
    %c0_12 = arith.constant 0 : index
    %25 = vector.load %arg8[%c0_11, %c0_12] : memref<32x64xf32, #tpu.memory_space<vmem>>, vector<32x64xf32>
    %cst_13 = arith.constant dense<0.000000e+00> : vector<256x64xf32>
    %26 = tpu.matmul %0, %25, %cst_13 {dimension_numbers = #tpu.dot_dimension_numbers<[1], [0], [0], [1], [0, 0, 1, 1], [], []>} : vector<256x32xf32>, vector<32x64xf32>, vector<256x64xf32> -> vector<256x64xf32>
    %c0_14 = arith.constant 0 : index
    %c0_15 = arith.constant 0 : index
    %27 = vector.load %arg9[%c0_14, %c0_15] : memref<8x32xf32, #tpu.memory_space<vmem>>, vector<8x32xf32>
    %cst_16 = arith.constant dense<0.000000e+00> : vector<8x256xf32>
    %28 = tpu.matmul %27, %0, %cst_16 {dimension_numbers = #tpu.dot_dimension_numbers<[1], [1], [0], [0], [0, 0, 1, 0], [], []>} : vector<8x32xf32>, vector<256x32xf32>, vector<8x256xf32> -> vector<8x256xf32>
    %c0_17 = arith.constant 0 : index
    %c0_18 = arith.constant 0 : index
    %29 = vector.load %arg10[%c0_17, %c0_18] : memref<8x1xf32, #tpu.memory_space<vmem>>, vector<8x1xf32>
    %30 = vector.broadcast %29 : vector<8x1xf32> to vector<8x256xf32>
    %31 = arith.addf %28, %30 : vector<8x256xf32>
    %cst_19 = arith.constant 0.0666666701 : f32
    %32 = vector.broadcast %cst_19 : f32 to vector<8x256xf32>
    %33 = arith.mulf %31, %32 : vector<8x256xf32>
    %34 = math.tanh %33 : vector<8x256xf32>
    %cst_20 = arith.constant 1.500000e+01 : f32
    %35 = vector.broadcast %cst_20 : f32 to vector<8x256xf32>
    %36 = arith.mulf %35, %34 : vector<8x256xf32>
    %cst_21 = arith.constant 0.000000e+00 : f32
    %37 = vector.broadcast %cst_21 : f32 to vector<8x256xf32>
    %38 = arith.minimumf %36, %37 : vector<8x256xf32>
    %39 = math.absf %36 : vector<8x256xf32>
    %cst_22 = arith.constant 0.000000e+00 : f32
    %40 = vector.broadcast %cst_22 : f32 to vector<8x256xf32>
    %41 = arith.subf %40, %39 : vector<8x256xf32>
    %42 = math.exp %41 : vector<8x256xf32>
    %cst_23 = arith.constant 1.000000e+00 : f32
    %43 = vector.broadcast %cst_23 : f32 to vector<8x256xf32>
    %44 = arith.addf %43, %42 : vector<8x256xf32>
    %45 = math.log %44 : vector<8x256xf32>
    %46 = arith.subf %38, %45 : vector<8x256xf32>
    %c0_24 = arith.constant 0 : index
    %c0_25 = arith.constant 0 : index
    %47 = vector.load %arg3[%c0_24, %c0_25] : memref<64x64xf32, #tpu.memory_space<vmem>>, vector<64x64xf32>
    %c0_26 = arith.constant 0 : index
    %c0_27 = arith.constant 0 : index
    %48 = vector.load %arg4[%c0_26, %c0_27] : memref<64x64xf32, #tpu.memory_space<vmem>>, vector<64x64xf32>
    %c0_28 = arith.constant 0 : index
    %c0_29 = arith.constant 0 : index
    %49 = vector.load %arg11[%c0_28, %c0_29] : memref<2x16xf32, #tpu.memory_space<vmem>>, vector<2x16xf32>
    %50 = vector.extract_strided_slice %24 {offsets = [0, 0], sizes = [64, 32], strides = [1, 1]} : vector<256x32xf32> to vector<64x32xf32>
    %51 = vector.extract_strided_slice %26 {offsets = [0, 0], sizes = [64, 64], strides = [1, 1]} : vector<256x64xf32> to vector<64x64xf32>
    %52 = vector.extract_strided_slice %36 {offsets = [0, 0], sizes = [8, 64], strides = [1, 1]} : vector<8x256xf32> to vector<8x64xf32>
    %53 = vector.extract_strided_slice %46 {offsets = [0, 0], sizes = [8, 64], strides = [1, 1]} : vector<8x256xf32> to vector<8x64xf32>
    %cst_30 = arith.constant dense<0.000000e+00> : vector<64x8xf32>
    %54 = tpu.matmul %47, %53, %cst_30 {dimension_numbers = #tpu.dot_dimension_numbers<[1], [1], [0], [0], [0, 0, 1, 0], [], []>} : vector<64x64xf32>, vector<8x64xf32>, vector<64x8xf32> -> vector<64x8xf32>
    %cst_31 = arith.constant dense<0.000000e+00> : vector<8x64xf32>
    %55 = tpu.matmul %53, %47, %cst_31 {dimension_numbers = #tpu.dot_dimension_numbers<[1], [1], [0], [0], [0, 0, 1, 0], [], []>} : vector<8x64xf32>, vector<64x64xf32>, vector<8x64xf32> -> vector<8x64xf32>
    %cst_32 = arith.constant 0.000000e+00 : f32
    %56 = vector.broadcast %cst_32 : f32 to vector<64x32xf32>
    %57 = vector.extract_strided_slice %50 {offsets = [0, 0], sizes = [64, 8], strides = [1, 1]} : vector<64x32xf32> to vector<64x8xf32>
    %58 = vector.extract_strided_slice %50 {offsets = [0, 16], sizes = [64, 8], strides = [1, 1]} : vector<64x32xf32> to vector<64x8xf32>
    %59 = vector.extract_strided_slice %51 {offsets = [0, 0], sizes = [64, 16], strides = [1, 1]} : vector<64x64xf32> to vector<64x16xf32>
    %60 = vector.extract_strided_slice %51 {offsets = [0, 32], sizes = [64, 16], strides = [1, 1]} : vector<64x64xf32> to vector<64x16xf32>
    %61 = vector.extract_strided_slice %52 {offsets = [0, 0], sizes = [1, 64], strides = [1, 1]} : vector<8x64xf32> to vector<1x64xf32>
    %62 = vector.extract_strided_slice %54 {offsets = [0, 2], sizes = [64, 1], strides = [1, 1]} : vector<64x8xf32> to vector<64x1xf32>
    %63 = vector.extract_strided_slice %55 {offsets = [2, 0], sizes = [1, 64], strides = [1, 1]} : vector<8x64xf32> to vector<1x64xf32>
    %64 = arith.subf %61, %63 : vector<1x64xf32>
    %65 = vector.broadcast %62 : vector<64x1xf32> to vector<64x64xf32>
    %66 = vector.broadcast %64 : vector<1x64xf32> to vector<64x64xf32>
    %67 = arith.addf %65, %66 : vector<64x64xf32>
    %68 = arith.addf %67, %48 : vector<64x64xf32>
    %cst_33 = arith.constant dense<0xFF800000> : vector<64xf32>
    %69 = vector.multi_reduction <maximumf>, %68, %cst_33 [1] : vector<64x64xf32> to vector<64xf32>
    %70 = vector.shape_cast %69 : vector<64xf32> to vector<64x1xf32>
    %71 = vector.broadcast %70 : vector<64x1xf32> to vector<64x64xf32>
    %72 = arith.subf %68, %71 : vector<64x64xf32>
    %73 = math.exp %72 : vector<64x64xf32>
    %cst_34 = arith.constant dense<0.000000e+00> : vector<64x64xf32>
    %74 = tpu.matmul %57, %58, %cst_34 {dimension_numbers = #tpu.dot_dimension_numbers<[1], [1], [0], [0], [0, 0, 1, 0], [], []>} : vector<64x8xf32>, vector<64x8xf32>, vector<64x64xf32> -> vector<64x64xf32>
    %cst_35 = arith.constant 0.353553385 : f32
    %75 = vector.broadcast %cst_35 : f32 to vector<64x64xf32>
    %76 = arith.mulf %74, %75 : vector<64x64xf32>
    %77 = arith.mulf %76, %73 : vector<64x64xf32>
    %cst_36 = arith.constant dense<0.000000e+00> : vector<64xf32>
    %78 = vector.multi_reduction <add>, %77, %cst_36 [1] : vector<64x64xf32> to vector<64xf32>
    %79 = vector.shape_cast %78 : vector<64xf32> to vector<64x1xf32>
    %80 = math.absf %79 : vector<64x1xf32>
    %cst_37 = arith.constant 0.000000e+00 : f32
    %81 = vector.broadcast %cst_37 : f32 to vector<64x1xf32>
    %82 = arith.subf %81, %70 : vector<64x1xf32>
    %83 = math.exp %82 : vector<64x1xf32>
    %84 = arith.maximumf %80, %83 : vector<64x1xf32>
    %cst_38 = arith.constant dense<0.000000e+00> : vector<64x16xf32>
    %85 = tpu.matmul %77, %59, %cst_38 {dimension_numbers = #tpu.dot_dimension_numbers<[1], [0], [0], [1], [0, 0, 1, 1], [], []>} : vector<64x64xf32>, vector<64x16xf32>, vector<64x16xf32> -> vector<64x16xf32>
    %cst_39 = arith.constant 9.99999997E-7 : f32
    %86 = vector.broadcast %cst_39 : f32 to vector<64x1xf32>
    %87 = arith.addf %84, %86 : vector<64x1xf32>
    %88 = vector.broadcast %87 : vector<64x1xf32> to vector<64x16xf32>
    %89 = arith.divf %85, %88 : vector<64x16xf32>
    %cst_40 = arith.constant dense<0.000000e+00> : vector<64xf32>
    %90 = vector.multi_reduction <add>, %89, %cst_40 [1] : vector<64x16xf32> to vector<64xf32>
    %91 = vector.shape_cast %90 : vector<64xf32> to vector<64x1xf32>
    %cst_41 = arith.constant 1.600000e+01 : f32
    %92 = vector.broadcast %cst_41 : f32 to vector<64x1xf32>
    %93 = arith.divf %91, %92 : vector<64x1xf32>
    %94 = vector.broadcast %93 : vector<64x1xf32> to vector<64x16xf32>
    %95 = arith.subf %89, %94 : vector<64x16xf32>
    %96 = arith.mulf %95, %95 : vector<64x16xf32>
    %cst_42 = arith.constant dense<0.000000e+00> : vector<64xf32>
    %97 = vector.multi_reduction <add>, %96, %cst_42 [1] : vector<64x16xf32> to vector<64xf32>
    %98 = vector.shape_cast %97 : vector<64xf32> to vector<64x1xf32>
    %cst_43 = arith.constant 1.600000e+01 : f32
    %99 = vector.broadcast %cst_43 : f32 to vector<64x1xf32>
    %100 = arith.divf %98, %99 : vector<64x1xf32>
    %cst_44 = arith.constant 9.99999997E-7 : f32
    %101 = vector.broadcast %cst_44 : f32 to vector<64x1xf32>
    %102 = arith.addf %100, %101 : vector<64x1xf32>
    %103 = math.rsqrt %102 : vector<64x1xf32>
    %104 = vector.broadcast %103 : vector<64x1xf32> to vector<64x16xf32>
    %105 = arith.mulf %95, %104 : vector<64x16xf32>
    %106 = vector.extract_strided_slice %49 {offsets = [0, 0], sizes = [1, 16], strides = [1, 1]} : vector<2x16xf32> to vector<1x16xf32>
    %107 = vector.broadcast %106 : vector<1x16xf32> to vector<64x16xf32>
    %108 = arith.mulf %105, %107 : vector<64x16xf32>
    %109 = arith.negf %60 : vector<64x16xf32>
    %110 = math.exp %109 : vector<64x16xf32>
    %cst_45 = arith.constant 1.000000e+00 : f32
    %111 = vector.broadcast %cst_45 : f32 to vector<64x16xf32>
    %112 = arith.addf %111, %110 : vector<64x16xf32>
    %113 = arith.divf %111, %112 : vector<64x16xf32>
    %114 = arith.mulf %113, %108 : vector<64x16xf32>
    %c0_46 = arith.constant 0 : index
    %c0_47 = arith.constant 0 : index
    %115 = vector.load %arg12[%c0_46, %c0_47] : memref<32x32xf32, #tpu.memory_space<vmem>>, vector<16x32xf32>
    %cst_48 = arith.constant dense<0.000000e+00> : vector<64x32xf32>
    %116 = tpu.matmul %114, %115, %cst_48 {dimension_numbers = #tpu.dot_dimension_numbers<[1], [0], [0], [1], [0, 0, 1, 1], [], []>} : vector<64x16xf32>, vector<16x32xf32>, vector<64x32xf32> -> vector<64x32xf32>
    %117 = arith.addf %56, %116 : vector<64x32xf32>
    %118 = vector.extract_strided_slice %50 {offsets = [0, 8], sizes = [64, 8], strides = [1, 1]} : vector<64x32xf32> to vector<64x8xf32>
    %119 = vector.extract_strided_slice %50 {offsets = [0, 24], sizes = [64, 8], strides = [1, 1]} : vector<64x32xf32> to vector<64x8xf32>
    %120 = vector.extract_strided_slice %51 {offsets = [0, 16], sizes = [64, 16], strides = [1, 1]} : vector<64x64xf32> to vector<64x16xf32>
    %121 = vector.extract_strided_slice %51 {offsets = [0, 48], sizes = [64, 16], strides = [1, 1]} : vector<64x64xf32> to vector<64x16xf32>
    %122 = vector.extract_strided_slice %52 {offsets = [1, 0], sizes = [1, 64], strides = [1, 1]} : vector<8x64xf32> to vector<1x64xf32>
    %123 = vector.extract_strided_slice %54 {offsets = [0, 3], sizes = [64, 1], strides = [1, 1]} : vector<64x8xf32> to vector<64x1xf32>
    %124 = vector.extract_strided_slice %55 {offsets = [3, 0], sizes = [1, 64], strides = [1, 1]} : vector<8x64xf32> to vector<1x64xf32>
    %125 = arith.subf %122, %124 : vector<1x64xf32>
    %126 = vector.broadcast %123 : vector<64x1xf32> to vector<64x64xf32>
    %127 = vector.broadcast %125 : vector<1x64xf32> to vector<64x64xf32>
    %128 = arith.addf %126, %127 : vector<64x64xf32>
    %129 = arith.addf %128, %48 : vector<64x64xf32>
    %cst_49 = arith.constant dense<0xFF800000> : vector<64xf32>
    %130 = vector.multi_reduction <maximumf>, %129, %cst_49 [1] : vector<64x64xf32> to vector<64xf32>
    %131 = vector.shape_cast %130 : vector<64xf32> to vector<64x1xf32>
    %132 = vector.broadcast %131 : vector<64x1xf32> to vector<64x64xf32>
    %133 = arith.subf %129, %132 : vector<64x64xf32>
    %134 = math.exp %133 : vector<64x64xf32>
    %cst_50 = arith.constant dense<0.000000e+00> : vector<64x64xf32>
    %135 = tpu.matmul %118, %119, %cst_50 {dimension_numbers = #tpu.dot_dimension_numbers<[1], [1], [0], [0], [0, 0, 1, 0], [], []>} : vector<64x8xf32>, vector<64x8xf32>, vector<64x64xf32> -> vector<64x64xf32>
    %cst_51 = arith.constant 0.353553385 : f32
    %136 = vector.broadcast %cst_51 : f32 to vector<64x64xf32>
    %137 = arith.mulf %135, %136 : vector<64x64xf32>
    %138 = arith.mulf %137, %134 : vector<64x64xf32>
    %cst_52 = arith.constant dense<0.000000e+00> : vector<64xf32>
    %139 = vector.multi_reduction <add>, %138, %cst_52 [1] : vector<64x64xf32> to vector<64xf32>
    %140 = vector.shape_cast %139 : vector<64xf32> to vector<64x1xf32>
    %141 = math.absf %140 : vector<64x1xf32>
    %cst_53 = arith.constant 0.000000e+00 : f32
    %142 = vector.broadcast %cst_53 : f32 to vector<64x1xf32>
    %143 = arith.subf %142, %131 : vector<64x1xf32>
    %144 = math.exp %143 : vector<64x1xf32>
    %145 = arith.maximumf %141, %144 : vector<64x1xf32>
    %cst_54 = arith.constant dense<0.000000e+00> : vector<64x16xf32>
    %146 = tpu.matmul %138, %120, %cst_54 {dimension_numbers = #tpu.dot_dimension_numbers<[1], [0], [0], [1], [0, 0, 1, 1], [], []>} : vector<64x64xf32>, vector<64x16xf32>, vector<64x16xf32> -> vector<64x16xf32>
    %cst_55 = arith.constant 9.99999997E-7 : f32
    %147 = vector.broadcast %cst_55 : f32 to vector<64x1xf32>
    %148 = arith.addf %145, %147 : vector<64x1xf32>
    %149 = vector.broadcast %148 : vector<64x1xf32> to vector<64x16xf32>
    %150 = arith.divf %146, %149 : vector<64x16xf32>
    %cst_56 = arith.constant dense<0.000000e+00> : vector<64xf32>
    %151 = vector.multi_reduction <add>, %150, %cst_56 [1] : vector<64x16xf32> to vector<64xf32>
    %152 = vector.shape_cast %151 : vector<64xf32> to vector<64x1xf32>
    %cst_57 = arith.constant 1.600000e+01 : f32
    %153 = vector.broadcast %cst_57 : f32 to vector<64x1xf32>
    %154 = arith.divf %152, %153 : vector<64x1xf32>
    %155 = vector.broadcast %154 : vector<64x1xf32> to vector<64x16xf32>
    %156 = arith.subf %150, %155 : vector<64x16xf32>
    %157 = arith.mulf %156, %156 : vector<64x16xf32>
    %cst_58 = arith.constant dense<0.000000e+00> : vector<64xf32>
    %158 = vector.multi_reduction <add>, %157, %cst_58 [1] : vector<64x16xf32> to vector<64xf32>
    %159 = vector.shape_cast %158 : vector<64xf32> to vector<64x1xf32>
    %cst_59 = arith.constant 1.600000e+01 : f32
    %160 = vector.broadcast %cst_59 : f32 to vector<64x1xf32>
    %161 = arith.divf %159, %160 : vector<64x1xf32>
    %cst_60 = arith.constant 9.99999997E-7 : f32
    %162 = vector.broadcast %cst_60 : f32 to vector<64x1xf32>
    %163 = arith.addf %161, %162 : vector<64x1xf32>
    %164 = math.rsqrt %163 : vector<64x1xf32>
    %165 = vector.broadcast %164 : vector<64x1xf32> to vector<64x16xf32>
    %166 = arith.mulf %156, %165 : vector<64x16xf32>
    %167 = vector.extract_strided_slice %49 {offsets = [1, 0], sizes = [1, 16], strides = [1, 1]} : vector<2x16xf32> to vector<1x16xf32>
    %168 = vector.broadcast %167 : vector<1x16xf32> to vector<64x16xf32>
    %169 = arith.mulf %166, %168 : vector<64x16xf32>
    %170 = arith.negf %121 : vector<64x16xf32>
    %171 = math.exp %170 : vector<64x16xf32>
    %cst_61 = arith.constant 1.000000e+00 : f32
    %172 = vector.broadcast %cst_61 : f32 to vector<64x16xf32>
    %173 = arith.addf %172, %171 : vector<64x16xf32>
    %174 = arith.divf %172, %173 : vector<64x16xf32>
    %175 = arith.mulf %174, %169 : vector<64x16xf32>
    %c16 = arith.constant 16 : index
    %c0_62 = arith.constant 0 : index
    %176 = vector.load %arg12[%c16, %c0_62] : memref<32x32xf32, #tpu.memory_space<vmem>>, vector<16x32xf32>
    %cst_63 = arith.constant dense<0.000000e+00> : vector<64x32xf32>
    %177 = tpu.matmul %175, %176, %cst_63 {dimension_numbers = #tpu.dot_dimension_numbers<[1], [0], [0], [1], [0, 0, 1, 1], [], []>} : vector<64x16xf32>, vector<16x32xf32>, vector<64x32xf32> -> vector<64x32xf32>
    %178 = arith.addf %117, %177 : vector<64x32xf32>
    %179 = vector.extract_strided_slice %24 {offsets = [64, 0], sizes = [64, 32], strides = [1, 1]} : vector<256x32xf32> to vector<64x32xf32>
    %180 = vector.extract_strided_slice %26 {offsets = [64, 0], sizes = [64, 64], strides = [1, 1]} : vector<256x64xf32> to vector<64x64xf32>
    %181 = vector.extract_strided_slice %36 {offsets = [0, 64], sizes = [8, 64], strides = [1, 1]} : vector<8x256xf32> to vector<8x64xf32>
    %182 = vector.extract_strided_slice %46 {offsets = [0, 64], sizes = [8, 64], strides = [1, 1]} : vector<8x256xf32> to vector<8x64xf32>
    %cst_64 = arith.constant dense<0.000000e+00> : vector<64x8xf32>
    %183 = tpu.matmul %47, %182, %cst_64 {dimension_numbers = #tpu.dot_dimension_numbers<[1], [1], [0], [0], [0, 0, 1, 0], [], []>} : vector<64x64xf32>, vector<8x64xf32>, vector<64x8xf32> -> vector<64x8xf32>
    %cst_65 = arith.constant dense<0.000000e+00> : vector<8x64xf32>
    %184 = tpu.matmul %182, %47, %cst_65 {dimension_numbers = #tpu.dot_dimension_numbers<[1], [1], [0], [0], [0, 0, 1, 0], [], []>} : vector<8x64xf32>, vector<64x64xf32>, vector<8x64xf32> -> vector<8x64xf32>
    %cst_66 = arith.constant 0.000000e+00 : f32
    %185 = vector.broadcast %cst_66 : f32 to vector<64x32xf32>
    %186 = vector.extract_strided_slice %179 {offsets = [0, 0], sizes = [64, 8], strides = [1, 1]} : vector<64x32xf32> to vector<64x8xf32>
    %187 = vector.extract_strided_slice %179 {offsets = [0, 16], sizes = [64, 8], strides = [1, 1]} : vector<64x32xf32> to vector<64x8xf32>
    %188 = vector.extract_strided_slice %180 {offsets = [0, 0], sizes = [64, 16], strides = [1, 1]} : vector<64x64xf32> to vector<64x16xf32>
    %189 = vector.extract_strided_slice %180 {offsets = [0, 32], sizes = [64, 16], strides = [1, 1]} : vector<64x64xf32> to vector<64x16xf32>
    %190 = vector.extract_strided_slice %181 {offsets = [0, 0], sizes = [1, 64], strides = [1, 1]} : vector<8x64xf32> to vector<1x64xf32>
    %191 = vector.extract_strided_slice %183 {offsets = [0, 2], sizes = [64, 1], strides = [1, 1]} : vector<64x8xf32> to vector<64x1xf32>
    %192 = vector.extract_strided_slice %184 {offsets = [2, 0], sizes = [1, 64], strides = [1, 1]} : vector<8x64xf32> to vector<1x64xf32>
    %193 = arith.subf %190, %192 : vector<1x64xf32>
    %194 = vector.broadcast %191 : vector<64x1xf32> to vector<64x64xf32>
    %195 = vector.broadcast %193 : vector<1x64xf32> to vector<64x64xf32>
    %196 = arith.addf %194, %195 : vector<64x64xf32>
    %197 = arith.addf %196, %48 : vector<64x64xf32>
    %cst_67 = arith.constant dense<0xFF800000> : vector<64xf32>
    %198 = vector.multi_reduction <maximumf>, %197, %cst_67 [1] : vector<64x64xf32> to vector<64xf32>
    %199 = vector.shape_cast %198 : vector<64xf32> to vector<64x1xf32>
    %200 = vector.broadcast %199 : vector<64x1xf32> to vector<64x64xf32>
    %201 = arith.subf %197, %200 : vector<64x64xf32>
    %202 = math.exp %201 : vector<64x64xf32>
    %cst_68 = arith.constant dense<0.000000e+00> : vector<64x64xf32>
    %203 = tpu.matmul %186, %187, %cst_68 {dimension_numbers = #tpu.dot_dimension_numbers<[1], [1], [0], [0], [0, 0, 1, 0], [], []>} : vector<64x8xf32>, vector<64x8xf32>, vector<64x64xf32> -> vector<64x64xf32>
    %cst_69 = arith.constant 0.353553385 : f32
    %204 = vector.broadcast %cst_69 : f32 to vector<64x64xf32>
    %205 = arith.mulf %203, %204 : vector<64x64xf32>
    %206 = arith.mulf %205, %202 : vector<64x64xf32>
    %cst_70 = arith.constant dense<0.000000e+00> : vector<64xf32>
    %207 = vector.multi_reduction <add>, %206, %cst_70 [1] : vector<64x64xf32> to vector<64xf32>
    %208 = vector.shape_cast %207 : vector<64xf32> to vector<64x1xf32>
    %209 = math.absf %208 : vector<64x1xf32>
    %cst_71 = arith.constant 0.000000e+00 : f32
    %210 = vector.broadcast %cst_71 : f32 to vector<64x1xf32>
    %211 = arith.subf %210, %199 : vector<64x1xf32>
    %212 = math.exp %211 : vector<64x1xf32>
    %213 = arith.maximumf %209, %212 : vector<64x1xf32>
    %cst_72 = arith.constant dense<0.000000e+00> : vector<64x16xf32>
    %214 = tpu.matmul %206, %188, %cst_72 {dimension_numbers = #tpu.dot_dimension_numbers<[1], [0], [0], [1], [0, 0, 1, 1], [], []>} : vector<64x64xf32>, vector<64x16xf32>, vector<64x16xf32> -> vector<64x16xf32>
    %cst_73 = arith.constant 9.99999997E-7 : f32
    %215 = vector.broadcast %cst_73 : f32 to vector<64x1xf32>
    %216 = arith.addf %213, %215 : vector<64x1xf32>
    %217 = vector.broadcast %216 : vector<64x1xf32> to vector<64x16xf32>
    %218 = arith.divf %214, %217 : vector<64x16xf32>
    %cst_74 = arith.constant dense<0.000000e+00> : vector<64xf32>
    %219 = vector.multi_reduction <add>, %218, %cst_74 [1] : vector<64x16xf32> to vector<64xf32>
    %220 = vector.shape_cast %219 : vector<64xf32> to vector<64x1xf32>
    %cst_75 = arith.constant 1.600000e+01 : f32
    %221 = vector.broadcast %cst_75 : f32 to vector<64x1xf32>
    %222 = arith.divf %220, %221 : vector<64x1xf32>
    %223 = vector.broadcast %222 : vector<64x1xf32> to vector<64x16xf32>
    %224 = arith.subf %218, %223 : vector<64x16xf32>
    %225 = arith.mulf %224, %224 : vector<64x16xf32>
    %cst_76 = arith.constant dense<0.000000e+00> : vector<64xf32>
    %226 = vector.multi_reduction <add>, %225, %cst_76 [1] : vector<64x16xf32> to vector<64xf32>
    %227 = vector.shape_cast %226 : vector<64xf32> to vector<64x1xf32>
    %cst_77 = arith.constant 1.600000e+01 : f32
    %228 = vector.broadcast %cst_77 : f32 to vector<64x1xf32>
    %229 = arith.divf %227, %228 : vector<64x1xf32>
    %cst_78 = arith.constant 9.99999997E-7 : f32
    %230 = vector.broadcast %cst_78 : f32 to vector<64x1xf32>
    %231 = arith.addf %229, %230 : vector<64x1xf32>
    %232 = math.rsqrt %231 : vector<64x1xf32>
    %233 = vector.broadcast %232 : vector<64x1xf32> to vector<64x16xf32>
    %234 = arith.mulf %224, %233 : vector<64x16xf32>
    %235 = vector.extract_strided_slice %49 {offsets = [0, 0], sizes = [1, 16], strides = [1, 1]} : vector<2x16xf32> to vector<1x16xf32>
    %236 = vector.broadcast %235 : vector<1x16xf32> to vector<64x16xf32>
    %237 = arith.mulf %234, %236 : vector<64x16xf32>
    %238 = arith.negf %189 : vector<64x16xf32>
    %239 = math.exp %238 : vector<64x16xf32>
    %cst_79 = arith.constant 1.000000e+00 : f32
    %240 = vector.broadcast %cst_79 : f32 to vector<64x16xf32>
    %241 = arith.addf %240, %239 : vector<64x16xf32>
    %242 = arith.divf %240, %241 : vector<64x16xf32>
    %243 = arith.mulf %242, %237 : vector<64x16xf32>
    %c0_80 = arith.constant 0 : index
    %c0_81 = arith.constant 0 : index
    %244 = vector.load %arg12[%c0_80, %c0_81] : memref<32x32xf32, #tpu.memory_space<vmem>>, vector<16x32xf32>
    %cst_82 = arith.constant dense<0.000000e+00> : vector<64x32xf32>
    %245 = tpu.matmul %243, %244, %cst_82 {dimension_numbers = #tpu.dot_dimension_numbers<[1], [0], [0], [1], [0, 0, 1, 1], [], []>} : vector<64x16xf32>, vector<16x32xf32>, vector<64x32xf32> -> vector<64x32xf32>
    %246 = arith.addf %185, %245 : vector<64x32xf32>
    %247 = vector.extract_strided_slice %179 {offsets = [0, 8], sizes = [64, 8], strides = [1, 1]} : vector<64x32xf32> to vector<64x8xf32>
    %248 = vector.extract_strided_slice %179 {offsets = [0, 24], sizes = [64, 8], strides = [1, 1]} : vector<64x32xf32> to vector<64x8xf32>
    %249 = vector.extract_strided_slice %180 {offsets = [0, 16], sizes = [64, 16], strides = [1, 1]} : vector<64x64xf32> to vector<64x16xf32>
    %250 = vector.extract_strided_slice %180 {offsets = [0, 48], sizes = [64, 16], strides = [1, 1]} : vector<64x64xf32> to vector<64x16xf32>
    %251 = vector.extract_strided_slice %181 {offsets = [1, 0], sizes = [1, 64], strides = [1, 1]} : vector<8x64xf32> to vector<1x64xf32>
    %252 = vector.extract_strided_slice %183 {offsets = [0, 3], sizes = [64, 1], strides = [1, 1]} : vector<64x8xf32> to vector<64x1xf32>
    %253 = vector.extract_strided_slice %184 {offsets = [3, 0], sizes = [1, 64], strides = [1, 1]} : vector<8x64xf32> to vector<1x64xf32>
    %254 = arith.subf %251, %253 : vector<1x64xf32>
    %255 = vector.broadcast %252 : vector<64x1xf32> to vector<64x64xf32>
    %256 = vector.broadcast %254 : vector<1x64xf32> to vector<64x64xf32>
    %257 = arith.addf %255, %256 : vector<64x64xf32>
    %258 = arith.addf %257, %48 : vector<64x64xf32>
    %cst_83 = arith.constant dense<0xFF800000> : vector<64xf32>
    %259 = vector.multi_reduction <maximumf>, %258, %cst_83 [1] : vector<64x64xf32> to vector<64xf32>
    %260 = vector.shape_cast %259 : vector<64xf32> to vector<64x1xf32>
    %261 = vector.broadcast %260 : vector<64x1xf32> to vector<64x64xf32>
    %262 = arith.subf %258, %261 : vector<64x64xf32>
    %263 = math.exp %262 : vector<64x64xf32>
    %cst_84 = arith.constant dense<0.000000e+00> : vector<64x64xf32>
    %264 = tpu.matmul %247, %248, %cst_84 {dimension_numbers = #tpu.dot_dimension_numbers<[1], [1], [0], [0], [0, 0, 1, 0], [], []>} : vector<64x8xf32>, vector<64x8xf32>, vector<64x64xf32> -> vector<64x64xf32>
    %cst_85 = arith.constant 0.353553385 : f32
    %265 = vector.broadcast %cst_85 : f32 to vector<64x64xf32>
    %266 = arith.mulf %264, %265 : vector<64x64xf32>
    %267 = arith.mulf %266, %263 : vector<64x64xf32>
    %cst_86 = arith.constant dense<0.000000e+00> : vector<64xf32>
    %268 = vector.multi_reduction <add>, %267, %cst_86 [1] : vector<64x64xf32> to vector<64xf32>
    %269 = vector.shape_cast %268 : vector<64xf32> to vector<64x1xf32>
    %270 = math.absf %269 : vector<64x1xf32>
    %cst_87 = arith.constant 0.000000e+00 : f32
    %271 = vector.broadcast %cst_87 : f32 to vector<64x1xf32>
    %272 = arith.subf %271, %260 : vector<64x1xf32>
    %273 = math.exp %272 : vector<64x1xf32>
    %274 = arith.maximumf %270, %273 : vector<64x1xf32>
    %cst_88 = arith.constant dense<0.000000e+00> : vector<64x16xf32>
    %275 = tpu.matmul %267, %249, %cst_88 {dimension_numbers = #tpu.dot_dimension_numbers<[1], [0], [0], [1], [0, 0, 1, 1], [], []>} : vector<64x64xf32>, vector<64x16xf32>, vector<64x16xf32> -> vector<64x16xf32>
    %cst_89 = arith.constant 9.99999997E-7 : f32
    %276 = vector.broadcast %cst_89 : f32 to vector<64x1xf32>
    %277 = arith.addf %274, %276 : vector<64x1xf32>
    %278 = vector.broadcast %277 : vector<64x1xf32> to vector<64x16xf32>
    %279 = arith.divf %275, %278 : vector<64x16xf32>
    %cst_90 = arith.constant dense<0.000000e+00> : vector<64xf32>
    %280 = vector.multi_reduction <add>, %279, %cst_90 [1] : vector<64x16xf32> to vector<64xf32>
    %281 = vector.shape_cast %280 : vector<64xf32> to vector<64x1xf32>
    %cst_91 = arith.constant 1.600000e+01 : f32
    %282 = vector.broadcast %cst_91 : f32 to vector<64x1xf32>
    %283 = arith.divf %281, %282 : vector<64x1xf32>
    %284 = vector.broadcast %283 : vector<64x1xf32> to vector<64x16xf32>
    %285 = arith.subf %279, %284 : vector<64x16xf32>
    %286 = arith.mulf %285, %285 : vector<64x16xf32>
    %cst_92 = arith.constant dense<0.000000e+00> : vector<64xf32>
    %287 = vector.multi_reduction <add>, %286, %cst_92 [1] : vector<64x16xf32> to vector<64xf32>
    %288 = vector.shape_cast %287 : vector<64xf32> to vector<64x1xf32>
    %cst_93 = arith.constant 1.600000e+01 : f32
    %289 = vector.broadcast %cst_93 : f32 to vector<64x1xf32>
    %290 = arith.divf %288, %289 : vector<64x1xf32>
    %cst_94 = arith.constant 9.99999997E-7 : f32
    %291 = vector.broadcast %cst_94 : f32 to vector<64x1xf32>
    %292 = arith.addf %290, %291 : vector<64x1xf32>
    %293 = math.rsqrt %292 : vector<64x1xf32>
    %294 = vector.broadcast %293 : vector<64x1xf32> to vector<64x16xf32>
    %295 = arith.mulf %285, %294 : vector<64x16xf32>
    %296 = vector.extract_strided_slice %49 {offsets = [1, 0], sizes = [1, 16], strides = [1, 1]} : vector<2x16xf32> to vector<1x16xf32>
    %297 = vector.broadcast %296 : vector<1x16xf32> to vector<64x16xf32>
    %298 = arith.mulf %295, %297 : vector<64x16xf32>
    %299 = arith.negf %250 : vector<64x16xf32>
    %300 = math.exp %299 : vector<64x16xf32>
    %cst_95 = arith.constant 1.000000e+00 : f32
    %301 = vector.broadcast %cst_95 : f32 to vector<64x16xf32>
    %302 = arith.addf %301, %300 : vector<64x16xf32>
    %303 = arith.divf %301, %302 : vector<64x16xf32>
    %304 = arith.mulf %303, %298 : vector<64x16xf32>
    %c16_96 = arith.constant 16 : index
    %c0_97 = arith.constant 0 : index
    %305 = vector.load %arg12[%c16_96, %c0_97] : memref<32x32xf32, #tpu.memory_space<vmem>>, vector<16x32xf32>
    %cst_98 = arith.constant dense<0.000000e+00> : vector<64x32xf32>
    %306 = tpu.matmul %304, %305, %cst_98 {dimension_numbers = #tpu.dot_dimension_numbers<[1], [0], [0], [1], [0, 0, 1, 1], [], []>} : vector<64x16xf32>, vector<16x32xf32>, vector<64x32xf32> -> vector<64x32xf32>
    %307 = arith.addf %246, %306 : vector<64x32xf32>
    %308 = vector.extract_strided_slice %24 {offsets = [128, 0], sizes = [64, 32], strides = [1, 1]} : vector<256x32xf32> to vector<64x32xf32>
    %309 = vector.extract_strided_slice %26 {offsets = [128, 0], sizes = [64, 64], strides = [1, 1]} : vector<256x64xf32> to vector<64x64xf32>
    %310 = vector.extract_strided_slice %36 {offsets = [0, 128], sizes = [8, 64], strides = [1, 1]} : vector<8x256xf32> to vector<8x64xf32>
    %311 = vector.extract_strided_slice %46 {offsets = [0, 128], sizes = [8, 64], strides = [1, 1]} : vector<8x256xf32> to vector<8x64xf32>
    %cst_99 = arith.constant dense<0.000000e+00> : vector<64x8xf32>
    %312 = tpu.matmul %47, %311, %cst_99 {dimension_numbers = #tpu.dot_dimension_numbers<[1], [1], [0], [0], [0, 0, 1, 0], [], []>} : vector<64x64xf32>, vector<8x64xf32>, vector<64x8xf32> -> vector<64x8xf32>
    %cst_100 = arith.constant dense<0.000000e+00> : vector<8x64xf32>
    %313 = tpu.matmul %311, %47, %cst_100 {dimension_numbers = #tpu.dot_dimension_numbers<[1], [1], [0], [0], [0, 0, 1, 0], [], []>} : vector<8x64xf32>, vector<64x64xf32>, vector<8x64xf32> -> vector<8x64xf32>
    %cst_101 = arith.constant 0.000000e+00 : f32
    %314 = vector.broadcast %cst_101 : f32 to vector<64x32xf32>
    %315 = vector.extract_strided_slice %308 {offsets = [0, 0], sizes = [64, 8], strides = [1, 1]} : vector<64x32xf32> to vector<64x8xf32>
    %316 = vector.extract_strided_slice %308 {offsets = [0, 16], sizes = [64, 8], strides = [1, 1]} : vector<64x32xf32> to vector<64x8xf32>
    %317 = vector.extract_strided_slice %309 {offsets = [0, 0], sizes = [64, 16], strides = [1, 1]} : vector<64x64xf32> to vector<64x16xf32>
    %318 = vector.extract_strided_slice %309 {offsets = [0, 32], sizes = [64, 16], strides = [1, 1]} : vector<64x64xf32> to vector<64x16xf32>
    %319 = vector.extract_strided_slice %310 {offsets = [0, 0], sizes = [1, 64], strides = [1, 1]} : vector<8x64xf32> to vector<1x64xf32>
    %320 = vector.extract_strided_slice %312 {offsets = [0, 2], sizes = [64, 1], strides = [1, 1]} : vector<64x8xf32> to vector<64x1xf32>
    %321 = vector.extract_strided_slice %313 {offsets = [2, 0], sizes = [1, 64], strides = [1, 1]} : vector<8x64xf32> to vector<1x64xf32>
    %322 = arith.subf %319, %321 : vector<1x64xf32>
    %323 = vector.broadcast %320 : vector<64x1xf32> to vector<64x64xf32>
    %324 = vector.broadcast %322 : vector<1x64xf32> to vector<64x64xf32>
    %325 = arith.addf %323, %324 : vector<64x64xf32>
    %326 = arith.addf %325, %48 : vector<64x64xf32>
    %cst_102 = arith.constant dense<0xFF800000> : vector<64xf32>
    %327 = vector.multi_reduction <maximumf>, %326, %cst_102 [1] : vector<64x64xf32> to vector<64xf32>
    %328 = vector.shape_cast %327 : vector<64xf32> to vector<64x1xf32>
    %329 = vector.broadcast %328 : vector<64x1xf32> to vector<64x64xf32>
    %330 = arith.subf %326, %329 : vector<64x64xf32>
    %331 = math.exp %330 : vector<64x64xf32>
    %cst_103 = arith.constant dense<0.000000e+00> : vector<64x64xf32>
    %332 = tpu.matmul %315, %316, %cst_103 {dimension_numbers = #tpu.dot_dimension_numbers<[1], [1], [0], [0], [0, 0, 1, 0], [], []>} : vector<64x8xf32>, vector<64x8xf32>, vector<64x64xf32> -> vector<64x64xf32>
    %cst_104 = arith.constant 0.353553385 : f32
    %333 = vector.broadcast %cst_104 : f32 to vector<64x64xf32>
    %334 = arith.mulf %332, %333 : vector<64x64xf32>
    %335 = arith.mulf %334, %331 : vector<64x64xf32>
    %cst_105 = arith.constant dense<0.000000e+00> : vector<64xf32>
    %336 = vector.multi_reduction <add>, %335, %cst_105 [1] : vector<64x64xf32> to vector<64xf32>
    %337 = vector.shape_cast %336 : vector<64xf32> to vector<64x1xf32>
    %338 = math.absf %337 : vector<64x1xf32>
    %cst_106 = arith.constant 0.000000e+00 : f32
    %339 = vector.broadcast %cst_106 : f32 to vector<64x1xf32>
    %340 = arith.subf %339, %328 : vector<64x1xf32>
    %341 = math.exp %340 : vector<64x1xf32>
    %342 = arith.maximumf %338, %341 : vector<64x1xf32>
    %cst_107 = arith.constant dense<0.000000e+00> : vector<64x16xf32>
    %343 = tpu.matmul %335, %317, %cst_107 {dimension_numbers = #tpu.dot_dimension_numbers<[1], [0], [0], [1], [0, 0, 1, 1], [], []>} : vector<64x64xf32>, vector<64x16xf32>, vector<64x16xf32> -> vector<64x16xf32>
    %cst_108 = arith.constant 9.99999997E-7 : f32
    %344 = vector.broadcast %cst_108 : f32 to vector<64x1xf32>
    %345 = arith.addf %342, %344 : vector<64x1xf32>
    %346 = vector.broadcast %345 : vector<64x1xf32> to vector<64x16xf32>
    %347 = arith.divf %343, %346 : vector<64x16xf32>
    %cst_109 = arith.constant dense<0.000000e+00> : vector<64xf32>
    %348 = vector.multi_reduction <add>, %347, %cst_109 [1] : vector<64x16xf32> to vector<64xf32>
    %349 = vector.shape_cast %348 : vector<64xf32> to vector<64x1xf32>
    %cst_110 = arith.constant 1.600000e+01 : f32
    %350 = vector.broadcast %cst_110 : f32 to vector<64x1xf32>
    %351 = arith.divf %349, %350 : vector<64x1xf32>
    %352 = vector.broadcast %351 : vector<64x1xf32> to vector<64x16xf32>
    %353 = arith.subf %347, %352 : vector<64x16xf32>
    %354 = arith.mulf %353, %353 : vector<64x16xf32>
    %cst_111 = arith.constant dense<0.000000e+00> : vector<64xf32>
    %355 = vector.multi_reduction <add>, %354, %cst_111 [1] : vector<64x16xf32> to vector<64xf32>
    %356 = vector.shape_cast %355 : vector<64xf32> to vector<64x1xf32>
    %cst_112 = arith.constant 1.600000e+01 : f32
    %357 = vector.broadcast %cst_112 : f32 to vector<64x1xf32>
    %358 = arith.divf %356, %357 : vector<64x1xf32>
    %cst_113 = arith.constant 9.99999997E-7 : f32
    %359 = vector.broadcast %cst_113 : f32 to vector<64x1xf32>
    %360 = arith.addf %358, %359 : vector<64x1xf32>
    %361 = math.rsqrt %360 : vector<64x1xf32>
    %362 = vector.broadcast %361 : vector<64x1xf32> to vector<64x16xf32>
    %363 = arith.mulf %353, %362 : vector<64x16xf32>
    %364 = vector.extract_strided_slice %49 {offsets = [0, 0], sizes = [1, 16], strides = [1, 1]} : vector<2x16xf32> to vector<1x16xf32>
    %365 = vector.broadcast %364 : vector<1x16xf32> to vector<64x16xf32>
    %366 = arith.mulf %363, %365 : vector<64x16xf32>
    %367 = arith.negf %318 : vector<64x16xf32>
    %368 = math.exp %367 : vector<64x16xf32>
    %cst_114 = arith.constant 1.000000e+00 : f32
    %369 = vector.broadcast %cst_114 : f32 to vector<64x16xf32>
    %370 = arith.addf %369, %368 : vector<64x16xf32>
    %371 = arith.divf %369, %370 : vector<64x16xf32>
    %372 = arith.mulf %371, %366 : vector<64x16xf32>
    %c0_115 = arith.constant 0 : index
    %c0_116 = arith.constant 0 : index
    %373 = vector.load %arg12[%c0_115, %c0_116] : memref<32x32xf32, #tpu.memory_space<vmem>>, vector<16x32xf32>
    %cst_117 = arith.constant dense<0.000000e+00> : vector<64x32xf32>
    %374 = tpu.matmul %372, %373, %cst_117 {dimension_numbers = #tpu.dot_dimension_numbers<[1], [0], [0], [1], [0, 0, 1, 1], [], []>} : vector<64x16xf32>, vector<16x32xf32>, vector<64x32xf32> -> vector<64x32xf32>
    %375 = arith.addf %314, %374 : vector<64x32xf32>
    %376 = vector.extract_strided_slice %308 {offsets = [0, 8], sizes = [64, 8], strides = [1, 1]} : vector<64x32xf32> to vector<64x8xf32>
    %377 = vector.extract_strided_slice %308 {offsets = [0, 24], sizes = [64, 8], strides = [1, 1]} : vector<64x32xf32> to vector<64x8xf32>
    %378 = vector.extract_strided_slice %309 {offsets = [0, 16], sizes = [64, 16], strides = [1, 1]} : vector<64x64xf32> to vector<64x16xf32>
    %379 = vector.extract_strided_slice %309 {offsets = [0, 48], sizes = [64, 16], strides = [1, 1]} : vector<64x64xf32> to vector<64x16xf32>
    %380 = vector.extract_strided_slice %310 {offsets = [1, 0], sizes = [1, 64], strides = [1, 1]} : vector<8x64xf32> to vector<1x64xf32>
    %381 = vector.extract_strided_slice %312 {offsets = [0, 3], sizes = [64, 1], strides = [1, 1]} : vector<64x8xf32> to vector<64x1xf32>
    %382 = vector.extract_strided_slice %313 {offsets = [3, 0], sizes = [1, 64], strides = [1, 1]} : vector<8x64xf32> to vector<1x64xf32>
    %383 = arith.subf %380, %382 : vector<1x64xf32>
    %384 = vector.broadcast %381 : vector<64x1xf32> to vector<64x64xf32>
    %385 = vector.broadcast %383 : vector<1x64xf32> to vector<64x64xf32>
    %386 = arith.addf %384, %385 : vector<64x64xf32>
    %387 = arith.addf %386, %48 : vector<64x64xf32>
    %cst_118 = arith.constant dense<0xFF800000> : vector<64xf32>
    %388 = vector.multi_reduction <maximumf>, %387, %cst_118 [1] : vector<64x64xf32> to vector<64xf32>
    %389 = vector.shape_cast %388 : vector<64xf32> to vector<64x1xf32>
    %390 = vector.broadcast %389 : vector<64x1xf32> to vector<64x64xf32>
    %391 = arith.subf %387, %390 : vector<64x64xf32>
    %392 = math.exp %391 : vector<64x64xf32>
    %cst_119 = arith.constant dense<0.000000e+00> : vector<64x64xf32>
    %393 = tpu.matmul %376, %377, %cst_119 {dimension_numbers = #tpu.dot_dimension_numbers<[1], [1], [0], [0], [0, 0, 1, 0], [], []>} : vector<64x8xf32>, vector<64x8xf32>, vector<64x64xf32> -> vector<64x64xf32>
    %cst_120 = arith.constant 0.353553385 : f32
    %394 = vector.broadcast %cst_120 : f32 to vector<64x64xf32>
    %395 = arith.mulf %393, %394 : vector<64x64xf32>
    %396 = arith.mulf %395, %392 : vector<64x64xf32>
    %cst_121 = arith.constant dense<0.000000e+00> : vector<64xf32>
    %397 = vector.multi_reduction <add>, %396, %cst_121 [1] : vector<64x64xf32> to vector<64xf32>
    %398 = vector.shape_cast %397 : vector<64xf32> to vector<64x1xf32>
    %399 = math.absf %398 : vector<64x1xf32>
    %cst_122 = arith.constant 0.000000e+00 : f32
    %400 = vector.broadcast %cst_122 : f32 to vector<64x1xf32>
    %401 = arith.subf %400, %389 : vector<64x1xf32>
    %402 = math.exp %401 : vector<64x1xf32>
    %403 = arith.maximumf %399, %402 : vector<64x1xf32>
    %cst_123 = arith.constant dense<0.000000e+00> : vector<64x16xf32>
    %404 = tpu.matmul %396, %378, %cst_123 {dimension_numbers = #tpu.dot_dimension_numbers<[1], [0], [0], [1], [0, 0, 1, 1], [], []>} : vector<64x64xf32>, vector<64x16xf32>, vector<64x16xf32> -> vector<64x16xf32>
    %cst_124 = arith.constant 9.99999997E-7 : f32
    %405 = vector.broadcast %cst_124 : f32 to vector<64x1xf32>
    %406 = arith.addf %403, %405 : vector<64x1xf32>
    %407 = vector.broadcast %406 : vector<64x1xf32> to vector<64x16xf32>
    %408 = arith.divf %404, %407 : vector<64x16xf32>
    %cst_125 = arith.constant dense<0.000000e+00> : vector<64xf32>
    %409 = vector.multi_reduction <add>, %408, %cst_125 [1] : vector<64x16xf32> to vector<64xf32>
    %410 = vector.shape_cast %409 : vector<64xf32> to vector<64x1xf32>
    %cst_126 = arith.constant 1.600000e+01 : f32
    %411 = vector.broadcast %cst_126 : f32 to vector<64x1xf32>
    %412 = arith.divf %410, %411 : vector<64x1xf32>
    %413 = vector.broadcast %412 : vector<64x1xf32> to vector<64x16xf32>
    %414 = arith.subf %408, %413 : vector<64x16xf32>
    %415 = arith.mulf %414, %414 : vector<64x16xf32>
    %cst_127 = arith.constant dense<0.000000e+00> : vector<64xf32>
    %416 = vector.multi_reduction <add>, %415, %cst_127 [1] : vector<64x16xf32> to vector<64xf32>
    %417 = vector.shape_cast %416 : vector<64xf32> to vector<64x1xf32>
    %cst_128 = arith.constant 1.600000e+01 : f32
    %418 = vector.broadcast %cst_128 : f32 to vector<64x1xf32>
    %419 = arith.divf %417, %418 : vector<64x1xf32>
    %cst_129 = arith.constant 9.99999997E-7 : f32
    %420 = vector.broadcast %cst_129 : f32 to vector<64x1xf32>
    %421 = arith.addf %419, %420 : vector<64x1xf32>
    %422 = math.rsqrt %421 : vector<64x1xf32>
    %423 = vector.broadcast %422 : vector<64x1xf32> to vector<64x16xf32>
    %424 = arith.mulf %414, %423 : vector<64x16xf32>
    %425 = vector.extract_strided_slice %49 {offsets = [1, 0], sizes = [1, 16], strides = [1, 1]} : vector<2x16xf32> to vector<1x16xf32>
    %426 = vector.broadcast %425 : vector<1x16xf32> to vector<64x16xf32>
    %427 = arith.mulf %424, %426 : vector<64x16xf32>
    %428 = arith.negf %379 : vector<64x16xf32>
    %429 = math.exp %428 : vector<64x16xf32>
    %cst_130 = arith.constant 1.000000e+00 : f32
    %430 = vector.broadcast %cst_130 : f32 to vector<64x16xf32>
    %431 = arith.addf %430, %429 : vector<64x16xf32>
    %432 = arith.divf %430, %431 : vector<64x16xf32>
    %433 = arith.mulf %432, %427 : vector<64x16xf32>
    %c16_131 = arith.constant 16 : index
    %c0_132 = arith.constant 0 : index
    %434 = vector.load %arg12[%c16_131, %c0_132] : memref<32x32xf32, #tpu.memory_space<vmem>>, vector<16x32xf32>
    %cst_133 = arith.constant dense<0.000000e+00> : vector<64x32xf32>
    %435 = tpu.matmul %433, %434, %cst_133 {dimension_numbers = #tpu.dot_dimension_numbers<[1], [0], [0], [1], [0, 0, 1, 1], [], []>} : vector<64x16xf32>, vector<16x32xf32>, vector<64x32xf32> -> vector<64x32xf32>
    %436 = arith.addf %375, %435 : vector<64x32xf32>
    %437 = vector.extract_strided_slice %24 {offsets = [192, 0], sizes = [64, 32], strides = [1, 1]} : vector<256x32xf32> to vector<64x32xf32>
    %438 = vector.extract_strided_slice %26 {offsets = [192, 0], sizes = [64, 64], strides = [1, 1]} : vector<256x64xf32> to vector<64x64xf32>
    %439 = vector.extract_strided_slice %36 {offsets = [0, 192], sizes = [8, 64], strides = [1, 1]} : vector<8x256xf32> to vector<8x64xf32>
    %440 = vector.extract_strided_slice %46 {offsets = [0, 192], sizes = [8, 64], strides = [1, 1]} : vector<8x256xf32> to vector<8x64xf32>
    %cst_134 = arith.constant dense<0.000000e+00> : vector<64x8xf32>
    %441 = tpu.matmul %47, %440, %cst_134 {dimension_numbers = #tpu.dot_dimension_numbers<[1], [1], [0], [0], [0, 0, 1, 0], [], []>} : vector<64x64xf32>, vector<8x64xf32>, vector<64x8xf32> -> vector<64x8xf32>
    %cst_135 = arith.constant dense<0.000000e+00> : vector<8x64xf32>
    %442 = tpu.matmul %440, %47, %cst_135 {dimension_numbers = #tpu.dot_dimension_numbers<[1], [1], [0], [0], [0, 0, 1, 0], [], []>} : vector<8x64xf32>, vector<64x64xf32>, vector<8x64xf32> -> vector<8x64xf32>
    %cst_136 = arith.constant 0.000000e+00 : f32
    %443 = vector.broadcast %cst_136 : f32 to vector<64x32xf32>
    %444 = vector.extract_strided_slice %437 {offsets = [0, 0], sizes = [64, 8], strides = [1, 1]} : vector<64x32xf32> to vector<64x8xf32>
    %445 = vector.extract_strided_slice %437 {offsets = [0, 16], sizes = [64, 8], strides = [1, 1]} : vector<64x32xf32> to vector<64x8xf32>
    %446 = vector.extract_strided_slice %438 {offsets = [0, 0], sizes = [64, 16], strides = [1, 1]} : vector<64x64xf32> to vector<64x16xf32>
    %447 = vector.extract_strided_slice %438 {offsets = [0, 32], sizes = [64, 16], strides = [1, 1]} : vector<64x64xf32> to vector<64x16xf32>
    %448 = vector.extract_strided_slice %439 {offsets = [0, 0], sizes = [1, 64], strides = [1, 1]} : vector<8x64xf32> to vector<1x64xf32>
    %449 = vector.extract_strided_slice %441 {offsets = [0, 2], sizes = [64, 1], strides = [1, 1]} : vector<64x8xf32> to vector<64x1xf32>
    %450 = vector.extract_strided_slice %442 {offsets = [2, 0], sizes = [1, 64], strides = [1, 1]} : vector<8x64xf32> to vector<1x64xf32>
    %451 = arith.subf %448, %450 : vector<1x64xf32>
    %452 = vector.broadcast %449 : vector<64x1xf32> to vector<64x64xf32>
    %453 = vector.broadcast %451 : vector<1x64xf32> to vector<64x64xf32>
    %454 = arith.addf %452, %453 : vector<64x64xf32>
    %455 = arith.addf %454, %48 : vector<64x64xf32>
    %cst_137 = arith.constant dense<0xFF800000> : vector<64xf32>
    %456 = vector.multi_reduction <maximumf>, %455, %cst_137 [1] : vector<64x64xf32> to vector<64xf32>
    %457 = vector.shape_cast %456 : vector<64xf32> to vector<64x1xf32>
    %458 = vector.broadcast %457 : vector<64x1xf32> to vector<64x64xf32>
    %459 = arith.subf %455, %458 : vector<64x64xf32>
    %460 = math.exp %459 : vector<64x64xf32>
    %cst_138 = arith.constant dense<0.000000e+00> : vector<64x64xf32>
    %461 = tpu.matmul %444, %445, %cst_138 {dimension_numbers = #tpu.dot_dimension_numbers<[1], [1], [0], [0], [0, 0, 1, 0], [], []>} : vector<64x8xf32>, vector<64x8xf32>, vector<64x64xf32> -> vector<64x64xf32>
    %cst_139 = arith.constant 0.353553385 : f32
    %462 = vector.broadcast %cst_139 : f32 to vector<64x64xf32>
    %463 = arith.mulf %461, %462 : vector<64x64xf32>
    %464 = arith.mulf %463, %460 : vector<64x64xf32>
    %cst_140 = arith.constant dense<0.000000e+00> : vector<64xf32>
    %465 = vector.multi_reduction <add>, %464, %cst_140 [1] : vector<64x64xf32> to vector<64xf32>
    %466 = vector.shape_cast %465 : vector<64xf32> to vector<64x1xf32>
    %467 = math.absf %466 : vector<64x1xf32>
    %cst_141 = arith.constant 0.000000e+00 : f32
    %468 = vector.broadcast %cst_141 : f32 to vector<64x1xf32>
    %469 = arith.subf %468, %457 : vector<64x1xf32>
    %470 = math.exp %469 : vector<64x1xf32>
    %471 = arith.maximumf %467, %470 : vector<64x1xf32>
    %cst_142 = arith.constant dense<0.000000e+00> : vector<64x16xf32>
    %472 = tpu.matmul %464, %446, %cst_142 {dimension_numbers = #tpu.dot_dimension_numbers<[1], [0], [0], [1], [0, 0, 1, 1], [], []>} : vector<64x64xf32>, vector<64x16xf32>, vector<64x16xf32> -> vector<64x16xf32>
    %cst_143 = arith.constant 9.99999997E-7 : f32
    %473 = vector.broadcast %cst_143 : f32 to vector<64x1xf32>
    %474 = arith.addf %471, %473 : vector<64x1xf32>
    %475 = vector.broadcast %474 : vector<64x1xf32> to vector<64x16xf32>
    %476 = arith.divf %472, %475 : vector<64x16xf32>
    %cst_144 = arith.constant dense<0.000000e+00> : vector<64xf32>
    %477 = vector.multi_reduction <add>, %476, %cst_144 [1] : vector<64x16xf32> to vector<64xf32>
    %478 = vector.shape_cast %477 : vector<64xf32> to vector<64x1xf32>
    %cst_145 = arith.constant 1.600000e+01 : f32
    %479 = vector.broadcast %cst_145 : f32 to vector<64x1xf32>
    %480 = arith.divf %478, %479 : vector<64x1xf32>
    %481 = vector.broadcast %480 : vector<64x1xf32> to vector<64x16xf32>
    %482 = arith.subf %476, %481 : vector<64x16xf32>
    %483 = arith.mulf %482, %482 : vector<64x16xf32>
    %cst_146 = arith.constant dense<0.000000e+00> : vector<64xf32>
    %484 = vector.multi_reduction <add>, %483, %cst_146 [1] : vector<64x16xf32> to vector<64xf32>
    %485 = vector.shape_cast %484 : vector<64xf32> to vector<64x1xf32>
    %cst_147 = arith.constant 1.600000e+01 : f32
    %486 = vector.broadcast %cst_147 : f32 to vector<64x1xf32>
    %487 = arith.divf %485, %486 : vector<64x1xf32>
    %cst_148 = arith.constant 9.99999997E-7 : f32
    %488 = vector.broadcast %cst_148 : f32 to vector<64x1xf32>
    %489 = arith.addf %487, %488 : vector<64x1xf32>
    %490 = math.rsqrt %489 : vector<64x1xf32>
    %491 = vector.broadcast %490 : vector<64x1xf32> to vector<64x16xf32>
    %492 = arith.mulf %482, %491 : vector<64x16xf32>
    %493 = vector.extract_strided_slice %49 {offsets = [0, 0], sizes = [1, 16], strides = [1, 1]} : vector<2x16xf32> to vector<1x16xf32>
    %494 = vector.broadcast %493 : vector<1x16xf32> to vector<64x16xf32>
    %495 = arith.mulf %492, %494 : vector<64x16xf32>
    %496 = arith.negf %447 : vector<64x16xf32>
    %497 = math.exp %496 : vector<64x16xf32>
    %cst_149 = arith.constant 1.000000e+00 : f32
    %498 = vector.broadcast %cst_149 : f32 to vector<64x16xf32>
    %499 = arith.addf %498, %497 : vector<64x16xf32>
    %500 = arith.divf %498, %499 : vector<64x16xf32>
    %501 = arith.mulf %500, %495 : vector<64x16xf32>
    %c0_150 = arith.constant 0 : index
    %c0_151 = arith.constant 0 : index
    %502 = vector.load %arg12[%c0_150, %c0_151] : memref<32x32xf32, #tpu.memory_space<vmem>>, vector<16x32xf32>
    %cst_152 = arith.constant dense<0.000000e+00> : vector<64x32xf32>
    %503 = tpu.matmul %501, %502, %cst_152 {dimension_numbers = #tpu.dot_dimension_numbers<[1], [0], [0], [1], [0, 0, 1, 1], [], []>} : vector<64x16xf32>, vector<16x32xf32>, vector<64x32xf32> -> vector<64x32xf32>
    %504 = arith.addf %443, %503 : vector<64x32xf32>
    %505 = vector.extract_strided_slice %437 {offsets = [0, 8], sizes = [64, 8], strides = [1, 1]} : vector<64x32xf32> to vector<64x8xf32>
    %506 = vector.extract_strided_slice %437 {offsets = [0, 24], sizes = [64, 8], strides = [1, 1]} : vector<64x32xf32> to vector<64x8xf32>
    %507 = vector.extract_strided_slice %438 {offsets = [0, 16], sizes = [64, 16], strides = [1, 1]} : vector<64x64xf32> to vector<64x16xf32>
    %508 = vector.extract_strided_slice %438 {offsets = [0, 48], sizes = [64, 16], strides = [1, 1]} : vector<64x64xf32> to vector<64x16xf32>
    %509 = vector.extract_strided_slice %439 {offsets = [1, 0], sizes = [1, 64], strides = [1, 1]} : vector<8x64xf32> to vector<1x64xf32>
    %510 = vector.extract_strided_slice %441 {offsets = [0, 3], sizes = [64, 1], strides = [1, 1]} : vector<64x8xf32> to vector<64x1xf32>
    %511 = vector.extract_strided_slice %442 {offsets = [3, 0], sizes = [1, 64], strides = [1, 1]} : vector<8x64xf32> to vector<1x64xf32>
    %512 = arith.subf %509, %511 : vector<1x64xf32>
    %513 = vector.broadcast %510 : vector<64x1xf32> to vector<64x64xf32>
    %514 = vector.broadcast %512 : vector<1x64xf32> to vector<64x64xf32>
    %515 = arith.addf %513, %514 : vector<64x64xf32>
    %516 = arith.addf %515, %48 : vector<64x64xf32>
    %cst_153 = arith.constant dense<0xFF800000> : vector<64xf32>
    %517 = vector.multi_reduction <maximumf>, %516, %cst_153 [1] : vector<64x64xf32> to vector<64xf32>
    %518 = vector.shape_cast %517 : vector<64xf32> to vector<64x1xf32>
    %519 = vector.broadcast %518 : vector<64x1xf32> to vector<64x64xf32>
    %520 = arith.subf %516, %519 : vector<64x64xf32>
    %521 = math.exp %520 : vector<64x64xf32>
    %cst_154 = arith.constant dense<0.000000e+00> : vector<64x64xf32>
    %522 = tpu.matmul %505, %506, %cst_154 {dimension_numbers = #tpu.dot_dimension_numbers<[1], [1], [0], [0], [0, 0, 1, 0], [], []>} : vector<64x8xf32>, vector<64x8xf32>, vector<64x64xf32> -> vector<64x64xf32>
    %cst_155 = arith.constant 0.353553385 : f32
    %523 = vector.broadcast %cst_155 : f32 to vector<64x64xf32>
    %524 = arith.mulf %522, %523 : vector<64x64xf32>
    %525 = arith.mulf %524, %521 : vector<64x64xf32>
    %cst_156 = arith.constant dense<0.000000e+00> : vector<64xf32>
    %526 = vector.multi_reduction <add>, %525, %cst_156 [1] : vector<64x64xf32> to vector<64xf32>
    %527 = vector.shape_cast %526 : vector<64xf32> to vector<64x1xf32>
    %528 = math.absf %527 : vector<64x1xf32>
    %cst_157 = arith.constant 0.000000e+00 : f32
    %529 = vector.broadcast %cst_157 : f32 to vector<64x1xf32>
    %530 = arith.subf %529, %518 : vector<64x1xf32>
    %531 = math.exp %530 : vector<64x1xf32>
    %532 = arith.maximumf %528, %531 : vector<64x1xf32>
    %cst_158 = arith.constant dense<0.000000e+00> : vector<64x16xf32>
    %533 = tpu.matmul %525, %507, %cst_158 {dimension_numbers = #tpu.dot_dimension_numbers<[1], [0], [0], [1], [0, 0, 1, 1], [], []>} : vector<64x64xf32>, vector<64x16xf32>, vector<64x16xf32> -> vector<64x16xf32>
    %cst_159 = arith.constant 9.99999997E-7 : f32
    %534 = vector.broadcast %cst_159 : f32 to vector<64x1xf32>
    %535 = arith.addf %532, %534 : vector<64x1xf32>
    %536 = vector.broadcast %535 : vector<64x1xf32> to vector<64x16xf32>
    %537 = arith.divf %533, %536 : vector<64x16xf32>
    %cst_160 = arith.constant dense<0.000000e+00> : vector<64xf32>
    %538 = vector.multi_reduction <add>, %537, %cst_160 [1] : vector<64x16xf32> to vector<64xf32>
    %539 = vector.shape_cast %538 : vector<64xf32> to vector<64x1xf32>
    %cst_161 = arith.constant 1.600000e+01 : f32
    %540 = vector.broadcast %cst_161 : f32 to vector<64x1xf32>
    %541 = arith.divf %539, %540 : vector<64x1xf32>
    %542 = vector.broadcast %541 : vector<64x1xf32> to vector<64x16xf32>
    %543 = arith.subf %537, %542 : vector<64x16xf32>
    %544 = arith.mulf %543, %543 : vector<64x16xf32>
    %cst_162 = arith.constant dense<0.000000e+00> : vector<64xf32>
    %545 = vector.multi_reduction <add>, %544, %cst_162 [1] : vector<64x16xf32> to vector<64xf32>
    %546 = vector.shape_cast %545 : vector<64xf32> to vector<64x1xf32>
    %cst_163 = arith.constant 1.600000e+01 : f32
    %547 = vector.broadcast %cst_163 : f32 to vector<64x1xf32>
    %548 = arith.divf %546, %547 : vector<64x1xf32>
    %cst_164 = arith.constant 9.99999997E-7 : f32
    %549 = vector.broadcast %cst_164 : f32 to vector<64x1xf32>
    %550 = arith.addf %548, %549 : vector<64x1xf32>
    %551 = math.rsqrt %550 : vector<64x1xf32>
    %552 = vector.broadcast %551 : vector<64x1xf32> to vector<64x16xf32>
    %553 = arith.mulf %543, %552 : vector<64x16xf32>
    %554 = vector.extract_strided_slice %49 {offsets = [1, 0], sizes = [1, 16], strides = [1, 1]} : vector<2x16xf32> to vector<1x16xf32>
    %555 = vector.broadcast %554 : vector<1x16xf32> to vector<64x16xf32>
    %556 = arith.mulf %553, %555 : vector<64x16xf32>
    %557 = arith.negf %508 : vector<64x16xf32>
    %558 = math.exp %557 : vector<64x16xf32>
    %cst_165 = arith.constant 1.000000e+00 : f32
    %559 = vector.broadcast %cst_165 : f32 to vector<64x16xf32>
    %560 = arith.addf %559, %558 : vector<64x16xf32>
    %561 = arith.divf %559, %560 : vector<64x16xf32>
    %562 = arith.mulf %561, %556 : vector<64x16xf32>
    %c16_166 = arith.constant 16 : index
    %c0_167 = arith.constant 0 : index
    %563 = vector.load %arg12[%c16_166, %c0_167] : memref<32x32xf32, #tpu.memory_space<vmem>>, vector<16x32xf32>
    %cst_168 = arith.constant dense<0.000000e+00> : vector<64x32xf32>
    %564 = tpu.matmul %562, %563, %cst_168 {dimension_numbers = #tpu.dot_dimension_numbers<[1], [0], [0], [1], [0, 0, 1, 1], [], []>} : vector<64x16xf32>, vector<16x32xf32>, vector<64x32xf32> -> vector<64x32xf32>
    %565 = arith.addf %504, %564 : vector<64x32xf32>
    %566 = tpu.concatenate %178, %307, %436, %565 in 1 : vector<64x32xf32>, vector<64x32xf32>, vector<64x32xf32>, vector<64x32xf32> -> vector<64x128xf32>
    %c0_169 = arith.constant 0 : index
    %c0_170 = arith.constant 0 : index
    %c0_171 = arith.constant 0 : index
    %567 = vector.load %arg13[%c0_169, %c0_170, %c0_171] : memref<1x64x128xf32, #tpu.memory_space<vmem>>, vector<1x64x128xf32>
    %568 = vector.shape_cast %567 : vector<1x64x128xf32> to vector<64x128xf32>
    %569 = vector.shape_cast %566 : vector<64x128xf32> to vector<1x64x128xf32>
    tpu.vector_store %arg13[%c0_169, %c0_170, %c0_171], %569 {strides = array<i32>} : memref<1x64x128xf32, #tpu.memory_space<vmem>>, vector<1x64x128xf32>,
    return
  }
  func.func @transform_0(%arg0: i32) -> (i32, i32) {
    %c0_i32 = arith.constant 0 : i32
    %c0_i32_0 = arith.constant 0 : i32
    return %arg0, %c0_i32 : i32, i32
  }
  func.func @transform_1(%arg0: i32) -> (i32, i32) {
    %c0_i32 = arith.constant 0 : i32
    %c0_i32_0 = arith.constant 0 : i32
    %c0_i32_1 = arith.constant 0 : i32
    return %c0_i32, %c0_i32_0 : i32, i32
  }
  func.func @transform_2(%arg0: i32) -> (i32, i32) {
    %c0_i32 = arith.constant 0 : i32
    %c0_i32_0 = arith.constant 0 : i32
    %c0_i32_1 = arith.constant 0 : i32
    return %c0_i32, %c0_i32_0 : i32, i32
  }
  func.func @transform_3(%arg0: i32) -> (i32, i32) {
    %c0_i32 = arith.constant 0 : i32
    %c0_i32_0 = arith.constant 0 : i32
    %c0_i32_1 = arith.constant 0 : i32
    return %c0_i32, %c0_i32_0 : i32, i32
  }
  func.func @transform_4(%arg0: i32) -> (i32, i32) {
    %c0_i32 = arith.constant 0 : i32
    %c0_i32_0 = arith.constant 0 : i32
    %c0_i32_1 = arith.constant 0 : i32
    return %c0_i32, %c0_i32_0 : i32, i32
  }
  func.func @transform_5(%arg0: i32) -> (i32, i32) {
    %c0_i32 = arith.constant 0 : i32
    %c0_i32_0 = arith.constant 0 : i32
    %c0_i32_1 = arith.constant 0 : i32
    return %c0_i32, %c0_i32_0 : i32, i32
  }
  func.func @transform_6(%arg0: i32) -> (i32, i32) {
    %c0_i32 = arith.constant 0 : i32
    %c0_i32_0 = arith.constant 0 : i32
    %c0_i32_1 = arith.constant 0 : i32
    return %c0_i32, %c0_i32_0 : i32, i32
  }
  func.func @transform_7(%arg0: i32) -> (i32, i32) {
    %c0_i32 = arith.constant 0 : i32
    %c0_i32_0 = arith.constant 0 : i32
    %c0_i32_1 = arith.constant 0 : i32
    return %c0_i32, %c0_i32_0 : i32, i32
  }
  func.func @transform_8(%arg0: i32) -> (i32, i32) {
    %c0_i32 = arith.constant 0 : i32
    %c0_i32_0 = arith.constant 0 : i32
    %c0_i32_1 = arith.constant 0 : i32
    return %c0_i32, %c0_i32_0 : i32, i32
  }
  func.func @transform_9(%arg0: i32) -> (i32, i32) {
    %c0_i32 = arith.constant 0 : i32
    %c0_i32_0 = arith.constant 0 : i32
    %c0_i32_1 = arith.constant 0 : i32
    return %c0_i32, %c0_i32_0 : i32, i32
  }
  func.func @transform_10(%arg0: i32) -> (i32, i32) {
    %c0_i32 = arith.constant 0 : i32
    %c0_i32_0 = arith.constant 0 : i32
    %c0_i32_1 = arith.constant 0 : i32
    return %c0_i32, %c0_i32_0 : i32, i32
  }
  func.func @transform_11(%arg0: i32) -> (i32, i32) {
    %c0_i32 = arith.constant 0 : i32
    %c0_i32_0 = arith.constant 0 : i32
    %c0_i32_1 = arith.constant 0 : i32
    return %c0_i32, %c0_i32_0 : i32, i32
  }
  func.func @transform_12(%arg0: i32) -> (i32, i32, i32) {
    %c0_i32 = arith.constant 0 : i32
    %c0_i32_0 = arith.constant 0 : i32
    %c0_i32_1 = arith.constant 0 : i32
    return %arg0, %c0_i32, %c0_i32_0 : i32, i32, i32
  }
}

</mosaic_0001>

<llo_original>
// kernel: mlstm_layer_vision_forward.1
$region0: #{mlstm_layer_vision_forward.1}
  #allocation0 [shape = 'u32[]', space=smem, size = 0x4, offset = 0x4, fixed_abs, tag = 'smem constant byte address 0x4 - core index']
  #allocation1 [shape = 'u32[144,128]{1,0:T(1,128)}', space=vmem, size = 0x12000, scoped, tag = 'internal scratch']
  %s0 = inlined_call_operand.vmem [shape: f32[512,32], index: 0, kind: input, shape index: {}]
  %s1 = inlined_call_operand.vmem [shape: f32[256,288], index: 1, kind: input, shape index: {}]
  %s2 = inlined_call_operand.vmem [shape: f32[64,64], index: 2, kind: input, shape index: {}]
  %s3 = inlined_call_operand.vmem [shape: f32[64,64], index: 3, kind: input, shape index: {}]
  %s4 = inlined_call_operand.vmem [shape: f32[288,32], index: 4, kind: input, shape index: {}]
  %s5 = inlined_call_operand.vmem [shape: f32[1,32], index: 5, kind: input, shape index: {}]
  %s6 = inlined_call_operand.vmem [shape: f32[32,32], index: 6, kind: input, shape index: {}]
  %s7 = inlined_call_operand.vmem [shape: f32[32,64], index: 7, kind: input, shape index: {}]
  %s8 = inlined_call_operand.vmem [shape: f32[8,32], index: 8, kind: input, shape index: {}]
  %s9 = inlined_call_operand.vmem [shape: f32[8,1], index: 9, kind: input, shape index: {}]
  %s10 = inlined_call_operand.vmem [shape: f32[2,16], index: 10, kind: input, shape index: {}]
  %s11 = inlined_call_operand.vmem [shape: f32[32,32], index: 11, kind: input, shape index: {}]
  %s12 = inlined_call_operand.vmem [shape: f32[2,64,128], index: 12, kind: output, shape index: {}]
  %s13 = sld [smem:[#allocation0]]
  $region81: #{mlstm_layer_vision_forward.1} parent=0
    _
  %s15 = ssub.s32 1, %s13
  %s16 = scalar_select 0, %s15, %s13
  loop: start=0, step=1, limit=4
  $region2: #{mlstm_layer_vision_forward.1} parent=0 // loop_pre_header
    _
  $region3: #{mlstm_layer_vision_forward.1} parent=0 // loop_header
    %s18 = sphi 0, %s22
    %p19 = scmp.ge.s32.totalorder %s18, 4
    %s28 = sphi 0, %s30
    %s31 = sphi 0, %s28
    %s32 = sphi 0, %s31
    %s48 = sphi 0, %s32
    %s52 = sphi 0, %s52
    %s54 = sphi 0, %s52
    %s55 = sphi 0, %s54
    %s69 = sphi 0, %s55
    %s73 = sphi 0, %s73
    %s75 = sphi 0, %s73
    %s76 = sphi 0, %s75
    %s90 = sphi 0, %s76
    %s94 = sphi 0, %s94
    %s96 = sphi 0, %s94
    %s97 = sphi 0, %s96
    %s111 = sphi 0, %s97
    %s115 = sphi 0, %s115
    %s117 = sphi 0, %s115
    %s118 = sphi 0, %s117
    %s132 = sphi 0, %s118
    %s136 = sphi 0, %s136
    %s138 = sphi 0, %s136
    %s139 = sphi 0, %s138
    %s153 = sphi 0, %s139
    %s157 = sphi 0, %s157
    %s159 = sphi 0, %s157
    %s160 = sphi 0, %s159
    %s174 = sphi 0, %s160
    %s178 = sphi 0, %s178
    %s180 = sphi 0, %s178
    %s181 = sphi 0, %s180
    %s195 = sphi 0, %s181
    %s199 = sphi 0, %s199
    %s201 = sphi 0, %s199
    %s202 = sphi 0, %s201
    %s216 = sphi 0, %s202
    %s220 = sphi 0, %s220
    %s222 = sphi 0, %s220
    %s223 = sphi 0, %s222
    %s237 = sphi 0, %s223
    %s241 = sphi 0, %s241
    %s243 = sphi 0, %s241
    %s244 = sphi 0, %s243
    %s258 = sphi 0, %s244
    %s262 = sphi 0, %s262
    %s264 = sphi 0, %s262
    %s265 = sphi 0, %s264
    %s279 = sphi 0, %s265
    %s285 = sphi 0, %s287
    %s288 = sphi 0, %s285
    %s289 = sphi 0, %s288
    %s305 = sphi 0, %s289
  $region4: #{mlstm_layer_vision_forward.1} parent=0 // loop_header_branch
    %21 = sbr.rel (%p19) target = $region8
  $region5: #{mlstm_layer_vision_forward.1} parent=0 // loop_body
    %s23 = ssub.s32 %s18, 1
    %s24 = ssub.s32 %s18, 2
    %s25 = sadd.s32 %s18, 1
    %s26 = ssub.s32 %s18, %s25
    %p27 = scmp.eq.s32.totalorder %s26, 0
    %s29 = sadd.s32 %s28, 1
    %s30 = scalar_select %p27, %s28, %s29
    %p33 = pneg %p27
    %p34 = scmp.eq.s32.totalorder %s18, 1
    %p35 = por %p33, %p34
    %p36 = scmp.ne.s32.totalorder %s28, %s31
    %p37 = scmp.eq.s32.totalorder %s18, 0
    %p38 = por %p36, %p37
    %p39 = scmp.ne.s32.totalorder %s28, %s31
    %p40 = scmp.eq.s32.totalorder %s23, 1
    %p41 = por %p39, %p40
    %p42 = scmp.ne.s32.totalorder %s31, %s32
    %p43 = scmp.eq.s32.totalorder %s23, 0
    %p44 = por %p42, %p43
    %p45 = scmp.ne.s32.totalorder %s31, %s32
    %p46 = scmp.eq.s32.totalorder %s24, 1
    %p47 = por %p45, %p46
    %p49 = scmp.ne.s32.totalorder %s32, %s48
    %p50 = scmp.eq.s32.totalorder %s24, 0
    %p51 = por %p49, %p50
    %s53 = sadd.s32 %s52, 1
    %p56 = scmp.eq.s32.totalorder %s18, 1
    %p57 = scmp.ne.s32.totalorder %s52, %s54
    %p58 = scmp.eq.s32.totalorder %s18, 0
    %p59 = por %p57, %p58
    %p60 = scmp.ne.s32.totalorder %s52, %s54
    %p61 = scmp.eq.s32.totalorder %s23, 1
    %p62 = por %p60, %p61
    %p63 = scmp.ne.s32.totalorder %s54, %s55
    %p64 = scmp.eq.s32.totalorder %s23, 0
    %p65 = por %p63, %p64
    %p66 = scmp.ne.s32.totalorder %s54, %s55
    %p67 = scmp.eq.s32.totalorder %s24, 1
    %p68 = por %p66, %p67
    %p70 = scmp.ne.s32.totalorder %s55, %s69
    %p71 = scmp.eq.s32.totalorder %s24, 0
    %p72 = por %p70, %p71
    %s74 = sadd.s32 %s73, 1
    %p77 = scmp.eq.s32.totalorder %s18, 1
    %p78 = scmp.ne.s32.totalorder %s73, %s75
    %p79 = scmp.eq.s32.totalorder %s18, 0
    %p80 = por %p78, %p79
    %p81 = scmp.ne.s32.totalorder %s73, %s75
    %p82 = scmp.eq.s32.totalorder %s23, 1
    %p83 = por %p81, %p82
    %p84 = scmp.ne.s32.totalorder %s75, %s76
    %p85 = scmp.eq.s32.totalorder %s23, 0
    %p86 = por %p84, %p85
    %p87 = scmp.ne.s32.totalorder %s75, %s76
    %p88 = scmp.eq.s32.totalorder %s24, 1
    %p89 = por %p87, %p88
    %p91 = scmp.ne.s32.totalorder %s76, %s90
    %p92 = scmp.eq.s32.totalorder %s24, 0
    %p93 = por %p91, %p92
    %s95 = sadd.s32 %s94, 1
    %p98 = scmp.eq.s32.totalorder %s18, 1
    %p99 = scmp.ne.s32.totalorder %s94, %s96
    %p100 = scmp.eq.s32.totalorder %s18, 0
    %p101 = por %p99, %p100
    %p102 = scmp.ne.s32.totalorder %s94, %s96
    %p103 = scmp.eq.s32.totalorder %s23, 1
    %p104 = por %p102, %p103
    %p105 = scmp.ne.s32.totalorder %s96, %s97
    %p106 = scmp.eq.s32.totalorder %s23, 0
    %p107 = por %p105, %p106
    %p108 = scmp.ne.s32.totalorder %s96, %s97
    %p109 = scmp.eq.s32.totalorder %s24, 1
    %p110 = por %p108, %p109
    %p112 = scmp.ne.s32.totalorder %s97, %s111
    %p113 = scmp.eq.s32.totalorder %s24, 0
    %p114 = por %p112, %p113
    %s116 = sadd.s32 %s115, 1
    %p119 = scmp.eq.s32.totalorder %s18, 1
    %p120 = scmp.ne.s32.totalorder %s115, %s117
    %p121 = scmp.eq.s32.totalorder %s18, 0
    %p122 = por %p120, %p121
    %p123 = scmp.ne.s32.totalorder %s115, %s117
    %p124 = scmp.eq.s32.totalorder %s23, 1
    %p125 = por %p123, %p124
    %p126 = scmp.ne.s32.totalorder %s117, %s118
    %p127 = scmp.eq.s32.totalorder %s23, 0
    %p128 = por %p126, %p127
    %p129 = scmp.ne.s32.totalorder %s117, %s118
    %p130 = scmp.eq.s32.totalorder %s24, 1
    %p131 = por %p129, %p130
    %p133 = scmp.ne.s32.totalorder %s118, %s132
    %p134 = scmp.eq.s32.totalorder %s24, 0
    %p135 = por %p133, %p134
    %s137 = sadd.s32 %s136, 1
    %p140 = scmp.eq.s32.totalorder %s18, 1
    %p141 = scmp.ne.s32.totalorder %s136, %s138
    %p142 = scmp.eq.s32.totalorder %s18, 0
    %p143 = por %p141, %p142
    %p144 = scmp.ne.s32.totalorder %s136, %s138
    %p145 = scmp.eq.s32.totalorder %s23, 1
    %p146 = por %p144, %p145
    %p147 = scmp.ne.s32.totalorder %s138, %s139
    %p148 = scmp.eq.s32.totalorder %s23, 0
    %p149 = por %p147, %p148
    %p150 = scmp.ne.s32.totalorder %s138, %s139
    %p151 = scmp.eq.s32.totalorder %s24, 1
    %p152 = por %p150, %p151
    %p154 = scmp.ne.s32.totalorder %s139, %s153
    %p155 = scmp.eq.s32.totalorder %s24, 0
    %p156 = por %p154, %p155
    %s158 = sadd.s32 %s157, 1
    %p161 = scmp.eq.s32.totalorder %s18, 1
    %p162 = scmp.ne.s32.totalorder %s157, %s159
    %p163 = scmp.eq.s32.totalorder %s18, 0
    %p164 = por %p162, %p163
    %p165 = scmp.ne.s32.totalorder %s157, %s159
    %p166 = scmp.eq.s32.totalorder %s23, 1
    %p167 = por %p165, %p166
    %p168 = scmp.ne.s32.totalorder %s159, %s160
    %p169 = scmp.eq.s32.totalorder %s23, 0
    %p170 = por %p168, %p169
    %p171 = scmp.ne.s32.totalorder %s159, %s160
    %p172 = scmp.eq.s32.totalorder %s24, 1
    %p173 = por %p171, %p172
    %p175 = scmp.ne.s32.totalorder %s160, %s174
    %p176 = scmp.eq.s32.totalorder %s24, 0
    %p177 = por %p175, %p176
    %s179 = sadd.s32 %s178, 1
    %p182 = scmp.eq.s32.totalorder %s18, 1
    %p183 = scmp.ne.s32.totalorder %s178, %s180
    %p184 = scmp.eq.s32.totalorder %s18, 0
    %p185 = por %p183, %p184
    %p186 = scmp.ne.s32.totalorder %s178, %s180
    %p187 = scmp.eq.s32.totalorder %s23, 1
    %p188 = por %p186, %p187
    %p189 = scmp.ne.s32.totalorder %s180, %s181
    %p190 = scmp.eq.s32.totalorder %s23, 0
    %p191 = por %p189, %p190
    %p192 = scmp.ne.s32.totalorder %s180, %s181
    %p193 = scmp.eq.s32.totalorder %s24, 1
    %p194 = por %p192, %p193
    %p196 = scmp.ne.s32.totalorder %s181, %s195
    %p197 = scmp.eq.s32.totalorder %s24, 0
    %p198 = por %p196, %p197
    %s200 = sadd.s32 %s199, 1
    %p203 = scmp.eq.s32.totalorder %s18, 1
    %p204 = scmp.ne.s32.totalorder %s199, %s201
    %p205 = scmp.eq.s32.totalorder %s18, 0
    %p206 = por %p204, %p205
    %p207 = scmp.ne.s32.totalorder %s199, %s201
    %p208 = scmp.eq.s32.totalorder %s23, 1
    %p209 = por %p207, %p208
    %p210 = scmp.ne.s32.totalorder %s201, %s202
    %p211 = scmp.eq.s32.totalorder %s23, 0
    %p212 = por %p210, %p211
    %p213 = scmp.ne.s32.totalorder %s201, %s202
    %p214 = scmp.eq.s32.totalorder %s24, 1
    %p215 = por %p213, %p214
    %p217 = scmp.ne.s32.totalorder %s202, %s216
    %p218 = scmp.eq.s32.totalorder %s24, 0
    %p219 = por %p217, %p218
    %s221 = sadd.s32 %s220, 1
    %p224 = scmp.eq.s32.totalorder %s18, 1
    %p225 = scmp.ne.s32.totalorder %s220, %s222
    %p226 = scmp.eq.s32.totalorder %s18, 0
    %p227 = por %p225, %p226
    %p228 = scmp.ne.s32.totalorder %s220, %s222
    %p229 = scmp.eq.s32.totalorder %s23, 1
    %p230 = por %p228, %p229
    %p231 = scmp.ne.s32.totalorder %s222, %s223
    %p232 = scmp.eq.s32.totalorder %s23, 0
    %p233 = por %p231, %p232
    %p234 = scmp.ne.s32.totalorder %s222, %s223
    %p235 = scmp.eq.s32.totalorder %s24, 1
    %p236 = por %p234, %p235
    %p238 = scmp.ne.s32.totalorder %s223, %s237
    %p239 = scmp.eq.s32.totalorder %s24, 0
    %p240 = por %p238, %p239
    %s242 = sadd.s32 %s241, 1
    %p245 = scmp.eq.s32.totalorder %s18, 1
    %p246 = scmp.ne.s32.totalorder %s241, %s243
    %p247 = scmp.eq.s32.totalorder %s18, 0
    %p248 = por %p246, %p247
    %p249 = scmp.ne.s32.totalorder %s241, %s243
    %p250 = scmp.eq.s32.totalorder %s23, 1
    %p251 = por %p249, %p250
    %p252 = scmp.ne.s32.totalorder %s243, %s244
    %p253 = scmp.eq.s32.totalorder %s23, 0
    %p254 = por %p252, %p253
    %p255 = scmp.ne.s32.totalorder %s243, %s244
    %p256 = scmp.eq.s32.totalorder %s24, 1
    %p257 = por %p255, %p256
    %p259 = scmp.ne.s32.totalorder %s244, %s258
    %p260 = scmp.eq.s32.totalorder %s24, 0
    %p261 = por %p259, %p260
    %s263 = sadd.s32 %s262, 1
    %p266 = scmp.eq.s32.totalorder %s18, 1
    %p267 = scmp.ne.s32.totalorder %s262, %s264
    %p268 = scmp.eq.s32.totalorder %s18, 0
    %p269 = por %p267, %p268
    %p270 = scmp.ne.s32.totalorder %s262, %s264
    %p271 = scmp.eq.s32.totalorder %s23, 1
    %p272 = por %p270, %p271
    %p273 = scmp.ne.s32.totalorder %s264, %s265
    %p274 = scmp.eq.s32.totalorder %s23, 0
    %p275 = por %p273, %p274
    %p276 = scmp.ne.s32.totalorder %s264, %s265
    %p277 = scmp.eq.s32.totalorder %s24, 1
    %p278 = por %p276, %p277
    %p280 = scmp.ne.s32.totalorder %s265, %s279
    %p281 = scmp.eq.s32.totalorder %s24, 0
    %p282 = por %p280, %p281
    %s283 = ssub.s32 %s18, %s25
    %p284 = scmp.eq.s32.totalorder %s283, 0
    %s286 = sadd.s32 %s285, 1
    %s287 = scalar_select %p284, %s285, %s286
    %p290 = pneg %p284
    %p291 = scmp.eq.s32.totalorder %s18, 1
    %p292 = por %p290, %p291
    %p293 = scmp.ne.s32.totalorder %s285, %s288
    %p294 = scmp.eq.s32.totalorder %s18, 0
    %p295 = por %p293, %p294
    %p296 = scmp.ne.s32.totalorder %s285, %s288
    %p297 = scmp.eq.s32.totalorder %s23, 1
    %p298 = por %p296, %p297
    %p299 = scmp.ne.s32.totalorder %s288, %s289
    %p300 = scmp.eq.s32.totalorder %s23, 0
    %p301 = por %p299, %p300
    %p302 = scmp.ne.s32.totalorder %s288, %s289
    %p303 = scmp.eq.s32.totalorder %s24, 1
    %p304 = por %p302, %p303
    %p306 = scmp.ne.s32.totalorder %s289, %s305
    %p307 = scmp.eq.s32.totalorder %s24, 0
    %p308 = por %p306, %p307
    %p309 = scmp.le.s32.totalorder 1, %s18
    %p310 = scmp.lt.s32.totalorder %s18, 3
    %p311 = pnand %p309, %p310
    %p312 = pneg %p311
    // Predicated region
    $region9: #{mlstm_layer_vision_forward.1} parent=5 // pred_check
      _
    $region10: #{mlstm_layer_vision_forward.1} parent=5 // pred_check_branch
      %314 = sbr.rel (%p311) target = $region12
    $region11: #{mlstm_layer_vision_forward.1} parent=5 // pred_region
      %s315 = ssub.s32 %s18, 1
      // Predicated region
      $region13: #{mlstm_layer_vision_forward.1} parent=11 // pred_check
        %p316 = pneg %p65
      $region14: #{mlstm_layer_vision_forward.1} parent=11 // pred_check_branch
        %318 = sbr.rel (%p316) target = $region16
      $region15: #{mlstm_layer_vision_forward.1} parent=11 // pred_region
        _
      $region16: #{mlstm_layer_vision_forward.1} parent=11 // pred_fallthru
        _
      // Predicated region
      $region17: #{mlstm_layer_vision_forward.1} parent=11 // pred_check
        %p319 = pneg %p86
      $region18: #{mlstm_layer_vision_forward.1} parent=11 // pred_check_branch
        %321 = sbr.rel (%p319) target = $region20
      $region19: #{mlstm_layer_vision_forward.1} parent=11 // pred_region
        _
      $region20: #{mlstm_layer_vision_forward.1} parent=11 // pred_fallthru
        _
      // Predicated region
      $region21: #{mlstm_layer_vision_forward.1} parent=11 // pred_check
        %p322 = pneg %p107
      $region22: #{mlstm_layer_vision_forward.1} parent=11 // pred_check_branch
        %324 = sbr.rel (%p322) target = $region24
      $region23: #{mlstm_layer_vision_forward.1} parent=11 // pred_region
        _
      $region24: #{mlstm_layer_vision_forward.1} parent=11 // pred_fallthru
        _
      // Predicated region
      $region25: #{mlstm_layer_vision_forward.1} parent=11 // pred_check
        %p325 = pneg %p128
      $region26: #{mlstm_layer_vision_forward.1} parent=11 // pred_check_branch
        %327 = sbr.rel (%p325) target = $region28
      $region27: #{mlstm_layer_vision_forward.1} parent=11 // pred_region
        _
      $region28: #{mlstm_layer_vision_forward.1} parent=11 // pred_fallthru
        _
      // Predicated region
      $region29: #{mlstm_layer_vision_forward.1} parent=11 // pred_check
        %p328 = pneg %p149
      $region30: #{mlstm_layer_vision_forward.1} parent=11 // pred_check_branch
        %330 = sbr.rel (%p328) target = $region32
      $region31: #{mlstm_layer_vision_forward.1} parent=11 // pred_region
        _
      $region32: #{mlstm_layer_vision_forward.1} parent=11 // pred_fallthru
        _
      // Predicated region
      $region33: #{mlstm_layer_vision_forward.1} parent=11 // pred_check
        %p331 = pneg %p170
      $region34: #{mlstm_layer_vision_forward.1} parent=11 // pred_check_branch
        %333 = sbr.rel (%p331) target = $region36
      $region35: #{mlstm_layer_vision_forward.1} parent=11 // pred_region
        _
      $region36: #{mlstm_layer_vision_forward.1} parent=11 // pred_fallthru
        _
      // Predicated region
      $region37: #{mlstm_layer_vision_forward.1} parent=11 // pred_check
        %p334 = pneg %p191
      $region38: #{mlstm_layer_vision_forward.1} parent=11 // pred_check_branch
        %336 = sbr.rel (%p334) target = $region40
      $region39: #{mlstm_layer_vision_forward.1} parent=11 // pred_region
        _
      $region40: #{mlstm_layer_vision_forward.1} parent=11 // pred_fallthru
        _
      // Predicated region
      $region41: #{mlstm_layer_vision_forward.1} parent=11 // pred_check
        %p337 = pneg %p212
      $region42: #{mlstm_layer_vision_forward.1} parent=11 // pred_check_branch
        %339 = sbr.rel (%p337) target = $region44
      $region43: #{mlstm_layer_vision_forward.1} parent=11 // pred_region
        _
      $region44: #{mlstm_layer_vision_forward.1} parent=11 // pred_fallthru
        _
      // Predicated region
      $region45: #{mlstm_layer_vision_forward.1} parent=11 // pred_check
        %p340 = pneg %p233
      $region46: #{mlstm_layer_vision_forward.1} parent=11 // pred_check_branch
        %342 = sbr.rel (%p340) target = $region48
      $region47: #{mlstm_layer_vision_forward.1} parent=11 // pred_region
        _
      $region48: #{mlstm_layer_vision_forward.1} parent=11 // pred_fallthru
        _
      // Predicated region
      $region49: #{mlstm_layer_vision_forward.1} parent=11 // pred_check
        %p343 = pneg %p254
      $region50: #{mlstm_layer_vision_forward.1} parent=11 // pred_check_branch
        %345 = sbr.rel (%p343) target = $region52
      $region51: #{mlstm_layer_vision_forward.1} parent=11 // pred_region
        _
      $region52: #{mlstm_layer_vision_forward.1} parent=11 // pred_fallthru
        _
      // Predicated region
      $region53: #{mlstm_layer_vision_forward.1} parent=11 // pred_check
        %p346 = pneg %p275
      $region54: #{mlstm_layer_vision_forward.1} parent=11 // pred_check_branch
        %348 = sbr.rel (%p346) target = $region56
      $region55: #{mlstm_layer_vision_forward.1} parent=11 // pred_region
        _
      $region56: #{mlstm_layer_vision_forward.1} parent=11 // pred_fallthru
        _
    $region12: #{mlstm_layer_vision_forward.1} parent=5 // pred_fallthru
      _
    %p349 = scmp.lt.s32.totalorder %s18, 2
    // Predicated region
    $region57: #{mlstm_layer_vision_forward.1} parent=5 // pred_check
      %p350 = pneg %p349
    $region58: #{mlstm_layer_vision_forward.1} parent=5 // pred_check_branch
      %352 = sbr.rel (%p350) target = $region60
    $region59: #{mlstm_layer_vision_forward.1} parent=5 // pred_region
      // Predicated region
      $region61: #{mlstm_layer_vision_forward.1} parent=59 // pred_check
        %p353 = pneg %p38
      $region62: #{mlstm_layer_vision_forward.1} parent=59 // pred_check_branch
        %355 = sbr.rel (%p353) target = $region64
      $region63: #{mlstm_layer_vision_forward.1} parent=59 // pred_region
        %s356 = smul.u32 32, %s18
        %p357 = scmp.lt.s32.totalorder %s356, 63
        %s358 = scalar_select %p357, %s356, 63
        %s359 = smul.addr %s358, 8
        %s360 = scalar_lea.vmem %s0, %s359
        %s361 = smul.u32 32, %s18
      $region64: #{mlstm_layer_vision_forward.1} parent=59 // pred_fallthru
        _
    $region60: #{mlstm_layer_vision_forward.1} parent=5 // pred_fallthru
      _
    %p362 = scmp.le.s32.totalorder 1, %s18
    %p363 = scmp.lt.s32.totalorder %s18, 3
    %p364 = pnand %p362, %p363
    %p365 = pneg %p364
    // Predicated region
    $region65: #{mlstm_layer_vision_forward.1} parent=5 // pred_check
      _
    $region66: #{mlstm_layer_vision_forward.1} parent=5 // pred_check_branch
      %367 = sbr.rel (%p364) target = $region68
    $region67: #{mlstm_layer_vision_forward.1} parent=5 // pred_region
      %s368 = ssub.s32 %s18, 1
      %s369 = smul.u32 32, %s23
      %p370 = scmp.lt.s32.totalorder %s369, 63
      %s371 = scalar_select %p370, %s369, 63
      %s372 = smul.addr %s371, 8
      %s373 = scalar_lea.vmem %s0, %s372
      %p374 = pneg %p44
      %p375 = pneg %p41
      %p376 = pneg %p65
      %p377 = pneg %p62
      %p378 = pneg %p86
      %p379 = pneg %p83
      %p380 = pneg %p107
      %p381 = pneg %p104
      %p382 = pneg %p128
      %p383 = pneg %p125
      %p384 = pneg %p149
      %p385 = pneg %p146
      %p386 = pneg %p170
      %p387 = pneg %p167
      %p388 = pneg %p191
      %p389 = pneg %p188
      %p390 = pneg %p212
      %p391 = pneg %p209
      %p392 = pneg %p233
      %p393 = pneg %p230
      %p394 = pneg %p254
      %p395 = pneg %p251
      %p396 = pneg %p275
      %p397 = pneg %p272
      %p398 = pneg %p301
      %p399 = pneg %p298
      %p400 = scmp.lt.s32.totalorder %s23, 1
      %s401 = scalar_select %p400, %s23, 1
      %s402 = smul.addr %s401, 8
      %s403 = smul.addr %s402, 8
      %s404 = scalar_lea.vmem %s12, %s403
      %s405 = smul.u32 32, %s23
      %p406 = scmp.lt.s32.totalorder %s405, 63
      %s407 = scalar_select %p406, %s405, 63
      %s408 = smul.addr %s407, 8
      %s409 = scalar_lea.vmem %s0, %s408
      %s410 = smul.u32 32, %s23
      %p411 = scmp.lt.s32.totalorder %s23, 1
      %s412 = scalar_select %p411, %s23, 1
      %s413 = smul.addr %s412, 8
      %s414 = smul.addr %s413, 8
      %s415 = scalar_lea.vmem %s12, %s414
      %v416 = vld [vmem:[%s409] sm:$0xff]
      %v417 = vld [vmem:[%s409 + $0x8] sm:$0xff]
      %v418 = vld [vmem:[%s409 + $0x10] sm:$0xff]
      %v419 = vld [vmem:[%s409 + $0x18] sm:$0xff]
      %v420 = vld [vmem:[%s409 + $0x20] sm:$0xff]
      %v421 = vld [vmem:[%s409 + $0x28] sm:$0xff]
      %v422 = vld [vmem:[%s409 + $0x30] sm:$0xff]
      %v423 = vld [vmem:[%s409 + $0x38] sm:$0xff]
      %v424 = vld [vmem:[%s409 + $0x40] sm:$0xff]
      %v425 = vld [vmem:[%s409 + $0x48] sm:$0xff]
      %v426 = vld [vmem:[%s409 + $0x50] sm:$0xff]
      %v427 = vld [vmem:[%s409 + $0x58] sm:$0xff]
      %v428 = vld [vmem:[%s409 + $0x60] sm:$0xff]
      %v429 = vld [vmem:[%s409 + $0x68] sm:$0xff]
      %v430 = vld [vmem:[%s409 + $0x70] sm:$0xff]
      %v431 = vld [vmem:[%s409 + $0x78] sm:$0xff]
      %v432 = vld [vmem:[%s409 + $0x80] sm:$0xff]
      %v433 = vld [vmem:[%s409 + $0x88] sm:$0xff]
      %v434 = vld [vmem:[%s409 + $0x90] sm:$0xff]
      %v435 = vld [vmem:[%s409 + $0x98] sm:$0xff]
      %v436 = vld [vmem:[%s409 + $0xa0] sm:$0xff]
      %v437 = vld [vmem:[%s409 + $0xa8] sm:$0xff]
      %v438 = vld [vmem:[%s409 + $0xb0] sm:$0xff]
      %v439 = vld [vmem:[%s409 + $0xb8] sm:$0xff]
      %v440 = vld [vmem:[%s409 + $0xc0] sm:$0xff]
      %v441 = vld [vmem:[%s409 + $0xc8] sm:$0xff]
      %v442 = vld [vmem:[%s409 + $0xd0] sm:$0xff]
      %v443 = vld [vmem:[%s409 + $0xd8] sm:$0xff]
      %v444 = vld [vmem:[%s409 + $0xe0] sm:$0xff]
      %v445 = vld [vmem:[%s409 + $0xe8] sm:$0xff]
      %v446 = vld [vmem:[%s409 + $0xf0] sm:$0xff]
      %v447 = vld [vmem:[%s409 + $0xf8] sm:$0xff]
      %v448 = vrot.slane %v416, 7
      %v449 = vrot.slane %v417, 7
      %v450 = vrot.slane %v418, 7
      %v451 = vrot.slane %v419, 7
      %v452 = vrot.slane %v420, 7
      %v453 = vrot.slane %v421, 7
      %v454 = vrot.slane %v422, 7
      %v455 = vrot.slane %v423, 7
      %v456 = vrot.slane %v424, 7
      %v457 = vrot.slane %v425, 7
      %v458 = vrot.slane %v426, 7
      %v459 = vrot.slane %v427, 7
      %v460 = vrot.slane %v428, 7
      %v461 = vrot.slane %v429, 7
      %v462 = vrot.slane %v430, 7
      %v463 = vrot.slane %v431, 7
      %v464 = vrot.slane %v432, 7
      %v465 = vrot.slane %v433, 7
      %v466 = vrot.slane %v434, 7
      %v467 = vrot.slane %v435, 7
      %v468 = vrot.slane %v436, 7
      %v469 = vrot.slane %v437, 7
      %v470 = vrot.slane %v438, 7
      %v471 = vrot.slane %v439, 7
      %v472 = vrot.slane %v440, 7
      %v473 = vrot.slane %v441, 7
      %v474 = vrot.slane %v442, 7
      %v475 = vrot.slane %v443, 7
      %v476 = vrot.slane %v444, 7
      %v477 = vrot.slane %v445, 7
      %v478 = vrot.slane %v446, 7
      %v479 = vrot.slane %v447, 7
      %v480 = vlaneseq
      %v481 = vshrl.u32 %v480, 7
      %vm482 = vcmp.lt.s32.totalorder %v481, 1
      %v483 = vsel %vm482, %v478, %v479
      %v484 = vsel %vm482, %v477, %v478
      %v485 = vsel %vm482, %v476, %v477
      %v486 = vsel %vm482, %v475, %v476
      %v487 = vsel %vm482, %v474, %v475
      %v488 = vsel %vm482, %v473, %v474
      %v489 = vsel %vm482, %v472, %v473
      %v490 = vsel %vm482, %v471, %v472
      %v491 = vsel %vm482, %v470, %v471
      %v492 = vsel %vm482, %v469, %v470
      %v493 = vsel %vm482, %v468, %v469
      %v494 = vsel %vm482, %v467, %v468
      %v495 = vsel %vm482, %v466, %v467
      %v496 = vsel %vm482, %v465, %v466
      %v497 = vsel %vm482, %v464, %v465
      %v498 = vsel %vm482, %v463, %v464
      %v499 = vsel %vm482, %v462, %v463
      %v500 = vsel %vm482, %v461, %v462
      %v501 = vsel %vm482, %v460, %v461
      %v502 = vsel %vm482, %v459, %v460
      %v503 = vsel %vm482, %v458, %v459
      %v504 = vsel %vm482, %v457, %v458
      %v505 = vsel %vm482, %v456, %v457
      %v506 = vsel %vm482, %v455, %v456
      %v507 = vsel %vm482, %v454, %v455
      %v508 = vsel %vm482, %v453, %v454
      %v509 = vsel %vm482, %v452, %v453
      %v510 = vsel %vm482, %v451, %v452
      %v511 = vsel %vm482, %v450, %v451
      %v512 = vsel %vm482, %v449, %v450
      %v513 = vsel %vm482, %v448, %v449
      %v514 = vsel %vm482, %v479, %v448
      %v515 = vrot.slane %v416, 1
      %v516 = vrot.slane %v417, 1
      %v517 = vrot.slane %v418, 1
      %v518 = vrot.slane %v419, 1
      %v519 = vrot.slane %v420, 1
      %v520 = vrot.slane %v421, 1
      %v521 = vrot.slane %v422, 1
      %v522 = vrot.slane %v423, 1
      %v523 = vrot.slane %v424, 1
      %v524 = vrot.slane %v425, 1
      %v525 = vrot.slane %v426, 1
      %v526 = vrot.slane %v427, 1
      %v527 = vrot.slane %v428, 1
      %v528 = vrot.slane %v429, 1
      %v529 = vrot.slane %v430, 1
      %v530 = vrot.slane %v431, 1
      %v531 = vrot.slane %v432, 1
      %v532 = vrot.slane %v433, 1
      %v533 = vrot.slane %v434, 1
      %v534 = vrot.slane %v435, 1
      %v535 = vrot.slane %v436, 1
      %v536 = vrot.slane %v437, 1
      %v537 = vrot.slane %v438, 1
      %v538 = vrot.slane %v439, 1
      %v539 = vrot.slane %v440, 1
      %v540 = vrot.slane %v441, 1
      %v541 = vrot.slane %v442, 1
      %v542 = vrot.slane %v443, 1
      %v543 = vrot.slane %v444, 1
      %v544 = vrot.slane %v445, 1
      %v545 = vrot.slane %v446, 1
      %v546 = vrot.slane %v447, 1
      %vm547 = vcmp.lt.s32.totalorder %v481, 7
      %v548 = vsel %vm547, %v545, %v546
      %v549 = vsel %vm547, %v544, %v545
      %v550 = vsel %vm547, %v543, %v544
      %v551 = vsel %vm547, %v542, %v543
      %v552 = vsel %vm547, %v541, %v542
      %v553 = vsel %vm547, %v540, %v541
      %v554 = vsel %vm547, %v539, %v540
      %v555 = vsel %vm547, %v538, %v539
      %v556 = vsel %vm547, %v537, %v538
      %v557 = vsel %vm547, %v536, %v537
      %v558 = vsel %vm547, %v535, %v536
      %v559 = vsel %vm547, %v534, %v535
      %v560 = vsel %vm547, %v533, %v534
      %v561 = vsel %vm547, %v532, %v533
      %v562 = vsel %vm547, %v531, %v532
      %v563 = vsel %vm547, %v530, %v531
      %v564 = vsel %vm547, %v529, %v530
      %v565 = vsel %vm547, %v528, %v529
      %v566 = vsel %vm547, %v527, %v528
      %v567 = vsel %vm547, %v526, %v527
      %v568 = vsel %vm547, %v525, %v526
      %v569 = vsel %vm547, %v524, %v525
      %v570 = vsel %vm547, %v523, %v524
      %v571 = vsel %vm547, %v522, %v523
      %v572 = vsel %vm547, %v521, %v522
      %v573 = vsel %vm547, %v520, %v521
      %v574 = vsel %vm547, %v519, %v520
      %v575 = vsel %vm547, %v518, %v519
      %v576 = vsel %vm547, %v517, %v518
      %v577 = vsel %vm547, %v516, %v517
      %v578 = vsel %vm547, %v515, %v516
      %v579 = vsel %vm547, %v546, %v515
      %612 = vrot.lane.b32.xlu0 %v447, 32
      %v613 = vpop.permute.xlu0 %612
      %614 = vrot.lane.b32.xlu0 %v416, 32
      %v615 = vpop.permute.xlu0 %614
      %616 = vrot.lane.b32.xlu0 %v417, 32
      %v617 = vpop.permute.xlu0 %616
      %618 = vrot.lane.b32.xlu0 %v418, 32
      %v619 = vpop.permute.xlu0 %618
      %620 = vrot.lane.b32.xlu0 %v419, 32
      %v621 = vpop.permute.xlu0 %620
      %622 = vrot.lane.b32.xlu0 %v420, 32
      %v623 = vpop.permute.xlu0 %622
      %624 = vrot.lane.b32.xlu0 %v421, 32
      %v625 = vpop.permute.xlu0 %624
      %626 = vrot.lane.b32.xlu0 %v422, 32
      %v627 = vpop.permute.xlu0 %626
      %628 = vrot.lane.b32.xlu0 %v423, 32
      %v629 = vpop.permute.xlu0 %628
      %630 = vrot.lane.b32.xlu0 %v424, 32
      %v631 = vpop.permute.xlu0 %630
      %632 = vrot.lane.b32.xlu0 %v425, 32
      %v633 = vpop.permute.xlu0 %632
      %634 = vrot.lane.b32.xlu0 %v426, 32
      %v635 = vpop.permute.xlu0 %634
      %636 = vrot.lane.b32.xlu0 %v427, 32
      %v637 = vpop.permute.xlu0 %636
      %638 = vrot.lane.b32.xlu0 %v428, 32
      %v639 = vpop.permute.xlu0 %638
      %640 = vrot.lane.b32.xlu0 %v429, 32
      %v641 = vpop.permute.xlu0 %640
      %642 = vrot.lane.b32.xlu0 %v430, 32
      %v643 = vpop.permute.xlu0 %642
      %644 = vrot.lane.b32.xlu0 %v431, 32
      %v645 = vpop.permute.xlu0 %644
      %646 = vrot.lane.b32.xlu0 %v432, 32
      %v647 = vpop.permute.xlu0 %646
      %648 = vrot.lane.b32.xlu0 %v433, 32
      %v649 = vpop.permute.xlu0 %648
      %650 = vrot.lane.b32.xlu0 %v434, 32
      %v651 = vpop.permute.xlu0 %650
      %652 = vrot.lane.b32.xlu0 %v435, 32
      %v653 = vpop.permute.xlu0 %652
      %654 = vrot.lane.b32.xlu0 %v436, 32
      %v655 = vpop.permute.xlu0 %654
      %656 = vrot.lane.b32.xlu0 %v437, 32
      %v657 = vpop.permute.xlu0 %656
      %658 = vrot.lane.b32.xlu0 %v438, 32
      %v659 = vpop.permute.xlu0 %658
      %660 = vrot.lane.b32.xlu0 %v439, 32
      %v661 = vpop.permute.xlu0 %660
      %662 = vrot.lane.b32.xlu0 %v440, 32
      %v663 = vpop.permute.xlu0 %662
      %664 = vrot.lane.b32.xlu0 %v441, 32
      %v665 = vpop.permute.xlu0 %664
      %666 = vrot.lane.b32.xlu0 %v442, 32
      %v667 = vpop.permute.xlu0 %666
      %668 = vrot.lane.b32.xlu0 %v443, 32
      %v669 = vpop.permute.xlu0 %668
      %670 = vrot.lane.b32.xlu0 %v444, 32
      %v671 = vpop.permute.xlu0 %670
      %672 = vrot.lane.b32.xlu0 %v445, 32
      %v673 = vpop.permute.xlu0 %672
      %674 = vrot.lane.b32.xlu0 %v446, 32
      %v675 = vpop.permute.xlu0 %674
      %740 = vrot.lane.b32.xlu0 %v579, 64
      %v741 = vpop.permute.xlu0 %740
      %742 = vrot.lane.b32.xlu0 %v578, 64
      %v743 = vpop.permute.xlu0 %742
      %744 = vrot.lane.b32.xlu0 %v577, 64
      %v745 = vpop.permute.xlu0 %744
      %746 = vrot.lane.b32.xlu0 %v576, 64
      %v747 = vpop.permute.xlu0 %746
      %748 = vrot.lane.b32.xlu0 %v575, 64
      %v749 = vpop.permute.xlu0 %748
      %750 = vrot.lane.b32.xlu0 %v574, 64
      %v751 = vpop.permute.xlu0 %750
      %752 = vrot.lane.b32.xlu0 %v573, 64
      %v753 = vpop.permute.xlu0 %752
      %754 = vrot.lane.b32.xlu0 %v572, 64
      %v755 = vpop.permute.xlu0 %754
      %756 = vrot.lane.b32.xlu0 %v571, 64
      %v757 = vpop.permute.xlu0 %756
      %758 = vrot.lane.b32.xlu0 %v570, 64
      %v759 = vpop.permute.xlu0 %758
      %760 = vrot.lane.b32.xlu0 %v569, 64
      %v761 = vpop.permute.xlu0 %760
      %762 = vrot.lane.b32.xlu0 %v568, 64
      %v763 = vpop.permute.xlu0 %762
      %764 = vrot.lane.b32.xlu0 %v567, 64
      %v765 = vpop.permute.xlu0 %764
      %766 = vrot.lane.b32.xlu0 %v566, 64
      %v767 = vpop.permute.xlu0 %766
      %768 = vrot.lane.b32.xlu0 %v565, 64
      %v769 = vpop.permute.xlu0 %768
      %770 = vrot.lane.b32.xlu0 %v564, 64
      %v771 = vpop.permute.xlu0 %770
      %772 = vrot.lane.b32.xlu0 %v563, 64
      %v773 = vpop.permute.xlu0 %772
      %774 = vrot.lane.b32.xlu0 %v562, 64
      %v775 = vpop.permute.xlu0 %774
      %776 = vrot.lane.b32.xlu0 %v561, 64
      %v777 = vpop.permute.xlu0 %776
      %778 = vrot.lane.b32.xlu0 %v560, 64
      %v779 = vpop.permute.xlu0 %778
      %780 = vrot.lane.b32.xlu0 %v559, 64
      %v781 = vpop.permute.xlu0 %780
      %782 = vrot.lane.b32.xlu0 %v558, 64
      %v783 = vpop.permute.xlu0 %782
      %784 = vrot.lane.b32.xlu0 %v557, 64
      %v785 = vpop.permute.xlu0 %784
      %786 = vrot.lane.b32.xlu0 %v556, 64
      %v787 = vpop.permute.xlu0 %786
      %788 = vrot.lane.b32.xlu0 %v555, 64
      %v789 = vpop.permute.xlu0 %788
      %790 = vrot.lane.b32.xlu0 %v554, 64
      %v791 = vpop.permute.xlu0 %790
      %792 = vrot.lane.b32.xlu0 %v553, 64
      %v793 = vpop.permute.xlu0 %792
      %794 = vrot.lane.b32.xlu0 %v552, 64
      %v795 = vpop.permute.xlu0 %794
      %796 = vrot.lane.b32.xlu0 %v551, 64
      %v797 = vpop.permute.xlu0 %796
      %798 = vrot.lane.b32.xlu0 %v550, 64
      %v799 = vpop.permute.xlu0 %798
      %800 = vrot.lane.b32.xlu0 %v549, 64
      %v801 = vpop.permute.xlu0 %800
      %802 = vrot.lane.b32.xlu0 %v548, 64
      %v803 = vpop.permute.xlu0 %802
      %868 = vrot.lane.b32.xlu0 %v514, 96
      %v869 = vpop.permute.xlu0 %868
      %870 = vrot.lane.b32.xlu0 %v513, 96
      %v871 = vpop.permute.xlu0 %870
      %872 = vrot.lane.b32.xlu0 %v512, 96
      %v873 = vpop.permute.xlu0 %872
      %874 = vrot.lane.b32.xlu0 %v511, 96
      %v875 = vpop.permute.xlu0 %874
      %876 = vrot.lane.b32.xlu0 %v510, 96
      %v877 = vpop.permute.xlu0 %876
      %878 = vrot.lane.b32.xlu0 %v509, 96
      %v879 = vpop.permute.xlu0 %878
      %880 = vrot.lane.b32.xlu0 %v508, 96
      %v881 = vpop.permute.xlu0 %880
      %882 = vrot.lane.b32.xlu0 %v507, 96
      %v883 = vpop.permute.xlu0 %882
      %884 = vrot.lane.b32.xlu0 %v506, 96
      %v885 = vpop.permute.xlu0 %884
      %886 = vrot.lane.b32.xlu0 %v505, 96
      %v887 = vpop.permute.xlu0 %886
      %888 = vrot.lane.b32.xlu0 %v504, 96
      %v889 = vpop.permute.xlu0 %888
      %890 = vrot.lane.b32.xlu0 %v503, 96
      %v891 = vpop.permute.xlu0 %890
      %892 = vrot.lane.b32.xlu0 %v502, 96
      %v893 = vpop.permute.xlu0 %892
      %894 = vrot.lane.b32.xlu0 %v501, 96
      %v895 = vpop.permute.xlu0 %894
      %896 = vrot.lane.b32.xlu0 %v500, 96
      %v897 = vpop.permute.xlu0 %896
      %898 = vrot.lane.b32.xlu0 %v499, 96
      %v899 = vpop.permute.xlu0 %898
      %900 = vrot.lane.b32.xlu0 %v498, 96
      %v901 = vpop.permute.xlu0 %900
      %902 = vrot.lane.b32.xlu0 %v497, 96
      %v903 = vpop.permute.xlu0 %902
      %904 = vrot.lane.b32.xlu0 %v496, 96
      %v905 = vpop.permute.xlu0 %904
      %906 = vrot.lane.b32.xlu0 %v495, 96
      %v907 = vpop.permute.xlu0 %906
      %908 = vrot.lane.b32.xlu0 %v494, 96
      %v909 = vpop.permute.xlu0 %908
      %910 = vrot.lane.b32.xlu0 %v493, 96
      %v911 = vpop.permute.xlu0 %910
      %912 = vrot.lane.b32.xlu0 %v492, 96
      %v913 = vpop.permute.xlu0 %912
      %914 = vrot.lane.b32.xlu0 %v491, 96
      %v915 = vpop.permute.xlu0 %914
      %916 = vrot.lane.b32.xlu0 %v490, 96
      %v917 = vpop.permute.xlu0 %916
      %918 = vrot.lane.b32.xlu0 %v489, 96
      %v919 = vpop.permute.xlu0 %918
      %920 = vrot.lane.b32.xlu0 %v488, 96
      %v921 = vpop.permute.xlu0 %920
      %922 = vrot.lane.b32.xlu0 %v487, 96
      %v923 = vpop.permute.xlu0 %922
      %924 = vrot.lane.b32.xlu0 %v486, 96
      %v925 = vpop.permute.xlu0 %924
      %926 = vrot.lane.b32.xlu0 %v485, 96
      %v927 = vpop.permute.xlu0 %926
      %928 = vrot.lane.b32.xlu0 %v484, 96
      %v929 = vpop.permute.xlu0 %928
      %930 = vrot.lane.b32.xlu0 %v483, 96
      %v931 = vpop.permute.xlu0 %930
      %964 = vrot.lane.b32.xlu0 %v578, 32
      %v965 = vpop.permute.xlu0 %964
      %966 = vrot.lane.b32.xlu0 %v577, 32
      %v967 = vpop.permute.xlu0 %966
      %968 = vrot.lane.b32.xlu0 %v576, 32
      %v969 = vpop.permute.xlu0 %968
      %970 = vrot.lane.b32.xlu0 %v575, 32
      %v971 = vpop.permute.xlu0 %970
      %972 = vrot.lane.b32.xlu0 %v574, 32
      %v973 = vpop.permute.xlu0 %972
      %974 = vrot.lane.b32.xlu0 %v573, 32
      %v975 = vpop.permute.xlu0 %974
      %976 = vrot.lane.b32.xlu0 %v572, 32
      %v977 = vpop.permute.xlu0 %976
      %978 = vrot.lane.b32.xlu0 %v571, 32
      %v979 = vpop.permute.xlu0 %978
      %980 = vrot.lane.b32.xlu0 %v570, 32
      %v981 = vpop.permute.xlu0 %980
      %982 = vrot.lane.b32.xlu0 %v569, 32
      %v983 = vpop.permute.xlu0 %982
      %984 = vrot.lane.b32.xlu0 %v568, 32
      %v985 = vpop.permute.xlu0 %984
      %986 = vrot.lane.b32.xlu0 %v567, 32
      %v987 = vpop.permute.xlu0 %986
      %988 = vrot.lane.b32.xlu0 %v566, 32
      %v989 = vpop.permute.xlu0 %988
      %990 = vrot.lane.b32.xlu0 %v565, 32
      %v991 = vpop.permute.xlu0 %990
      %992 = vrot.lane.b32.xlu0 %v564, 32
      %v993 = vpop.permute.xlu0 %992
      %994 = vrot.lane.b32.xlu0 %v563, 32
      %v995 = vpop.permute.xlu0 %994
      %996 = vrot.lane.b32.xlu0 %v562, 32
      %v997 = vpop.permute.xlu0 %996
      %998 = vrot.lane.b32.xlu0 %v561, 32
      %v999 = vpop.permute.xlu0 %998
      %1000 = vrot.lane.b32.xlu0 %v560, 32
      %v1001 = vpop.permute.xlu0 %1000
      %1002 = vrot.lane.b32.xlu0 %v559, 32
      %v1003 = vpop.permute.xlu0 %1002
      %1004 = vrot.lane.b32.xlu0 %v558, 32
      %v1005 = vpop.permute.xlu0 %1004
      %1006 = vrot.lane.b32.xlu0 %v557, 32
      %v1007 = vpop.permute.xlu0 %1006
      %1008 = vrot.lane.b32.xlu0 %v556, 32
      %v1009 = vpop.permute.xlu0 %1008
      %1010 = vrot.lane.b32.xlu0 %v555, 32
      %v1011 = vpop.permute.xlu0 %1010
      %1012 = vrot.lane.b32.xlu0 %v554, 32
      %v1013 = vpop.permute.xlu0 %1012
      %1014 = vrot.lane.b32.xlu0 %v553, 32
      %v1015 = vpop.permute.xlu0 %1014
      %1016 = vrot.lane.b32.xlu0 %v552, 32
      %v1017 = vpop.permute.xlu0 %1016
      %1018 = vrot.lane.b32.xlu0 %v551, 32
      %v1019 = vpop.permute.xlu0 %1018
      %1020 = vrot.lane.b32.xlu0 %v550, 32
      %v1021 = vpop.permute.xlu0 %1020
      %1022 = vrot.lane.b32.xlu0 %v549, 32
      %v1023 = vpop.permute.xlu0 %1022
      %1024 = vrot.lane.b32.xlu0 %v548, 32
      %v1025 = vpop.permute.xlu0 %1024
      %1026 = vrot.lane.b32.xlu0 %v579, 32
      %v1027 = vpop.permute.xlu0 %1026
      %1060 = vrot.lane.b32.xlu0 %v513, 64
      %v1061 = vpop.permute.xlu0 %1060
      %1062 = vrot.lane.b32.xlu0 %v512, 64
      %v1063 = vpop.permute.xlu0 %1062
      %1064 = vrot.lane.b32.xlu0 %v511, 64
      %v1065 = vpop.permute.xlu0 %1064
      %1066 = vrot.lane.b32.xlu0 %v510, 64
      %v1067 = vpop.permute.xlu0 %1066
      %1068 = vrot.lane.b32.xlu0 %v509, 64
      %v1069 = vpop.permute.xlu0 %1068
      %1070 = vrot.lane.b32.xlu0 %v508, 64
      %v1071 = vpop.permute.xlu0 %1070
      %1072 = vrot.lane.b32.xlu0 %v507, 64
      %v1073 = vpop.permute.xlu0 %1072
      %1074 = vrot.lane.b32.xlu0 %v506, 64
      %v1075 = vpop.permute.xlu0 %1074
      %1076 = vrot.lane.b32.xlu0 %v505, 64
      %v1077 = vpop.permute.xlu0 %1076
      %1078 = vrot.lane.b32.xlu0 %v504, 64
      %v1079 = vpop.permute.xlu0 %1078
      %1080 = vrot.lane.b32.xlu0 %v503, 64
      %v1081 = vpop.permute.xlu0 %1080
      %1082 = vrot.lane.b32.xlu0 %v502, 64
      %v1083 = vpop.permute.xlu0 %1082
      %1084 = vrot.lane.b32.xlu0 %v501, 64
      %v1085 = vpop.permute.xlu0 %1084
      %1086 = vrot.lane.b32.xlu0 %v500, 64
      %v1087 = vpop.permute.xlu0 %1086
      %1088 = vrot.lane.b32.xlu0 %v499, 64
      %v1089 = vpop.permute.xlu0 %1088
      %1090 = vrot.lane.b32.xlu0 %v498, 64
      %v1091 = vpop.permute.xlu0 %1090
      %1092 = vrot.lane.b32.xlu0 %v497, 64
      %v1093 = vpop.permute.xlu0 %1092
      %1094 = vrot.lane.b32.xlu0 %v496, 64
      %v1095 = vpop.permute.xlu0 %1094
      %1096 = vrot.lane.b32.xlu0 %v495, 64
      %v1097 = vpop.permute.xlu0 %1096
      %1098 = vrot.lane.b32.xlu0 %v494, 64
      %v1099 = vpop.permute.xlu0 %1098
      %1100 = vrot.lane.b32.xlu0 %v493, 64
      %v1101 = vpop.permute.xlu0 %1100
      %1102 = vrot.lane.b32.xlu0 %v492, 64
      %v1103 = vpop.permute.xlu0 %1102
      %1104 = vrot.lane.b32.xlu0 %v491, 64
      %v1105 = vpop.permute.xlu0 %1104
      %1106 = vrot.lane.b32.xlu0 %v490, 64
      %v1107 = vpop.permute.xlu0 %1106
      %1108 = vrot.lane.b32.xlu0 %v489, 64
      %v1109 = vpop.permute.xlu0 %1108
      %1110 = vrot.lane.b32.xlu0 %v488, 64
      %v1111 = vpop.permute.xlu0 %1110
      %1112 = vrot.lane.b32.xlu0 %v487, 64
      %v1113 = vpop.permute.xlu0 %1112
      %1114 = vrot.lane.b32.xlu0 %v486, 64
      %v1115 = vpop.permute.xlu0 %1114
      %1116 = vrot.lane.b32.xlu0 %v485, 64
      %v1117 = vpop.permute.xlu0 %1116
      %1118 = vrot.lane.b32.xlu0 %v484, 64
      %v1119 = vpop.permute.xlu0 %1118
      %1120 = vrot.lane.b32.xlu0 %v483, 64
      %v1121 = vpop.permute.xlu0 %1120
      %1122 = vrot.lane.b32.xlu0 %v514, 64
      %v1123 = vpop.permute.xlu0 %1122
      %1156 = vrot.lane.b32.xlu0 %v417, 96
      %v1157 = vpop.permute.xlu0 %1156
      %1158 = vrot.lane.b32.xlu0 %v418, 96
      %v1159 = vpop.permute.xlu0 %1158
      %1160 = vrot.lane.b32.xlu0 %v419, 96
      %v1161 = vpop.permute.xlu0 %1160
      %1162 = vrot.lane.b32.xlu0 %v420, 96
      %v1163 = vpop.permute.xlu0 %1162
      %1164 = vrot.lane.b32.xlu0 %v421, 96
      %v1165 = vpop.permute.xlu0 %1164
      %1166 = vrot.lane.b32.xlu0 %v422, 96
      %v1167 = vpop.permute.xlu0 %1166
      %1168 = vrot.lane.b32.xlu0 %v423, 96
      %v1169 = vpop.permute.xlu0 %1168
      %1170 = vrot.lane.b32.xlu0 %v424, 96
      %v1171 = vpop.permute.xlu0 %1170
      %1172 = vrot.lane.b32.xlu0 %v425, 96
      %v1173 = vpop.permute.xlu0 %1172
      %1174 = vrot.lane.b32.xlu0 %v426, 96
      %v1175 = vpop.permute.xlu0 %1174
      %1176 = vrot.lane.b32.xlu0 %v427, 96
      %v1177 = vpop.permute.xlu0 %1176
      %1178 = vrot.lane.b32.xlu0 %v428, 96
      %v1179 = vpop.permute.xlu0 %1178
      %1180 = vrot.lane.b32.xlu0 %v429, 96
      %v1181 = vpop.permute.xlu0 %1180
      %1182 = vrot.lane.b32.xlu0 %v430, 96
      %v1183 = vpop.permute.xlu0 %1182
      %1184 = vrot.lane.b32.xlu0 %v431, 96
      %v1185 = vpop.permute.xlu0 %1184
      %1186 = vrot.lane.b32.xlu0 %v432, 96
      %v1187 = vpop.permute.xlu0 %1186
      %1188 = vrot.lane.b32.xlu0 %v433, 96
      %v1189 = vpop.permute.xlu0 %1188
      %1190 = vrot.lane.b32.xlu0 %v434, 96
      %v1191 = vpop.permute.xlu0 %1190
      %1192 = vrot.lane.b32.xlu0 %v435, 96
      %v1193 = vpop.permute.xlu0 %1192
      %1194 = vrot.lane.b32.xlu0 %v436, 96
      %v1195 = vpop.permute.xlu0 %1194
      %1196 = vrot.lane.b32.xlu0 %v437, 96
      %v1197 = vpop.permute.xlu0 %1196
      %1198 = vrot.lane.b32.xlu0 %v438, 96
      %v1199 = vpop.permute.xlu0 %1198
      %1200 = vrot.lane.b32.xlu0 %v439, 96
      %v1201 = vpop.permute.xlu0 %1200
      %1202 = vrot.lane.b32.xlu0 %v440, 96
      %v1203 = vpop.permute.xlu0 %1202
      %1204 = vrot.lane.b32.xlu0 %v441, 96
      %v1205 = vpop.permute.xlu0 %1204
      %1206 = vrot.lane.b32.xlu0 %v442, 96
      %v1207 = vpop.permute.xlu0 %1206
      %1208 = vrot.lane.b32.xlu0 %v443, 96
      %v1209 = vpop.permute.xlu0 %1208
      %1210 = vrot.lane.b32.xlu0 %v444, 96
      %v1211 = vpop.permute.xlu0 %1210
      %1212 = vrot.lane.b32.xlu0 %v445, 96
      %v1213 = vpop.permute.xlu0 %1212
      %1214 = vrot.lane.b32.xlu0 %v446, 96
      %v1215 = vpop.permute.xlu0 %1214
      %1216 = vrot.lane.b32.xlu0 %v447, 96
      %v1217 = vpop.permute.xlu0 %1216
      %1218 = vrot.lane.b32.xlu0 %v416, 96
      %v1219 = vpop.permute.xlu0 %1218
      %vm1252 = vcmask 261120
      %v1253 = vsel %vm1252, %v483, %v613
      %v1254 = vsel %vm1252, %v514, %v615
      %v1255 = vsel %vm1252, %v513, %v617
      %v1256 = vsel %vm1252, %v512, %v619
      %v1257 = vsel %vm1252, %v511, %v621
      %v1258 = vsel %vm1252, %v510, %v623
      %v1259 = vsel %vm1252, %v509, %v625
      %v1260 = vsel %vm1252, %v508, %v627
      %v1261 = vsel %vm1252, %v507, %v629
      %v1262 = vsel %vm1252, %v506, %v631
      %v1263 = vsel %vm1252, %v505, %v633
      %v1264 = vsel %vm1252, %v504, %v635
      %v1265 = vsel %vm1252, %v503, %v637
      %v1266 = vsel %vm1252, %v502, %v639
      %v1267 = vsel %vm1252, %v501, %v641
      %v1268 = vsel %vm1252, %v500, %v643
      %v1269 = vsel %vm1252, %v499, %v645
      %v1270 = vsel %vm1252, %v498, %v647
      %v1271 = vsel %vm1252, %v497, %v649
      %v1272 = vsel %vm1252, %v496, %v651
      %v1273 = vsel %vm1252, %v495, %v653
      %v1274 = vsel %vm1252, %v494, %v655
      %v1275 = vsel %vm1252, %v493, %v657
      %v1276 = vsel %vm1252, %v492, %v659
      %v1277 = vsel %vm1252, %v491, %v661
      %v1278 = vsel %vm1252, %v490, %v663
      %v1279 = vsel %vm1252, %v489, %v665
      %v1280 = vsel %vm1252, %v488, %v667
      %v1281 = vsel %vm1252, %v487, %v669
      %v1282 = vsel %vm1252, %v486, %v671
      %v1283 = vsel %vm1252, %v485, %v673
      %v1284 = vsel %vm1252, %v484, %v675
      %vm1285 = vcmask 523264
      %v1286 = vsel %vm1285, %v1253, %v741
      %v1287 = vsel %vm1285, %v1254, %v743
      %v1288 = vsel %vm1285, %v1255, %v745
      %v1289 = vsel %vm1285, %v1256, %v747
      %v1290 = vsel %vm1285, %v1257, %v749
      %v1291 = vsel %vm1285, %v1258, %v751
      %v1292 = vsel %vm1285, %v1259, %v753
      %v1293 = vsel %vm1285, %v1260, %v755
      %v1294 = vsel %vm1285, %v1261, %v757
      %v1295 = vsel %vm1285, %v1262, %v759
      %v1296 = vsel %vm1285, %v1263, %v761
      %v1297 = vsel %vm1285, %v1264, %v763
      %v1298 = vsel %vm1285, %v1265, %v765
      %v1299 = vsel %vm1285, %v1266, %v767
      %v1300 = vsel %vm1285, %v1267, %v769
      %v1301 = vsel %vm1285, %v1268, %v771
      %v1302 = vsel %vm1285, %v1269, %v773
      %v1303 = vsel %vm1285, %v1270, %v775
      %v1304 = vsel %vm1285, %v1271, %v777
      %v1305 = vsel %vm1285, %v1272, %v779
      %v1306 = vsel %vm1285, %v1273, %v781
      %v1307 = vsel %vm1285, %v1274, %v783
      %v1308 = vsel %vm1285, %v1275, %v785
      %v1309 = vsel %vm1285, %v1276, %v787
      %v1310 = vsel %vm1285, %v1277, %v789
      %v1311 = vsel %vm1285, %v1278, %v791
      %v1312 = vsel %vm1285, %v1279, %v793
      %v1313 = vsel %vm1285, %v1280, %v795
      %v1314 = vsel %vm1285, %v1281, %v797
      %v1315 = vsel %vm1285, %v1282, %v799
      %v1316 = vsel %vm1285, %v1283, %v801
      %v1317 = vsel %vm1285, %v1284, %v803
      %vm1318 = vcmask 785408
      %v1319 = vsel %vm1318, %v1286, %v869
      %v1320 = vsel %vm1318, %v1287, %v871
      %v1321 = vsel %vm1318, %v1288, %v873
      %v1322 = vsel %vm1318, %v1289, %v875
      %v1323 = vsel %vm1318, %v1290, %v877
      %v1324 = vsel %vm1318, %v1291, %v879
      %v1325 = vsel %vm1318, %v1292, %v881
      %v1326 = vsel %vm1318, %v1293, %v883
      %v1327 = vsel %vm1318, %v1294, %v885
      %v1328 = vsel %vm1318, %v1295, %v887
      %v1329 = vsel %vm1318, %v1296, %v889
      %v1330 = vsel %vm1318, %v1297, %v891
      %v1331 = vsel %vm1318, %v1298, %v893
      %v1332 = vsel %vm1318, %v1299, %v895
      %v1333 = vsel %vm1318, %v1300, %v897
      %v1334 = vsel %vm1318, %v1301, %v899
      %v1335 = vsel %vm1318, %v1302, %v901
      %v1336 = vsel %vm1318, %v1303, %v903
      %v1337 = vsel %vm1318, %v1304, %v905
      %v1338 = vsel %vm1318, %v1305, %v907
      %v1339 = vsel %vm1318, %v1306, %v909
      %v1340 = vsel %vm1318, %v1307, %v911
      %v1341 = vsel %vm1318, %v1308, %v913
      %v1342 = vsel %vm1318, %v1309, %v915
      %v1343 = vsel %vm1318, %v1310, %v917
      %v1344 = vsel %vm1318, %v1311, %v919
      %v1345 = vsel %vm1318, %v1312, %v921
      %v1346 = vsel %vm1318, %v1313, %v923
      %v1347 = vsel %vm1318, %v1314, %v925
      %v1348 = vsel %vm1318, %v1315, %v927
      %v1349 = vsel %vm1318, %v1316, %v929
      %v1350 = vsel %vm1318, %v1317, %v931
      %v1351 = vsel %vm1252, %v416, %v965
      %v1352 = vsel %vm1252, %v417, %v967
      %v1353 = vsel %vm1252, %v418, %v969
      %v1354 = vsel %vm1252, %v419, %v971
      %v1355 = vsel %vm1252, %v420, %v973
      %v1356 = vsel %vm1252, %v421, %v975
      %v1357 = vsel %vm1252, %v422, %v977
      %v1358 = vsel %vm1252, %v423, %v979
      %v1359 = vsel %vm1252, %v424, %v981
      %v1360 = vsel %vm1252, %v425, %v983
      %v1361 = vsel %vm1252, %v426, %v985
      %v1362 = vsel %vm1252, %v427, %v987
      %v1363 = vsel %vm1252, %v428, %v989
      %v1364 = vsel %vm1252, %v429, %v991
      %v1365 = vsel %vm1252, %v430, %v993
      %v1366 = vsel %vm1252, %v431, %v995
      %v1367 = vsel %vm1252, %v432, %v997
      %v1368 = vsel %vm1252, %v433, %v999
      %v1369 = vsel %vm1252, %v434, %v1001
      %v1370 = vsel %vm1252, %v435, %v1003
      %v1371 = vsel %vm1252, %v436, %v1005
      %v1372 = vsel %vm1252, %v437, %v1007
      %v1373 = vsel %vm1252, %v438, %v1009
      %v1374 = vsel %vm1252, %v439, %v1011
      %v1375 = vsel %vm1252, %v440, %v1013
      %v1376 = vsel %vm1252, %v441, %v1015
      %v1377 = vsel %vm1252, %v442, %v1017
      %v1378 = vsel %vm1252, %v443, %v1019
      %v1379 = vsel %vm1252, %v444, %v1021
      %v1380 = vsel %vm1252, %v445, %v1023
      %v1381 = vsel %vm1252, %v446, %v1025
      %v1382 = vsel %vm1252, %v447, %v1027
      %v1383 = vsel %vm1285, %v1351, %v1061
      %v1384 = vsel %vm1285, %v1352, %v1063
      %v1385 = vsel %vm1285, %v1353, %v1065
      %v1386 = vsel %vm1285, %v1354, %v1067
      %v1387 = vsel %vm1285, %v1355, %v1069
      %v1388 = vsel %vm1285, %v1356, %v1071
      %v1389 = vsel %vm1285, %v1357, %v1073
      %v1390 = vsel %vm1285, %v1358, %v1075
      %v1391 = vsel %vm1285, %v1359, %v1077
      %v1392 = vsel %vm1285, %v1360, %v1079
      %v1393 = vsel %vm1285, %v1361, %v1081
      %v1394 = vsel %vm1285, %v1362, %v1083
      %v1395 = vsel %vm1285, %v1363, %v1085
      %v1396 = vsel %vm1285, %v1364, %v1087
      %v1397 = vsel %vm1285, %v1365, %v1089
      %v1398 = vsel %vm1285, %v1366, %v1091
      %v1399 = vsel %vm1285, %v1367, %v1093
      %v1400 = vsel %vm1285, %v1368, %v1095
      %v1401 = vsel %vm1285, %v1369, %v1097
      %v1402 = vsel %vm1285, %v1370, %v1099
      %v1403 = vsel %vm1285, %v1371, %v1101
      %v1404 = vsel %vm1285, %v1372, %v1103
      %v1405 = vsel %vm1285, %v1373, %v1105
      %v1406 = vsel %vm1285, %v1374, %v1107
      %v1407 = vsel %vm1285, %v1375, %v1109
      %v1408 = vsel %vm1285, %v1376, %v1111
      %v1409 = vsel %vm1285, %v1377, %v1113
      %v1410 = vsel %vm1285, %v1378, %v1115
      %v1411 = vsel %vm1285, %v1379, %v1117
      %v1412 = vsel %vm1285, %v1380, %v1119
      %v1413 = vsel %vm1285, %v1381, %v1121
      %v1414 = vsel %vm1285, %v1382, %v1123
      %v1415 = vsel %vm1318, %v1383, %v1157
      %v1416 = vsel %vm1318, %v1384, %v1159
      %v1417 = vsel %vm1318, %v1385, %v1161
      %v1418 = vsel %vm1318, %v1386, %v1163
      %v1419 = vsel %vm1318, %v1387, %v1165
      %v1420 = vsel %vm1318, %v1388, %v1167
      %v1421 = vsel %vm1318, %v1389, %v1169
      %v1422 = vsel %vm1318, %v1390, %v1171
      %v1423 = vsel %vm1318, %v1391, %v1173
      %v1424 = vsel %vm1318, %v1392, %v1175
      %v1425 = vsel %vm1318, %v1393, %v1177
      %v1426 = vsel %vm1318, %v1394, %v1179
      %v1427 = vsel %vm1318, %v1395, %v1181
      %v1428 = vsel %vm1318, %v1396, %v1183
      %v1429 = vsel %vm1318, %v1397, %v1185
      %v1430 = vsel %vm1318, %v1398, %v1187
      %v1431 = vsel %vm1318, %v1399, %v1189
      %v1432 = vsel %vm1318, %v1400, %v1191
      %v1433 = vsel %vm1318, %v1401, %v1193
      %v1434 = vsel %vm1318, %v1402, %v1195
      %v1435 = vsel %vm1318, %v1403, %v1197
      %v1436 = vsel %vm1318, %v1404, %v1199
      %v1437 = vsel %vm1318, %v1405, %v1201
      %v1438 = vsel %vm1318, %v1406, %v1203
      %v1439 = vsel %vm1318, %v1407, %v1205
      %v1440 = vsel %vm1318, %v1408, %v1207
      %v1441 = vsel %vm1318, %v1409, %v1209
      %v1442 = vsel %vm1318, %v1410, %v1211
      %v1443 = vsel %vm1318, %v1411, %v1213
      %v1444 = vsel %vm1318, %v1412, %v1215
      %v1445 = vsel %vm1318, %v1413, %v1217
      %v1446 = vsel %vm1318, %v1414, %v1219
      %v1447 = vld [vmem:[%s1] sm:$0xff]
      %v1448 = vld [vmem:[%s1 + $0x8] sm:$0xff]
      %v1449 = vld [vmem:[%s1 + $0x10] sm:$0xff]
      %v1450 = vld [vmem:[%s1 + $0x18] sm:$0xff]
      %v1451 = vld [vmem:[%s1 + $0x20] sm:$0xff]
      %v1452 = vld [vmem:[%s1 + $0x28] sm:$0xff]
      %v1453 = vld [vmem:[%s1 + $0x30] sm:$0xff]
      %v1454 = vld [vmem:[%s1 + $0x38] sm:$0xff]
      %v1455 = vld [vmem:[%s1 + $0x40] sm:$0xff]
      %v1456 = vld [vmem:[%s1 + $0x48] sm:$0xff]
      %v1457 = vld [vmem:[%s1 + $0x50] sm:$0xff]
      %v1458 = vld [vmem:[%s1 + $0x58] sm:$0xff]
      %v1459 = vld [vmem:[%s1 + $0x60] sm:$0xff]
      %v1460 = vld [vmem:[%s1 + $0x68] sm:$0xff]
      %v1461 = vld [vmem:[%s1 + $0x70] sm:$0xff]
      %v1462 = vld [vmem:[%s1 + $0x78] sm:$0xff]
      %v1463 = vld [vmem:[%s1 + $0x80] sm:$0xff]
      %v1464 = vld [vmem:[%s1 + $0x88] sm:$0xff]
      %v1465 = vld [vmem:[%s1 + $0x90] sm:$0xff]
      %v1466 = vld [vmem:[%s1 + $0x98] sm:$0xff]
      %v1467 = vld [vmem:[%s1 + $0xa0] sm:$0xff]
      %v1468 = vld [vmem:[%s1 + $0xa8] sm:$0xff]
      %v1469 = vld [vmem:[%s1 + $0xb0] sm:$0xff]
      %v1470 = vld [vmem:[%s1 + $0xb8] sm:$0xff]
      %v1471 = vld [vmem:[%s1 + $0xc0] sm:$0xff]
      %v1472 = vld [vmem:[%s1 + $0xc8] sm:$0xff]
      %v1473 = vld [vmem:[%s1 + $0xd0] sm:$0xff]
      %v1474 = vld [vmem:[%s1 + $0xd8] sm:$0xff]
      %v1475 = vld [vmem:[%s1 + $0xe0] sm:$0xff]
      %v1476 = vld [vmem:[%s1 + $0xe8] sm:$0xff]
      %v1477 = vld [vmem:[%s1 + $0xf0] sm:$0xff]
      %v1478 = vld [vmem:[%s1 + $0xf8] sm:$0xff]
      %v1479 = vld [vmem:[%s1 + $0x100] sm:$0xff]
      %v1480 = vld [vmem:[%s1 + $0x108] sm:$0xff]
      %v1481 = vld [vmem:[%s1 + $0x110] sm:$0xff]
      %v1482 = vld [vmem:[%s1 + $0x118] sm:$0xff]
      %v1483 = vld [vmem:[%s1 + $0x120] sm:$0xff]
      %v1484 = vld [vmem:[%s1 + $0x128] sm:$0xff]
      %v1485 = vld [vmem:[%s1 + $0x130] sm:$0xff]
      %v1486 = vld [vmem:[%s1 + $0x138] sm:$0xff]
      %v1487 = vld [vmem:[%s1 + $0x140] sm:$0xff]
      %v1488 = vld [vmem:[%s1 + $0x148] sm:$0xff]
      %v1489 = vld [vmem:[%s1 + $0x150] sm:$0xff]
      %v1490 = vld [vmem:[%s1 + $0x158] sm:$0xff]
      %v1491 = vld [vmem:[%s1 + $0x160] sm:$0xff]
      %v1492 = vld [vmem:[%s1 + $0x168] sm:$0xff]
      %v1493 = vld [vmem:[%s1 + $0x170] sm:$0xff]
      %v1494 = vld [vmem:[%s1 + $0x178] sm:$0xff]
      %v1495 = vld [vmem:[%s1 + $0x180] sm:$0xff]
      %v1496 = vld [vmem:[%s1 + $0x188] sm:$0xff]
      %v1497 = vld [vmem:[%s1 + $0x190] sm:$0xff]
      %v1498 = vld [vmem:[%s1 + $0x198] sm:$0xff]
      %v1499 = vld [vmem:[%s1 + $0x1a0] sm:$0xff]
      %v1500 = vld [vmem:[%s1 + $0x1a8] sm:$0xff]
      %v1501 = vld [vmem:[%s1 + $0x1b0] sm:$0xff]
      %v1502 = vld [vmem:[%s1 + $0x1b8] sm:$0xff]
      %v1503 = vld [vmem:[%s1 + $0x1c0] sm:$0xff]
      %v1504 = vld [vmem:[%s1 + $0x1c8] sm:$0xff]
      %v1505 = vld [vmem:[%s1 + $0x1d0] sm:$0xff]
      %v1506 = vld [vmem:[%s1 + $0x1d8] sm:$0xff]
      %v1507 = vld [vmem:[%s1 + $0x1e0] sm:$0xff]
      %v1508 = vld [vmem:[%s1 + $0x1e8] sm:$0xff]
      %v1509 = vld [vmem:[%s1 + $0x1f0] sm:$0xff]
      %v1510 = vld [vmem:[%s1 + $0x1f8] sm:$0xff]
      %v1511 = vld [vmem:[%s1 + $0x200] sm:$0xff]
      %v1512 = vld [vmem:[%s1 + $0x208] sm:$0xff]
      %v1513 = vld [vmem:[%s1 + $0x210] sm:$0xff]
      %v1514 = vld [vmem:[%s1 + $0x218] sm:$0xff]
      %v1515 = vld [vmem:[%s1 + $0x220] sm:$0xff]
      %v1516 = vld [vmem:[%s1 + $0x228] sm:$0xff]
      %v1517 = vld [vmem:[%s1 + $0x230] sm:$0xff]
      %v1518 = vld [vmem:[%s1 + $0x238] sm:$0xff]
      %v1519 = vld [vmem:[%s1 + $0x240] sm:$0xff]
      %v1520 = vld [vmem:[%s1 + $0x248] sm:$0xff]
      %v1521 = vld [vmem:[%s1 + $0x250] sm:$0xff]
      %v1522 = vld [vmem:[%s1 + $0x258] sm:$0xff]
      %v1523 = vld [vmem:[%s1 + $0x260] sm:$0xff]
      %v1524 = vld [vmem:[%s1 + $0x268] sm:$0xff]
      %v1525 = vld [vmem:[%s1 + $0x270] sm:$0xff]
      %v1526 = vld [vmem:[%s1 + $0x278] sm:$0xff]
      %v1527 = vld [vmem:[%s1 + $0x280] sm:$0xff]
      %v1528 = vld [vmem:[%s1 + $0x288] sm:$0xff]
      %v1529 = vld [vmem:[%s1 + $0x290] sm:$0xff]
      %v1530 = vld [vmem:[%s1 + $0x298] sm:$0xff]
      %v1531 = vld [vmem:[%s1 + $0x2a0] sm:$0xff]
      %v1532 = vld [vmem:[%s1 + $0x2a8] sm:$0xff]
      %v1533 = vld [vmem:[%s1 + $0x2b0] sm:$0xff]
      %v1534 = vld [vmem:[%s1 + $0x2b8] sm:$0xff]
      %v1535 = vld [vmem:[%s1 + $0x2c0] sm:$0xff]
      %v1536 = vld [vmem:[%s1 + $0x2c8] sm:$0xff]
      %v1537 = vld [vmem:[%s1 + $0x2d0] sm:$0xff]
      %v1538 = vld [vmem:[%s1 + $0x2d8] sm:$0xff]
      %v1539 = vld [vmem:[%s1 + $0x2e0] sm:$0xff]
      %v1540 = vld [vmem:[%s1 + $0x2e8] sm:$0xff]
      %v1541 = vld [vmem:[%s1 + $0x2f0] sm:$0xff]
      %v1542 = vld [vmem:[%s1 + $0x2f8] sm:$0xff]
      %v1543 = vmul.f32 %v1319, %v1447
      %v1544 = vmul.f32 %v1415, %v1448
      %v1545 = vmul.f32 %v577, %v1449
      %v1546 = vmul.f32 %v1320, %v1450
      %v1547 = vmul.f32 %v1416, %v1451
      %v1548 = vmul.f32 %v576, %v1452
      %v1549 = vmul.f32 %v1321, %v1453
      %v1550 = vmul.f32 %v1417, %v1454
      %v1551 = vmul.f32 %v575, %v1455
      %v1552 = vmul.f32 %v1322, %v1456
      %v1553 = vmul.f32 %v1418, %v1457
      %v1554 = vmul.f32 %v574, %v1458
      %v1555 = vmul.f32 %v1323, %v1459
      %v1556 = vmul.f32 %v1419, %v1460
      %v1557 = vmul.f32 %v573, %v1461
      %v1558 = vmul.f32 %v1324, %v1462
      %v1559 = vmul.f32 %v1420, %v1463
      %v1560 = vmul.f32 %v572, %v1464
      %v1561 = vmul.f32 %v1325, %v1465
      %v1562 = vmul.f32 %v1421, %v1466
      %v1563 = vmul.f32 %v571, %v1467
      %v1564 = vmul.f32 %v1326, %v1468
      %v1565 = vmul.f32 %v1422, %v1469
      %v1566 = vmul.f32 %v570, %v1470
      %v1567 = vmul.f32 %v1327, %v1471
      %v1568 = vmul.f32 %v1423, %v1472
      %v1569 = vmul.f32 %v569, %v1473
      %v1570 = vmul.f32 %v1328, %v1474
      %v1571 = vmul.f32 %v1424, %v1475
      %v1572 = vmul.f32 %v568, %v1476
      %v1573 = vmul.f32 %v1329, %v1477
      %v1574 = vmul.f32 %v1425, %v1478
      %v1575 = vmul.f32 %v567, %v1479
      %v1576 = vmul.f32 %v1330, %v1480
      %v1577 = vmul.f32 %v1426, %v1481
      %v1578 = vmul.f32 %v566, %v1482
      %v1579 = vmul.f32 %v1331, %v1483
      %v1580 = vmul.f32 %v1427, %v1484
      %v1581 = vmul.f32 %v565, %v1485
      %v1582 = vmul.f32 %v1332, %v1486
      %v1583 = vmul.f32 %v1428, %v1487
      %v1584 = vmul.f32 %v564, %v1488
      %v1585 = vmul.f32 %v1333, %v1489
      %v1586 = vmul.f32 %v1429, %v1490
      %v1587 = vmul.f32 %v563, %v1491
      %v1588 = vmul.f32 %v1334, %v1492
      %v1589 = vmul.f32 %v1430, %v1493
      %v1590 = vmul.f32 %v562, %v1494
      %v1591 = vmul.f32 %v1335, %v1495
      %v1592 = vmul.f32 %v1431, %v1496
      %v1593 = vmul.f32 %v561, %v1497
      %v1594 = vmul.f32 %v1336, %v1498
      %v1595 = vmul.f32 %v1432, %v1499
      %v1596 = vmul.f32 %v560, %v1500
      %v1597 = vmul.f32 %v1337, %v1501
      %v1598 = vmul.f32 %v1433, %v1502
      %v1599 = vmul.f32 %v559, %v1503
      %v1600 = vmul.f32 %v1338, %v1504
      %v1601 = vmul.f32 %v1434, %v1505
      %v1602 = vmul.f32 %v558, %v1506
      %v1603 = vmul.f32 %v1339, %v1507
      %v1604 = vmul.f32 %v1435, %v1508
      %v1605 = vmul.f32 %v557, %v1509
      %v1606 = vmul.f32 %v1340, %v1510
      %v1607 = vmul.f32 %v1436, %v1511
      %v1608 = vmul.f32 %v556, %v1512
      %v1609 = vmul.f32 %v1341, %v1513
      %v1610 = vmul.f32 %v1437, %v1514
      %v1611 = vmul.f32 %v555, %v1515
      %v1612 = vmul.f32 %v1342, %v1516
      %v1613 = vmul.f32 %v1438, %v1517
      %v1614 = vmul.f32 %v554, %v1518
      %v1615 = vmul.f32 %v1343, %v1519
      %v1616 = vmul.f32 %v1439, %v1520
      %v1617 = vmul.f32 %v553, %v1521
      %v1618 = vmul.f32 %v1344, %v1522
      %v1619 = vmul.f32 %v1440, %v1523
      %v1620 = vmul.f32 %v552, %v1524
      %v1621 = vmul.f32 %v1345, %v1525
      %v1622 = vmul.f32 %v1441, %v1526
      %v1623 = vmul.f32 %v551, %v1527
      %v1624 = vmul.f32 %v1346, %v1528
      %v1625 = vmul.f32 %v1442, %v1529
      %v1626 = vmul.f32 %v550, %v1530
      %v1627 = vmul.f32 %v1347, %v1531
      %v1628 = vmul.f32 %v1443, %v1532
      %v1629 = vmul.f32 %v549, %v1533
      %v1630 = vmul.f32 %v1348, %v1534
      %v1631 = vmul.f32 %v1444, %v1535
      %v1632 = vmul.f32 %v548, %v1536
      %v1633 = vmul.f32 %v1349, %v1537
      %v1634 = vmul.f32 %v1445, %v1538
      %v1635 = vmul.f32 %v579, %v1539
      %v1636 = vmul.f32 %v1350, %v1540
      %v1637 = vmul.f32 %v1446, %v1541
      %v1638 = vmul.f32 %v578, %v1542
      %v1639 = vld [vmem:[%s4] sm:$0xff]
      %v1640 = vld [vmem:[%s4 + $0x8] sm:$0xff]
      %v1641 = vld [vmem:[%s4 + $0x10] sm:$0xff]
      %v1642 = vld [vmem:[%s4 + $0x18] sm:$0xff]
      %v1643 = vld [vmem:[%s4 + $0x20] sm:$0xff]
      %v1644 = vld [vmem:[%s4 + $0x28] sm:$0xff]
      %v1645 = vld [vmem:[%s4 + $0x30] sm:$0xff]
      %v1646 = vld [vmem:[%s4 + $0x38] sm:$0xff]
      %v1647 = vld [vmem:[%s4 + $0x40] sm:$0xff]
      %v1648 = vld [vmem:[%s4 + $0x48] sm:$0xff]
      %v1649 = vld [vmem:[%s4 + $0x50] sm:$0xff]
      %v1650 = vld [vmem:[%s4 + $0x58] sm:$0xff]
      %v1651 = vld [vmem:[%s4 + $0x60] sm:$0xff]
      %v1652 = vld [vmem:[%s4 + $0x68] sm:$0xff]
      %v1653 = vld [vmem:[%s4 + $0x70] sm:$0xff]
      %v1654 = vld [vmem:[%s4 + $0x78] sm:$0xff]
      %v1655 = vld [vmem:[%s4 + $0x80] sm:$0xff]
      %v1656 = vld [vmem:[%s4 + $0x88] sm:$0xff]
      %v1657 = vld [vmem:[%s4 + $0x90] sm:$0xff]
      %v1658 = vld [vmem:[%s4 + $0x98] sm:$0xff]
      %v1659 = vld [vmem:[%s4 + $0xa0] sm:$0xff]
      %v1660 = vld [vmem:[%s4 + $0xa8] sm:$0xff]
      %v1661 = vld [vmem:[%s4 + $0xb0] sm:$0xff]
      %v1662 = vld [vmem:[%s4 + $0xb8] sm:$0xff]
      %v1663 = vld [vmem:[%s4 + $0xc0] sm:$0xff]
      %v1664 = vld [vmem:[%s4 + $0xc8] sm:$0xff]
      %v1665 = vld [vmem:[%s4 + $0xd0] sm:$0xff]
      %v1666 = vld [vmem:[%s4 + $0xd8] sm:$0xff]
      %v1667 = vld [vmem:[%s4 + $0xe0] sm:$0xff]
      %v1668 = vld [vmem:[%s4 + $0xe8] sm:$0xff]
      %v1669 = vld [vmem:[%s4 + $0xf0] sm:$0xff]
      %v1670 = vld [vmem:[%s4 + $0xf8] sm:$0xff]
      %v1671 = vld [vmem:[%s4 + $0x100] sm:$0xff]
      %v1672 = vld [vmem:[%s4 + $0x108] sm:$0xff]
      %v1673 = vld [vmem:[%s4 + $0x110] sm:$0xff]
      %v1674 = vld [vmem:[%s4 + $0x118] sm:$0xff]
      %v1675 = vld [vmem:[%s5] sm:$0x1]
      %v1677 = vlaneseq
      %v1678 = vshrl.u32 %v1677, 7
      %v1679 = vsub.s32 0, %v1678
      %v1680 = vrot.slane %v1675, %v1679
      %v1683 = vsel %vm1252, %v1545, 0
      %v1686 = vsel %vm1252, %v1548, 0
      %v1689 = vsel %vm1252, %v1551, 0
      %v1692 = vsel %vm1252, %v1554, 0
      %v1695 = vsel %vm1252, %v1557, 0
      %v1698 = vsel %vm1252, %v1560, 0
      %v1701 = vsel %vm1252, %v1563, 0
      %v1704 = vsel %vm1252, %v1566, 0
      %v1707 = vsel %vm1252, %v1569, 0
      %v1710 = vsel %vm1252, %v1572, 0
      %v1713 = vsel %vm1252, %v1575, 0
      %v1716 = vsel %vm1252, %v1578, 0
      %v1719 = vsel %vm1252, %v1581, 0
      %v1722 = vsel %vm1252, %v1584, 0
      %v1725 = vsel %vm1252, %v1587, 0
      %v1728 = vsel %vm1252, %v1590, 0
      %v1731 = vsel %vm1252, %v1593, 0
      %v1734 = vsel %vm1252, %v1596, 0
      %v1737 = vsel %vm1252, %v1599, 0
      %v1740 = vsel %vm1252, %v1602, 0
      %v1743 = vsel %vm1252, %v1605, 0
      %v1746 = vsel %vm1252, %v1608, 0
      %v1749 = vsel %vm1252, %v1611, 0
      %v1752 = vsel %vm1252, %v1614, 0
      %v1755 = vsel %vm1252, %v1617, 0
      %v1758 = vsel %vm1252, %v1620, 0
      %v1761 = vsel %vm1252, %v1623, 0
      %v1764 = vsel %vm1252, %v1626, 0
      %v1767 = vsel %vm1252, %v1629, 0
      %v1770 = vsel %vm1252, %v1632, 0
      %v1773 = vsel %vm1252, %v1635, 0
      %v1776 = vsel %vm1252, %v1638, 0
      %1778 = vmatprep.subr.mxu0 0.0
      %1779 = vmatpush1.msra.mxu0 %v1639
      %1780 = vmatprep.subr.mxu0 0.0
      %1781 = vmatpush1.msra.mxu0 %v1640
      %1782 = vmatprep.subr.mxu0 0.0
      %1783 = vmatpush1.msra.mxu0 %v1641
      %1784 = vmatprep.subr.mxu0 0.0
      %1785 = vmatpush1.msra.mxu0 %v1642
      %1786 = vmatprep.subr.mxu0 0.0
      %1787 = vmatpush1.msra.mxu0 %v1643
      %1788 = vmatprep.subr.mxu0 0.0
      %1789 = vmatpush1.msra.mxu0 %v1644
      %1790 = vmatprep.subr.mxu0 0.0
      %1791 = vmatpush1.msra.mxu0 %v1645
      %1792 = vmatprep.subr.mxu0 0.0
      %1793 = vmatpush1.msra.mxu0 %v1646
      %1794 = vmatprep.subr.mxu0 0.0
      %1795 = vmatpush1.msra.mxu0 %v1647
      %1796 = vmatprep.subr.mxu0 0.0
      %1797 = vmatpush1.msra.mxu0 %v1648
      %1798 = vmatprep.subr.mxu0 0.0
      %1799 = vmatpush1.msra.mxu0 %v1649
      %1800 = vmatprep.subr.mxu0 0.0
      %1801 = vmatpush1.msra.mxu0 %v1650
      %1802 = vmatprep.subr.mxu0 0.0
      %1803 = vmatpush1.msra.mxu0 %v1651
      %1804 = vmatprep.subr.mxu0 0.0
      %1805 = vmatpush1.msra.mxu0 %v1652
      %1806 = vmatprep.subr.mxu0 0.0
      %1807 = vmatpush1.msra.mxu0 %v1653
      %1808 = vmatprep.subr.mxu0 0.0
      %1809 = vmatpush1.msra.mxu0 %v1654
      %1810 = vmatprep.subr.mxu0 0.0
      %1811 = vmatpush1.msra.mxu0 %v1655
      %1812 = vmatprep.subr.mxu0 0.0
      %1813 = vmatpush1.msra.mxu0 %v1656
      %1814 = vmatprep.subr.mxu0 0.0
      %1815 = vmatpush1.msra.mxu0 %v1657
      %1816 = vmatprep.subr.mxu0 0.0
      %1817 = vmatpush1.msra.mxu0 %v1658
      %1818 = vmatprep.subr.mxu0 0.0
      %1819 = vmatpush1.msra.mxu0 %v1659
      %1820 = vmatprep.subr.mxu0 0.0
      %1821 = vmatpush1.msra.mxu0 %v1660
      %1822 = vmatprep.subr.mxu0 0.0
      %1823 = vmatpush1.msra.mxu0 %v1661
      %1824 = vmatprep.subr.mxu0 0.0
      %1825 = vmatpush1.msra.mxu0 %v1662
      %1826 = vmatprep.subr.mxu0 0.0
      %1827 = vmatpush1.msra.mxu0 %v1663
      %1828 = vmatprep.subr.mxu0 0.0
      %1829 = vmatpush1.msra.mxu0 %v1664
      %1830 = vmatprep.subr.mxu0 0.0
      %1831 = vmatpush1.msra.mxu0 %v1665
      %1832 = vmatprep.subr.mxu0 0.0
      %1833 = vmatpush1.msra.mxu0 %v1666
      %1834 = vmatprep.subr.mxu0 0.0
      %1835 = vmatpush1.msra.mxu0 %v1667
      %1836 = vmatprep.subr.mxu0 0.0
      %1837 = vmatpush1.msra.mxu0 %v1668
      %1838 = vmatprep.subr.mxu0 0.0
      %1839 = vmatpush1.msra.mxu0 %v1669
      %1840 = vmatprep.subr.mxu0 0.0
      %1841 = vmatpush1.msra.mxu0 %v1670
      %1842 = vmatprep.mubr.f32.mxu0 %v1544
      %1843 = vmatmul.mubr.f32.gmra.mrb[0].mxu0 %v1543
      %v1844 = vpop.f32.mrb[0].mxu0
      %v1845 = vadd.f32 %v1680, %v1844
      %v1846 = vpop.f32.mrb[0].mxu0
      %1847 = vmatprep.mubr.f32.mxu0 %v1547
      %1848 = vmatmul.mubr.f32.gmra.mrb[0].mxu0 %v1546
      %v1849 = vpop.f32.mrb[0].mxu0
      %v1850 = vadd.f32 %v1680, %v1849
      %v1851 = vpop.f32.mrb[0].mxu0
      %1852 = vmatprep.mubr.f32.mxu0 %v1550
      %1853 = vmatmul.mubr.f32.gmra.mrb[0].mxu0 %v1549
      %v1854 = vpop.f32.mrb[0].mxu0
      %v1855 = vadd.f32 %v1680, %v1854
      %v1856 = vpop.f32.mrb[0].mxu0
      %1857 = vmatprep.mubr.f32.mxu0 %v1553
      %1858 = vmatmul.mubr.f32.gmra.mrb[0].mxu0 %v1552
      %v1859 = vpop.f32.mrb[0].mxu0
      %v1860 = vadd.f32 %v1680, %v1859
      %v1861 = vpop.f32.mrb[0].mxu0
      %1862 = vmatprep.mubr.f32.mxu0 %v1556
      %1863 = vmatmul.mubr.f32.gmra.mrb[0].mxu0 %v1555
      %v1864 = vpop.f32.mrb[0].mxu0
      %v1865 = vadd.f32 %v1680, %v1864
      %v1866 = vpop.f32.mrb[0].mxu0
      %1867 = vmatprep.mubr.f32.mxu0 %v1559
      %1868 = vmatmul.mubr.f32.gmra.mrb[0].mxu0 %v1558
      %v1869 = vpop.f32.mrb[0].mxu0
      %v1870 = vadd.f32 %v1680, %v1869
      %v1871 = vpop.f32.mrb[0].mxu0
      %1872 = vmatprep.mubr.f32.mxu0 %v1562
      %1873 = vmatmul.mubr.f32.gmra.mrb[0].mxu0 %v1561
      %v1874 = vpop.f32.mrb[0].mxu0
      %v1875 = vadd.f32 %v1680, %v1874
      %v1876 = vpop.f32.mrb[0].mxu0
      %1877 = vmatprep.mubr.f32.mxu0 %v1565
      %1878 = vmatmul.mubr.f32.gmra.mrb[0].mxu0 %v1564
      %v1879 = vpop.f32.mrb[0].mxu0
      %v1880 = vadd.f32 %v1680, %v1879
      %v1881 = vpop.f32.mrb[0].mxu0
      %1882 = vmatprep.mubr.f32.mxu0 %v1568
      %1883 = vmatmul.mubr.f32.gmra.mrb[0].mxu0 %v1567
      %v1884 = vpop.f32.mrb[0].mxu0
      %v1885 = vadd.f32 %v1680, %v1884
      %v1886 = vpop.f32.mrb[0].mxu0
      %1887 = vmatprep.mubr.f32.mxu0 %v1571
      %1888 = vmatmul.mubr.f32.gmra.mrb[0].mxu0 %v1570
      %v1889 = vpop.f32.mrb[0].mxu0
      %v1890 = vadd.f32 %v1680, %v1889
      %v1891 = vpop.f32.mrb[0].mxu0
      %1892 = vmatprep.mubr.f32.mxu0 %v1574
      %1893 = vmatmul.mubr.f32.gmra.mrb[0].mxu0 %v1573
      %v1894 = vpop.f32.mrb[0].mxu0
      %v1895 = vadd.f32 %v1680, %v1894
      %v1896 = vpop.f32.mrb[0].mxu0
      %1897 = vmatprep.mubr.f32.mxu0 %v1577
      %1898 = vmatmul.mubr.f32.gmra.mrb[0].mxu0 %v1576
      %v1899 = vpop.f32.mrb[0].mxu0
      %v1900 = vadd.f32 %v1680, %v1899
      %v1901 = vpop.f32.mrb[0].mxu0
      %1902 = vmatprep.mubr.f32.mxu0 %v1580
      %1903 = vmatmul.mubr.f32.gmra.mrb[0].mxu0 %v1579
      %v1904 = vpop.f32.mrb[0].mxu0
      %v1905 = vadd.f32 %v1680, %v1904
      %v1906 = vpop.f32.mrb[0].mxu0
      %1907 = vmatprep.mubr.f32.mxu0 %v1583
      %1908 = vmatmul.mubr.f32.gmra.mrb[0].mxu0 %v1582
      %v1909 = vpop.f32.mrb[0].mxu0
      %v1910 = vadd.f32 %v1680, %v1909
      %v1911 = vpop.f32.mrb[0].mxu0
      %1912 = vmatprep.mubr.f32.mxu0 %v1586
      %1913 = vmatmul.mubr.f32.gmra.mrb[0].mxu0 %v1585
      %v1914 = vpop.f32.mrb[0].mxu0
      %v1915 = vadd.f32 %v1680, %v1914
      %v1916 = vpop.f32.mrb[0].mxu0
      %1917 = vmatprep.mubr.f32.mxu0 %v1589
      %1918 = vmatmul.mubr.f32.gmra.mrb[0].mxu0 %v1588
      %v1919 = vpop.f32.mrb[0].mxu0
      %v1920 = vadd.f32 %v1680, %v1919
      %v1921 = vpop.f32.mrb[0].mxu0
      %1922 = vmatprep.mubr.f32.mxu0 %v1592
      %1923 = vmatmul.mubr.f32.gmra.mrb[0].mxu0 %v1591
      %v1924 = vpop.f32.mrb[0].mxu0
      %v1925 = vadd.f32 %v1680, %v1924
      %v1926 = vpop.f32.mrb[0].mxu0
      %1927 = vmatprep.mubr.f32.mxu0 %v1595
      %1928 = vmatmul.mubr.f32.gmra.mrb[0].mxu0 %v1594
      %v1929 = vpop.f32.mrb[0].mxu0
      %v1930 = vadd.f32 %v1680, %v1929
      %v1931 = vpop.f32.mrb[0].mxu0
      %1932 = vmatprep.mubr.f32.mxu0 %v1598
      %1933 = vmatmul.mubr.f32.gmra.mrb[0].mxu0 %v1597
      %v1934 = vpop.f32.mrb[0].mxu0
      %v1935 = vadd.f32 %v1680, %v1934
      %v1936 = vpop.f32.mrb[0].mxu0
      %1937 = vmatprep.mubr.f32.mxu0 %v1601
      %1938 = vmatmul.mubr.f32.gmra.mrb[0].mxu0 %v1600
      %v1939 = vpop.f32.mrb[0].mxu0
      %v1940 = vadd.f32 %v1680, %v1939
      %v1941 = vpop.f32.mrb[0].mxu0
      %1942 = vmatprep.mubr.f32.mxu0 %v1604
      %1943 = vmatmul.mubr.f32.gmra.mrb[0].mxu0 %v1603
      %v1944 = vpop.f32.mrb[0].mxu0
      %v1945 = vadd.f32 %v1680, %v1944
      %v1946 = vpop.f32.mrb[0].mxu0
      %1947 = vmatprep.mubr.f32.mxu0 %v1607
      %1948 = vmatmul.mubr.f32.gmra.mrb[0].mxu0 %v1606
      %v1949 = vpop.f32.mrb[0].mxu0
      %v1950 = vadd.f32 %v1680, %v1949
      %v1951 = vpop.f32.mrb[0].mxu0
      %1952 = vmatprep.mubr.f32.mxu0 %v1610
      %1953 = vmatmul.mubr.f32.gmra.mrb[0].mxu0 %v1609
      %v1954 = vpop.f32.mrb[0].mxu0
      %v1955 = vadd.f32 %v1680, %v1954
      %v1956 = vpop.f32.mrb[0].mxu0
      %1957 = vmatprep.mubr.f32.mxu0 %v1613
      %1958 = vmatmul.mubr.f32.gmra.mrb[0].mxu0 %v1612
      %v1959 = vpop.f32.mrb[0].mxu0
      %v1960 = vadd.f32 %v1680, %v1959
      %v1961 = vpop.f32.mrb[0].mxu0
      %1962 = vmatprep.mubr.f32.mxu0 %v1616
      %1963 = vmatmul.mubr.f32.gmra.mrb[0].mxu0 %v1615
      %v1964 = vpop.f32.mrb[0].mxu0
      %v1965 = vadd.f32 %v1680, %v1964
      %v1966 = vpop.f32.mrb[0].mxu0
      %1967 = vmatprep.mubr.f32.mxu0 %v1619
      %1968 = vmatmul.mubr.f32.gmra.mrb[0].mxu0 %v1618
      %v1969 = vpop.f32.mrb[0].mxu0
      %v1970 = vadd.f32 %v1680, %v1969
      %v1971 = vpop.f32.mrb[0].mxu0
      %1972 = vmatprep.mubr.f32.mxu0 %v1622
      %1973 = vmatmul.mubr.f32.gmra.mrb[0].mxu0 %v1621
      %v1974 = vpop.f32.mrb[0].mxu0
      %v1975 = vadd.f32 %v1680, %v1974
      %v1976 = vpop.f32.mrb[0].mxu0
      %1977 = vmatprep.mubr.f32.mxu0 %v1625
      %1978 = vmatmul.mubr.f32.gmra.mrb[0].mxu0 %v1624
      %v1979 = vpop.f32.mrb[0].mxu0
      %v1980 = vadd.f32 %v1680, %v1979
      %v1981 = vpop.f32.mrb[0].mxu0
      %1982 = vmatprep.mubr.f32.mxu0 %v1628
      %1983 = vmatmul.mubr.f32.gmra.mrb[0].mxu0 %v1627
      %v1984 = vpop.f32.mrb[0].mxu0
      %v1985 = vadd.f32 %v1680, %v1984
      %v1986 = vpop.f32.mrb[0].mxu0
      %1987 = vmatprep.mubr.f32.mxu0 %v1631
      %1988 = vmatmul.mubr.f32.gmra.mrb[0].mxu0 %v1630
      %v1989 = vpop.f32.mrb[0].mxu0
      %v1990 = vadd.f32 %v1680, %v1989
      %v1991 = vpop.f32.mrb[0].mxu0
      %1992 = vmatprep.mubr.f32.mxu0 %v1634
      %1993 = vmatmul.mubr.f32.gmra.mrb[0].mxu0 %v1633
      %v1994 = vpop.f32.mrb[0].mxu0
      %v1995 = vadd.f32 %v1680, %v1994
      %v1996 = vpop.f32.mrb[0].mxu0
      %1997 = vmatprep.mubr.f32.mxu0 %v1637
      %1998 = vmatmul.mubr.f32.gmra.mrb[0].mxu0 %v1636
      %v1999 = vpop.f32.mrb[0].mxu0
      %v2000 = vadd.f32 %v1680, %v1999
      %v2001 = vpop.f32.mrb[0].mxu0
      %2002 = vdwg.mxu0
      %2003 = vmatprep.subr.mxu0 0.0
      %2004 = vmatpush1.msra.mxu0 %v1671
      %2005 = vmatprep.subr.mxu0 0.0
      %2006 = vmatpush1.msra.mxu0 %v1672
      %2007 = vmatprep.subr.mxu0 0.0
      %2008 = vmatpush1.msra.mxu0 %v1673
      %2009 = vmatprep.subr.mxu0 0.0
      %2010 = vmatpush1.msra.mxu0 %v1674
      %2011 = vmatprep.subr.mxu0 0.0
      %2012 = vmatpush1.msra.mxu0 0.0
      %2013 = vmatprep.subr.mxu0 0.0
      %2014 = vmatpush1.msra.mxu0 0.0
      %2015 = vmatprep.subr.mxu0 0.0
      %2016 = vmatpush1.msra.mxu0 0.0
      %2017 = vmatprep.subr.mxu0 0.0
      %2018 = vmatpush1.msra.mxu0 0.0
      %2019 = vmatprep.subr.mxu0 0.0
      %2020 = vmatpush1.msra.mxu0 0.0
      %2021 = vmatprep.subr.mxu0 0.0
      %2022 = vmatpush1.msra.mxu0 0.0
      %2023 = vmatprep.subr.mxu0 0.0
      %2024 = vmatpush1.msra.mxu0 0.0
      %2025 = vmatprep.subr.mxu0 0.0
      %2026 = vmatpush1.msra.mxu0 0.0
      %2027 = vmatprep.subr.mxu0 0.0
      %2028 = vmatpush1.msra.mxu0 0.0
      %2029 = vmatprep.subr.mxu0 0.0
      %2030 = vmatpush1.msra.mxu0 0.0
      %2031 = vmatprep.subr.mxu0 0.0
      %2032 = vmatpush1.msra.mxu0 0.0
      %2033 = vmatprep.subr.mxu0 0.0
      %2034 = vmatpush1.msra.mxu0 0.0
      %2035 = vmatprep.subr.mxu0 0.0
      %2036 = vmatpush1.msra.mxu0 0.0
      %2037 = vmatprep.subr.mxu0 0.0
      %2038 = vmatpush1.msra.mxu0 0.0
      %2039 = vmatprep.subr.mxu0 0.0
      %2040 = vmatpush1.msra.mxu0 0.0
      %2041 = vmatprep.subr.mxu0 0.0
      %2042 = vmatpush1.msra.mxu0 0.0
      %2043 = vmatprep.subr.mxu0 0.0
      %2044 = vmatpush1.msra.mxu0 0.0
      %2045 = vmatprep.subr.mxu0 0.0
      %2046 = vmatpush1.msra.mxu0 0.0
      %2047 = vmatprep.subr.mxu0 0.0
      %2048 = vmatpush1.msra.mxu0 0.0
      %2049 = vmatprep.subr.mxu0 0.0
      %2050 = vmatpush1.msra.mxu0 0.0
      %2051 = vmatprep.subr.mxu0 0.0
      %2052 = vmatpush1.msra.mxu0 0.0
      %2053 = vmatprep.subr.mxu0 0.0
      %2054 = vmatpush1.msra.mxu0 0.0
      %2055 = vmatprep.subr.mxu0 0.0
      %2056 = vmatpush1.msra.mxu0 0.0
      %2057 = vmatprep.subr.mxu0 0.0
      %2058 = vmatpush1.msra.mxu0 0.0
      %2059 = vmatprep.subr.mxu0 0.0
      %2060 = vmatpush1.msra.mxu0 0.0
      %2061 = vmatprep.subr.mxu0 0.0
      %2062 = vmatpush1.msra.mxu0 0.0
      %2063 = vmatprep.subr.mxu0 0.0
      %2064 = vmatpush1.msra.mxu0 0.0
      %2065 = vmatprep.subr.mxu0 0.0
      %2066 = vmatpush1.msra.mxu0 0.0
      %2067 = vmatprep.mubr.f32.mxu0 0.0
      %2068 = vmatmul.mubr.f32.gmra.mrb[0].mxu0 %v1683
      %v2069 = vpop.f32.mrb[0].mxu0
      %v2070 = vadd.f32 %v1845, %v2069
      %v2071 = vpop.f32.mrb[0].mxu0
      %2072 = vmatprep.mubr.f32.mxu0 0.0
      %2073 = vmatmul.mubr.f32.gmra.mrb[0].mxu0 %v1686
      %v2074 = vpop.f32.mrb[0].mxu0
      %v2075 = vadd.f32 %v1850, %v2074
      %v2076 = vpop.f32.mrb[0].mxu0
      %2077 = vmatprep.mubr.f32.mxu0 0.0
      %2078 = vmatmul.mubr.f32.gmra.mrb[0].mxu0 %v1689
      %v2079 = vpop.f32.mrb[0].mxu0
      %v2080 = vadd.f32 %v1855, %v2079
      %v2081 = vpop.f32.mrb[0].mxu0
      %2082 = vmatprep.mubr.f32.mxu0 0.0
      %2083 = vmatmul.mubr.f32.gmra.mrb[0].mxu0 %v1692
      %v2084 = vpop.f32.mrb[0].mxu0
      %v2085 = vadd.f32 %v1860, %v2084
      %v2086 = vpop.f32.mrb[0].mxu0
      %2087 = vmatprep.mubr.f32.mxu0 0.0
      %2088 = vmatmul.mubr.f32.gmra.mrb[0].mxu0 %v1695
      %v2089 = vpop.f32.mrb[0].mxu0
      %v2090 = vadd.f32 %v1865, %v2089
      %v2091 = vpop.f32.mrb[0].mxu0
      %2092 = vmatprep.mubr.f32.mxu0 0.0
      %2093 = vmatmul.mubr.f32.gmra.mrb[0].mxu0 %v1698
      %v2094 = vpop.f32.mrb[0].mxu0
      %v2095 = vadd.f32 %v1870, %v2094
      %v2096 = vpop.f32.mrb[0].mxu0
      %2097 = vmatprep.mubr.f32.mxu0 0.0
      %2098 = vmatmul.mubr.f32.gmra.mrb[0].mxu0 %v1701
      %v2099 = vpop.f32.mrb[0].mxu0
      %v2100 = vadd.f32 %v1875, %v2099
      %v2101 = vpop.f32.mrb[0].mxu0
      %2102 = vmatprep.mubr.f32.mxu0 0.0
      %2103 = vmatmul.mubr.f32.gmra.mrb[0].mxu0 %v1704
      %v2104 = vpop.f32.mrb[0].mxu0
      %v2105 = vadd.f32 %v1880, %v2104
      %v2106 = vpop.f32.mrb[0].mxu0
      %2107 = vmatprep.mubr.f32.mxu0 0.0
      %2108 = vmatmul.mubr.f32.gmra.mrb[0].mxu0 %v1707
      %v2109 = vpop.f32.mrb[0].mxu0
      %v2110 = vadd.f32 %v1885, %v2109
      %v2111 = vpop.f32.mrb[0].mxu0
      %2112 = vmatprep.mubr.f32.mxu0 0.0
      %2113 = vmatmul.mubr.f32.gmra.mrb[0].mxu0 %v1710
      %v2114 = vpop.f32.mrb[0].mxu0
      %v2115 = vadd.f32 %v1890, %v2114
      %v2116 = vpop.f32.mrb[0].mxu0
      %2117 = vmatprep.mubr.f32.mxu0 0.0
      %2118 = vmatmul.mubr.f32.gmra.mrb[0].mxu0 %v1713
      %v2119 = vpop.f32.mrb[0].mxu0
      %v2120 = vadd.f32 %v1895, %v2119
      %v2121 = vpop.f32.mrb[0].mxu0
      %2122 = vmatprep.mubr.f32.mxu0 0.0
      %2123 = vmatmul.mubr.f32.gmra.mrb[0].mxu0 %v1716
      %v2124 = vpop.f32.mrb[0].mxu0
      %v2125 = vadd.f32 %v1900, %v2124
      %v2126 = vpop.f32.mrb[0].mxu0
      %2127 = vmatprep.mubr.f32.mxu0 0.0
      %2128 = vmatmul.mubr.f32.gmra.mrb[0].mxu0 %v1719
      %v2129 = vpop.f32.mrb[0].mxu0
      %v2130 = vadd.f32 %v1905, %v2129
      %v2131 = vpop.f32.mrb[0].mxu0
      %2132 = vmatprep.mubr.f32.mxu0 0.0
      %2133 = vmatmul.mubr.f32.gmra.mrb[0].mxu0 %v1722
      %v2134 = vpop.f32.mrb[0].mxu0
      %v2135 = vadd.f32 %v1910, %v2134
      %v2136 = vpop.f32.mrb[0].mxu0
      %2137 = vmatprep.mubr.f32.mxu0 0.0
      %2138 = vmatmul.mubr.f32.gmra.mrb[0].mxu0 %v1725
      %v2139 = vpop.f32.mrb[0].mxu0
      %v2140 = vadd.f32 %v1915, %v2139
      %v2141 = vpop.f32.mrb[0].mxu0
      %2142 = vmatprep.mubr.f32.mxu0 0.0
      %2143 = vmatmul.mubr.f32.gmra.mrb[0].mxu0 %v1728
      %v2144 = vpop.f32.mrb[0].mxu0
      %v2145 = vadd.f32 %v1920, %v2144
      %v2146 = vpop.f32.mrb[0].mxu0
      %2147 = vmatprep.mubr.f32.mxu0 0.0
      %2148 = vmatmul.mubr.f32.gmra.mrb[0].mxu0 %v1731
      %v2149 = vpop.f32.mrb[0].mxu0
      %v2150 = vadd.f32 %v1925, %v2149
      %v2151 = vpop.f32.mrb[0].mxu0
      %2152 = vmatprep.mubr.f32.mxu0 0.0
      %2153 = vmatmul.mubr.f32.gmra.mrb[0].mxu0 %v1734
      %v2154 = vpop.f32.mrb[0].mxu0
      %v2155 = vadd.f32 %v1930, %v2154
      %v2156 = vpop.f32.mrb[0].mxu0
      %2157 = vmatprep.mubr.f32.mxu0 0.0
      %2158 = vmatmul.mubr.f32.gmra.mrb[0].mxu0 %v1737
      %v2159 = vpop.f32.mrb[0].mxu0
      %v2160 = vadd.f32 %v1935, %v2159
      %v2161 = vpop.f32.mrb[0].mxu0
      %2162 = vmatprep.mubr.f32.mxu0 0.0
      %2163 = vmatmul.mubr.f32.gmra.mrb[0].mxu0 %v1740
      %v2164 = vpop.f32.mrb[0].mxu0
      %v2165 = vadd.f32 %v1940, %v2164
      %v2166 = vpop.f32.mrb[0].mxu0
      %2167 = vmatprep.mubr.f32.mxu0 0.0
      %2168 = vmatmul.mubr.f32.gmra.mrb[0].mxu0 %v1743
      %v2169 = vpop.f32.mrb[0].mxu0
      %v2170 = vadd.f32 %v1945, %v2169
      %v2171 = vpop.f32.mrb[0].mxu0
      %2172 = vmatprep.mubr.f32.mxu0 0.0
      %2173 = vmatmul.mubr.f32.gmra.mrb[0].mxu0 %v1746
      %v2174 = vpop.f32.mrb[0].mxu0
      %v2175 = vadd.f32 %v1950, %v2174
      %v2176 = vpop.f32.mrb[0].mxu0
      %2177 = vmatprep.mubr.f32.mxu0 0.0
      %2178 = vmatmul.mubr.f32.gmra.mrb[0].mxu0 %v1749
      %v2179 = vpop.f32.mrb[0].mxu0
      %v2180 = vadd.f32 %v1955, %v2179
      %v2181 = vpop.f32.mrb[0].mxu0
      %2182 = vmatprep.mubr.f32.mxu0 0.0
      %2183 = vmatmul.mubr.f32.gmra.mrb[0].mxu0 %v1752
      %v2184 = vpop.f32.mrb[0].mxu0
      %v2185 = vadd.f32 %v1960, %v2184
      %v2186 = vpop.f32.mrb[0].mxu0
      %2187 = vmatprep.mubr.f32.mxu0 0.0
      %2188 = vmatmul.mubr.f32.gmra.mrb[0].mxu0 %v1755
      %v2189 = vpop.f32.mrb[0].mxu0
      %v2190 = vadd.f32 %v1965, %v2189
      %v2191 = vpop.f32.mrb[0].mxu0
      %2192 = vmatprep.mubr.f32.mxu0 0.0
      %2193 = vmatmul.mubr.f32.gmra.mrb[0].mxu0 %v1758
      %v2194 = vpop.f32.mrb[0].mxu0
      %v2195 = vadd.f32 %v1970, %v2194
      %v2196 = vpop.f32.mrb[0].mxu0
      %2197 = vmatprep.mubr.f32.mxu0 0.0
      %2198 = vmatmul.mubr.f32.gmra.mrb[0].mxu0 %v1761
      %v2199 = vpop.f32.mrb[0].mxu0
      %v2200 = vadd.f32 %v1975, %v2199
      %v2201 = vpop.f32.mrb[0].mxu0
      %2202 = vmatprep.mubr.f32.mxu0 0.0
      %2203 = vmatmul.mubr.f32.gmra.mrb[0].mxu0 %v1764
      %v2204 = vpop.f32.mrb[0].mxu0
      %v2205 = vadd.f32 %v1980, %v2204
      %v2206 = vpop.f32.mrb[0].mxu0
      %2207 = vmatprep.mubr.f32.mxu0 0.0
      %2208 = vmatmul.mubr.f32.gmra.mrb[0].mxu0 %v1767
      %v2209 = vpop.f32.mrb[0].mxu0
      %v2210 = vadd.f32 %v1985, %v2209
      %v2211 = vpop.f32.mrb[0].mxu0
      %2212 = vmatprep.mubr.f32.mxu0 0.0
      %2213 = vmatmul.mubr.f32.gmra.mrb[0].mxu0 %v1770
      %v2214 = vpop.f32.mrb[0].mxu0
      %v2215 = vadd.f32 %v1990, %v2214
      %v2216 = vpop.f32.mrb[0].mxu0
      %2217 = vmatprep.mubr.f32.mxu0 0.0
      %2218 = vmatmul.mubr.f32.gmra.mrb[0].mxu0 %v1773
      %v2219 = vpop.f32.mrb[0].mxu0
      %v2220 = vadd.f32 %v1995, %v2219
      %v2221 = vpop.f32.mrb[0].mxu0
      %2222 = vmatprep.mubr.f32.mxu0 0.0
      %2223 = vmatmul.mubr.f32.gmra.mrb[0].mxu0 %v1776
      %v2224 = vpop.f32.mrb[0].mxu0
      %v2225 = vadd.f32 %v2000, %v2224
      %v2226 = vpop.f32.mrb[0].mxu0
      %2227 = vdwg.mxu0
      %v2228 = vxor.u32 %v2070, 2147483648
      %v2229 = vxor.u32 %v2075, 2147483648
      %v2230 = vxor.u32 %v2080, 2147483648
      %v2231 = vxor.u32 %v2085, 2147483648
      %v2232 = vxor.u32 %v2090, 2147483648
      %v2233 = vxor.u32 %v2095, 2147483648
      %v2234 = vxor.u32 %v2100, 2147483648
      %v2235 = vxor.u32 %v2105, 2147483648
      %v2236 = vxor.u32 %v2110, 2147483648
      %v2237 = vxor.u32 %v2115, 2147483648
      %v2238 = vxor.u32 %v2120, 2147483648
      %v2239 = vxor.u32 %v2125, 2147483648
      %v2240 = vxor.u32 %v2130, 2147483648
      %v2241 = vxor.u32 %v2135, 2147483648
      %v2242 = vxor.u32 %v2140, 2147483648
      %v2243 = vxor.u32 %v2145, 2147483648
      %v2244 = vxor.u32 %v2150, 2147483648
      %v2245 = vxor.u32 %v2155, 2147483648
      %v2246 = vxor.u32 %v2160, 2147483648
      %v2247 = vxor.u32 %v2165, 2147483648
      %v2248 = vxor.u32 %v2170, 2147483648
      %v2249 = vxor.u32 %v2175, 2147483648
      %v2250 = vxor.u32 %v2180, 2147483648
      %v2251 = vxor.u32 %v2185, 2147483648
      %v2252 = vxor.u32 %v2190, 2147483648
      %v2253 = vxor.u32 %v2195, 2147483648
      %v2254 = vxor.u32 %v2200, 2147483648
      %v2255 = vxor.u32 %v2205, 2147483648
      %v2256 = vxor.u32 %v2210, 2147483648
      %v2257 = vxor.u32 %v2215, 2147483648
      %v2258 = vxor.u32 %v2220, 2147483648
      %v2259 = vxor.u32 %v2225, 2147483648
      %v2260 = vmul.f32 %v2228, 1.442695
      %v2261 = vpow.pop %v2260
      %v2262 = vmul.f32 %v2229, 1.442695
      %v2263 = vpow.pop %v2262
      %v2264 = vmul.f32 %v2230, 1.442695
      %v2265 = vpow.pop %v2264
      %v2266 = vmul.f32 %v2231, 1.442695
      %v2267 = vpow.pop %v2266
      %v2268 = vmul.f32 %v2232, 1.442695
      %v2269 = vpow.pop %v2268
      %v2270 = vmul.f32 %v2233, 1.442695
      %v2271 = vpow.pop %v2270
      %v2272 = vmul.f32 %v2234, 1.442695
      %v2273 = vpow.pop %v2272
      %v2274 = vmul.f32 %v2235, 1.442695
      %v2275 = vpow.pop %v2274
      %v2276 = vmul.f32 %v2236, 1.442695
      %v2277 = vpow.pop %v2276
      %v2278 = vmul.f32 %v2237, 1.442695
      %v2279 = vpow.pop %v2278
      %v2280 = vmul.f32 %v2238, 1.442695
      %v2281 = vpow.pop %v2280
      %v2282 = vmul.f32 %v2239, 1.442695
      %v2283 = vpow.pop %v2282
      %v2284 = vmul.f32 %v2240, 1.442695
      %v2285 = vpow.pop %v2284
      %v2286 = vmul.f32 %v2241, 1.442695
      %v2287 = vpow.pop %v2286
      %v2288 = vmul.f32 %v2242, 1.442695
      %v2289 = vpow.pop %v2288
      %v2290 = vmul.f32 %v2243, 1.442695
      %v2291 = vpow.pop %v2290
      %v2292 = vmul.f32 %v2244, 1.442695
      %v2293 = vpow.pop %v2292
      %v2294 = vmul.f32 %v2245, 1.442695
      %v2295 = vpow.pop %v2294
      %v2296 = vmul.f32 %v2246, 1.442695
      %v2297 = vpow.pop %v2296
      %v2298 = vmul.f32 %v2247, 1.442695
      %v2299 = vpow.pop %v2298
      %v2300 = vmul.f32 %v2248, 1.442695
      %v2301 = vpow.pop %v2300
      %v2302 = vmul.f32 %v2249, 1.442695
      %v2303 = vpow.pop %v2302
      %v2304 = vmul.f32 %v2250, 1.442695
      %v2305 = vpow.pop %v2304
      %v2306 = vmul.f32 %v2251, 1.442695
      %v2307 = vpow.pop %v2306
      %v2308 = vmul.f32 %v2252, 1.442695
      %v2309 = vpow.pop %v2308
      %v2310 = vmul.f32 %v2253, 1.442695
      %v2311 = vpow.pop %v2310
      %v2312 = vmul.f32 %v2254, 1.442695
      %v2313 = vpow.pop %v2312
      %v2314 = vmul.f32 %v2255, 1.442695
      %v2315 = vpow.pop %v2314
      %v2316 = vmul.f32 %v2256, 1.442695
      %v2317 = vpow.pop %v2316
      %v2318 = vmul.f32 %v2257, 1.442695
      %v2319 = vpow.pop %v2318
      %v2320 = vmul.f32 %v2258, 1.442695
      %v2321 = vpow.pop %v2320
      %v2322 = vmul.f32 %v2259, 1.442695
      %v2323 = vpow.pop %v2322
      %v2324 = vadd.f32 %v2261, 1.0
      %v2325 = vadd.f32 %v2263, 1.0
      %v2326 = vadd.f32 %v2265, 1.0
      %v2327 = vadd.f32 %v2267, 1.0
      %v2328 = vadd.f32 %v2269, 1.0
      %v2329 = vadd.f32 %v2271, 1.0
      %v2330 = vadd.f32 %v2273, 1.0
      %v2331 = vadd.f32 %v2275, 1.0
      %v2332 = vadd.f32 %v2277, 1.0
      %v2333 = vadd.f32 %v2279, 1.0
      %v2334 = vadd.f32 %v2281, 1.0
      %v2335 = vadd.f32 %v2283, 1.0
      %v2336 = vadd.f32 %v2285, 1.0
      %v2337 = vadd.f32 %v2287, 1.0
      %v2338 = vadd.f32 %v2289, 1.0
      %v2339 = vadd.f32 %v2291, 1.0
      %v2340 = vadd.f32 %v2293, 1.0
      %v2341 = vadd.f32 %v2295, 1.0
      %v2342 = vadd.f32 %v2297, 1.0
      %v2343 = vadd.f32 %v2299, 1.0
      %v2344 = vadd.f32 %v2301, 1.0
      %v2345 = vadd.f32 %v2303, 1.0
      %v2346 = vadd.f32 %v2305, 1.0
      %v2347 = vadd.f32 %v2307, 1.0
      %v2348 = vadd.f32 %v2309, 1.0
      %v2349 = vadd.f32 %v2311, 1.0
      %v2350 = vadd.f32 %v2313, 1.0
      %v2351 = vadd.f32 %v2315, 1.0
      %v2352 = vadd.f32 %v2317, 1.0
      %v2353 = vadd.f32 %v2319, 1.0
      %v2354 = vadd.f32 %v2321, 1.0
      %v2355 = vadd.f32 %v2323, 1.0
      %v2356 = vrcp.pop %v2324
      %v2357 = vmul.f32 1.0, %v2356
      %v2358 = vrcp.pop %v2325
      %v2359 = vmul.f32 1.0, %v2358
      %v2360 = vrcp.pop %v2326
      %v2361 = vmul.f32 1.0, %v2360
      %v2362 = vrcp.pop %v2327
      %v2363 = vmul.f32 1.0, %v2362
      %v2364 = vrcp.pop %v2328
      %v2365 = vmul.f32 1.0, %v2364
      %v2366 = vrcp.pop %v2329
      %v2367 = vmul.f32 1.0, %v2366
      %v2368 = vrcp.pop %v2330
      %v2369 = vmul.f32 1.0, %v2368
      %v2370 = vrcp.pop %v2331
      %v2371 = vmul.f32 1.0, %v2370
      %v2372 = vrcp.pop %v2332
      %v2373 = vmul.f32 1.0, %v2372
      %v2374 = vrcp.pop %v2333
      %v2375 = vmul.f32 1.0, %v2374
      %v2376 = vrcp.pop %v2334
      %v2377 = vmul.f32 1.0, %v2376
      %v2378 = vrcp.pop %v2335
      %v2379 = vmul.f32 1.0, %v2378
      %v2380 = vrcp.pop %v2336
      %v2381 = vmul.f32 1.0, %v2380
      %v2382 = vrcp.pop %v2337
      %v2383 = vmul.f32 1.0, %v2382
      %v2384 = vrcp.pop %v2338
      %v2385 = vmul.f32 1.0, %v2384
      %v2386 = vrcp.pop %v2339
      %v2387 = vmul.f32 1.0, %v2386
      %v2388 = vrcp.pop %v2340
      %v2389 = vmul.f32 1.0, %v2388
      %v2390 = vrcp.pop %v2341
      %v2391 = vmul.f32 1.0, %v2390
      %v2392 = vrcp.pop %v2342
      %v2393 = vmul.f32 1.0, %v2392
      %v2394 = vrcp.pop %v2343
      %v2395 = vmul.f32 1.0, %v2394
      %v2396 = vrcp.pop %v2344
      %v2397 = vmul.f32 1.0, %v2396
      %v2398 = vrcp.pop %v2345
      %v2399 = vmul.f32 1.0, %v2398
      %v2400 = vrcp.pop %v2346
      %v2401 = vmul.f32 1.0, %v2400
      %v2402 = vrcp.pop %v2347
      %v2403 = vmul.f32 1.0, %v2402
      %v2404 = vrcp.pop %v2348
      %v2405 = vmul.f32 1.0, %v2404
      %v2406 = vrcp.pop %v2349
      %v2407 = vmul.f32 1.0, %v2406
      %v2408 = vrcp.pop %v2350
      %v2409 = vmul.f32 1.0, %v2408
      %v2410 = vrcp.pop %v2351
      %v2411 = vmul.f32 1.0, %v2410
      %v2412 = vrcp.pop %v2352
      %v2413 = vmul.f32 1.0, %v2412
      %v2414 = vrcp.pop %v2353
      %v2415 = vmul.f32 1.0, %v2414
      %v2416 = vrcp.pop %v2354
      %v2417 = vmul.f32 1.0, %v2416
      %v2418 = vrcp.pop %v2355
      %v2419 = vmul.f32 1.0, %v2418
      %v2420 = vmul.f32 %v2070, %v2357
      %v2421 = vmul.f32 %v2075, %v2359
      %v2422 = vmul.f32 %v2080, %v2361
      %v2423 = vmul.f32 %v2085, %v2363
      %v2424 = vmul.f32 %v2090, %v2365
      %v2425 = vmul.f32 %v2095, %v2367
      %v2426 = vmul.f32 %v2100, %v2369
      %v2427 = vmul.f32 %v2105, %v2371
      %v2428 = vmul.f32 %v2110, %v2373
      %v2429 = vmul.f32 %v2115, %v2375
      %v2430 = vmul.f32 %v2120, %v2377
      %v2431 = vmul.f32 %v2125, %v2379
      %v2432 = vmul.f32 %v2130, %v2381
      %v2433 = vmul.f32 %v2135, %v2383
      %v2434 = vmul.f32 %v2140, %v2385
      %v2435 = vmul.f32 %v2145, %v2387
      %v2436 = vmul.f32 %v2150, %v2389
      %v2437 = vmul.f32 %v2155, %v2391
      %v2438 = vmul.f32 %v2160, %v2393
      %v2439 = vmul.f32 %v2165, %v2395
      %v2440 = vmul.f32 %v2170, %v2397
      %v2441 = vmul.f32 %v2175, %v2399
      %v2442 = vmul.f32 %v2180, %v2401
      %v2443 = vmul.f32 %v2185, %v2403
      %v2444 = vmul.f32 %v2190, %v2405
      %v2445 = vmul.f32 %v2195, %v2407
      %v2446 = vmul.f32 %v2200, %v2409
      %v2447 = vmul.f32 %v2205, %v2411
      %v2448 = vmul.f32 %v2210, %v2413
      %v2449 = vmul.f32 %v2215, %v2415
      %v2450 = vmul.f32 %v2220, %v2417
      %v2451 = vmul.f32 %v2225, %v2419
      %v2452 = vld [vmem:[%s6] sm:$0xff]
      %v2453 = vld [vmem:[%s6 + $0x8] sm:$0xff]
      %v2454 = vld [vmem:[%s6 + $0x10] sm:$0xff]
      %v2455 = vld [vmem:[%s6 + $0x18] sm:$0xff]
      %v2457 = vsel %vm1252, %v2420, 0
      %v2460 = vsel %vm1252, %v2421, 0
      %v2463 = vsel %vm1252, %v2422, 0
      %v2466 = vsel %vm1252, %v2423, 0
      %v2469 = vsel %vm1252, %v2424, 0
      %v2472 = vsel %vm1252, %v2425, 0
      %v2475 = vsel %vm1252, %v2426, 0
      %v2478 = vsel %vm1252, %v2427, 0
      %v2481 = vsel %vm1252, %v2428, 0
      %v2484 = vsel %vm1252, %v2429, 0
      %v2487 = vsel %vm1252, %v2430, 0
      %v2490 = vsel %vm1252, %v2431, 0
      %v2493 = vsel %vm1252, %v2432, 0
      %v2496 = vsel %vm1252, %v2433, 0
      %v2499 = vsel %vm1252, %v2434, 0
      %v2502 = vsel %vm1252, %v2435, 0
      %v2505 = vsel %vm1252, %v2436, 0
      %v2508 = vsel %vm1252, %v2437, 0
      %v2511 = vsel %vm1252, %v2438, 0
      %v2514 = vsel %vm1252, %v2439, 0
      %v2517 = vsel %vm1252, %v2440, 0
      %v2520 = vsel %vm1252, %v2441, 0
      %v2523 = vsel %vm1252, %v2442, 0
      %v2526 = vsel %vm1252, %v2443, 0
      %v2529 = vsel %vm1252, %v2444, 0
      %v2532 = vsel %vm1252, %v2445, 0
      %v2535 = vsel %vm1252, %v2446, 0
      %v2538 = vsel %vm1252, %v2447, 0
      %v2541 = vsel %vm1252, %v2448, 0
      %v2544 = vsel %vm1252, %v2449, 0
      %v2547 = vsel %vm1252, %v2450, 0
      %v2550 = vsel %vm1252, %v2451, 0
      %2552 = vmatprep.subr.mxu0 0.0
      %2553 = vmatpush1.msra.mxu0 %v2452
      %2554 = vmatprep.subr.mxu0 0.0
      %2555 = vmatpush1.msra.mxu0 %v2453
      %2556 = vmatprep.subr.mxu0 0.0
      %2557 = vmatpush1.msra.mxu0 %v2454
      %2558 = vmatprep.subr.mxu0 0.0
      %2559 = vmatpush1.msra.mxu0 %v2455
      %2560 = vmatprep.subr.mxu0 0.0
      %2561 = vmatpush1.msra.mxu0 0.0
      %2562 = vmatprep.subr.mxu0 0.0
      %2563 = vmatpush1.msra.mxu0 0.0
      %2564 = vmatprep.subr.mxu0 0.0
      %2565 = vmatpush1.msra.mxu0 0.0
      %2566 = vmatprep.subr.mxu0 0.0
      %2567 = vmatpush1.msra.mxu0 0.0
      %2568 = vmatprep.subr.mxu0 0.0
      %2569 = vmatpush1.msra.mxu0 0.0
      %2570 = vmatprep.subr.mxu0 0.0
      %2571 = vmatpush1.msra.mxu0 0.0
      %2572 = vmatprep.subr.mxu0 0.0
      %2573 = vmatpush1.msra.mxu0 0.0
      %2574 = vmatprep.subr.mxu0 0.0
      %2575 = vmatpush1.msra.mxu0 0.0
      %2576 = vmatprep.subr.mxu0 0.0
      %2577 = vmatpush1.msra.mxu0 0.0
      %2578 = vmatprep.subr.mxu0 0.0
      %2579 = vmatpush1.msra.mxu0 0.0
      %2580 = vmatprep.subr.mxu0 0.0
      %2581 = vmatpush1.msra.mxu0 0.0
      %2582 = vmatprep.subr.mxu0 0.0
      %2583 = vmatpush1.msra.mxu0 0.0
      %2584 = vmatprep.subr.mxu0 0.0
      %2585 = vmatpush1.msra.mxu0 0.0
      %2586 = vmatprep.subr.mxu0 0.0
      %2587 = vmatpush1.msra.mxu0 0.0
      %2588 = vmatprep.subr.mxu0 0.0
      %2589 = vmatpush1.msra.mxu0 0.0
      %2590 = vmatprep.subr.mxu0 0.0
      %2591 = vmatpush1.msra.mxu0 0.0
      %2592 = vmatprep.subr.mxu0 0.0
      %2593 = vmatpush1.msra.mxu0 0.0
      %2594 = vmatprep.subr.mxu0 0.0
      %2595 = vmatpush1.msra.mxu0 0.0
      %2596 = vmatprep.subr.mxu0 0.0
      %2597 = vmatpush1.msra.mxu0 0.0
      %2598 = vmatprep.subr.mxu0 0.0
      %2599 = vmatpush1.msra.mxu0 0.0
      %2600 = vmatprep.subr.mxu0 0.0
      %2601 = vmatpush1.msra.mxu0 0.0
      %2602 = vmatprep.subr.mxu0 0.0
      %2603 = vmatpush1.msra.mxu0 0.0
      %2604 = vmatprep.subr.mxu0 0.0
      %2605 = vmatpush1.msra.mxu0 0.0
      %2606 = vmatprep.subr.mxu0 0.0
      %2607 = vmatpush1.msra.mxu0 0.0
      %2608 = vmatprep.subr.mxu0 0.0
      %2609 = vmatpush1.msra.mxu0 0.0
      %2610 = vmatprep.subr.mxu0 0.0
      %2611 = vmatpush1.msra.mxu0 0.0
      %2612 = vmatprep.subr.mxu0 0.0
      %2613 = vmatpush1.msra.mxu0 0.0
      %2614 = vmatprep.subr.mxu0 0.0
      %2615 = vmatpush1.msra.mxu0 0.0
      %2616 = vmatprep.mubr.f32.mxu0 0.0
      %2617 = vmatmul.mubr.f32.gmra.mrb[0].mxu0 %v2457
      %v2618 = vpop.f32.mrb[0].mxu0
      %v2619 = vadd.f32 0.0, %v2618
      %v2620 = vpop.f32.mrb[0].mxu0
      %2621 = vmatprep.mubr.f32.mxu0 0.0
      %2622 = vmatmul.mubr.f32.gmra.mrb[0].mxu0 %v2460
      %v2623 = vpop.f32.mrb[0].mxu0
      %v2624 = vadd.f32 0.0, %v2623
      %v2625 = vpop.f32.mrb[0].mxu0
      %2626 = vmatprep.mubr.f32.mxu0 0.0
      %2627 = vmatmul.mubr.f32.gmra.mrb[0].mxu0 %v2463
      %v2628 = vpop.f32.mrb[0].mxu0
      %v2629 = vadd.f32 0.0, %v2628
      %v2630 = vpop.f32.mrb[0].mxu0
      %2631 = vmatprep.mubr.f32.mxu0 0.0
      %2632 = vmatmul.mubr.f32.gmra.mrb[0].mxu0 %v2466
      %v2633 = vpop.f32.mrb[0].mxu0
      %v2634 = vadd.f32 0.0, %v2633
      %v2635 = vpop.f32.mrb[0].mxu0
      %2636 = vmatprep.mubr.f32.mxu0 0.0
      %2637 = vmatmul.mubr.f32.gmra.mrb[0].mxu0 %v2469
      %v2638 = vpop.f32.mrb[0].mxu0
      %v2639 = vadd.f32 0.0, %v2638
      %v2640 = vpop.f32.mrb[0].mxu0
      %2641 = vmatprep.mubr.f32.mxu0 0.0
      %2642 = vmatmul.mubr.f32.gmra.mrb[0].mxu0 %v2472
      %v2643 = vpop.f32.mrb[0].mxu0
      %v2644 = vadd.f32 0.0, %v2643
      %v2645 = vpop.f32.mrb[0].mxu0
      %2646 = vmatprep.mubr.f32.mxu0 0.0
      %2647 = vmatmul.mubr.f32.gmra.mrb[0].mxu0 %v2475
      %v2648 = vpop.f32.mrb[0].mxu0
      %v2649 = vadd.f32 0.0, %v2648
      %v2650 = vpop.f32.mrb[0].mxu0
      %2651 = vmatprep.mubr.f32.mxu0 0.0
      %2652 = vmatmul.mubr.f32.gmra.mrb[0].mxu0 %v2478
      %v2653 = vpop.f32.mrb[0].mxu0
      %v2654 = vadd.f32 0.0, %v2653
      %v2655 = vpop.f32.mrb[0].mxu0
      %2656 = vmatprep.mubr.f32.mxu0 0.0
      %2657 = vmatmul.mubr.f32.gmra.mrb[0].mxu0 %v2481
      %v2658 = vpop.f32.mrb[0].mxu0
      %v2659 = vadd.f32 0.0, %v2658
      %v2660 = vpop.f32.mrb[0].mxu0
      %2661 = vmatprep.mubr.f32.mxu0 0.0
      %2662 = vmatmul.mubr.f32.gmra.mrb[0].mxu0 %v2484
      %v2663 = vpop.f32.mrb[0].mxu0
      %v2664 = vadd.f32 0.0, %v2663
      %v2665 = vpop.f32.mrb[0].mxu0
      %2666 = vmatprep.mubr.f32.mxu0 0.0
      %2667 = vmatmul.mubr.f32.gmra.mrb[0].mxu0 %v2487
      %v2668 = vpop.f32.mrb[0].mxu0
      %v2669 = vadd.f32 0.0, %v2668
      %v2670 = vpop.f32.mrb[0].mxu0
      %2671 = vmatprep.mubr.f32.mxu0 0.0
      %2672 = vmatmul.mubr.f32.gmra.mrb[0].mxu0 %v2490
      %v2673 = vpop.f32.mrb[0].mxu0
      %v2674 = vadd.f32 0.0, %v2673
      %v2675 = vpop.f32.mrb[0].mxu0
      %2676 = vmatprep.mubr.f32.mxu0 0.0
      %2677 = vmatmul.mubr.f32.gmra.mrb[0].mxu0 %v2493
      %v2678 = vpop.f32.mrb[0].mxu0
      %v2679 = vadd.f32 0.0, %v2678
      %v2680 = vpop.f32.mrb[0].mxu0
      %2681 = vmatprep.mubr.f32.mxu0 0.0
      %2682 = vmatmul.mubr.f32.gmra.mrb[0].mxu0 %v2496
      %v2683 = vpop.f32.mrb[0].mxu0
      %v2684 = vadd.f32 0.0, %v2683
      %v2685 = vpop.f32.mrb[0].mxu0
      %2686 = vmatprep.mubr.f32.mxu0 0.0
      %2687 = vmatmul.mubr.f32.gmra.mrb[0].mxu0 %v2499
      %v2688 = vpop.f32.mrb[0].mxu0
      %v2689 = vadd.f32 0.0, %v2688
      %v2690 = vpop.f32.mrb[0].mxu0
      %2691 = vmatprep.mubr.f32.mxu0 0.0
      %2692 = vmatmul.mubr.f32.gmra.mrb[0].mxu0 %v2502
      %v2693 = vpop.f32.mrb[0].mxu0
      %v2694 = vadd.f32 0.0, %v2693
      %v2695 = vpop.f32.mrb[0].mxu0
      %2696 = vmatprep.mubr.f32.mxu0 0.0
      %2697 = vmatmul.mubr.f32.gmra.mrb[0].mxu0 %v2505
      %v2698 = vpop.f32.mrb[0].mxu0
      %v2699 = vadd.f32 0.0, %v2698
      %v2700 = vpop.f32.mrb[0].mxu0
      %2701 = vmatprep.mubr.f32.mxu0 0.0
      %2702 = vmatmul.mubr.f32.gmra.mrb[0].mxu0 %v2508
      %v2703 = vpop.f32.mrb[0].mxu0
      %v2704 = vadd.f32 0.0, %v2703
      %v2705 = vpop.f32.mrb[0].mxu0
      %2706 = vmatprep.mubr.f32.mxu0 0.0
      %2707 = vmatmul.mubr.f32.gmra.mrb[0].mxu0 %v2511
      %v2708 = vpop.f32.mrb[0].mxu0
      %v2709 = vadd.f32 0.0, %v2708
      %v2710 = vpop.f32.mrb[0].mxu0
      %2711 = vmatprep.mubr.f32.mxu0 0.0
      %2712 = vmatmul.mubr.f32.gmra.mrb[0].mxu0 %v2514
      %v2713 = vpop.f32.mrb[0].mxu0
      %v2714 = vadd.f32 0.0, %v2713
      %v2715 = vpop.f32.mrb[0].mxu0
      %2716 = vmatprep.mubr.f32.mxu0 0.0
      %2717 = vmatmul.mubr.f32.gmra.mrb[0].mxu0 %v2517
      %v2718 = vpop.f32.mrb[0].mxu0
      %v2719 = vadd.f32 0.0, %v2718
      %v2720 = vpop.f32.mrb[0].mxu0
      %2721 = vmatprep.mubr.f32.mxu0 0.0
      %2722 = vmatmul.mubr.f32.gmra.mrb[0].mxu0 %v2520
      %v2723 = vpop.f32.mrb[0].mxu0
      %v2724 = vadd.f32 0.0, %v2723
      %v2725 = vpop.f32.mrb[0].mxu0
      %2726 = vmatprep.mubr.f32.mxu0 0.0
      %2727 = vmatmul.mubr.f32.gmra.mrb[0].mxu0 %v2523
      %v2728 = vpop.f32.mrb[0].mxu0
      %v2729 = vadd.f32 0.0, %v2728
      %v2730 = vpop.f32.mrb[0].mxu0
      %2731 = vmatprep.mubr.f32.mxu0 0.0
      %2732 = vmatmul.mubr.f32.gmra.mrb[0].mxu0 %v2526
      %v2733 = vpop.f32.mrb[0].mxu0
      %v2734 = vadd.f32 0.0, %v2733
      %v2735 = vpop.f32.mrb[0].mxu0
      %2736 = vmatprep.mubr.f32.mxu0 0.0
      %2737 = vmatmul.mubr.f32.gmra.mrb[0].mxu0 %v2529
      %v2738 = vpop.f32.mrb[0].mxu0
      %v2739 = vadd.f32 0.0, %v2738
      %v2740 = vpop.f32.mrb[0].mxu0
      %2741 = vmatprep.mubr.f32.mxu0 0.0
      %2742 = vmatmul.mubr.f32.gmra.mrb[0].mxu0 %v2532
      %v2743 = vpop.f32.mrb[0].mxu0
      %v2744 = vadd.f32 0.0, %v2743
      %v2745 = vpop.f32.mrb[0].mxu0
      %2746 = vmatprep.mubr.f32.mxu0 0.0
      %2747 = vmatmul.mubr.f32.gmra.mrb[0].mxu0 %v2535
      %v2748 = vpop.f32.mrb[0].mxu0
      %v2749 = vadd.f32 0.0, %v2748
      %v2750 = vpop.f32.mrb[0].mxu0
      %2751 = vmatprep.mubr.f32.mxu0 0.0
      %2752 = vmatmul.mubr.f32.gmra.mrb[0].mxu0 %v2538
      %v2753 = vpop.f32.mrb[0].mxu0
      %v2754 = vadd.f32 0.0, %v2753
      %v2755 = vpop.f32.mrb[0].mxu0
      %2756 = vmatprep.mubr.f32.mxu0 0.0
      %2757 = vmatmul.mubr.f32.gmra.mrb[0].mxu0 %v2541
      %v2758 = vpop.f32.mrb[0].mxu0
      %v2759 = vadd.f32 0.0, %v2758
      %v2760 = vpop.f32.mrb[0].mxu0
      %2761 = vmatprep.mubr.f32.mxu0 0.0
      %2762 = vmatmul.mubr.f32.gmra.mrb[0].mxu0 %v2544
      %v2763 = vpop.f32.mrb[0].mxu0
      %v2764 = vadd.f32 0.0, %v2763
      %v2765 = vpop.f32.mrb[0].mxu0
      %2766 = vmatprep.mubr.f32.mxu0 0.0
      %2767 = vmatmul.mubr.f32.gmra.mrb[0].mxu0 %v2547
      %v2768 = vpop.f32.mrb[0].mxu0
      %v2769 = vadd.f32 0.0, %v2768
      %v2770 = vpop.f32.mrb[0].mxu0
      %2771 = vmatprep.mubr.f32.mxu0 0.0
      %2772 = vmatmul.mubr.f32.gmra.mrb[0].mxu0 %v2550
      %v2773 = vpop.f32.mrb[0].mxu0
      %v2774 = vadd.f32 0.0, %v2773
      %v2775 = vpop.f32.mrb[0].mxu0
      %2776 = vdwg.mxu0
      %v2777 = vld [vmem:[%s7] sm:$0xff]
      %v2778 = vld [vmem:[%s7 + $0x8] sm:$0xff]
      %v2779 = vld [vmem:[%s7 + $0x10] sm:$0xff]
      %v2780 = vld [vmem:[%s7 + $0x18] sm:$0xff]
      %v2781 = vsel %vm1252, %v416, 0
      %v2783 = vsel %vm1252, %v417, 0
      %v2785 = vsel %vm1252, %v418, 0
      %v2787 = vsel %vm1252, %v419, 0
      %v2789 = vsel %vm1252, %v420, 0
      %v2791 = vsel %vm1252, %v421, 0
      %v2793 = vsel %vm1252, %v422, 0
      %v2795 = vsel %vm1252, %v423, 0
      %v2797 = vsel %vm1252, %v424, 0
      %v2799 = vsel %vm1252, %v425, 0
      %v2801 = vsel %vm1252, %v426, 0
      %v2803 = vsel %vm1252, %v427, 0
      %v2805 = vsel %vm1252, %v428, 0
      %v2807 = vsel %vm1252, %v429, 0
      %v2809 = vsel %vm1252, %v430, 0
      %v2811 = vsel %vm1252, %v431, 0
      %v2813 = vsel %vm1252, %v432, 0
      %v2815 = vsel %vm1252, %v433, 0
      %v2817 = vsel %vm1252, %v434, 0
      %v2819 = vsel %vm1252, %v435, 0
      %v2821 = vsel %vm1252, %v436, 0
      %v2823 = vsel %vm1252, %v437, 0
      %v2825 = vsel %vm1252, %v438, 0
      %v2827 = vsel %vm1252, %v439, 0
      %v2829 = vsel %vm1252, %v440, 0
      %v2831 = vsel %vm1252, %v441, 0
      %v2833 = vsel %vm1252, %v442, 0
      %v2835 = vsel %vm1252, %v443, 0
      %v2837 = vsel %vm1252, %v444, 0
      %v2839 = vsel %vm1252, %v445, 0
      %v2841 = vsel %vm1252, %v446, 0
      %v2843 = vsel %vm1252, %v447, 0
      %2845 = vmatprep.subr.mxu0 0.0
      %2846 = vmatpush1.msra.mxu0 %v2777
      %2847 = vmatprep.subr.mxu0 0.0
      %2848 = vmatpush1.msra.mxu0 %v2778
      %2849 = vmatprep.subr.mxu0 0.0
      %2850 = vmatpush1.msra.mxu0 %v2779
      %2851 = vmatprep.subr.mxu0 0.0
      %2852 = vmatpush1.msra.mxu0 %v2780
      %2853 = vmatprep.subr.mxu0 0.0
      %2854 = vmatpush1.msra.mxu0 0.0
      %2855 = vmatprep.subr.mxu0 0.0
      %2856 = vmatpush1.msra.mxu0 0.0
      %2857 = vmatprep.subr.mxu0 0.0
      %2858 = vmatpush1.msra.mxu0 0.0
      %2859 = vmatprep.subr.mxu0 0.0
      %2860 = vmatpush1.msra.mxu0 0.0
      %2861 = vmatprep.subr.mxu0 0.0
      %2862 = vmatpush1.msra.mxu0 0.0
      %2863 = vmatprep.subr.mxu0 0.0
      %2864 = vmatpush1.msra.mxu0 0.0
      %2865 = vmatprep.subr.mxu0 0.0
      %2866 = vmatpush1.msra.mxu0 0.0
      %2867 = vmatprep.subr.mxu0 0.0
      %2868 = vmatpush1.msra.mxu0 0.0
      %2869 = vmatprep.subr.mxu0 0.0
      %2870 = vmatpush1.msra.mxu0 0.0
      %2871 = vmatprep.subr.mxu0 0.0
      %2872 = vmatpush1.msra.mxu0 0.0
      %2873 = vmatprep.subr.mxu0 0.0
      %2874 = vmatpush1.msra.mxu0 0.0
      %2875 = vmatprep.subr.mxu0 0.0
      %2876 = vmatpush1.msra.mxu0 0.0
      %2877 = vmatprep.subr.mxu0 0.0
      %2878 = vmatpush1.msra.mxu0 0.0
      %2879 = vmatprep.subr.mxu0 0.0
      %2880 = vmatpush1.msra.mxu0 0.0
      %2881 = vmatprep.subr.mxu0 0.0
      %2882 = vmatpush1.msra.mxu0 0.0
      %2883 = vmatprep.subr.mxu0 0.0
      %2884 = vmatpush1.msra.mxu0 0.0
      %2885 = vmatprep.subr.mxu0 0.0
      %2886 = vmatpush1.msra.mxu0 0.0
      %2887 = vmatprep.subr.mxu0 0.0
      %2888 = vmatpush1.msra.mxu0 0.0
      %2889 = vmatprep.subr.mxu0 0.0
      %2890 = vmatpush1.msra.mxu0 0.0
      %2891 = vmatprep.subr.mxu0 0.0
      %2892 = vmatpush1.msra.mxu0 0.0
      %2893 = vmatprep.subr.mxu0 0.0
      %2894 = vmatpush1.msra.mxu0 0.0
      %2895 = vmatprep.subr.mxu0 0.0
      %2896 = vmatpush1.msra.mxu0 0.0
      %2897 = vmatprep.subr.mxu0 0.0
      %2898 = vmatpush1.msra.mxu0 0.0
      %2899 = vmatprep.subr.mxu0 0.0
      %2900 = vmatpush1.msra.mxu0 0.0
      %2901 = vmatprep.subr.mxu0 0.0
      %2902 = vmatpush1.msra.mxu0 0.0
      %2903 = vmatprep.subr.mxu0 0.0
      %2904 = vmatpush1.msra.mxu0 0.0
      %2905 = vmatprep.subr.mxu0 0.0
      %2906 = vmatpush1.msra.mxu0 0.0
      %2907 = vmatprep.subr.mxu0 0.0
      %2908 = vmatpush1.msra.mxu0 0.0
      %2909 = vmatprep.mubr.f32.mxu0 0.0
      %2910 = vmatmul.mubr.f32.gmra.mrb[0].mxu0 %v2781
      %v2911 = vpop.f32.mrb[0].mxu0
      %v2912 = vadd.f32 0.0, %v2911
      %v2913 = vpop.f32.mrb[0].mxu0
      %2914 = vmatprep.mubr.f32.mxu0 0.0
      %2915 = vmatmul.mubr.f32.gmra.mrb[0].mxu0 %v2783
      %v2916 = vpop.f32.mrb[0].mxu0
      %v2917 = vadd.f32 0.0, %v2916
      %v2918 = vpop.f32.mrb[0].mxu0
      %2919 = vmatprep.mubr.f32.mxu0 0.0
      %2920 = vmatmul.mubr.f32.gmra.mrb[0].mxu0 %v2785
      %v2921 = vpop.f32.mrb[0].mxu0
      %v2922 = vadd.f32 0.0, %v2921
      %v2923 = vpop.f32.mrb[0].mxu0
      %2924 = vmatprep.mubr.f32.mxu0 0.0
      %2925 = vmatmul.mubr.f32.gmra.mrb[0].mxu0 %v2787
      %v2926 = vpop.f32.mrb[0].mxu0
      %v2927 = vadd.f32 0.0, %v2926
      %v2928 = vpop.f32.mrb[0].mxu0
      %2929 = vmatprep.mubr.f32.mxu0 0.0
      %2930 = vmatmul.mubr.f32.gmra.mrb[0].mxu0 %v2789
      %v2931 = vpop.f32.mrb[0].mxu0
      %v2932 = vadd.f32 0.0, %v2931
      %v2933 = vpop.f32.mrb[0].mxu0
      %2934 = vmatprep.mubr.f32.mxu0 0.0
      %2935 = vmatmul.mubr.f32.gmra.mrb[0].mxu0 %v2791
      %v2936 = vpop.f32.mrb[0].mxu0
      %v2937 = vadd.f32 0.0, %v2936
      %v2938 = vpop.f32.mrb[0].mxu0
      %2939 = vmatprep.mubr.f32.mxu0 0.0
      %2940 = vmatmul.mubr.f32.gmra.mrb[0].mxu0 %v2793
      %v2941 = vpop.f32.mrb[0].mxu0
      %v2942 = vadd.f32 0.0, %v2941
      %v2943 = vpop.f32.mrb[0].mxu0
      %2944 = vmatprep.mubr.f32.mxu0 0.0
      %2945 = vmatmul.mubr.f32.gmra.mrb[0].mxu0 %v2795
      %v2946 = vpop.f32.mrb[0].mxu0
      %v2947 = vadd.f32 0.0, %v2946
      %v2948 = vpop.f32.mrb[0].mxu0
      %2949 = vmatprep.mubr.f32.mxu0 0.0
      %2950 = vmatmul.mubr.f32.gmra.mrb[0].mxu0 %v2797
      %v2951 = vpop.f32.mrb[0].mxu0
      %v2952 = vadd.f32 0.0, %v2951
      %v2953 = vpop.f32.mrb[0].mxu0
      %2954 = vmatprep.mubr.f32.mxu0 0.0
      %2955 = vmatmul.mubr.f32.gmra.mrb[0].mxu0 %v2799
      %v2956 = vpop.f32.mrb[0].mxu0
      %v2957 = vadd.f32 0.0, %v2956
      %v2958 = vpop.f32.mrb[0].mxu0
      %2959 = vmatprep.mubr.f32.mxu0 0.0
      %2960 = vmatmul.mubr.f32.gmra.mrb[0].mxu0 %v2801
      %v2961 = vpop.f32.mrb[0].mxu0
      %v2962 = vadd.f32 0.0, %v2961
      %v2963 = vpop.f32.mrb[0].mxu0
      %2964 = vmatprep.mubr.f32.mxu0 0.0
      %2965 = vmatmul.mubr.f32.gmra.mrb[0].mxu0 %v2803
      %v2966 = vpop.f32.mrb[0].mxu0
      %v2967 = vadd.f32 0.0, %v2966
      %v2968 = vpop.f32.mrb[0].mxu0
      %2969 = vmatprep.mubr.f32.mxu0 0.0
      %2970 = vmatmul.mubr.f32.gmra.mrb[0].mxu0 %v2805
      %v2971 = vpop.f32.mrb[0].mxu0
      %v2972 = vadd.f32 0.0, %v2971
      %v2973 = vpop.f32.mrb[0].mxu0
      %2974 = vmatprep.mubr.f32.mxu0 0.0
      %2975 = vmatmul.mubr.f32.gmra.mrb[0].mxu0 %v2807
      %v2976 = vpop.f32.mrb[0].mxu0
      %v2977 = vadd.f32 0.0, %v2976
      %v2978 = vpop.f32.mrb[0].mxu0
      %2979 = vmatprep.mubr.f32.mxu0 0.0
      %2980 = vmatmul.mubr.f32.gmra.mrb[0].mxu0 %v2809
      %v2981 = vpop.f32.mrb[0].mxu0
      %v2982 = vadd.f32 0.0, %v2981
      %v2983 = vpop.f32.mrb[0].mxu0
      %2984 = vmatprep.mubr.f32.mxu0 0.0
      %2985 = vmatmul.mubr.f32.gmra.mrb[0].mxu0 %v2811
      %v2986 = vpop.f32.mrb[0].mxu0
      %v2987 = vadd.f32 0.0, %v2986
      %v2988 = vpop.f32.mrb[0].mxu0
      %2989 = vmatprep.mubr.f32.mxu0 0.0
      %2990 = vmatmul.mubr.f32.gmra.mrb[0].mxu0 %v2813
      %v2991 = vpop.f32.mrb[0].mxu0
      %v2992 = vadd.f32 0.0, %v2991
      %v2993 = vpop.f32.mrb[0].mxu0
      %2994 = vmatprep.mubr.f32.mxu0 0.0
      %2995 = vmatmul.mubr.f32.gmra.mrb[0].mxu0 %v2815
      %v2996 = vpop.f32.mrb[0].mxu0
      %v2997 = vadd.f32 0.0, %v2996
      %v2998 = vpop.f32.mrb[0].mxu0
      %2999 = vmatprep.mubr.f32.mxu0 0.0
      %3000 = vmatmul.mubr.f32.gmra.mrb[0].mxu0 %v2817
      %v3001 = vpop.f32.mrb[0].mxu0
      %v3002 = vadd.f32 0.0, %v3001
      %v3003 = vpop.f32.mrb[0].mxu0
      %3004 = vmatprep.mubr.f32.mxu0 0.0
      %3005 = vmatmul.mubr.f32.gmra.mrb[0].mxu0 %v2819
      %v3006 = vpop.f32.mrb[0].mxu0
      %v3007 = vadd.f32 0.0, %v3006
      %v3008 = vpop.f32.mrb[0].mxu0
      %3009 = vmatprep.mubr.f32.mxu0 0.0
      %3010 = vmatmul.mubr.f32.gmra.mrb[0].mxu0 %v2821
      %v3011 = vpop.f32.mrb[0].mxu0
      %v3012 = vadd.f32 0.0, %v3011
      %v3013 = vpop.f32.mrb[0].mxu0
      %3014 = vmatprep.mubr.f32.mxu0 0.0
      %3015 = vmatmul.mubr.f32.gmra.mrb[0].mxu0 %v2823
      %v3016 = vpop.f32.mrb[0].mxu0
      %v3017 = vadd.f32 0.0, %v3016
      %v3018 = vpop.f32.mrb[0].mxu0
      %3019 = vmatprep.mubr.f32.mxu0 0.0
      %3020 = vmatmul.mubr.f32.gmra.mrb[0].mxu0 %v2825
      %v3021 = vpop.f32.mrb[0].mxu0
      %v3022 = vadd.f32 0.0, %v3021
      %v3023 = vpop.f32.mrb[0].mxu0
      %3024 = vmatprep.mubr.f32.mxu0 0.0
      %3025 = vmatmul.mubr.f32.gmra.mrb[0].mxu0 %v2827
      %v3026 = vpop.f32.mrb[0].mxu0
      %v3027 = vadd.f32 0.0, %v3026
      %v3028 = vpop.f32.mrb[0].mxu0
      %3029 = vmatprep.mubr.f32.mxu0 0.0
      %3030 = vmatmul.mubr.f32.gmra.mrb[0].mxu0 %v2829
      %v3031 = vpop.f32.mrb[0].mxu0
      %v3032 = vadd.f32 0.0, %v3031
      %v3033 = vpop.f32.mrb[0].mxu0
      %3034 = vmatprep.mubr.f32.mxu0 0.0
      %3035 = vmatmul.mubr.f32.gmra.mrb[0].mxu0 %v2831
      %v3036 = vpop.f32.mrb[0].mxu0
      %v3037 = vadd.f32 0.0, %v3036
      %v3038 = vpop.f32.mrb[0].mxu0
      %3039 = vmatprep.mubr.f32.mxu0 0.0
      %3040 = vmatmul.mubr.f32.gmra.mrb[0].mxu0 %v2833
      %v3041 = vpop.f32.mrb[0].mxu0
      %v3042 = vadd.f32 0.0, %v3041
      %v3043 = vpop.f32.mrb[0].mxu0
      %3044 = vmatprep.mubr.f32.mxu0 0.0
      %3045 = vmatmul.mubr.f32.gmra.mrb[0].mxu0 %v2835
      %v3046 = vpop.f32.mrb[0].mxu0
      %v3047 = vadd.f32 0.0, %v3046
      %v3048 = vpop.f32.mrb[0].mxu0
      %3049 = vmatprep.mubr.f32.mxu0 0.0
      %3050 = vmatmul.mubr.f32.gmra.mrb[0].mxu0 %v2837
      %v3051 = vpop.f32.mrb[0].mxu0
      %v3052 = vadd.f32 0.0, %v3051
      %v3053 = vpop.f32.mrb[0].mxu0
      %3054 = vmatprep.mubr.f32.mxu0 0.0
      %3055 = vmatmul.mubr.f32.gmra.mrb[0].mxu0 %v2839
      %v3056 = vpop.f32.mrb[0].mxu0
      %v3057 = vadd.f32 0.0, %v3056
      %v3058 = vpop.f32.mrb[0].mxu0
      %3059 = vmatprep.mubr.f32.mxu0 0.0
      %3060 = vmatmul.mubr.f32.gmra.mrb[0].mxu0 %v2841
      %v3061 = vpop.f32.mrb[0].mxu0
      %v3062 = vadd.f32 0.0, %v3061
      %v3063 = vpop.f32.mrb[0].mxu0
      %3064 = vmatprep.mubr.f32.mxu0 0.0
      %3065 = vmatmul.mubr.f32.gmra.mrb[0].mxu0 %v2843
      %v3066 = vpop.f32.mrb[0].mxu0
      %v3067 = vadd.f32 0.0, %v3066
      %v3068 = vpop.f32.mrb[0].mxu0
      %3069 = vdwg.mxu0
      %v3070 = vld [vmem:[%s8] sm:$0xff]
      %v3071 = vld [vmem:[%s9] sm:$0xff]
      %3073 = vset.pattern.permute.xlu0 0
      %3074 = vperm.xlu0 %3073, %v3071
      %v3075 = vpop.permute.xlu0 %3074
      %v3078 = vsel %vm1252, %v3070, 0
      %3080 = vmatprep.subr.mxu0 0.0
      %3081 = vmatpush1.xpose.msra.mxu0 %v2781
      %3082 = vmatprep.subr.mxu0 0.0
      %3083 = vmatpush1.xpose.msra.mxu0 %v2783
      %3084 = vmatprep.subr.mxu0 0.0
      %3085 = vmatpush1.xpose.msra.mxu0 %v2785
      %3086 = vmatprep.subr.mxu0 0.0
      %3087 = vmatpush1.xpose.msra.mxu0 %v2787
      %3088 = vmatprep.subr.mxu0 0.0
      %3089 = vmatpush1.xpose.msra.mxu0 %v2789
      %3090 = vmatprep.subr.mxu0 0.0
      %3091 = vmatpush1.xpose.msra.mxu0 %v2791
      %3092 = vmatprep.subr.mxu0 0.0
      %3093 = vmatpush1.xpose.msra.mxu0 %v2793
      %3094 = vmatprep.subr.mxu0 0.0
      %3095 = vmatpush1.xpose.msra.mxu0 %v2795
      %3096 = vmatprep.subr.mxu0 0.0
      %3097 = vmatpush1.xpose.msra.mxu0 %v2797
      %3098 = vmatprep.subr.mxu0 0.0
      %3099 = vmatpush1.xpose.msra.mxu0 %v2799
      %3100 = vmatprep.subr.mxu0 0.0
      %3101 = vmatpush1.xpose.msra.mxu0 %v2801
      %3102 = vmatprep.subr.mxu0 0.0
      %3103 = vmatpush1.xpose.msra.mxu0 %v2803
      %3104 = vmatprep.subr.mxu0 0.0
      %3105 = vmatpush1.xpose.msra.mxu0 %v2805
      %3106 = vmatprep.subr.mxu0 0.0
      %3107 = vmatpush1.xpose.msra.mxu0 %v2807
      %3108 = vmatprep.subr.mxu0 0.0
      %3109 = vmatpush1.xpose.msra.mxu0 %v2809
      %3110 = vmatprep.subr.mxu0 0.0
      %3111 = vmatpush1.xpose.msra.mxu0 %v2811
      %3112 = vmatprep.subr.mxu0 0.0
      %3113 = vmatpush1.xpose.msra.mxu0 %v2813
      %3114 = vmatprep.subr.mxu0 0.0
      %3115 = vmatpush1.xpose.msra.mxu0 %v2815
      %3116 = vmatprep.subr.mxu0 0.0
      %3117 = vmatpush1.xpose.msra.mxu0 %v2817
      %3118 = vmatprep.subr.mxu0 0.0
      %3119 = vmatpush1.xpose.msra.mxu0 %v2819
      %3120 = vmatprep.subr.mxu0 0.0
      %3121 = vmatpush1.xpose.msra.mxu0 %v2821
      %3122 = vmatprep.subr.mxu0 0.0
      %3123 = vmatpush1.xpose.msra.mxu0 %v2823
      %3124 = vmatprep.subr.mxu0 0.0
      %3125 = vmatpush1.xpose.msra.mxu0 %v2825
      %3126 = vmatprep.subr.mxu0 0.0
      %3127 = vmatpush1.xpose.msra.mxu0 %v2827
      %3128 = vmatprep.subr.mxu0 0.0
      %3129 = vmatpush1.xpose.msra.mxu0 %v2829
      %3130 = vmatprep.subr.mxu0 0.0
      %3131 = vmatpush1.xpose.msra.mxu0 %v2831
      %3132 = vmatprep.subr.mxu0 0.0
      %3133 = vmatpush1.xpose.msra.mxu0 %v2833
      %3134 = vmatprep.subr.mxu0 0.0
      %3135 = vmatpush1.xpose.msra.mxu0 %v2835
      %3136 = vmatprep.subr.mxu0 0.0
      %3137 = vmatpush1.xpose.msra.mxu0 %v2837
      %3138 = vmatprep.subr.mxu0 0.0
      %3139 = vmatpush1.xpose.msra.mxu0 %v2839
      %3140 = vmatprep.subr.mxu0 0.0
      %3141 = vmatpush1.xpose.msra.mxu0 %v2841
      %3142 = vmatprep.subr.mxu0 0.0
      %3143 = vmatpush1.xpose.msra.mxu0 %v2843
      %3144 = vmatprep.mubr.f32.mxu0 0.0
      %3145 = vmatmul.mubr.f32.gmra.mrb[0].mxu0 %v3078
      %v3146 = vpop.f32.mrb[0].mxu0
      %v3147 = vadd.f32 %v3075, %v3146
      %v3148 = vpop.f32.mrb[0].mxu0
      %v3149 = vadd.f32 %v3075, %v3148
      %3150 = vdwg.mxu0
      %v3151 = vmul.f32 %v3147, 0.06666667
      %v3152 = vmul.f32 %v3149, 0.06666667
      %v3153 = vtanh.pop %v3151
      %v3154 = vtanh.pop %v3152
      %v3155 = vmul.f32 %v3153, 15.0
      %v3156 = vmul.f32 %v3154, 15.0
      %v3157 = vmin.f32 %v3155, 0.0
      %v3158 = vmin.f32 %v3156, 0.0
      %v3159 = vand.u32 2147483647, %v3155
      %v3160 = vand.u32 2147483647, %v3156
      %v3161 = vsub.f32 0.0, %v3159
      %v3162 = vsub.f32 0.0, %v3160
      %v3163 = vmul.f32 %v3161, 1.442695
      %v3164 = vpow.pop %v3163
      %v3165 = vmul.f32 %v3162, 1.442695
      %v3166 = vpow.pop %v3165
      %v3167 = vadd.f32 %v3164, 1.0
      %v3168 = vadd.f32 %v3166, 1.0
      %v3169 = vlog2.pop %v3167
      %v3170 = vmul.f32 %v3169, 0.6931472
      %v3171 = vlog2.pop %v3168
      %v3172 = vmul.f32 %v3171, 0.6931472
      %v3173 = vsub.f32 %v3157, %v3170
      %v3174 = vsub.f32 %v3158, %v3172
      %v3175 = vld [vmem:[%s2] sm:$0xff]
      %v3176 = vld [vmem:[%s2 + $0x8] sm:$0xff]
      %v3177 = vld [vmem:[%s2 + $0x10] sm:$0xff]
      %v3178 = vld [vmem:[%s2 + $0x18] sm:$0xff]
      %v3179 = vld [vmem:[%s2 + $0x20] sm:$0xff]
      %v3180 = vld [vmem:[%s2 + $0x28] sm:$0xff]
      %v3181 = vld [vmem:[%s2 + $0x30] sm:$0xff]
      %v3182 = vld [vmem:[%s2 + $0x38] sm:$0xff]
      %v3183 = vld [vmem:[%s3] sm:$0xff]
      %v3184 = vld [vmem:[%s3 + $0x8] sm:$0xff]
      %v3185 = vld [vmem:[%s3 + $0x10] sm:$0xff]
      %v3186 = vld [vmem:[%s3 + $0x18] sm:$0xff]
      %v3187 = vld [vmem:[%s3 + $0x20] sm:$0xff]
      %v3188 = vld [vmem:[%s3 + $0x28] sm:$0xff]
      %v3189 = vld [vmem:[%s3 + $0x30] sm:$0xff]
      %v3190 = vld [vmem:[%s3 + $0x38] sm:$0xff]
      %v3191 = vld [vmem:[%s10] sm:$0x3]
      %v3193 = vsel %vm1285, %v3175, 0
      %v3196 = vsel %vm1285, %v3176, 0
      %v3199 = vsel %vm1285, %v3177, 0
      %v3202 = vsel %vm1285, %v3178, 0
      %v3205 = vsel %vm1285, %v3179, 0
      %v3208 = vsel %vm1285, %v3180, 0
      %v3211 = vsel %vm1285, %v3181, 0
      %v3214 = vsel %vm1285, %v3182, 0
      %v3217 = vsel %vm1285, %v3173, 0
      %3219 = vmatprep.subr.mxu0 0.0
      %3220 = vmatpush1.xpose.msra.mxu0 %v3217
      %3221 = vmatprep.subr.mxu0 0.0
      %3222 = vmatpush1.xpose.msra.mxu0 0.0
      %3223 = vmatprep.subr.mxu0 0.0
      %3224 = vmatpush1.xpose.msra.mxu0 0.0
      %3225 = vmatprep.subr.mxu0 0.0
      %3226 = vmatpush1.xpose.msra.mxu0 0.0
      %3227 = vmatprep.subr.mxu0 0.0
      %3228 = vmatpush1.xpose.msra.mxu0 0.0
      %3229 = vmatprep.subr.mxu0 0.0
      %3230 = vmatpush1.xpose.msra.mxu0 0.0
      %3231 = vmatprep.subr.mxu0 0.0
      %3232 = vmatpush1.xpose.msra.mxu0 0.0
      %3233 = vmatprep.subr.mxu0 0.0
      %3234 = vmatpush1.xpose.msra.mxu0 0.0
      %3235 = vmatprep.subr.mxu0 0.0
      %3236 = vmatpush1.xpose.msra.mxu0 0.0
      %3237 = vmatprep.subr.mxu0 0.0
      %3238 = vmatpush1.xpose.msra.mxu0 0.0
      %3239 = vmatprep.subr.mxu0 0.0
      %3240 = vmatpush1.xpose.msra.mxu0 0.0
      %3241 = vmatprep.subr.mxu0 0.0
      %3242 = vmatpush1.xpose.msra.mxu0 0.0
      %3243 = vmatprep.subr.mxu0 0.0
      %3244 = vmatpush1.xpose.msra.mxu0 0.0
      %3245 = vmatprep.subr.mxu0 0.0
      %3246 = vmatpush1.xpose.msra.mxu0 0.0
      %3247 = vmatprep.subr.mxu0 0.0
      %3248 = vmatpush1.xpose.msra.mxu0 0.0
      %3249 = vmatprep.subr.mxu0 0.0
      %3250 = vmatpush1.xpose.msra.mxu0 0.0
      %3251 = vmatprep.subr.mxu0 0.0
      %3252 = vmatpush1.xpose.msra.mxu0 0.0
      %3253 = vmatprep.subr.mxu0 0.0
      %3254 = vmatpush1.xpose.msra.mxu0 0.0
      %3255 = vmatprep.subr.mxu0 0.0
      %3256 = vmatpush1.xpose.msra.mxu0 0.0
      %3257 = vmatprep.subr.mxu0 0.0
      %3258 = vmatpush1.xpose.msra.mxu0 0.0
      %3259 = vmatprep.subr.mxu0 0.0
      %3260 = vmatpush1.xpose.msra.mxu0 0.0
      %3261 = vmatprep.subr.mxu0 0.0
      %3262 = vmatpush1.xpose.msra.mxu0 0.0
      %3263 = vmatprep.subr.mxu0 0.0
      %3264 = vmatpush1.xpose.msra.mxu0 0.0
      %3265 = vmatprep.subr.mxu0 0.0
      %3266 = vmatpush1.xpose.msra.mxu0 0.0
      %3267 = vmatprep.subr.mxu0 0.0
      %3268 = vmatpush1.xpose.msra.mxu0 0.0
      %3269 = vmatprep.subr.mxu0 0.0
      %3270 = vmatpush1.xpose.msra.mxu0 0.0
      %3271 = vmatprep.subr.mxu0 0.0
      %3272 = vmatpush1.xpose.msra.mxu0 0.0
      %3273 = vmatprep.subr.mxu0 0.0
      %3274 = vmatpush1.xpose.msra.mxu0 0.0
      %3275 = vmatprep.subr.mxu0 0.0
      %3276 = vmatpush1.xpose.msra.mxu0 0.0
      %3277 = vmatprep.subr.mxu0 0.0
      %3278 = vmatpush1.xpose.msra.mxu0 0.0
      %3279 = vmatprep.subr.mxu0 0.0
      %3280 = vmatpush1.xpose.msra.mxu0 0.0
      %3281 = vmatprep.subr.mxu0 0.0
      %3282 = vmatpush1.xpose.msra.mxu0 0.0
      %3283 = vmatprep.mubr.f32.mxu0 0.0
      %3284 = vmatmul.mubr.f32.gmra.mrb[0].mxu0 %v3193
      %v3285 = vpop.f32.mrb[0].mxu0
      %v3286 = vadd.f32 0.0, %v3285
      %v3287 = vpop.f32.mrb[0].mxu0
      %3288 = vmatprep.mubr.f32.mxu0 0.0
      %3289 = vmatmul.mubr.f32.gmra.mrb[0].mxu0 %v3196
      %v3290 = vpop.f32.mrb[0].mxu0
      %v3291 = vadd.f32 0.0, %v3290
      %v3292 = vpop.f32.mrb[0].mxu0
      %3293 = vmatprep.mubr.f32.mxu0 0.0
      %3294 = vmatmul.mubr.f32.gmra.mrb[0].mxu0 %v3199
      %v3295 = vpop.f32.mrb[0].mxu0
      %v3296 = vadd.f32 0.0, %v3295
      %v3297 = vpop.f32.mrb[0].mxu0
      %3298 = vmatprep.mubr.f32.mxu0 0.0
      %3299 = vmatmul.mubr.f32.gmra.mrb[0].mxu0 %v3202
      %v3300 = vpop.f32.mrb[0].mxu0
      %v3301 = vadd.f32 0.0, %v3300
      %v3302 = vpop.f32.mrb[0].mxu0
      %3303 = vmatprep.mubr.f32.mxu0 0.0
      %3304 = vmatmul.mubr.f32.gmra.mrb[0].mxu0 %v3205
      %v3305 = vpop.f32.mrb[0].mxu0
      %v3306 = vadd.f32 0.0, %v3305
      %v3307 = vpop.f32.mrb[0].mxu0
      %3308 = vmatprep.mubr.f32.mxu0 0.0
      %3309 = vmatmul.mubr.f32.gmra.mrb[0].mxu0 %v3208
      %v3310 = vpop.f32.mrb[0].mxu0
      %v3311 = vadd.f32 0.0, %v3310
      %v3312 = vpop.f32.mrb[0].mxu0
      %3313 = vmatprep.mubr.f32.mxu0 0.0
      %3314 = vmatmul.mubr.f32.gmra.mrb[0].mxu0 %v3211
      %v3315 = vpop.f32.mrb[0].mxu0
      %v3316 = vadd.f32 0.0, %v3315
      %v3317 = vpop.f32.mrb[0].mxu0
      %3318 = vmatprep.mubr.f32.mxu0 0.0
      %3319 = vmatmul.mubr.f32.gmra.mrb[0].mxu0 %v3214
      %v3320 = vpop.f32.mrb[0].mxu0
      %v3321 = vadd.f32 0.0, %v3320
      %v3322 = vpop.f32.mrb[0].mxu0
      %3323 = vdwg.mxu0
      %3324 = vmatprep.subr.mxu0 0.0
      %3325 = vmatpush1.xpose.msra.mxu0 %v3193
      %3326 = vmatprep.subr.mxu0 0.0
      %3327 = vmatpush1.xpose.msra.mxu0 %v3196
      %3328 = vmatprep.subr.mxu0 0.0
      %3329 = vmatpush1.xpose.msra.mxu0 %v3199
      %3330 = vmatprep.subr.mxu0 0.0
      %3331 = vmatpush1.xpose.msra.mxu0 %v3202
      %3332 = vmatprep.subr.mxu0 0.0
      %3333 = vmatpush1.xpose.msra.mxu0 %v3205
      %3334 = vmatprep.subr.mxu0 0.0
      %3335 = vmatpush1.xpose.msra.mxu0 %v3208
      %3336 = vmatprep.subr.mxu0 0.0
      %3337 = vmatpush1.xpose.msra.mxu0 %v3211
      %3338 = vmatprep.subr.mxu0 0.0
      %3339 = vmatpush1.xpose.msra.mxu0 %v3214
      %3340 = vmatprep.subr.mxu0 0.0
      %3341 = vmatpush1.xpose.msra.mxu0 0.0
      %3342 = vmatprep.subr.mxu0 0.0
      %3343 = vmatpush1.xpose.msra.mxu0 0.0
      %3344 = vmatprep.subr.mxu0 0.0
      %3345 = vmatpush1.xpose.msra.mxu0 0.0
      %3346 = vmatprep.subr.mxu0 0.0
      %3347 = vmatpush1.xpose.msra.mxu0 0.0
      %3348 = vmatprep.subr.mxu0 0.0
      %3349 = vmatpush1.xpose.msra.mxu0 0.0
      %3350 = vmatprep.subr.mxu0 0.0
      %3351 = vmatpush1.xpose.msra.mxu0 0.0
      %3352 = vmatprep.subr.mxu0 0.0
      %3353 = vmatpush1.xpose.msra.mxu0 0.0
      %3354 = vmatprep.subr.mxu0 0.0
      %3355 = vmatpush1.xpose.msra.mxu0 0.0
      %3356 = vmatprep.subr.mxu0 0.0
      %3357 = vmatpush1.xpose.msra.mxu0 0.0
      %3358 = vmatprep.subr.mxu0 0.0
      %3359 = vmatpush1.xpose.msra.mxu0 0.0
      %3360 = vmatprep.subr.mxu0 0.0
      %3361 = vmatpush1.xpose.msra.mxu0 0.0
      %3362 = vmatprep.subr.mxu0 0.0
      %3363 = vmatpush1.xpose.msra.mxu0 0.0
      %3364 = vmatprep.subr.mxu0 0.0
      %3365 = vmatpush1.xpose.msra.mxu0 0.0
      %3366 = vmatprep.subr.mxu0 0.0
      %3367 = vmatpush1.xpose.msra.mxu0 0.0
      %3368 = vmatprep.subr.mxu0 0.0
      %3369 = vmatpush1.xpose.msra.mxu0 0.0
      %3370 = vmatprep.subr.mxu0 0.0
      %3371 = vmatpush1.xpose.msra.mxu0 0.0
      %3372 = vmatprep.subr.mxu0 0.0
      %3373 = vmatpush1.xpose.msra.mxu0 0.0
      %3374 = vmatprep.subr.mxu0 0.0
      %3375 = vmatpush1.xpose.msra.mxu0 0.0
      %3376 = vmatprep.subr.mxu0 0.0
      %3377 = vmatpush1.xpose.msra.mxu0 0.0
      %3378 = vmatprep.subr.mxu0 0.0
      %3379 = vmatpush1.xpose.msra.mxu0 0.0
      %3380 = vmatprep.subr.mxu0 0.0
      %3381 = vmatpush1.xpose.msra.mxu0 0.0
      %3382 = vmatprep.subr.mxu0 0.0
      %3383 = vmatpush1.xpose.msra.mxu0 0.0
      %3384 = vmatprep.subr.mxu0 0.0
      %3385 = vmatpush1.xpose.msra.mxu0 0.0
      %3386 = vmatprep.subr.mxu0 0.0
      %3387 = vmatpush1.xpose.msra.mxu0 0.0
      %3388 = vmatprep.mubr.f32.mxu0 0.0
      %3389 = vmatmul.mubr.f32.gmra.mrb[0].mxu0 %v3217
      %v3390 = vpop.f32.mrb[0].mxu0
      %v3391 = vadd.f32 0.0, %v3390
      %v3392 = vpop.f32.mrb[0].mxu0
      %3393 = vdwg.mxu0
      %v3395 = vrot.slane %v3391, 2
      %v3397 = vsub.f32 %v3155, %v3395
      %3399 = vset.pattern.permute.xlu0 2
      %3400 = vperm.xlu0 %3399, %v3286
      %v3401 = vpop.permute.xlu0 %3400
      %3404 = vset.pattern.permute.xlu0 2
      %3405 = vperm.xlu0 %3404, %v3291
      %v3406 = vpop.permute.xlu0 %3405
      %3409 = vset.pattern.permute.xlu0 2
      %3410 = vperm.xlu0 %3409, %v3296
      %v3411 = vpop.permute.xlu0 %3410
      %3414 = vset.pattern.permute.xlu0 2
      %3415 = vperm.xlu0 %3414, %v3301
      %v3416 = vpop.permute.xlu0 %3415
      %3419 = vset.pattern.permute.xlu0 2
      %3420 = vperm.xlu0 %3419, %v3306
      %v3421 = vpop.permute.xlu0 %3420
      %3424 = vset.pattern.permute.xlu0 2
      %3425 = vperm.xlu0 %3424, %v3311
      %v3426 = vpop.permute.xlu0 %3425
      %3429 = vset.pattern.permute.xlu0 2
      %3430 = vperm.xlu0 %3429, %v3316
      %v3431 = vpop.permute.xlu0 %3430
      %3434 = vset.pattern.permute.xlu0 2
      %3435 = vperm.xlu0 %3434, %v3321
      %v3436 = vpop.permute.xlu0 %3435
      %v3438 = vlaneseq
      %v3439 = vshrl.u32 %v3438, 7
      %v3440 = vsub.s32 0, %v3439
      %v3441 = vrot.slane %v3397, %v3440
      %v3442 = vadd.f32 %v3401, %v3441
      %v3443 = vadd.f32 %v3406, %v3441
      %v3444 = vadd.f32 %v3411, %v3441
      %v3445 = vadd.f32 %v3416, %v3441
      %v3446 = vadd.f32 %v3421, %v3441
      %v3447 = vadd.f32 %v3426, %v3441
      %v3448 = vadd.f32 %v3431, %v3441
      %v3449 = vadd.f32 %v3436, %v3441
      %v3450 = vadd.f32 %v3442, %v3183
      %v3451 = vadd.f32 %v3443, %v3184
      %v3452 = vadd.f32 %v3444, %v3185
      %v3453 = vadd.f32 %v3445, %v3186
      %v3454 = vadd.f32 %v3446, %v3187
      %v3455 = vadd.f32 %v3447, %v3188
      %v3456 = vadd.f32 %v3448, %v3189
      %v3457 = vadd.f32 %v3449, %v3190
      %v3458 = vsel %vm1285, %v3450, -inf
      %3459 = vmax.xlane.f32.xlu0 %v3458
      %v3460 = vpop.xlane.xlu0 %3459
      %v3461 = vsel %vm1285, %v3451, -inf
      %3462 = vmax.xlane.f32.xlu0 %v3461
      %v3463 = vpop.xlane.xlu0 %3462
      %v3464 = vsel %vm1285, %v3452, -inf
      %3465 = vmax.xlane.f32.xlu0 %v3464
      %v3466 = vpop.xlane.xlu0 %3465
      %v3467 = vsel %vm1285, %v3453, -inf
      %3468 = vmax.xlane.f32.xlu0 %v3467
      %v3469 = vpop.xlane.xlu0 %3468
      %v3470 = vsel %vm1285, %v3454, -inf
      %3471 = vmax.xlane.f32.xlu0 %v3470
      %v3472 = vpop.xlane.xlu0 %3471
      %v3473 = vsel %vm1285, %v3455, -inf
      %3474 = vmax.xlane.f32.xlu0 %v3473
      %v3475 = vpop.xlane.xlu0 %3474
      %v3476 = vsel %vm1285, %v3456, -inf
      %3477 = vmax.xlane.f32.xlu0 %v3476
      %v3478 = vpop.xlane.xlu0 %3477
      %v3479 = vsel %vm1285, %v3457, -inf
      %3480 = vmax.xlane.f32.xlu0 %v3479
      %v3481 = vpop.xlane.xlu0 %3480
      %v3482 = vsub.f32 %v3450, %v3460
      %v3483 = vsub.f32 %v3451, %v3463
      %v3484 = vsub.f32 %v3452, %v3466
      %v3485 = vsub.f32 %v3453, %v3469
      %v3486 = vsub.f32 %v3454, %v3472
      %v3487 = vsub.f32 %v3455, %v3475
      %v3488 = vsub.f32 %v3456, %v3478
      %v3489 = vsub.f32 %v3457, %v3481
      %v3490 = vmul.f32 %v3482, 1.442695
      %v3491 = vpow.pop %v3490
      %v3492 = vmul.f32 %v3483, 1.442695
      %v3493 = vpow.pop %v3492
      %v3494 = vmul.f32 %v3484, 1.442695
      %v3495 = vpow.pop %v3494
      %v3496 = vmul.f32 %v3485, 1.442695
      %v3497 = vpow.pop %v3496
      %v3498 = vmul.f32 %v3486, 1.442695
      %v3499 = vpow.pop %v3498
      %v3500 = vmul.f32 %v3487, 1.442695
      %v3501 = vpow.pop %v3500
      %v3502 = vmul.f32 %v3488, 1.442695
      %v3503 = vpow.pop %v3502
      %v3504 = vmul.f32 %v3489, 1.442695
      %v3505 = vpow.pop %v3504
      %3514 = vrot.lane.b32.xlu0 %v2619, 112
      %v3515 = vpop.permute.xlu0 %3514
      %3516 = vrot.lane.b32.xlu0 %v2624, 112
      %v3517 = vpop.permute.xlu0 %3516
      %3518 = vrot.lane.b32.xlu0 %v2629, 112
      %v3519 = vpop.permute.xlu0 %3518
      %3520 = vrot.lane.b32.xlu0 %v2634, 112
      %v3521 = vpop.permute.xlu0 %3520
      %3522 = vrot.lane.b32.xlu0 %v2639, 112
      %v3523 = vpop.permute.xlu0 %3522
      %3524 = vrot.lane.b32.xlu0 %v2644, 112
      %v3525 = vpop.permute.xlu0 %3524
      %3526 = vrot.lane.b32.xlu0 %v2649, 112
      %v3527 = vpop.permute.xlu0 %3526
      %3528 = vrot.lane.b32.xlu0 %v2654, 112
      %v3529 = vpop.permute.xlu0 %3528
      %vm3530 = vcmask 64512
      %v3531 = vsel %vm3530, %v2619, 0
      %v3533 = vsel %vm3530, %v2624, 0
      %v3535 = vsel %vm3530, %v2629, 0
      %v3537 = vsel %vm3530, %v2634, 0
      %v3539 = vsel %vm3530, %v2639, 0
      %v3541 = vsel %vm3530, %v2644, 0
      %v3543 = vsel %vm3530, %v2649, 0
      %v3545 = vsel %vm3530, %v2654, 0
      %v3547 = vsel %vm3530, %v3515, 0
      %v3549 = vsel %vm3530, %v3517, 0
      %v3551 = vsel %vm3530, %v3519, 0
      %v3553 = vsel %vm3530, %v3521, 0
      %v3555 = vsel %vm3530, %v3523, 0
      %v3557 = vsel %vm3530, %v3525, 0
      %v3559 = vsel %vm3530, %v3527, 0
      %v3561 = vsel %vm3530, %v3529, 0
      %3563 = vmatprep.subr.mxu0 0.0
      %3564 = vmatpush1.xpose.msra.mxu0 %v3547
      %3565 = vmatprep.subr.mxu0 0.0
      %3566 = vmatpush1.xpose.msra.mxu0 %v3549
      %3567 = vmatprep.subr.mxu0 0.0
      %3568 = vmatpush1.xpose.msra.mxu0 %v3551
      %3569 = vmatprep.subr.mxu0 0.0
      %3570 = vmatpush1.xpose.msra.mxu0 %v3553
      %3571 = vmatprep.subr.mxu0 0.0
      %3572 = vmatpush1.xpose.msra.mxu0 %v3555
      %3573 = vmatprep.subr.mxu0 0.0
      %3574 = vmatpush1.xpose.msra.mxu0 %v3557
      %3575 = vmatprep.subr.mxu0 0.0
      %3576 = vmatpush1.xpose.msra.mxu0 %v3559
      %3577 = vmatprep.subr.mxu0 0.0
      %3578 = vmatpush1.xpose.msra.mxu0 %v3561
      %3579 = vmatprep.subr.mxu0 0.0
      %3580 = vmatpush1.xpose.msra.mxu0 0.0
      %3581 = vmatprep.subr.mxu0 0.0
      %3582 = vmatpush1.xpose.msra.mxu0 0.0
      %3583 = vmatprep.subr.mxu0 0.0
      %3584 = vmatpush1.xpose.msra.mxu0 0.0
      %3585 = vmatprep.subr.mxu0 0.0
      %3586 = vmatpush1.xpose.msra.mxu0 0.0
      %3587 = vmatprep.subr.mxu0 0.0
      %3588 = vmatpush1.xpose.msra.mxu0 0.0
      %3589 = vmatprep.subr.mxu0 0.0
      %3590 = vmatpush1.xpose.msra.mxu0 0.0
      %3591 = vmatprep.subr.mxu0 0.0
      %3592 = vmatpush1.xpose.msra.mxu0 0.0
      %3593 = vmatprep.subr.mxu0 0.0
      %3594 = vmatpush1.xpose.msra.mxu0 0.0
      %3595 = vmatprep.subr.mxu0 0.0
      %3596 = vmatpush1.xpose.msra.mxu0 0.0
      %3597 = vmatprep.subr.mxu0 0.0
      %3598 = vmatpush1.xpose.msra.mxu0 0.0
      %3599 = vmatprep.subr.mxu0 0.0
      %3600 = vmatpush1.xpose.msra.mxu0 0.0
      %3601 = vmatprep.subr.mxu0 0.0
      %3602 = vmatpush1.xpose.msra.mxu0 0.0
      %3603 = vmatprep.subr.mxu0 0.0
      %3604 = vmatpush1.xpose.msra.mxu0 0.0
      %3605 = vmatprep.subr.mxu0 0.0
      %3606 = vmatpush1.xpose.msra.mxu0 0.0
      %3607 = vmatprep.subr.mxu0 0.0
      %3608 = vmatpush1.xpose.msra.mxu0 0.0
      %3609 = vmatprep.subr.mxu0 0.0
      %3610 = vmatpush1.xpose.msra.mxu0 0.0
      %3611 = vmatprep.subr.mxu0 0.0
      %3612 = vmatpush1.xpose.msra.mxu0 0.0
      %3613 = vmatprep.subr.mxu0 0.0
      %3614 = vmatpush1.xpose.msra.mxu0 0.0
      %3615 = vmatprep.subr.mxu0 0.0
      %3616 = vmatpush1.xpose.msra.mxu0 0.0
      %3617 = vmatprep.subr.mxu0 0.0
      %3618 = vmatpush1.xpose.msra.mxu0 0.0
      %3619 = vmatprep.subr.mxu0 0.0
      %3620 = vmatpush1.xpose.msra.mxu0 0.0
      %3621 = vmatprep.subr.mxu0 0.0
      %3622 = vmatpush1.xpose.msra.mxu0 0.0
      %3623 = vmatprep.subr.mxu0 0.0
      %3624 = vmatpush1.xpose.msra.mxu0 0.0
      %3625 = vmatprep.subr.mxu0 0.0
      %3626 = vmatpush1.xpose.msra.mxu0 0.0
      %3627 = vmatprep.mubr.f32.mxu0 0.0
      %3628 = vmatmul.mubr.f32.gmra.mrb[0].mxu0 %v3531
      %v3629 = vpop.f32.mrb[0].mxu0
      %v3630 = vadd.f32 0.0, %v3629
      %v3631 = vpop.f32.mrb[0].mxu0
      %3632 = vmatprep.mubr.f32.mxu0 0.0
      %3633 = vmatmul.mubr.f32.gmra.mrb[0].mxu0 %v3533
      %v3634 = vpop.f32.mrb[0].mxu0
      %v3635 = vadd.f32 0.0, %v3634
      %v3636 = vpop.f32.mrb[0].mxu0
      %3637 = vmatprep.mubr.f32.mxu0 0.0
      %3638 = vmatmul.mubr.f32.gmra.mrb[0].mxu0 %v3535
      %v3639 = vpop.f32.mrb[0].mxu0
      %v3640 = vadd.f32 0.0, %v3639
      %v3641 = vpop.f32.mrb[0].mxu0
      %3642 = vmatprep.mubr.f32.mxu0 0.0
      %3643 = vmatmul.mubr.f32.gmra.mrb[0].mxu0 %v3537
      %v3644 = vpop.f32.mrb[0].mxu0
      %v3645 = vadd.f32 0.0, %v3644
      %v3646 = vpop.f32.mrb[0].mxu0
      %3647 = vmatprep.mubr.f32.mxu0 0.0
      %3648 = vmatmul.mubr.f32.gmra.mrb[0].mxu0 %v3539
      %v3649 = vpop.f32.mrb[0].mxu0
      %v3650 = vadd.f32 0.0, %v3649
      %v3651 = vpop.f32.mrb[0].mxu0
      %3652 = vmatprep.mubr.f32.mxu0 0.0
      %3653 = vmatmul.mubr.f32.gmra.mrb[0].mxu0 %v3541
      %v3654 = vpop.f32.mrb[0].mxu0
      %v3655 = vadd.f32 0.0, %v3654
      %v3656 = vpop.f32.mrb[0].mxu0
      %3657 = vmatprep.mubr.f32.mxu0 0.0
      %3658 = vmatmul.mubr.f32.gmra.mrb[0].mxu0 %v3543
      %v3659 = vpop.f32.mrb[0].mxu0
      %v3660 = vadd.f32 0.0, %v3659
      %v3661 = vpop.f32.mrb[0].mxu0
      %3662 = vmatprep.mubr.f32.mxu0 0.0
      %3663 = vmatmul.mubr.f32.gmra.mrb[0].mxu0 %v3545
      %v3664 = vpop.f32.mrb[0].mxu0
      %v3665 = vadd.f32 0.0, %v3664
      %v3666 = vpop.f32.mrb[0].mxu0
      %3667 = vdwg.mxu0
      %v3668 = vmul.f32 %v3630, 0.35355338
      %v3669 = vmul.f32 %v3635, 0.35355338
      %v3670 = vmul.f32 %v3640, 0.35355338
      %v3671 = vmul.f32 %v3645, 0.35355338
      %v3672 = vmul.f32 %v3650, 0.35355338
      %v3673 = vmul.f32 %v3655, 0.35355338
      %v3674 = vmul.f32 %v3660, 0.35355338
      %v3675 = vmul.f32 %v3665, 0.35355338
      %v3676 = vmul.f32 %v3668, %v3491
      %v3677 = vmul.f32 %v3669, %v3493
      %v3678 = vmul.f32 %v3670, %v3495
      %v3679 = vmul.f32 %v3671, %v3497
      %v3680 = vmul.f32 %v3672, %v3499
      %v3681 = vmul.f32 %v3673, %v3501
      %v3682 = vmul.f32 %v3674, %v3503
      %v3683 = vmul.f32 %v3675, %v3505
      %v3684 = vsel %vm1285, %v3676, 0.0
      %3685 = vadd.xlane.f32.xlu0 %v3684
      %v3686 = vpop.xlane.xlu0 %3685
      %v3687 = vsel %vm1285, %v3677, 0.0
      %3688 = vadd.xlane.f32.xlu0 %v3687
      %v3689 = vpop.xlane.xlu0 %3688
      %v3690 = vsel %vm1285, %v3678, 0.0
      %3691 = vadd.xlane.f32.xlu0 %v3690
      %v3692 = vpop.xlane.xlu0 %3691
      %v3693 = vsel %vm1285, %v3679, 0.0
      %3694 = vadd.xlane.f32.xlu0 %v3693
      %v3695 = vpop.xlane.xlu0 %3694
      %v3696 = vsel %vm1285, %v3680, 0.0
      %3697 = vadd.xlane.f32.xlu0 %v3696
      %v3698 = vpop.xlane.xlu0 %3697
      %v3699 = vsel %vm1285, %v3681, 0.0
      %3700 = vadd.xlane.f32.xlu0 %v3699
      %v3701 = vpop.xlane.xlu0 %3700
      %v3702 = vsel %vm1285, %v3682, 0.0
      %3703 = vadd.xlane.f32.xlu0 %v3702
      %v3704 = vpop.xlane.xlu0 %3703
      %v3705 = vsel %vm1285, %v3683, 0.0
      %3706 = vadd.xlane.f32.xlu0 %v3705
      %v3707 = vpop.xlane.xlu0 %3706
      %v3708 = vand.u32 2147483647, %v3686
      %v3709 = vand.u32 2147483647, %v3689
      %v3710 = vand.u32 2147483647, %v3692
      %v3711 = vand.u32 2147483647, %v3695
      %v3712 = vand.u32 2147483647, %v3698
      %v3713 = vand.u32 2147483647, %v3701
      %v3714 = vand.u32 2147483647, %v3704
      %v3715 = vand.u32 2147483647, %v3707
      %v3716 = vsub.f32 0.0, %v3460
      %v3717 = vsub.f32 0.0, %v3463
      %v3718 = vsub.f32 0.0, %v3466
      %v3719 = vsub.f32 0.0, %v3469
      %v3720 = vsub.f32 0.0, %v3472
      %v3721 = vsub.f32 0.0, %v3475
      %v3722 = vsub.f32 0.0, %v3478
      %v3723 = vsub.f32 0.0, %v3481
      %v3724 = vmul.f32 %v3716, 1.442695
      %v3725 = vpow.pop %v3724
      %v3726 = vmul.f32 %v3717, 1.442695
      %v3727 = vpow.pop %v3726
      %v3728 = vmul.f32 %v3718, 1.442695
      %v3729 = vpow.pop %v3728
      %v3730 = vmul.f32 %v3719, 1.442695
      %v3731 = vpow.pop %v3730
      %v3732 = vmul.f32 %v3720, 1.442695
      %v3733 = vpow.pop %v3732
      %v3734 = vmul.f32 %v3721, 1.442695
      %v3735 = vpow.pop %v3734
      %v3736 = vmul.f32 %v3722, 1.442695
      %v3737 = vpow.pop %v3736
      %v3738 = vmul.f32 %v3723, 1.442695
      %v3739 = vpow.pop %v3738
      %v3740 = vmax.f32 %v3708, %v3725
      %v3741 = vmax.f32 %v3709, %v3727
      %v3742 = vmax.f32 %v3710, %v3729
      %v3743 = vmax.f32 %v3711, %v3731
      %v3744 = vmax.f32 %v3712, %v3733
      %v3745 = vmax.f32 %v3713, %v3735
      %v3746 = vmax.f32 %v3714, %v3737
      %v3747 = vmax.f32 %v3715, %v3739
      %v3749 = vsel %vm1285, %v3676, 0
      %v3752 = vsel %vm1285, %v3677, 0
      %v3755 = vsel %vm1285, %v3678, 0
      %v3758 = vsel %vm1285, %v3679, 0
      %v3761 = vsel %vm1285, %v3680, 0
      %v3764 = vsel %vm1285, %v3681, 0
      %v3767 = vsel %vm1285, %v3682, 0
      %v3770 = vsel %vm1285, %v3683, 0
      %3772 = vmatprep.subr.mxu0 0.0
      %3773 = vmatpush1.msra.mxu0 %v2912
      %3774 = vmatprep.subr.mxu0 0.0
      %3775 = vmatpush1.msra.mxu0 %v2917
      %3776 = vmatprep.subr.mxu0 0.0
      %3777 = vmatpush1.msra.mxu0 %v2922
      %3778 = vmatprep.subr.mxu0 0.0
      %3779 = vmatpush1.msra.mxu0 %v2927
      %3780 = vmatprep.subr.mxu0 0.0
      %3781 = vmatpush1.msra.mxu0 %v2932
      %3782 = vmatprep.subr.mxu0 0.0
      %3783 = vmatpush1.msra.mxu0 %v2937
      %3784 = vmatprep.subr.mxu0 0.0
      %3785 = vmatpush1.msra.mxu0 %v2942
      %3786 = vmatprep.subr.mxu0 0.0
      %3787 = vmatpush1.msra.mxu0 %v2947
      %3788 = vmatprep.subr.mxu0 0.0
      %3789 = vmatpush1.msra.mxu0 0.0
      %3790 = vmatprep.subr.mxu0 0.0
      %3791 = vmatpush1.msra.mxu0 0.0
      %3792 = vmatprep.subr.mxu0 0.0
      %3793 = vmatpush1.msra.mxu0 0.0
      %3794 = vmatprep.subr.mxu0 0.0
      %3795 = vmatpush1.msra.mxu0 0.0
      %3796 = vmatprep.subr.mxu0 0.0
      %3797 = vmatpush1.msra.mxu0 0.0
      %3798 = vmatprep.subr.mxu0 0.0
      %3799 = vmatpush1.msra.mxu0 0.0
      %3800 = vmatprep.subr.mxu0 0.0
      %3801 = vmatpush1.msra.mxu0 0.0
      %3802 = vmatprep.subr.mxu0 0.0
      %3803 = vmatpush1.msra.mxu0 0.0
      %3804 = vmatprep.subr.mxu0 0.0
      %3805 = vmatpush1.msra.mxu0 0.0
      %3806 = vmatprep.subr.mxu0 0.0
      %3807 = vmatpush1.msra.mxu0 0.0
      %3808 = vmatprep.subr.mxu0 0.0
      %3809 = vmatpush1.msra.mxu0 0.0
      %3810 = vmatprep.subr.mxu0 0.0
      %3811 = vmatpush1.msra.mxu0 0.0
      %3812 = vmatprep.subr.mxu0 0.0
      %3813 = vmatpush1.msra.mxu0 0.0
      %3814 = vmatprep.subr.mxu0 0.0
      %3815 = vmatpush1.msra.mxu0 0.0
      %3816 = vmatprep.subr.mxu0 0.0
      %3817 = vmatpush1.msra.mxu0 0.0
      %3818 = vmatprep.subr.mxu0 0.0
      %3819 = vmatpush1.msra.mxu0 0.0
      %3820 = vmatprep.subr.mxu0 0.0
      %3821 = vmatpush1.msra.mxu0 0.0
      %3822 = vmatprep.subr.mxu0 0.0
      %3823 = vmatpush1.msra.mxu0 0.0
      %3824 = vmatprep.subr.mxu0 0.0
      %3825 = vmatpush1.msra.mxu0 0.0
      %3826 = vmatprep.subr.mxu0 0.0
      %3827 = vmatpush1.msra.mxu0 0.0
      %3828 = vmatprep.subr.mxu0 0.0
      %3829 = vmatpush1.msra.mxu0 0.0
      %3830 = vmatprep.subr.mxu0 0.0
      %3831 = vmatpush1.msra.mxu0 0.0
      %3832 = vmatprep.subr.mxu0 0.0
      %3833 = vmatpush1.msra.mxu0 0.0
      %3834 = vmatprep.subr.mxu0 0.0
      %3835 = vmatpush1.msra.mxu0 0.0
      %3836 = vmatprep.mubr.f32.mxu0 0.0
      %3837 = vmatmul.mubr.f32.gmra.mrb[0].mxu0 %v3749
      %v3838 = vpop.f32.mrb[0].mxu0
      %v3839 = vadd.f32 0.0, %v3838
      %v3840 = vpop.f32.mrb[0].mxu0
      %3841 = vmatprep.mubr.f32.mxu0 0.0
      %3842 = vmatmul.mubr.f32.gmra.mrb[0].mxu0 %v3752
      %v3843 = vpop.f32.mrb[0].mxu0
      %v3844 = vadd.f32 0.0, %v3843
      %v3845 = vpop.f32.mrb[0].mxu0
      %3846 = vmatprep.mubr.f32.mxu0 0.0
      %3847 = vmatmul.mubr.f32.gmra.mrb[0].mxu0 %v3755
      %v3848 = vpop.f32.mrb[0].mxu0
      %v3849 = vadd.f32 0.0, %v3848
      %v3850 = vpop.f32.mrb[0].mxu0
      %3851 = vmatprep.mubr.f32.mxu0 0.0
      %3852 = vmatmul.mubr.f32.gmra.mrb[0].mxu0 %v3758
      %v3853 = vpop.f32.mrb[0].mxu0
      %v3854 = vadd.f32 0.0, %v3853
      %v3855 = vpop.f32.mrb[0].mxu0
      %3856 = vmatprep.mubr.f32.mxu0 0.0
      %3857 = vmatmul.mubr.f32.gmra.mrb[0].mxu0 %v3761
      %v3858 = vpop.f32.mrb[0].mxu0
      %v3859 = vadd.f32 0.0, %v3858
      %v3860 = vpop.f32.mrb[0].mxu0
      %3861 = vmatprep.mubr.f32.mxu0 0.0
      %3862 = vmatmul.mubr.f32.gmra.mrb[0].mxu0 %v3764
      %v3863 = vpop.f32.mrb[0].mxu0
      %v3864 = vadd.f32 0.0, %v3863
      %v3865 = vpop.f32.mrb[0].mxu0
      %3866 = vmatprep.mubr.f32.mxu0 0.0
      %3867 = vmatmul.mubr.f32.gmra.mrb[0].mxu0 %v3767
      %v3868 = vpop.f32.mrb[0].mxu0
      %v3869 = vadd.f32 0.0, %v3868
      %v3870 = vpop.f32.mrb[0].mxu0
      %3871 = vmatprep.mubr.f32.mxu0 0.0
      %3872 = vmatmul.mubr.f32.gmra.mrb[0].mxu0 %v3770
      %v3873 = vpop.f32.mrb[0].mxu0
      %v3874 = vadd.f32 0.0, %v3873
      %v3875 = vpop.f32.mrb[0].mxu0
      %3876 = vdwg.mxu0
      %v3877 = vadd.f32 %v3740, 1e-06
      %v3878 = vadd.f32 %v3741, 1e-06
      %v3879 = vadd.f32 %v3742, 1e-06
      %v3880 = vadd.f32 %v3743, 1e-06
      %v3881 = vadd.f32 %v3744, 1e-06
      %v3882 = vadd.f32 %v3745, 1e-06
      %v3883 = vadd.f32 %v3746, 1e-06
      %v3884 = vadd.f32 %v3747, 1e-06
      %v3885 = vrcp.pop %v3877
      %v3886 = vmul.f32 %v3839, %v3885
      %v3887 = vrcp.pop %v3878
      %v3888 = vmul.f32 %v3844, %v3887
      %v3889 = vrcp.pop %v3879
      %v3890 = vmul.f32 %v3849, %v3889
      %v3891 = vrcp.pop %v3880
      %v3892 = vmul.f32 %v3854, %v3891
      %v3893 = vrcp.pop %v3881
      %v3894 = vmul.f32 %v3859, %v3893
      %v3895 = vrcp.pop %v3882
      %v3896 = vmul.f32 %v3864, %v3895
      %v3897 = vrcp.pop %v3883
      %v3898 = vmul.f32 %v3869, %v3897
      %v3899 = vrcp.pop %v3884
      %v3900 = vmul.f32 %v3874, %v3899
      %vm3901 = vcmask 130048
      %v3902 = vsel %vm3901, %v3886, 0.0
      %3903 = vadd.xlane.f32.xlu0 %v3902
      %v3904 = vpop.xlane.xlu0 %3903
      %v3905 = vsel %vm3901, %v3888, 0.0
      %3906 = vadd.xlane.f32.xlu0 %v3905
      %v3907 = vpop.xlane.xlu0 %3906
      %v3908 = vsel %vm3901, %v3890, 0.0
      %3909 = vadd.xlane.f32.xlu0 %v3908
      %v3910 = vpop.xlane.xlu0 %3909
      %v3911 = vsel %vm3901, %v3892, 0.0
      %3912 = vadd.xlane.f32.xlu0 %v3911
      %v3913 = vpop.xlane.xlu0 %3912
      %v3914 = vsel %vm3901, %v3894, 0.0
      %3915 = vadd.xlane.f32.xlu0 %v3914
      %v3916 = vpop.xlane.xlu0 %3915
      %v3917 = vsel %vm3901, %v3896, 0.0
      %3918 = vadd.xlane.f32.xlu0 %v3917
      %v3919 = vpop.xlane.xlu0 %3918
      %v3920 = vsel %vm3901, %v3898, 0.0
      %3921 = vadd.xlane.f32.xlu0 %v3920
      %v3922 = vpop.xlane.xlu0 %3921
      %v3923 = vsel %vm3901, %v3900, 0.0
      %3924 = vadd.xlane.f32.xlu0 %v3923
      %v3925 = vpop.xlane.xlu0 %3924
      %v3926 = vrcp.pop 16.0
      %v3927 = vmul.f32 %v3904, %v3926
      %v3928 = vmul.f32 %v3907, %v3926
      %v3929 = vmul.f32 %v3910, %v3926
      %v3930 = vmul.f32 %v3913, %v3926
      %v3931 = vmul.f32 %v3916, %v3926
      %v3932 = vmul.f32 %v3919, %v3926
      %v3933 = vmul.f32 %v3922, %v3926
      %v3934 = vmul.f32 %v3925, %v3926
      %v3935 = vsub.f32 %v3886, %v3927
      %v3936 = vsub.f32 %v3888, %v3928
      %v3937 = vsub.f32 %v3890, %v3929
      %v3938 = vsub.f32 %v3892, %v3930
      %v3939 = vsub.f32 %v3894, %v3931
      %v3940 = vsub.f32 %v3896, %v3932
      %v3941 = vsub.f32 %v3898, %v3933
      %v3942 = vsub.f32 %v3900, %v3934
      %v3943 = vmul.f32 %v3935, %v3935
      %v3944 = vmul.f32 %v3936, %v3936
      %v3945 = vmul.f32 %v3937, %v3937
      %v3946 = vmul.f32 %v3938, %v3938
      %v3947 = vmul.f32 %v3939, %v3939
      %v3948 = vmul.f32 %v3940, %v3940
      %v3949 = vmul.f32 %v3941, %v3941
      %v3950 = vmul.f32 %v3942, %v3942
      %v3951 = vsel %vm3901, %v3943, 0.0
      %3952 = vadd.xlane.f32.xlu0 %v3951
      %v3953 = vpop.xlane.xlu0 %3952
      %v3954 = vsel %vm3901, %v3944, 0.0
      %3955 = vadd.xlane.f32.xlu0 %v3954
      %v3956 = vpop.xlane.xlu0 %3955
      %v3957 = vsel %vm3901, %v3945, 0.0
      %3958 = vadd.xlane.f32.xlu0 %v3957
      %v3959 = vpop.xlane.xlu0 %3958
      %v3960 = vsel %vm3901, %v3946, 0.0
      %3961 = vadd.xlane.f32.xlu0 %v3960
      %v3962 = vpop.xlane.xlu0 %3961
      %v3963 = vsel %vm3901, %v3947, 0.0
      %3964 = vadd.xlane.f32.xlu0 %v3963
      %v3965 = vpop.xlane.xlu0 %3964
      %v3966 = vsel %vm3901, %v3948, 0.0
      %3967 = vadd.xlane.f32.xlu0 %v3966
      %v3968 = vpop.xlane.xlu0 %3967
      %v3969 = vsel %vm3901, %v3949, 0.0
      %3970 = vadd.xlane.f32.xlu0 %v3969
      %v3971 = vpop.xlane.xlu0 %3970
      %v3972 = vsel %vm3901, %v3950, 0.0
      %3973 = vadd.xlane.f32.xlu0 %v3972
      %v3974 = vpop.xlane.xlu0 %3973
      %v3975 = vmul.f32 %v3953, %v3926
      %v3976 = vmul.f32 %v3956, %v3926
      %v3977 = vmul.f32 %v3959, %v3926
      %v3978 = vmul.f32 %v3962, %v3926
      %v3979 = vmul.f32 %v3965, %v3926
      %v3980 = vmul.f32 %v3968, %v3926
      %v3981 = vmul.f32 %v3971, %v3926
      %v3982 = vmul.f32 %v3974, %v3926
      %v3983 = vadd.f32 %v3975, 1e-06
      %v3984 = vadd.f32 %v3976, 1e-06
      %v3985 = vadd.f32 %v3977, 1e-06
      %v3986 = vadd.f32 %v3978, 1e-06
      %v3987 = vadd.f32 %v3979, 1e-06
      %v3988 = vadd.f32 %v3980, 1e-06
      %v3989 = vadd.f32 %v3981, 1e-06
      %v3990 = vadd.f32 %v3982, 1e-06
      %v3991 = vrsqrt.pop %v3983
      %v3992 = vrsqrt.pop %v3984
      %v3993 = vrsqrt.pop %v3985
      %v3994 = vrsqrt.pop %v3986
      %v3995 = vrsqrt.pop %v3987
      %v3996 = vrsqrt.pop %v3988
      %v3997 = vrsqrt.pop %v3989
      %v3998 = vrsqrt.pop %v3990
      %v3999 = vmul.f32 %v3935, %v3991
      %v4000 = vmul.f32 %v3936, %v3992
      %v4001 = vmul.f32 %v3937, %v3993
      %v4002 = vmul.f32 %v3938, %v3994
      %v4003 = vmul.f32 %v3939, %v3995
      %v4004 = vmul.f32 %v3940, %v3996
      %v4005 = vmul.f32 %v3941, %v3997
      %v4006 = vmul.f32 %v3942, %v3998
      %v4007 = vlaneseq
      %v4008 = vshrl.u32 %v4007, 7
      %v4009 = vsub.s32 0, %v4008
      %v4010 = vrot.slane %v3191, %v4009
      %v4011 = vmul.f32 %v3999, %v4010
      %v4012 = vmul.f32 %v4000, %v4010
      %v4013 = vmul.f32 %v4001, %v4010
      %v4014 = vmul.f32 %v4002, %v4010
      %v4015 = vmul.f32 %v4003, %v4010
      %v4016 = vmul.f32 %v4004, %v4010
      %v4017 = vmul.f32 %v4005, %v4010
      %v4018 = vmul.f32 %v4006, %v4010
      %v4019 = vxor.u32 %v2912, 2147483648
      %v4020 = vxor.u32 %v2917, 2147483648
      %v4021 = vxor.u32 %v2922, 2147483648
      %v4022 = vxor.u32 %v2927, 2147483648
      %v4023 = vxor.u32 %v2932, 2147483648
      %v4024 = vxor.u32 %v2937, 2147483648
      %v4025 = vxor.u32 %v2942, 2147483648
      %v4026 = vxor.u32 %v2947, 2147483648
      %v4027 = vmul.f32 %v4019, 1.442695
      %v4028 = vpow.pop %v4027
      %v4029 = vmul.f32 %v4020, 1.442695
      %v4030 = vpow.pop %v4029
      %v4031 = vmul.f32 %v4021, 1.442695
      %v4032 = vpow.pop %v4031
      %v4033 = vmul.f32 %v4022, 1.442695
      %v4034 = vpow.pop %v4033
      %v4035 = vmul.f32 %v4023, 1.442695
      %v4036 = vpow.pop %v4035
      %v4037 = vmul.f32 %v4024, 1.442695
      %v4038 = vpow.pop %v4037
      %v4039 = vmul.f32 %v4025, 1.442695
      %v4040 = vpow.pop %v4039
      %v4041 = vmul.f32 %v4026, 1.442695
      %v4042 = vpow.pop %v4041
      %v4043 = vadd.f32 %v4028, 1.0
      %v4044 = vadd.f32 %v4030, 1.0
      %v4045 = vadd.f32 %v4032, 1.0
      %v4046 = vadd.f32 %v4034, 1.0
      %v4047 = vadd.f32 %v4036, 1.0
      %v4048 = vadd.f32 %v4038, 1.0
      %v4049 = vadd.f32 %v4040, 1.0
      %v4050 = vadd.f32 %v4042, 1.0
      %v4051 = vrcp.pop %v4043
      %v4052 = vmul.f32 1.0, %v4051
      %v4053 = vrcp.pop %v4044
      %v4054 = vmul.f32 1.0, %v4053
      %v4055 = vrcp.pop %v4045
      %v4056 = vmul.f32 1.0, %v4055
      %v4057 = vrcp.pop %v4046
      %v4058 = vmul.f32 1.0, %v4057
      %v4059 = vrcp.pop %v4047
      %v4060 = vmul.f32 1.0, %v4059
      %v4061 = vrcp.pop %v4048
      %v4062 = vmul.f32 1.0, %v4061
      %v4063 = vrcp.pop %v4049
      %v4064 = vmul.f32 1.0, %v4063
      %v4065 = vrcp.pop %v4050
      %v4066 = vmul.f32 1.0, %v4065
      %4075 = vrot.lane.b32.xlu0 %v4011, 32
      %v4076 = vpop.permute.xlu0 %4075
      %4077 = vrot.lane.b32.xlu0 %v4012, 32
      %v4078 = vpop.permute.xlu0 %4077
      %4079 = vrot.lane.b32.xlu0 %v4013, 32
      %v4080 = vpop.permute.xlu0 %4079
      %4081 = vrot.lane.b32.xlu0 %v4014, 32
      %v4082 = vpop.permute.xlu0 %4081
      %4083 = vrot.lane.b32.xlu0 %v4015, 32
      %v4084 = vpop.permute.xlu0 %4083
      %4085 = vrot.lane.b32.xlu0 %v4016, 32
      %v4086 = vpop.permute.xlu0 %4085
      %4087 = vrot.lane.b32.xlu0 %v4017, 32
      %v4088 = vpop.permute.xlu0 %4087
      %4089 = vrot.lane.b32.xlu0 %v4018, 32
      %v4090 = vpop.permute.xlu0 %4089
      %v4099 = vmul.f32 %v4052, %v4076
      %v4100 = vmul.f32 %v4054, %v4078
      %v4101 = vmul.f32 %v4056, %v4080
      %v4102 = vmul.f32 %v4058, %v4082
      %v4103 = vmul.f32 %v4060, %v4084
      %v4104 = vmul.f32 %v4062, %v4086
      %v4105 = vmul.f32 %v4064, %v4088
      %v4106 = vmul.f32 %v4066, %v4090
      %v4107 = vld [vmem:[%s11] sm:$0xff]
      %v4108 = vld [vmem:[%s11 + $0x8] sm:$0xff]
      %4109 = vset.pattern.permute.xlu0 3
      %4110 = vperm.xlu0 %4109, %v3286
      %v4111 = vpop.permute.xlu0 %4110
      %4113 = vset.pattern.permute.xlu0 3
      %4114 = vperm.xlu0 %4113, %v3291
      %v4115 = vpop.permute.xlu0 %4114
      %4117 = vset.pattern.permute.xlu0 3
      %4118 = vperm.xlu0 %4117, %v3296
      %v4119 = vpop.permute.xlu0 %4118
      %4121 = vset.pattern.permute.xlu0 3
      %4122 = vperm.xlu0 %4121, %v3301
      %v4123 = vpop.permute.xlu0 %4122
      %4125 = vset.pattern.permute.xlu0 3
      %4126 = vperm.xlu0 %4125, %v3306
      %v4127 = vpop.permute.xlu0 %4126
      %4129 = vset.pattern.permute.xlu0 3
      %4130 = vperm.xlu0 %4129, %v3311
      %v4131 = vpop.permute.xlu0 %4130
      %4133 = vset.pattern.permute.xlu0 3
      %4134 = vperm.xlu0 %4133, %v3316
      %v4135 = vpop.permute.xlu0 %4134
      %4137 = vset.pattern.permute.xlu0 3
      %4138 = vperm.xlu0 %4137, %v3321
      %v4139 = vpop.permute.xlu0 %4138
      %v4141 = vlaneseq
      %v4142 = vshrl.u32 %v4141, 7
      %v4143 = vsub.s32 1, %v4142
      %v4144 = vrot.slane %v3397, %v4143
      %v4145 = vadd.f32 %v4111, %v4144
      %v4146 = vadd.f32 %v4115, %v4144
      %v4147 = vadd.f32 %v4119, %v4144
      %v4148 = vadd.f32 %v4123, %v4144
      %v4149 = vadd.f32 %v4127, %v4144
      %v4150 = vadd.f32 %v4131, %v4144
      %v4151 = vadd.f32 %v4135, %v4144
      %v4152 = vadd.f32 %v4139, %v4144
      %v4153 = vadd.f32 %v4145, %v3183
      %v4154 = vadd.f32 %v4146, %v3184
      %v4155 = vadd.f32 %v4147, %v3185
      %v4156 = vadd.f32 %v4148, %v3186
      %v4157 = vadd.f32 %v4149, %v3187
      %v4158 = vadd.f32 %v4150, %v3188
      %v4159 = vadd.f32 %v4151, %v3189
      %v4160 = vadd.f32 %v4152, %v3190
      %v4161 = vsel %vm1285, %v4153, -inf
      %4162 = vmax.xlane.f32.xlu0 %v4161
      %v4163 = vpop.xlane.xlu0 %4162
      %v4164 = vsel %vm1285, %v4154, -inf
      %4165 = vmax.xlane.f32.xlu0 %v4164
      %v4166 = vpop.xlane.xlu0 %4165
      %v4167 = vsel %vm1285, %v4155, -inf
      %4168 = vmax.xlane.f32.xlu0 %v4167
      %v4169 = vpop.xlane.xlu0 %4168
      %v4170 = vsel %vm1285, %v4156, -inf
      %4171 = vmax.xlane.f32.xlu0 %v4170
      %v4172 = vpop.xlane.xlu0 %4171
      %v4173 = vsel %vm1285, %v4157, -inf
      %4174 = vmax.xlane.f32.xlu0 %v4173
      %v4175 = vpop.xlane.xlu0 %4174
      %v4176 = vsel %vm1285, %v4158, -inf
      %4177 = vmax.xlane.f32.xlu0 %v4176
      %v4178 = vpop.xlane.xlu0 %4177
      %v4179 = vsel %vm1285, %v4159, -inf
      %4180 = vmax.xlane.f32.xlu0 %v4179
      %v4181 = vpop.xlane.xlu0 %4180
      %v4182 = vsel %vm1285, %v4160, -inf
      %4183 = vmax.xlane.f32.xlu0 %v4182
      %v4184 = vpop.xlane.xlu0 %4183
      %v4185 = vsub.f32 %v4153, %v4163
      %v4186 = vsub.f32 %v4154, %v4166
      %v4187 = vsub.f32 %v4155, %v4169
      %v4188 = vsub.f32 %v4156, %v4172
      %v4189 = vsub.f32 %v4157, %v4175
      %v4190 = vsub.f32 %v4158, %v4178
      %v4191 = vsub.f32 %v4159, %v4181
      %v4192 = vsub.f32 %v4160, %v4184
      %v4193 = vmul.f32 %v4185, 1.442695
      %v4194 = vpow.pop %v4193
      %v4195 = vmul.f32 %v4186, 1.442695
      %v4196 = vpow.pop %v4195
      %v4197 = vmul.f32 %v4187, 1.442695
      %v4198 = vpow.pop %v4197
      %v4199 = vmul.f32 %v4188, 1.442695
      %v4200 = vpow.pop %v4199
      %v4201 = vmul.f32 %v4189, 1.442695
      %v4202 = vpow.pop %v4201
      %v4203 = vmul.f32 %v4190, 1.442695
      %v4204 = vpow.pop %v4203
      %v4205 = vmul.f32 %v4191, 1.442695
      %v4206 = vpow.pop %v4205
      %v4207 = vmul.f32 %v4192, 1.442695
      %v4208 = vpow.pop %v4207
      %4209 = vrot.lane.b32.xlu0 %v2619, 120
      %v4210 = vpop.permute.xlu0 %4209
      %4211 = vrot.lane.b32.xlu0 %v2624, 120
      %v4212 = vpop.permute.xlu0 %4211
      %4213 = vrot.lane.b32.xlu0 %v2629, 120
      %v4214 = vpop.permute.xlu0 %4213
      %4215 = vrot.lane.b32.xlu0 %v2634, 120
      %v4216 = vpop.permute.xlu0 %4215
      %4217 = vrot.lane.b32.xlu0 %v2639, 120
      %v4218 = vpop.permute.xlu0 %4217
      %4219 = vrot.lane.b32.xlu0 %v2644, 120
      %v4220 = vpop.permute.xlu0 %4219
      %4221 = vrot.lane.b32.xlu0 %v2649, 120
      %v4222 = vpop.permute.xlu0 %4221
      %4223 = vrot.lane.b32.xlu0 %v2654, 120
      %v4224 = vpop.permute.xlu0 %4223
      %4225 = vrot.lane.b32.xlu0 %v2619, 104
      %v4226 = vpop.permute.xlu0 %4225
      %4227 = vrot.lane.b32.xlu0 %v2624, 104
      %v4228 = vpop.permute.xlu0 %4227
      %4229 = vrot.lane.b32.xlu0 %v2629, 104
      %v4230 = vpop.permute.xlu0 %4229
      %4231 = vrot.lane.b32.xlu0 %v2634, 104
      %v4232 = vpop.permute.xlu0 %4231
      %4233 = vrot.lane.b32.xlu0 %v2639, 104
      %v4234 = vpop.permute.xlu0 %4233
      %4235 = vrot.lane.b32.xlu0 %v2644, 104
      %v4236 = vpop.permute.xlu0 %4235
      %4237 = vrot.lane.b32.xlu0 %v2649, 104
      %v4238 = vpop.permute.xlu0 %4237
      %4239 = vrot.lane.b32.xlu0 %v2654, 104
      %v4240 = vpop.permute.xlu0 %4239
      %v4241 = vsel %vm3530, %v4210, 0
      %v4243 = vsel %vm3530, %v4212, 0
      %v4245 = vsel %vm3530, %v4214, 0
      %v4247 = vsel %vm3530, %v4216, 0
      %v4249 = vsel %vm3530, %v4218, 0
      %v4251 = vsel %vm3530, %v4220, 0
      %v4253 = vsel %vm3530, %v4222, 0
      %v4255 = vsel %vm3530, %v4224, 0
      %v4257 = vsel %vm3530, %v4226, 0
      %v4259 = vsel %vm3530, %v4228, 0
      %v4261 = vsel %vm3530, %v4230, 0
      %v4263 = vsel %vm3530, %v4232, 0
      %v4265 = vsel %vm3530, %v4234, 0
      %v4267 = vsel %vm3530, %v4236, 0
      %v4269 = vsel %vm3530, %v4238, 0
      %v4271 = vsel %vm3530, %v4240, 0
      %4273 = vmatprep.subr.mxu0 0.0
      %4274 = vmatpush1.xpose.msra.mxu0 %v4257
      %4275 = vmatprep.subr.mxu0 0.0
      %4276 = vmatpush1.xpose.msra.mxu0 %v4259
      %4277 = vmatprep.subr.mxu0 0.0
      %4278 = vmatpush1.xpose.msra.mxu0 %v4261
      %4279 = vmatprep.subr.mxu0 0.0
      %4280 = vmatpush1.xpose.msra.mxu0 %v4263
      %4281 = vmatprep.subr.mxu0 0.0
      %4282 = vmatpush1.xpose.msra.mxu0 %v4265
      %4283 = vmatprep.subr.mxu0 0.0
      %4284 = vmatpush1.xpose.msra.mxu0 %v4267
      %4285 = vmatprep.subr.mxu0 0.0
      %4286 = vmatpush1.xpose.msra.mxu0 %v4269
      %4287 = vmatprep.subr.mxu0 0.0
      %4288 = vmatpush1.xpose.msra.mxu0 %v4271
      %4289 = vmatprep.subr.mxu0 0.0
      %4290 = vmatpush1.xpose.msra.mxu0 0.0
      %4291 = vmatprep.subr.mxu0 0.0
      %4292 = vmatpush1.xpose.msra.mxu0 0.0
      %4293 = vmatprep.subr.mxu0 0.0
      %4294 = vmatpush1.xpose.msra.mxu0 0.0
      %4295 = vmatprep.subr.mxu0 0.0
      %4296 = vmatpush1.xpose.msra.mxu0 0.0
      %4297 = vmatprep.subr.mxu0 0.0
      %4298 = vmatpush1.xpose.msra.mxu0 0.0
      %4299 = vmatprep.subr.mxu0 0.0
      %4300 = vmatpush1.xpose.msra.mxu0 0.0
      %4301 = vmatprep.subr.mxu0 0.0
      %4302 = vmatpush1.xpose.msra.mxu0 0.0
      %4303 = vmatprep.subr.mxu0 0.0
      %4304 = vmatpush1.xpose.msra.mxu0 0.0
      %4305 = vmatprep.subr.mxu0 0.0
      %4306 = vmatpush1.xpose.msra.mxu0 0.0
      %4307 = vmatprep.subr.mxu0 0.0
      %4308 = vmatpush1.xpose.msra.mxu0 0.0
      %4309 = vmatprep.subr.mxu0 0.0
      %4310 = vmatpush1.xpose.msra.mxu0 0.0
      %4311 = vmatprep.subr.mxu0 0.0
      %4312 = vmatpush1.xpose.msra.mxu0 0.0
      %4313 = vmatprep.subr.mxu0 0.0
      %4314 = vmatpush1.xpose.msra.mxu0 0.0
      %4315 = vmatprep.subr.mxu0 0.0
      %4316 = vmatpush1.xpose.msra.mxu0 0.0
      %4317 = vmatprep.subr.mxu0 0.0
      %4318 = vmatpush1.xpose.msra.mxu0 0.0
      %4319 = vmatprep.subr.mxu0 0.0
      %4320 = vmatpush1.xpose.msra.mxu0 0.0
      %4321 = vmatprep.subr.mxu0 0.0
      %4322 = vmatpush1.xpose.msra.mxu0 0.0
      %4323 = vmatprep.subr.mxu0 0.0
      %4324 = vmatpush1.xpose.msra.mxu0 0.0
      %4325 = vmatprep.subr.mxu0 0.0
      %4326 = vmatpush1.xpose.msra.mxu0 0.0
      %4327 = vmatprep.subr.mxu0 0.0
      %4328 = vmatpush1.xpose.msra.mxu0 0.0
      %4329 = vmatprep.subr.mxu0 0.0
      %4330 = vmatpush1.xpose.msra.mxu0 0.0
      %4331 = vmatprep.subr.mxu0 0.0
      %4332 = vmatpush1.xpose.msra.mxu0 0.0
      %4333 = vmatprep.subr.mxu0 0.0
      %4334 = vmatpush1.xpose.msra.mxu0 0.0
      %4335 = vmatprep.subr.mxu0 0.0
      %4336 = vmatpush1.xpose.msra.mxu0 0.0
      %4337 = vmatprep.mubr.f32.mxu0 0.0
      %4338 = vmatmul.mubr.f32.gmra.mrb[0].mxu0 %v4241
      %v4339 = vpop.f32.mrb[0].mxu0
      %v4340 = vadd.f32 0.0, %v4339
      %v4341 = vpop.f32.mrb[0].mxu0
      %4342 = vmatprep.mubr.f32.mxu0 0.0
      %4343 = vmatmul.mubr.f32.gmra.mrb[0].mxu0 %v4243
      %v4344 = vpop.f32.mrb[0].mxu0
      %v4345 = vadd.f32 0.0, %v4344
      %v4346 = vpop.f32.mrb[0].mxu0
      %4347 = vmatprep.mubr.f32.mxu0 0.0
      %4348 = vmatmul.mubr.f32.gmra.mrb[0].mxu0 %v4245
      %v4349 = vpop.f32.mrb[0].mxu0
      %v4350 = vadd.f32 0.0, %v4349
      %v4351 = vpop.f32.mrb[0].mxu0
      %4352 = vmatprep.mubr.f32.mxu0 0.0
      %4353 = vmatmul.mubr.f32.gmra.mrb[0].mxu0 %v4247
      %v4354 = vpop.f32.mrb[0].mxu0
      %v4355 = vadd.f32 0.0, %v4354
      %v4356 = vpop.f32.mrb[0].mxu0
      %4357 = vmatprep.mubr.f32.mxu0 0.0
      %4358 = vmatmul.mubr.f32.gmra.mrb[0].mxu0 %v4249
      %v4359 = vpop.f32.mrb[0].mxu0
      %v4360 = vadd.f32 0.0, %v4359
      %v4361 = vpop.f32.mrb[0].mxu0
      %4362 = vmatprep.mubr.f32.mxu0 0.0
      %4363 = vmatmul.mubr.f32.gmra.mrb[0].mxu0 %v4251
      %v4364 = vpop.f32.mrb[0].mxu0
      %v4365 = vadd.f32 0.0, %v4364
      %v4366 = vpop.f32.mrb[0].mxu0
      %4367 = vmatprep.mubr.f32.mxu0 0.0
      %4368 = vmatmul.mubr.f32.gmra.mrb[0].mxu0 %v4253
      %v4369 = vpop.f32.mrb[0].mxu0
      %v4370 = vadd.f32 0.0, %v4369
      %v4371 = vpop.f32.mrb[0].mxu0
      %4372 = vmatprep.mubr.f32.mxu0 0.0
      %4373 = vmatmul.mubr.f32.gmra.mrb[0].mxu0 %v4255
      %v4374 = vpop.f32.mrb[0].mxu0
      %v4375 = vadd.f32 0.0, %v4374
      %v4376 = vpop.f32.mrb[0].mxu0
      %4377 = vdwg.mxu0
      %v4378 = vmul.f32 %v4340, 0.35355338
      %v4379 = vmul.f32 %v4345, 0.35355338
      %v4380 = vmul.f32 %v4350, 0.35355338
      %v4381 = vmul.f32 %v4355, 0.35355338
      %v4382 = vmul.f32 %v4360, 0.35355338
      %v4383 = vmul.f32 %v4365, 0.35355338
      %v4384 = vmul.f32 %v4370, 0.35355338
      %v4385 = vmul.f32 %v4375, 0.35355338
      %v4386 = vmul.f32 %v4378, %v4194
      %v4387 = vmul.f32 %v4379, %v4196
      %v4388 = vmul.f32 %v4380, %v4198
      %v4389 = vmul.f32 %v4381, %v4200
      %v4390 = vmul.f32 %v4382, %v4202
      %v4391 = vmul.f32 %v4383, %v4204
      %v4392 = vmul.f32 %v4384, %v4206
      %v4393 = vmul.f32 %v4385, %v4208
      %v4394 = vsel %vm1285, %v4386, 0.0
      %4395 = vadd.xlane.f32.xlu0 %v4394
      %v4396 = vpop.xlane.xlu0 %4395
      %v4397 = vsel %vm1285, %v4387, 0.0
      %4398 = vadd.xlane.f32.xlu0 %v4397
      %v4399 = vpop.xlane.xlu0 %4398
      %v4400 = vsel %vm1285, %v4388, 0.0
      %4401 = vadd.xlane.f32.xlu0 %v4400
      %v4402 = vpop.xlane.xlu0 %4401
      %v4403 = vsel %vm1285, %v4389, 0.0
      %4404 = vadd.xlane.f32.xlu0 %v4403
      %v4405 = vpop.xlane.xlu0 %4404
      %v4406 = vsel %vm1285, %v4390, 0.0
      %4407 = vadd.xlane.f32.xlu0 %v4406
      %v4408 = vpop.xlane.xlu0 %4407
      %v4409 = vsel %vm1285, %v4391, 0.0
      %4410 = vadd.xlane.f32.xlu0 %v4409
      %v4411 = vpop.xlane.xlu0 %4410
      %v4412 = vsel %vm1285, %v4392, 0.0
      %4413 = vadd.xlane.f32.xlu0 %v4412
      %v4414 = vpop.xlane.xlu0 %4413
      %v4415 = vsel %vm1285, %v4393, 0.0
      %4416 = vadd.xlane.f32.xlu0 %v4415
      %v4417 = vpop.xlane.xlu0 %4416
      %v4418 = vand.u32 2147483647, %v4396
      %v4419 = vand.u32 2147483647, %v4399
      %v4420 = vand.u32 2147483647, %v4402
      %v4421 = vand.u32 2147483647, %v4405
      %v4422 = vand.u32 2147483647, %v4408
      %v4423 = vand.u32 2147483647, %v4411
      %v4424 = vand.u32 2147483647, %v4414
      %v4425 = vand.u32 2147483647, %v4417
      %v4426 = vsub.f32 0.0, %v4163
      %v4427 = vsub.f32 0.0, %v4166
      %v4428 = vsub.f32 0.0, %v4169
      %v4429 = vsub.f32 0.0, %v4172
      %v4430 = vsub.f32 0.0, %v4175
      %v4431 = vsub.f32 0.0, %v4178
      %v4432 = vsub.f32 0.0, %v4181
      %v4433 = vsub.f32 0.0, %v4184
      %v4434 = vmul.f32 %v4426, 1.442695
      %v4435 = vpow.pop %v4434
      %v4436 = vmul.f32 %v4427, 1.442695
      %v4437 = vpow.pop %v4436
      %v4438 = vmul.f32 %v4428, 1.442695
      %v4439 = vpow.pop %v4438
      %v4440 = vmul.f32 %v4429, 1.442695
      %v4441 = vpow.pop %v4440
      %v4442 = vmul.f32 %v4430, 1.442695
      %v4443 = vpow.pop %v4442
      %v4444 = vmul.f32 %v4431, 1.442695
      %v4445 = vpow.pop %v4444
      %v4446 = vmul.f32 %v4432, 1.442695
      %v4447 = vpow.pop %v4446
      %v4448 = vmul.f32 %v4433, 1.442695
      %v4449 = vpow.pop %v4448
      %v4450 = vmax.f32 %v4418, %v4435
      %v4451 = vmax.f32 %v4419, %v4437
      %v4452 = vmax.f32 %v4420, %v4439
      %v4453 = vmax.f32 %v4421, %v4441
      %v4454 = vmax.f32 %v4422, %v4443
      %v4455 = vmax.f32 %v4423, %v4445
      %v4456 = vmax.f32 %v4424, %v4447
      %v4457 = vmax.f32 %v4425, %v4449
      %4466 = vrot.lane.b32.xlu0 %v2912, 112
      %v4467 = vpop.permute.xlu0 %4466
      %4468 = vrot.lane.b32.xlu0 %v2917, 112
      %v4469 = vpop.permute.xlu0 %4468
      %4470 = vrot.lane.b32.xlu0 %v2922, 112
      %v4471 = vpop.permute.xlu0 %4470
      %4472 = vrot.lane.b32.xlu0 %v2927, 112
      %v4473 = vpop.permute.xlu0 %4472
      %4474 = vrot.lane.b32.xlu0 %v2932, 112
      %v4475 = vpop.permute.xlu0 %4474
      %4476 = vrot.lane.b32.xlu0 %v2937, 112
      %v4477 = vpop.permute.xlu0 %4476
      %4478 = vrot.lane.b32.xlu0 %v2942, 112
      %v4479 = vpop.permute.xlu0 %4478
      %4480 = vrot.lane.b32.xlu0 %v2947, 112
      %v4481 = vpop.permute.xlu0 %4480
      %v4491 = vsel %vm1285, %v4386, 0
      %v4494 = vsel %vm1285, %v4387, 0
      %v4497 = vsel %vm1285, %v4388, 0
      %v4500 = vsel %vm1285, %v4389, 0
      %v4503 = vsel %vm1285, %v4390, 0
      %v4506 = vsel %vm1285, %v4391, 0
      %v4509 = vsel %vm1285, %v4392, 0
      %v4512 = vsel %vm1285, %v4393, 0
      %4514 = vmatprep.subr.mxu0 0.0
      %4515 = vmatpush1.msra.mxu0 %v4467
      %4516 = vmatprep.subr.mxu0 0.0
      %4517 = vmatpush1.msra.mxu0 %v4469
      %4518 = vmatprep.subr.mxu0 0.0
      %4519 = vmatpush1.msra.mxu0 %v4471
      %4520 = vmatprep.subr.mxu0 0.0
      %4521 = vmatpush1.msra.mxu0 %v4473
      %4522 = vmatprep.subr.mxu0 0.0
      %4523 = vmatpush1.msra.mxu0 %v4475
      %4524 = vmatprep.subr.mxu0 0.0
      %4525 = vmatpush1.msra.mxu0 %v4477
      %4526 = vmatprep.subr.mxu0 0.0
      %4527 = vmatpush1.msra.mxu0 %v4479
      %4528 = vmatprep.subr.mxu0 0.0
      %4529 = vmatpush1.msra.mxu0 %v4481
      %4530 = vmatprep.subr.mxu0 0.0
      %4531 = vmatpush1.msra.mxu0 0.0
      %4532 = vmatprep.subr.mxu0 0.0
      %4533 = vmatpush1.msra.mxu0 0.0
      %4534 = vmatprep.subr.mxu0 0.0
      %4535 = vmatpush1.msra.mxu0 0.0
      %4536 = vmatprep.subr.mxu0 0.0
      %4537 = vmatpush1.msra.mxu0 0.0
      %4538 = vmatprep.subr.mxu0 0.0
      %4539 = vmatpush1.msra.mxu0 0.0
      %4540 = vmatprep.subr.mxu0 0.0
      %4541 = vmatpush1.msra.mxu0 0.0
      %4542 = vmatprep.subr.mxu0 0.0
      %4543 = vmatpush1.msra.mxu0 0.0
      %4544 = vmatprep.subr.mxu0 0.0
      %4545 = vmatpush1.msra.mxu0 0.0
      %4546 = vmatprep.subr.mxu0 0.0
      %4547 = vmatpush1.msra.mxu0 0.0
      %4548 = vmatprep.subr.mxu0 0.0
      %4549 = vmatpush1.msra.mxu0 0.0
      %4550 = vmatprep.subr.mxu0 0.0
      %4551 = vmatpush1.msra.mxu0 0.0
      %4552 = vmatprep.subr.mxu0 0.0
      %4553 = vmatpush1.msra.mxu0 0.0
      %4554 = vmatprep.subr.mxu0 0.0
      %4555 = vmatpush1.msra.mxu0 0.0
      %4556 = vmatprep.subr.mxu0 0.0
      %4557 = vmatpush1.msra.mxu0 0.0
      %4558 = vmatprep.subr.mxu0 0.0
      %4559 = vmatpush1.msra.mxu0 0.0
      %4560 = vmatprep.subr.mxu0 0.0
      %4561 = vmatpush1.msra.mxu0 0.0
      %4562 = vmatprep.subr.mxu0 0.0
      %4563 = vmatpush1.msra.mxu0 0.0
      %4564 = vmatprep.subr.mxu0 0.0
      %4565 = vmatpush1.msra.mxu0 0.0
      %4566 = vmatprep.subr.mxu0 0.0
      %4567 = vmatpush1.msra.mxu0 0.0
      %4568 = vmatprep.subr.mxu0 0.0
      %4569 = vmatpush1.msra.mxu0 0.0
      %4570 = vmatprep.subr.mxu0 0.0
      %4571 = vmatpush1.msra.mxu0 0.0
      %4572 = vmatprep.subr.mxu0 0.0
      %4573 = vmatpush1.msra.mxu0 0.0
      %4574 = vmatprep.subr.mxu0 0.0
      %4575 = vmatpush1.msra.mxu0 0.0
      %4576 = vmatprep.subr.mxu0 0.0
      %4577 = vmatpush1.msra.mxu0 0.0
      %4578 = vmatprep.mubr.f32.mxu0 0.0
      %4579 = vmatmul.mubr.f32.gmra.mrb[0].mxu0 %v4491
      %v4580 = vpop.f32.mrb[0].mxu0
      %v4581 = vadd.f32 0.0, %v4580
      %v4582 = vpop.f32.mrb[0].mxu0
      %4583 = vmatprep.mubr.f32.mxu0 0.0
      %4584 = vmatmul.mubr.f32.gmra.mrb[0].mxu0 %v4494
      %v4585 = vpop.f32.mrb[0].mxu0
      %v4586 = vadd.f32 0.0, %v4585
      %v4587 = vpop.f32.mrb[0].mxu0
      %4588 = vmatprep.mubr.f32.mxu0 0.0
      %4589 = vmatmul.mubr.f32.gmra.mrb[0].mxu0 %v4497
      %v4590 = vpop.f32.mrb[0].mxu0
      %v4591 = vadd.f32 0.0, %v4590
      %v4592 = vpop.f32.mrb[0].mxu0
      %4593 = vmatprep.mubr.f32.mxu0 0.0
      %4594 = vmatmul.mubr.f32.gmra.mrb[0].mxu0 %v4500
      %v4595 = vpop.f32.mrb[0].mxu0
      %v4596 = vadd.f32 0.0, %v4595
      %v4597 = vpop.f32.mrb[0].mxu0
      %4598 = vmatprep.mubr.f32.mxu0 0.0
      %4599 = vmatmul.mubr.f32.gmra.mrb[0].mxu0 %v4503
      %v4600 = vpop.f32.mrb[0].mxu0
      %v4601 = vadd.f32 0.0, %v4600
      %v4602 = vpop.f32.mrb[0].mxu0
      %4603 = vmatprep.mubr.f32.mxu0 0.0
      %4604 = vmatmul.mubr.f32.gmra.mrb[0].mxu0 %v4506
      %v4605 = vpop.f32.mrb[0].mxu0
      %v4606 = vadd.f32 0.0, %v4605
      %v4607 = vpop.f32.mrb[0].mxu0
      %4608 = vmatprep.mubr.f32.mxu0 0.0
      %4609 = vmatmul.mubr.f32.gmra.mrb[0].mxu0 %v4509
      %v4610 = vpop.f32.mrb[0].mxu0
      %v4611 = vadd.f32 0.0, %v4610
      %v4612 = vpop.f32.mrb[0].mxu0
      %4613 = vmatprep.mubr.f32.mxu0 0.0
      %4614 = vmatmul.mubr.f32.gmra.mrb[0].mxu0 %v4512
      %v4615 = vpop.f32.mrb[0].mxu0
      %v4616 = vadd.f32 0.0, %v4615
      %v4617 = vpop.f32.mrb[0].mxu0
      %4618 = vdwg.mxu0
      %v4619 = vadd.f32 %v4450, 1e-06
      %v4620 = vadd.f32 %v4451, 1e-06
      %v4621 = vadd.f32 %v4452, 1e-06
      %v4622 = vadd.f32 %v4453, 1e-06
      %v4623 = vadd.f32 %v4454, 1e-06
      %v4624 = vadd.f32 %v4455, 1e-06
      %v4625 = vadd.f32 %v4456, 1e-06
      %v4626 = vadd.f32 %v4457, 1e-06
      %v4627 = vrcp.pop %v4619
      %v4628 = vmul.f32 %v4581, %v4627
      %v4629 = vrcp.pop %v4620
      %v4630 = vmul.f32 %v4586, %v4629
      %v4631 = vrcp.pop %v4621
      %v4632 = vmul.f32 %v4591, %v4631
      %v4633 = vrcp.pop %v4622
      %v4634 = vmul.f32 %v4596, %v4633
      %v4635 = vrcp.pop %v4623
      %v4636 = vmul.f32 %v4601, %v4635
      %v4637 = vrcp.pop %v4624
      %v4638 = vmul.f32 %v4606, %v4637
      %v4639 = vrcp.pop %v4625
      %v4640 = vmul.f32 %v4611, %v4639
      %v4641 = vrcp.pop %v4626
      %v4642 = vmul.f32 %v4616, %v4641
      %v4643 = vsel %vm3901, %v4628, 0.0
      %4644 = vadd.xlane.f32.xlu0 %v4643
      %v4645 = vpop.xlane.xlu0 %4644
      %v4646 = vsel %vm3901, %v4630, 0.0
      %4647 = vadd.xlane.f32.xlu0 %v4646
      %v4648 = vpop.xlane.xlu0 %4647
      %v4649 = vsel %vm3901, %v4632, 0.0
      %4650 = vadd.xlane.f32.xlu0 %v4649
      %v4651 = vpop.xlane.xlu0 %4650
      %v4652 = vsel %vm3901, %v4634, 0.0
      %4653 = vadd.xlane.f32.xlu0 %v4652
      %v4654 = vpop.xlane.xlu0 %4653
      %v4655 = vsel %vm3901, %v4636, 0.0
      %4656 = vadd.xlane.f32.xlu0 %v4655
      %v4657 = vpop.xlane.xlu0 %4656
      %v4658 = vsel %vm3901, %v4638, 0.0
      %4659 = vadd.xlane.f32.xlu0 %v4658
      %v4660 = vpop.xlane.xlu0 %4659
      %v4661 = vsel %vm3901, %v4640, 0.0
      %4662 = vadd.xlane.f32.xlu0 %v4661
      %v4663 = vpop.xlane.xlu0 %4662
      %v4664 = vsel %vm3901, %v4642, 0.0
      %4665 = vadd.xlane.f32.xlu0 %v4664
      %v4666 = vpop.xlane.xlu0 %4665
      %v4667 = vmul.f32 %v4645, %v3926
      %v4668 = vmul.f32 %v4648, %v3926
      %v4669 = vmul.f32 %v4651, %v3926
      %v4670 = vmul.f32 %v4654, %v3926
      %v4671 = vmul.f32 %v4657, %v3926
      %v4672 = vmul.f32 %v4660, %v3926
      %v4673 = vmul.f32 %v4663, %v3926
      %v4674 = vmul.f32 %v4666, %v3926
      %v4675 = vsub.f32 %v4628, %v4667
      %v4676 = vsub.f32 %v4630, %v4668
      %v4677 = vsub.f32 %v4632, %v4669
      %v4678 = vsub.f32 %v4634, %v4670
      %v4679 = vsub.f32 %v4636, %v4671
      %v4680 = vsub.f32 %v4638, %v4672
      %v4681 = vsub.f32 %v4640, %v4673
      %v4682 = vsub.f32 %v4642, %v4674
      %v4683 = vmul.f32 %v4675, %v4675
      %v4684 = vmul.f32 %v4676, %v4676
      %v4685 = vmul.f32 %v4677, %v4677
      %v4686 = vmul.f32 %v4678, %v4678
      %v4687 = vmul.f32 %v4679, %v4679
      %v4688 = vmul.f32 %v4680, %v4680
      %v4689 = vmul.f32 %v4681, %v4681
      %v4690 = vmul.f32 %v4682, %v4682
      %v4691 = vsel %vm3901, %v4683, 0.0
      %4692 = vadd.xlane.f32.xlu0 %v4691
      %v4693 = vpop.xlane.xlu0 %4692
      %v4694 = vsel %vm3901, %v4684, 0.0
      %4695 = vadd.xlane.f32.xlu0 %v4694
      %v4696 = vpop.xlane.xlu0 %4695
      %v4697 = vsel %vm3901, %v4685, 0.0
      %4698 = vadd.xlane.f32.xlu0 %v4697
      %v4699 = vpop.xlane.xlu0 %4698
      %v4700 = vsel %vm3901, %v4686, 0.0
      %4701 = vadd.xlane.f32.xlu0 %v4700
      %v4702 = vpop.xlane.xlu0 %4701
      %v4703 = vsel %vm3901, %v4687, 0.0
      %4704 = vadd.xlane.f32.xlu0 %v4703
      %v4705 = vpop.xlane.xlu0 %4704
      %v4706 = vsel %vm3901, %v4688, 0.0
      %4707 = vadd.xlane.f32.xlu0 %v4706
      %v4708 = vpop.xlane.xlu0 %4707
      %v4709 = vsel %vm3901, %v4689, 0.0
      %4710 = vadd.xlane.f32.xlu0 %v4709
      %v4711 = vpop.xlane.xlu0 %4710
      %v4712 = vsel %vm3901, %v4690, 0.0
      %4713 = vadd.xlane.f32.xlu0 %v4712
      %v4714 = vpop.xlane.xlu0 %4713
      %v4715 = vmul.f32 %v4693, %v3926
      %v4716 = vmul.f32 %v4696, %v3926
      %v4717 = vmul.f32 %v4699, %v3926
      %v4718 = vmul.f32 %v4702, %v3926
      %v4719 = vmul.f32 %v4705, %v3926
      %v4720 = vmul.f32 %v4708, %v3926
      %v4721 = vmul.f32 %v4711, %v3926
      %v4722 = vmul.f32 %v4714, %v3926
      %v4723 = vadd.f32 %v4715, 1e-06
      %v4724 = vadd.f32 %v4716, 1e-06
      %v4725 = vadd.f32 %v4717, 1e-06
      %v4726 = vadd.f32 %v4718, 1e-06
      %v4727 = vadd.f32 %v4719, 1e-06
      %v4728 = vadd.f32 %v4720, 1e-06
      %v4729 = vadd.f32 %v4721, 1e-06
      %v4730 = vadd.f32 %v4722, 1e-06
      %v4731 = vrsqrt.pop %v4723
      %v4732 = vrsqrt.pop %v4724
      %v4733 = vrsqrt.pop %v4725
      %v4734 = vrsqrt.pop %v4726
      %v4735 = vrsqrt.pop %v4727
      %v4736 = vrsqrt.pop %v4728
      %v4737 = vrsqrt.pop %v4729
      %v4738 = vrsqrt.pop %v4730
      %v4739 = vmul.f32 %v4675, %v4731
      %v4740 = vmul.f32 %v4676, %v4732
      %v4741 = vmul.f32 %v4677, %v4733
      %v4742 = vmul.f32 %v4678, %v4734
      %v4743 = vmul.f32 %v4679, %v4735
      %v4744 = vmul.f32 %v4680, %v4736
      %v4745 = vmul.f32 %v4681, %v4737
      %v4746 = vmul.f32 %v4682, %v4738
      %v4747 = vlaneseq
      %v4748 = vshrl.u32 %v4747, 7
      %v4749 = vsub.s32 1, %v4748
      %v4750 = vrot.slane %v3191, %v4749
      %v4751 = vmul.f32 %v4739, %v4750
      %v4752 = vmul.f32 %v4740, %v4750
      %v4753 = vmul.f32 %v4741, %v4750
      %v4754 = vmul.f32 %v4742, %v4750
      %v4755 = vmul.f32 %v4743, %v4750
      %v4756 = vmul.f32 %v4744, %v4750
      %v4757 = vmul.f32 %v4745, %v4750
      %v4758 = vmul.f32 %v4746, %v4750
      %4767 = vrot.lane.b32.xlu0 %v4751, 48
      %v4768 = vpop.permute.xlu0 %4767
      %4769 = vrot.lane.b32.xlu0 %v4752, 48
      %v4770 = vpop.permute.xlu0 %4769
      %4771 = vrot.lane.b32.xlu0 %v4753, 48
      %v4772 = vpop.permute.xlu0 %4771
      %4773 = vrot.lane.b32.xlu0 %v4754, 48
      %v4774 = vpop.permute.xlu0 %4773
      %4775 = vrot.lane.b32.xlu0 %v4755, 48
      %v4776 = vpop.permute.xlu0 %4775
      %4777 = vrot.lane.b32.xlu0 %v4756, 48
      %v4778 = vpop.permute.xlu0 %4777
      %4779 = vrot.lane.b32.xlu0 %v4757, 48
      %v4780 = vpop.permute.xlu0 %4779
      %4781 = vrot.lane.b32.xlu0 %v4758, 48
      %v4782 = vpop.permute.xlu0 %4781
      %v4791 = vmul.f32 %v4052, %v4768
      %v4792 = vmul.f32 %v4054, %v4770
      %v4793 = vmul.f32 %v4056, %v4772
      %v4794 = vmul.f32 %v4058, %v4774
      %v4795 = vmul.f32 %v4060, %v4776
      %v4796 = vmul.f32 %v4062, %v4778
      %v4797 = vmul.f32 %v4064, %v4780
      %v4798 = vmul.f32 %v4066, %v4782
      %v4799 = vld [vmem:[%s11 + $0x10] sm:$0xff]
      %v4800 = vld [vmem:[%s11 + $0x18] sm:$0xff]
      %4809 = vrot.lane.b32.xlu0 %v4791, 80
      %v4810 = vpop.permute.xlu0 %4809
      %4811 = vrot.lane.b32.xlu0 %v4792, 80
      %v4812 = vpop.permute.xlu0 %4811
      %4813 = vrot.lane.b32.xlu0 %v4793, 80
      %v4814 = vpop.permute.xlu0 %4813
      %4815 = vrot.lane.b32.xlu0 %v4794, 80
      %v4816 = vpop.permute.xlu0 %4815
      %4817 = vrot.lane.b32.xlu0 %v4795, 80
      %v4818 = vpop.permute.xlu0 %4817
      %4819 = vrot.lane.b32.xlu0 %v4796, 80
      %v4820 = vpop.permute.xlu0 %4819
      %4821 = vrot.lane.b32.xlu0 %v4797, 80
      %v4822 = vpop.permute.xlu0 %4821
      %4823 = vrot.lane.b32.xlu0 %v4798, 80
      %v4824 = vpop.permute.xlu0 %4823
      %v4825 = vsel %vm3901, %v4810, 0
      %v4827 = vsel %vm3901, %v4812, 0
      %v4829 = vsel %vm3901, %v4814, 0
      %v4831 = vsel %vm3901, %v4816, 0
      %v4833 = vsel %vm3901, %v4818, 0
      %v4835 = vsel %vm3901, %v4820, 0
      %v4837 = vsel %vm3901, %v4822, 0
      %v4839 = vsel %vm3901, %v4824, 0
      %4841 = vmatprep.subr.mxu0 0.0
      %4842 = vmatpush1.msra.mxu0 %v4799
      %4843 = vmatprep.subr.mxu0 0.0
      %4844 = vmatpush1.msra.mxu0 %v4800
      %4845 = vmatprep.subr.mxu0 0.0
      %4846 = vmatpush1.msra.mxu0 0.0
      %4847 = vmatprep.subr.mxu0 0.0
      %4848 = vmatpush1.msra.mxu0 0.0
      %4849 = vmatprep.subr.mxu0 0.0
      %4850 = vmatpush1.msra.mxu0 0.0
      %4851 = vmatprep.subr.mxu0 0.0
      %4852 = vmatpush1.msra.mxu0 0.0
      %4853 = vmatprep.subr.mxu0 0.0
      %4854 = vmatpush1.msra.mxu0 0.0
      %4855 = vmatprep.subr.mxu0 0.0
      %4856 = vmatpush1.msra.mxu0 0.0
      %4857 = vmatprep.subr.mxu0 0.0
      %4858 = vmatpush1.msra.mxu0 0.0
      %4859 = vmatprep.subr.mxu0 0.0
      %4860 = vmatpush1.msra.mxu0 0.0
      %4861 = vmatprep.subr.mxu0 0.0
      %4862 = vmatpush1.msra.mxu0 0.0
      %4863 = vmatprep.subr.mxu0 0.0
      %4864 = vmatpush1.msra.mxu0 0.0
      %4865 = vmatprep.subr.mxu0 0.0
      %4866 = vmatpush1.msra.mxu0 0.0
      %4867 = vmatprep.subr.mxu0 0.0
      %4868 = vmatpush1.msra.mxu0 0.0
      %4869 = vmatprep.subr.mxu0 0.0
      %4870 = vmatpush1.msra.mxu0 0.0
      %4871 = vmatprep.subr.mxu0 0.0
      %4872 = vmatpush1.msra.mxu0 0.0
      %4873 = vmatprep.subr.mxu0 0.0
      %4874 = vmatpush1.msra.mxu0 0.0
      %4875 = vmatprep.subr.mxu0 0.0
      %4876 = vmatpush1.msra.mxu0 0.0
      %4877 = vmatprep.subr.mxu0 0.0
      %4878 = vmatpush1.msra.mxu0 0.0
      %4879 = vmatprep.subr.mxu0 0.0
      %4880 = vmatpush1.msra.mxu0 0.0
      %4881 = vmatprep.subr.mxu0 0.0
      %4882 = vmatpush1.msra.mxu0 0.0
      %4883 = vmatprep.subr.mxu0 0.0
      %4884 = vmatpush1.msra.mxu0 0.0
      %4885 = vmatprep.subr.mxu0 0.0
      %4886 = vmatpush1.msra.mxu0 0.0
      %4887 = vmatprep.subr.mxu0 0.0
      %4888 = vmatpush1.msra.mxu0 0.0
      %4889 = vmatprep.subr.mxu0 0.0
      %4890 = vmatpush1.msra.mxu0 0.0
      %4891 = vmatprep.subr.mxu0 0.0
      %4892 = vmatpush1.msra.mxu0 0.0
      %4893 = vmatprep.subr.mxu0 0.0
      %4894 = vmatpush1.msra.mxu0 0.0
      %4895 = vmatprep.subr.mxu0 0.0
      %4896 = vmatpush1.msra.mxu0 0.0
      %4897 = vmatprep.subr.mxu0 0.0
      %4898 = vmatpush1.msra.mxu0 0.0
      %4899 = vmatprep.subr.mxu0 0.0
      %4900 = vmatpush1.msra.mxu0 0.0
      %4901 = vmatprep.subr.mxu0 0.0
      %4902 = vmatpush1.msra.mxu0 0.0
      %4903 = vmatprep.subr.mxu0 0.0
      %4904 = vmatpush1.msra.mxu0 0.0
      %4905 = vmatprep.mubr.f32.mxu0 0.0
      %4906 = vmatmul.mubr.f32.gmra.mrb[0].mxu0 %v4825
      %v4907 = vpop.f32.mrb[0].mxu0
      %v4908 = vadd.f32 0.0, %v4907
      %v4909 = vpop.f32.mrb[0].mxu0
      %4910 = vmatprep.mubr.f32.mxu0 0.0
      %4911 = vmatmul.mubr.f32.gmra.mrb[0].mxu0 %v4827
      %v4912 = vpop.f32.mrb[0].mxu0
      %v4913 = vadd.f32 0.0, %v4912
      %v4914 = vpop.f32.mrb[0].mxu0
      %4915 = vmatprep.mubr.f32.mxu0 0.0
      %4916 = vmatmul.mubr.f32.gmra.mrb[0].mxu0 %v4829
      %v4917 = vpop.f32.mrb[0].mxu0
      %v4918 = vadd.f32 0.0, %v4917
      %v4919 = vpop.f32.mrb[0].mxu0
      %4920 = vmatprep.mubr.f32.mxu0 0.0
      %4921 = vmatmul.mubr.f32.gmra.mrb[0].mxu0 %v4831
      %v4922 = vpop.f32.mrb[0].mxu0
      %v4923 = vadd.f32 0.0, %v4922
      %v4924 = vpop.f32.mrb[0].mxu0
      %4925 = vmatprep.mubr.f32.mxu0 0.0
      %4926 = vmatmul.mubr.f32.gmra.mrb[0].mxu0 %v4833
      %v4927 = vpop.f32.mrb[0].mxu0
      %v4928 = vadd.f32 0.0, %v4927
      %v4929 = vpop.f32.mrb[0].mxu0
      %4930 = vmatprep.mubr.f32.mxu0 0.0
      %4931 = vmatmul.mubr.f32.gmra.mrb[0].mxu0 %v4835
      %v4932 = vpop.f32.mrb[0].mxu0
      %v4933 = vadd.f32 0.0, %v4932
      %v4934 = vpop.f32.mrb[0].mxu0
      %4935 = vmatprep.mubr.f32.mxu0 0.0
      %4936 = vmatmul.mubr.f32.gmra.mrb[0].mxu0 %v4837
      %v4937 = vpop.f32.mrb[0].mxu0
      %v4938 = vadd.f32 0.0, %v4937
      %v4939 = vpop.f32.mrb[0].mxu0
      %4940 = vmatprep.mubr.f32.mxu0 0.0
      %4941 = vmatmul.mubr.f32.gmra.mrb[0].mxu0 %v4839
      %v4942 = vpop.f32.mrb[0].mxu0
      %v4943 = vadd.f32 0.0, %v4942
      %v4944 = vpop.f32.mrb[0].mxu0
      %4945 = vdwg.mxu0
      %4954 = vrot.lane.b32.xlu0 %v4099, 96
      %v4955 = vpop.permute.xlu0 %4954
      %4956 = vrot.lane.b32.xlu0 %v4100, 96
      %v4957 = vpop.permute.xlu0 %4956
      %4958 = vrot.lane.b32.xlu0 %v4101, 96
      %v4959 = vpop.permute.xlu0 %4958
      %4960 = vrot.lane.b32.xlu0 %v4102, 96
      %v4961 = vpop.permute.xlu0 %4960
      %4962 = vrot.lane.b32.xlu0 %v4103, 96
      %v4963 = vpop.permute.xlu0 %4962
      %4964 = vrot.lane.b32.xlu0 %v4104, 96
      %v4965 = vpop.permute.xlu0 %4964
      %4966 = vrot.lane.b32.xlu0 %v4105, 96
      %v4967 = vpop.permute.xlu0 %4966
      %4968 = vrot.lane.b32.xlu0 %v4106, 96
      %v4969 = vpop.permute.xlu0 %4968
      %v4970 = vsel %vm3901, %v4955, 0
      %v4972 = vsel %vm3901, %v4957, 0
      %v4974 = vsel %vm3901, %v4959, 0
      %v4976 = vsel %vm3901, %v4961, 0
      %v4978 = vsel %vm3901, %v4963, 0
      %v4980 = vsel %vm3901, %v4965, 0
      %v4982 = vsel %vm3901, %v4967, 0
      %v4984 = vsel %vm3901, %v4969, 0
      %4986 = vmatprep.subr.mxu0 0.0
      %4987 = vmatpush1.msra.mxu0 %v4107
      %4988 = vmatprep.subr.mxu0 0.0
      %4989 = vmatpush1.msra.mxu0 %v4108
      %4990 = vmatprep.subr.mxu0 0.0
      %4991 = vmatpush1.msra.mxu0 0.0
      %4992 = vmatprep.subr.mxu0 0.0
      %4993 = vmatpush1.msra.mxu0 0.0
      %4994 = vmatprep.subr.mxu0 0.0
      %4995 = vmatpush1.msra.mxu0 0.0
      %4996 = vmatprep.subr.mxu0 0.0
      %4997 = vmatpush1.msra.mxu0 0.0
      %4998 = vmatprep.subr.mxu0 0.0
      %4999 = vmatpush1.msra.mxu0 0.0
      %5000 = vmatprep.subr.mxu0 0.0
      %5001 = vmatpush1.msra.mxu0 0.0
      %5002 = vmatprep.subr.mxu0 0.0
      %5003 = vmatpush1.msra.mxu0 0.0
      %5004 = vmatprep.subr.mxu0 0.0
      %5005 = vmatpush1.msra.mxu0 0.0
      %5006 = vmatprep.subr.mxu0 0.0
      %5007 = vmatpush1.msra.mxu0 0.0
      %5008 = vmatprep.subr.mxu0 0.0
      %5009 = vmatpush1.msra.mxu0 0.0
      %5010 = vmatprep.subr.mxu0 0.0
      %5011 = vmatpush1.msra.mxu0 0.0
      %5012 = vmatprep.subr.mxu0 0.0
      %5013 = vmatpush1.msra.mxu0 0.0
      %5014 = vmatprep.subr.mxu0 0.0
      %5015 = vmatpush1.msra.mxu0 0.0
      %5016 = vmatprep.subr.mxu0 0.0
      %5017 = vmatpush1.msra.mxu0 0.0
      %5018 = vmatprep.subr.mxu0 0.0
      %5019 = vmatpush1.msra.mxu0 0.0
      %5020 = vmatprep.subr.mxu0 0.0
      %5021 = vmatpush1.msra.mxu0 0.0
      %5022 = vmatprep.subr.mxu0 0.0
      %5023 = vmatpush1.msra.mxu0 0.0
      %5024 = vmatprep.subr.mxu0 0.0
      %5025 = vmatpush1.msra.mxu0 0.0
      %5026 = vmatprep.subr.mxu0 0.0
      %5027 = vmatpush1.msra.mxu0 0.0
      %5028 = vmatprep.subr.mxu0 0.0
      %5029 = vmatpush1.msra.mxu0 0.0
      %5030 = vmatprep.subr.mxu0 0.0
      %5031 = vmatpush1.msra.mxu0 0.0
      %5032 = vmatprep.subr.mxu0 0.0
      %5033 = vmatpush1.msra.mxu0 0.0
      %5034 = vmatprep.subr.mxu0 0.0
      %5035 = vmatpush1.msra.mxu0 0.0
      %5036 = vmatprep.subr.mxu0 0.0
      %5037 = vmatpush1.msra.mxu0 0.0
      %5038 = vmatprep.subr.mxu0 0.0
      %5039 = vmatpush1.msra.mxu0 0.0
      %5040 = vmatprep.subr.mxu0 0.0
      %5041 = vmatpush1.msra.mxu0 0.0
      %5042 = vmatprep.subr.mxu0 0.0
      %5043 = vmatpush1.msra.mxu0 0.0
      %5044 = vmatprep.subr.mxu0 0.0
      %5045 = vmatpush1.msra.mxu0 0.0
      %5046 = vmatprep.subr.mxu0 0.0
      %5047 = vmatpush1.msra.mxu0 0.0
      %5048 = vmatprep.subr.mxu0 0.0
      %5049 = vmatpush1.msra.mxu0 0.0
      %5050 = vmatprep.mubr.f32.mxu0 0.0
      %5051 = vmatmul.mubr.f32.gmra.mrb[0].mxu0 %v4970
      %v5052 = vpop.f32.mrb[0].mxu0
      %v5053 = vadd.f32 %v4908, %v5052
      %v5054 = vpop.f32.mrb[0].mxu0
      %5055 = vmatprep.mubr.f32.mxu0 0.0
      %5056 = vmatmul.mubr.f32.gmra.mrb[0].mxu0 %v4972
      %v5057 = vpop.f32.mrb[0].mxu0
      %v5058 = vadd.f32 %v4913, %v5057
      %v5059 = vpop.f32.mrb[0].mxu0
      %5060 = vmatprep.mubr.f32.mxu0 0.0
      %5061 = vmatmul.mubr.f32.gmra.mrb[0].mxu0 %v4974
      %v5062 = vpop.f32.mrb[0].mxu0
      %v5063 = vadd.f32 %v4918, %v5062
      %v5064 = vpop.f32.mrb[0].mxu0
      %5065 = vmatprep.mubr.f32.mxu0 0.0
      %5066 = vmatmul.mubr.f32.gmra.mrb[0].mxu0 %v4976
      %v5067 = vpop.f32.mrb[0].mxu0
      %v5068 = vadd.f32 %v4923, %v5067
      %v5069 = vpop.f32.mrb[0].mxu0
      %5070 = vmatprep.mubr.f32.mxu0 0.0
      %5071 = vmatmul.mubr.f32.gmra.mrb[0].mxu0 %v4978
      %v5072 = vpop.f32.mrb[0].mxu0
      %v5073 = vadd.f32 %v4928, %v5072
      %v5074 = vpop.f32.mrb[0].mxu0
      %5075 = vmatprep.mubr.f32.mxu0 0.0
      %5076 = vmatmul.mubr.f32.gmra.mrb[0].mxu0 %v4980
      %v5077 = vpop.f32.mrb[0].mxu0
      %v5078 = vadd.f32 %v4933, %v5077
      %v5079 = vpop.f32.mrb[0].mxu0
      %5080 = vmatprep.mubr.f32.mxu0 0.0
      %5081 = vmatmul.mubr.f32.gmra.mrb[0].mxu0 %v4982
      %v5082 = vpop.f32.mrb[0].mxu0
      %v5083 = vadd.f32 %v4938, %v5082
      %v5084 = vpop.f32.mrb[0].mxu0
      %5085 = vmatprep.mubr.f32.mxu0 0.0
      %5086 = vmatmul.mubr.f32.gmra.mrb[0].mxu0 %v4984
      %v5087 = vpop.f32.mrb[0].mxu0
      %v5088 = vadd.f32 %v4943, %v5087
      %v5089 = vpop.f32.mrb[0].mxu0
      %5090 = vdwg.mxu0
      %5091 = vrot.lane.b32.xlu0 %v3173, 64
      %v5092 = vpop.permute.xlu0 %5091
      %v5093 = vsel %vm1285, %v5092, 0
      %5095 = vmatprep.subr.mxu0 0.0
      %5096 = vmatpush1.xpose.msra.mxu0 %v5093
      %5097 = vmatprep.subr.mxu0 0.0
      %5098 = vmatpush1.xpose.msra.mxu0 0.0
      %5099 = vmatprep.subr.mxu0 0.0
      %5100 = vmatpush1.xpose.msra.mxu0 0.0
      %5101 = vmatprep.subr.mxu0 0.0
      %5102 = vmatpush1.xpose.msra.mxu0 0.0
      %5103 = vmatprep.subr.mxu0 0.0
      %5104 = vmatpush1.xpose.msra.mxu0 0.0
      %5105 = vmatprep.subr.mxu0 0.0
      %5106 = vmatpush1.xpose.msra.mxu0 0.0
      %5107 = vmatprep.subr.mxu0 0.0
      %5108 = vmatpush1.xpose.msra.mxu0 0.0
      %5109 = vmatprep.subr.mxu0 0.0
      %5110 = vmatpush1.xpose.msra.mxu0 0.0
      %5111 = vmatprep.subr.mxu0 0.0
      %5112 = vmatpush1.xpose.msra.mxu0 0.0
      %5113 = vmatprep.subr.mxu0 0.0
      %5114 = vmatpush1.xpose.msra.mxu0 0.0
      %5115 = vmatprep.subr.mxu0 0.0
      %5116 = vmatpush1.xpose.msra.mxu0 0.0
      %5117 = vmatprep.subr.mxu0 0.0
      %5118 = vmatpush1.xpose.msra.mxu0 0.0
      %5119 = vmatprep.subr.mxu0 0.0
      %5120 = vmatpush1.xpose.msra.mxu0 0.0
      %5121 = vmatprep.subr.mxu0 0.0
      %5122 = vmatpush1.xpose.msra.mxu0 0.0
      %5123 = vmatprep.subr.mxu0 0.0
      %5124 = vmatpush1.xpose.msra.mxu0 0.0
      %5125 = vmatprep.subr.mxu0 0.0
      %5126 = vmatpush1.xpose.msra.mxu0 0.0
      %5127 = vmatprep.subr.mxu0 0.0
      %5128 = vmatpush1.xpose.msra.mxu0 0.0
      %5129 = vmatprep.subr.mxu0 0.0
      %5130 = vmatpush1.xpose.msra.mxu0 0.0
      %5131 = vmatprep.subr.mxu0 0.0
      %5132 = vmatpush1.xpose.msra.mxu0 0.0
      %5133 = vmatprep.subr.mxu0 0.0
      %5134 = vmatpush1.xpose.msra.mxu0 0.0
      %5135 = vmatprep.subr.mxu0 0.0
      %5136 = vmatpush1.xpose.msra.mxu0 0.0
      %5137 = vmatprep.subr.mxu0 0.0
      %5138 = vmatpush1.xpose.msra.mxu0 0.0
      %5139 = vmatprep.subr.mxu0 0.0
      %5140 = vmatpush1.xpose.msra.mxu0 0.0
      %5141 = vmatprep.subr.mxu0 0.0
      %5142 = vmatpush1.xpose.msra.mxu0 0.0
      %5143 = vmatprep.subr.mxu0 0.0
      %5144 = vmatpush1.xpose.msra.mxu0 0.0
      %5145 = vmatprep.subr.mxu0 0.0
      %5146 = vmatpush1.xpose.msra.mxu0 0.0
      %5147 = vmatprep.subr.mxu0 0.0
      %5148 = vmatpush1.xpose.msra.mxu0 0.0
      %5149 = vmatprep.subr.mxu0 0.0
      %5150 = vmatpush1.xpose.msra.mxu0 0.0
      %5151 = vmatprep.subr.mxu0 0.0
      %5152 = vmatpush1.xpose.msra.mxu0 0.0
      %5153 = vmatprep.subr.mxu0 0.0
      %5154 = vmatpush1.xpose.msra.mxu0 0.0
      %5155 = vmatprep.subr.mxu0 0.0
      %5156 = vmatpush1.xpose.msra.mxu0 0.0
      %5157 = vmatprep.subr.mxu0 0.0
      %5158 = vmatpush1.xpose.msra.mxu0 0.0
      %5159 = vmatprep.mubr.f32.mxu0 0.0
      %5160 = vmatmul.mubr.f32.gmra.mrb[0].mxu0 %v3193
      %v5161 = vpop.f32.mrb[0].mxu0
      %v5162 = vadd.f32 0.0, %v5161
      %v5163 = vpop.f32.mrb[0].mxu0
      %5164 = vmatprep.mubr.f32.mxu0 0.0
      %5165 = vmatmul.mubr.f32.gmra.mrb[0].mxu0 %v3196
      %v5166 = vpop.f32.mrb[0].mxu0
      %v5167 = vadd.f32 0.0, %v5166
      %v5168 = vpop.f32.mrb[0].mxu0
      %5169 = vmatprep.mubr.f32.mxu0 0.0
      %5170 = vmatmul.mubr.f32.gmra.mrb[0].mxu0 %v3199
      %v5171 = vpop.f32.mrb[0].mxu0
      %v5172 = vadd.f32 0.0, %v5171
      %v5173 = vpop.f32.mrb[0].mxu0
      %5174 = vmatprep.mubr.f32.mxu0 0.0
      %5175 = vmatmul.mubr.f32.gmra.mrb[0].mxu0 %v3202
      %v5176 = vpop.f32.mrb[0].mxu0
      %v5177 = vadd.f32 0.0, %v5176
      %v5178 = vpop.f32.mrb[0].mxu0
      %5179 = vmatprep.mubr.f32.mxu0 0.0
      %5180 = vmatmul.mubr.f32.gmra.mrb[0].mxu0 %v3205
      %v5181 = vpop.f32.mrb[0].mxu0
      %v5182 = vadd.f32 0.0, %v5181
      %v5183 = vpop.f32.mrb[0].mxu0
      %5184 = vmatprep.mubr.f32.mxu0 0.0
      %5185 = vmatmul.mubr.f32.gmra.mrb[0].mxu0 %v3208
      %v5186 = vpop.f32.mrb[0].mxu0
      %v5187 = vadd.f32 0.0, %v5186
      %v5188 = vpop.f32.mrb[0].mxu0
      %5189 = vmatprep.mubr.f32.mxu0 0.0
      %5190 = vmatmul.mubr.f32.gmra.mrb[0].mxu0 %v3211
      %v5191 = vpop.f32.mrb[0].mxu0
      %v5192 = vadd.f32 0.0, %v5191
      %v5193 = vpop.f32.mrb[0].mxu0
      %5194 = vmatprep.mubr.f32.mxu0 0.0
      %5195 = vmatmul.mubr.f32.gmra.mrb[0].mxu0 %v3214
      %v5196 = vpop.f32.mrb[0].mxu0
      %v5197 = vadd.f32 0.0, %v5196
      %v5198 = vpop.f32.mrb[0].mxu0
      %5199 = vdwg.mxu0
      %5200 = vmatprep.subr.mxu0 0.0
      %5201 = vmatpush1.xpose.msra.mxu0 %v3193
      %5202 = vmatprep.subr.mxu0 0.0
      %5203 = vmatpush1.xpose.msra.mxu0 %v3196
      %5204 = vmatprep.subr.mxu0 0.0
      %5205 = vmatpush1.xpose.msra.mxu0 %v3199
      %5206 = vmatprep.subr.mxu0 0.0
      %5207 = vmatpush1.xpose.msra.mxu0 %v3202
      %5208 = vmatprep.subr.mxu0 0.0
      %5209 = vmatpush1.xpose.msra.mxu0 %v3205
      %5210 = vmatprep.subr.mxu0 0.0
      %5211 = vmatpush1.xpose.msra.mxu0 %v3208
      %5212 = vmatprep.subr.mxu0 0.0
      %5213 = vmatpush1.xpose.msra.mxu0 %v3211
      %5214 = vmatprep.subr.mxu0 0.0
      %5215 = vmatpush1.xpose.msra.mxu0 %v3214
      %5216 = vmatprep.subr.mxu0 0.0
      %5217 = vmatpush1.xpose.msra.mxu0 0.0
      %5218 = vmatprep.subr.mxu0 0.0
      %5219 = vmatpush1.xpose.msra.mxu0 0.0
      %5220 = vmatprep.subr.mxu0 0.0
      %5221 = vmatpush1.xpose.msra.mxu0 0.0
      %5222 = vmatprep.subr.mxu0 0.0
      %5223 = vmatpush1.xpose.msra.mxu0 0.0
      %5224 = vmatprep.subr.mxu0 0.0
      %5225 = vmatpush1.xpose.msra.mxu0 0.0
      %5226 = vmatprep.subr.mxu0 0.0
      %5227 = vmatpush1.xpose.msra.mxu0 0.0
      %5228 = vmatprep.subr.mxu0 0.0
      %5229 = vmatpush1.xpose.msra.mxu0 0.0
      %5230 = vmatprep.subr.mxu0 0.0
      %5231 = vmatpush1.xpose.msra.mxu0 0.0
      %5232 = vmatprep.subr.mxu0 0.0
      %5233 = vmatpush1.xpose.msra.mxu0 0.0
      %5234 = vmatprep.subr.mxu0 0.0
      %5235 = vmatpush1.xpose.msra.mxu0 0.0
      %5236 = vmatprep.subr.mxu0 0.0
      %5237 = vmatpush1.xpose.msra.mxu0 0.0
      %5238 = vmatprep.subr.mxu0 0.0
      %5239 = vmatpush1.xpose.msra.mxu0 0.0
      %5240 = vmatprep.subr.mxu0 0.0
      %5241 = vmatpush1.xpose.msra.mxu0 0.0
      %5242 = vmatprep.subr.mxu0 0.0
      %5243 = vmatpush1.xpose.msra.mxu0 0.0
      %5244 = vmatprep.subr.mxu0 0.0
      %5245 = vmatpush1.xpose.msra.mxu0 0.0
      %5246 = vmatprep.subr.mxu0 0.0
      %5247 = vmatpush1.xpose.msra.mxu0 0.0
      %5248 = vmatprep.subr.mxu0 0.0
      %5249 = vmatpush1.xpose.msra.mxu0 0.0
      %5250 = vmatprep.subr.mxu0 0.0
      %5251 = vmatpush1.xpose.msra.mxu0 0.0
      %5252 = vmatprep.subr.mxu0 0.0
      %5253 = vmatpush1.xpose.msra.mxu0 0.0
      %5254 = vmatprep.subr.mxu0 0.0
      %5255 = vmatpush1.xpose.msra.mxu0 0.0
      %5256 = vmatprep.subr.mxu0 0.0
      %5257 = vmatpush1.xpose.msra.mxu0 0.0
      %5258 = vmatprep.subr.mxu0 0.0
      %5259 = vmatpush1.xpose.msra.mxu0 0.0
      %5260 = vmatprep.subr.mxu0 0.0
      %5261 = vmatpush1.xpose.msra.mxu0 0.0
      %5262 = vmatprep.subr.mxu0 0.0
      %5263 = vmatpush1.xpose.msra.mxu0 0.0
      %5264 = vmatprep.mubr.f32.mxu0 0.0
      %5265 = vmatmul.mubr.f32.gmra.mrb[0].mxu0 %v5093
      %v5266 = vpop.f32.mrb[0].mxu0
      %v5267 = vadd.f32 0.0, %v5266
      %v5268 = vpop.f32.mrb[0].mxu0
      %5269 = vdwg.mxu0
      %v5271 = vrot.slane %v5267, 2
      %5272 = vrot.lane.b32.xlu0 %v5271, 64
      %v5273 = vpop.permute.xlu0 %5272
      %v5275 = vsub.f32 %v3155, %v5273
      %5277 = vset.pattern.permute.xlu0 2
      %5278 = vperm.xlu0 %5277, %v5162
      %v5279 = vpop.permute.xlu0 %5278
      %5282 = vset.pattern.permute.xlu0 2
      %5283 = vperm.xlu0 %5282, %v5167
      %v5284 = vpop.permute.xlu0 %5283
      %5287 = vset.pattern.permute.xlu0 2
      %5288 = vperm.xlu0 %5287, %v5172
      %v5289 = vpop.permute.xlu0 %5288
      %5292 = vset.pattern.permute.xlu0 2
      %5293 = vperm.xlu0 %5292, %v5177
      %v5294 = vpop.permute.xlu0 %5293
      %5297 = vset.pattern.permute.xlu0 2
      %5298 = vperm.xlu0 %5297, %v5182
      %v5299 = vpop.permute.xlu0 %5298
      %5302 = vset.pattern.permute.xlu0 2
      %5303 = vperm.xlu0 %5302, %v5187
      %v5304 = vpop.permute.xlu0 %5303
      %5307 = vset.pattern.permute.xlu0 2
      %5308 = vperm.xlu0 %5307, %v5192
      %v5309 = vpop.permute.xlu0 %5308
      %5312 = vset.pattern.permute.xlu0 2
      %5313 = vperm.xlu0 %5312, %v5197
      %v5314 = vpop.permute.xlu0 %5313
      %v5316 = vlaneseq
      %v5317 = vshrl.u32 %v5316, 7
      %v5318 = vsub.s32 0, %v5317
      %v5319 = vrot.slane %v5275, %v5318
      %v5320 = vadd.f32 %v5279, %v5319
      %v5321 = vadd.f32 %v5284, %v5319
      %v5322 = vadd.f32 %v5289, %v5319
      %v5323 = vadd.f32 %v5294, %v5319
      %v5324 = vadd.f32 %v5299, %v5319
      %v5325 = vadd.f32 %v5304, %v5319
      %v5326 = vadd.f32 %v5309, %v5319
      %v5327 = vadd.f32 %v5314, %v5319
      %5336 = vrot.lane.b32.xlu0 %v3183, 64
      %v5337 = vpop.permute.xlu0 %5336
      %5338 = vrot.lane.b32.xlu0 %v3184, 64
      %v5339 = vpop.permute.xlu0 %5338
      %5340 = vrot.lane.b32.xlu0 %v3185, 64
      %v5341 = vpop.permute.xlu0 %5340
      %5342 = vrot.lane.b32.xlu0 %v3186, 64
      %v5343 = vpop.permute.xlu0 %5342
      %5344 = vrot.lane.b32.xlu0 %v3187, 64
      %v5345 = vpop.permute.xlu0 %5344
      %5346 = vrot.lane.b32.xlu0 %v3188, 64
      %v5347 = vpop.permute.xlu0 %5346
      %5348 = vrot.lane.b32.xlu0 %v3189, 64
      %v5349 = vpop.permute.xlu0 %5348
      %5350 = vrot.lane.b32.xlu0 %v3190, 64
      %v5351 = vpop.permute.xlu0 %5350
      %v5360 = vadd.f32 %v5320, %v5337
      %v5361 = vadd.f32 %v5321, %v5339
      %v5362 = vadd.f32 %v5322, %v5341
      %v5363 = vadd.f32 %v5323, %v5343
      %v5364 = vadd.f32 %v5324, %v5345
      %v5365 = vadd.f32 %v5325, %v5347
      %v5366 = vadd.f32 %v5326, %v5349
      %v5367 = vadd.f32 %v5327, %v5351
      %vm5368 = vcmask 1048064
      %v5369 = vsel %vm5368, %v5360, -inf
      %5370 = vmax.xlane.f32.xlu0 %v5369
      %v5371 = vpop.xlane.xlu0 %5370
      %v5372 = vsel %vm5368, %v5361, -inf
      %5373 = vmax.xlane.f32.xlu0 %v5372
      %v5374 = vpop.xlane.xlu0 %5373
      %v5375 = vsel %vm5368, %v5362, -inf
      %5376 = vmax.xlane.f32.xlu0 %v5375
      %v5377 = vpop.xlane.xlu0 %5376
      %v5378 = vsel %vm5368, %v5363, -inf
      %5379 = vmax.xlane.f32.xlu0 %v5378
      %v5380 = vpop.xlane.xlu0 %5379
      %v5381 = vsel %vm5368, %v5364, -inf
      %5382 = vmax.xlane.f32.xlu0 %v5381
      %v5383 = vpop.xlane.xlu0 %5382
      %v5384 = vsel %vm5368, %v5365, -inf
      %5385 = vmax.xlane.f32.xlu0 %v5384
      %v5386 = vpop.xlane.xlu0 %5385
      %v5387 = vsel %vm5368, %v5366, -inf
      %5388 = vmax.xlane.f32.xlu0 %v5387
      %v5389 = vpop.xlane.xlu0 %5388
      %v5390 = vsel %vm5368, %v5367, -inf
      %5391 = vmax.xlane.f32.xlu0 %v5390
      %v5392 = vpop.xlane.xlu0 %5391
      %v5393 = vsub.f32 %v5360, %v5371
      %v5394 = vsub.f32 %v5361, %v5374
      %v5395 = vsub.f32 %v5362, %v5377
      %v5396 = vsub.f32 %v5363, %v5380
      %v5397 = vsub.f32 %v5364, %v5383
      %v5398 = vsub.f32 %v5365, %v5386
      %v5399 = vsub.f32 %v5366, %v5389
      %v5400 = vsub.f32 %v5367, %v5392
      %v5401 = vmul.f32 %v5393, 1.442695
      %v5402 = vpow.pop %v5401
      %v5403 = vmul.f32 %v5394, 1.442695
      %v5404 = vpow.pop %v5403
      %v5405 = vmul.f32 %v5395, 1.442695
      %v5406 = vpow.pop %v5405
      %v5407 = vmul.f32 %v5396, 1.442695
      %v5408 = vpow.pop %v5407
      %v5409 = vmul.f32 %v5397, 1.442695
      %v5410 = vpow.pop %v5409
      %v5411 = vmul.f32 %v5398, 1.442695
      %v5412 = vpow.pop %v5411
      %v5413 = vmul.f32 %v5399, 1.442695
      %v5414 = vpow.pop %v5413
      %v5415 = vmul.f32 %v5400, 1.442695
      %v5416 = vpow.pop %v5415
      %5425 = vrot.lane.b32.xlu0 %v2659, 112
      %v5426 = vpop.permute.xlu0 %5425
      %5427 = vrot.lane.b32.xlu0 %v2664, 112
      %v5428 = vpop.permute.xlu0 %5427
      %5429 = vrot.lane.b32.xlu0 %v2669, 112
      %v5430 = vpop.permute.xlu0 %5429
      %5431 = vrot.lane.b32.xlu0 %v2674, 112
      %v5432 = vpop.permute.xlu0 %5431
      %5433 = vrot.lane.b32.xlu0 %v2679, 112
      %v5434 = vpop.permute.xlu0 %5433
      %5435 = vrot.lane.b32.xlu0 %v2684, 112
      %v5436 = vpop.permute.xlu0 %5435
      %5437 = vrot.lane.b32.xlu0 %v2689, 112
      %v5438 = vpop.permute.xlu0 %5437
      %5439 = vrot.lane.b32.xlu0 %v2694, 112
      %v5440 = vpop.permute.xlu0 %5439
      %v5441 = vsel %vm3530, %v2659, 0
      %v5443 = vsel %vm3530, %v2664, 0
      %v5445 = vsel %vm3530, %v2669, 0
      %v5447 = vsel %vm3530, %v2674, 0
      %v5449 = vsel %vm3530, %v2679, 0
      %v5451 = vsel %vm3530, %v2684, 0
      %v5453 = vsel %vm3530, %v2689, 0
      %v5455 = vsel %vm3530, %v2694, 0
      %v5457 = vsel %vm3530, %v5426, 0
      %v5459 = vsel %vm3530, %v5428, 0
      %v5461 = vsel %vm3530, %v5430, 0
      %v5463 = vsel %vm3530, %v5432, 0
      %v5465 = vsel %vm3530, %v5434, 0
      %v5467 = vsel %vm3530, %v5436, 0
      %v5469 = vsel %vm3530, %v5438, 0
      %v5471 = vsel %vm3530, %v5440, 0
      %5473 = vmatprep.subr.mxu0 0.0
      %5474 = vmatpush1.xpose.msra.mxu0 %v5457
      %5475 = vmatprep.subr.mxu0 0.0
      %5476 = vmatpush1.xpose.msra.mxu0 %v5459
      %5477 = vmatprep.subr.mxu0 0.0
      %5478 = vmatpush1.xpose.msra.mxu0 %v5461
      %5479 = vmatprep.subr.mxu0 0.0
      %5480 = vmatpush1.xpose.msra.mxu0 %v5463
      %5481 = vmatprep.subr.mxu0 0.0
      %5482 = vmatpush1.xpose.msra.mxu0 %v5465
      %5483 = vmatprep.subr.mxu0 0.0
      %5484 = vmatpush1.xpose.msra.mxu0 %v5467
      %5485 = vmatprep.subr.mxu0 0.0
      %5486 = vmatpush1.xpose.msra.mxu0 %v5469
      %5487 = vmatprep.subr.mxu0 0.0
      %5488 = vmatpush1.xpose.msra.mxu0 %v5471
      %5489 = vmatprep.subr.mxu0 0.0
      %5490 = vmatpush1.xpose.msra.mxu0 0.0
      %5491 = vmatprep.subr.mxu0 0.0
      %5492 = vmatpush1.xpose.msra.mxu0 0.0
      %5493 = vmatprep.subr.mxu0 0.0
      %5494 = vmatpush1.xpose.msra.mxu0 0.0
      %5495 = vmatprep.subr.mxu0 0.0
      %5496 = vmatpush1.xpose.msra.mxu0 0.0
      %5497 = vmatprep.subr.mxu0 0.0
      %5498 = vmatpush1.xpose.msra.mxu0 0.0
      %5499 = vmatprep.subr.mxu0 0.0
      %5500 = vmatpush1.xpose.msra.mxu0 0.0
      %5501 = vmatprep.subr.mxu0 0.0
      %5502 = vmatpush1.xpose.msra.mxu0 0.0
      %5503 = vmatprep.subr.mxu0 0.0
      %5504 = vmatpush1.xpose.msra.mxu0 0.0
      %5505 = vmatprep.subr.mxu0 0.0
      %5506 = vmatpush1.xpose.msra.mxu0 0.0
      %5507 = vmatprep.subr.mxu0 0.0
      %5508 = vmatpush1.xpose.msra.mxu0 0.0
      %5509 = vmatprep.subr.mxu0 0.0
      %5510 = vmatpush1.xpose.msra.mxu0 0.0
      %5511 = vmatprep.subr.mxu0 0.0
      %5512 = vmatpush1.xpose.msra.mxu0 0.0
      %5513 = vmatprep.subr.mxu0 0.0
      %5514 = vmatpush1.xpose.msra.mxu0 0.0
      %5515 = vmatprep.subr.mxu0 0.0
      %5516 = vmatpush1.xpose.msra.mxu0 0.0
      %5517 = vmatprep.subr.mxu0 0.0
      %5518 = vmatpush1.xpose.msra.mxu0 0.0
      %5519 = vmatprep.subr.mxu0 0.0
      %5520 = vmatpush1.xpose.msra.mxu0 0.0
      %5521 = vmatprep.subr.mxu0 0.0
      %5522 = vmatpush1.xpose.msra.mxu0 0.0
      %5523 = vmatprep.subr.mxu0 0.0
      %5524 = vmatpush1.xpose.msra.mxu0 0.0
      %5525 = vmatprep.subr.mxu0 0.0
      %5526 = vmatpush1.xpose.msra.mxu0 0.0
      %5527 = vmatprep.subr.mxu0 0.0
      %5528 = vmatpush1.xpose.msra.mxu0 0.0
      %5529 = vmatprep.subr.mxu0 0.0
      %5530 = vmatpush1.xpose.msra.mxu0 0.0
      %5531 = vmatprep.subr.mxu0 0.0
      %5532 = vmatpush1.xpose.msra.mxu0 0.0
      %5533 = vmatprep.subr.mxu0 0.0
      %5534 = vmatpush1.xpose.msra.mxu0 0.0
      %5535 = vmatprep.subr.mxu0 0.0
      %5536 = vmatpush1.xpose.msra.mxu0 0.0
      %5537 = vmatprep.mubr.f32.mxu0 0.0
      %5538 = vmatmul.mubr.f32.gmra.mrb[0].mxu0 %v5441
      %v5539 = vpop.f32.mrb[0].mxu0
      %v5540 = vadd.f32 0.0, %v5539
      %v5541 = vpop.f32.mrb[0].mxu0
      %5542 = vmatprep.mubr.f32.mxu0 0.0
      %5543 = vmatmul.mubr.f32.gmra.mrb[0].mxu0 %v5443
      %v5544 = vpop.f32.mrb[0].mxu0
      %v5545 = vadd.f32 0.0, %v5544
      %v5546 = vpop.f32.mrb[0].mxu0
      %5547 = vmatprep.mubr.f32.mxu0 0.0
      %5548 = vmatmul.mubr.f32.gmra.mrb[0].mxu0 %v5445
      %v5549 = vpop.f32.mrb[0].mxu0
      %v5550 = vadd.f32 0.0, %v5549
      %v5551 = vpop.f32.mrb[0].mxu0
      %5552 = vmatprep.mubr.f32.mxu0 0.0
      %5553 = vmatmul.mubr.f32.gmra.mrb[0].mxu0 %v5447
      %v5554 = vpop.f32.mrb[0].mxu0
      %v5555 = vadd.f32 0.0, %v5554
      %v5556 = vpop.f32.mrb[0].mxu0
      %5557 = vmatprep.mubr.f32.mxu0 0.0
      %5558 = vmatmul.mubr.f32.gmra.mrb[0].mxu0 %v5449
      %v5559 = vpop.f32.mrb[0].mxu0
      %v5560 = vadd.f32 0.0, %v5559
      %v5561 = vpop.f32.mrb[0].mxu0
      %5562 = vmatprep.mubr.f32.mxu0 0.0
      %5563 = vmatmul.mubr.f32.gmra.mrb[0].mxu0 %v5451
      %v5564 = vpop.f32.mrb[0].mxu0
      %v5565 = vadd.f32 0.0, %v5564
      %v5566 = vpop.f32.mrb[0].mxu0
      %5567 = vmatprep.mubr.f32.mxu0 0.0
      %5568 = vmatmul.mubr.f32.gmra.mrb[0].mxu0 %v5453
      %v5569 = vpop.f32.mrb[0].mxu0
      %v5570 = vadd.f32 0.0, %v5569
      %v5571 = vpop.f32.mrb[0].mxu0
      %5572 = vmatprep.mubr.f32.mxu0 0.0
      %5573 = vmatmul.mubr.f32.gmra.mrb[0].mxu0 %v5455
      %v5574 = vpop.f32.mrb[0].mxu0
      %v5575 = vadd.f32 0.0, %v5574
      %v5576 = vpop.f32.mrb[0].mxu0
      %5577 = vdwg.mxu0
      %v5578 = vmul.f32 %v5540, 0.35355338
      %v5579 = vmul.f32 %v5545, 0.35355338
      %v5580 = vmul.f32 %v5550, 0.35355338
      %v5581 = vmul.f32 %v5555, 0.35355338
      %v5582 = vmul.f32 %v5560, 0.35355338
      %v5583 = vmul.f32 %v5565, 0.35355338
      %v5584 = vmul.f32 %v5570, 0.35355338
      %v5585 = vmul.f32 %v5575, 0.35355338
      %5594 = vrot.lane.b32.xlu0 %v5402, 64
      %v5595 = vpop.permute.xlu0 %5594
      %5596 = vrot.lane.b32.xlu0 %v5404, 64
      %v5597 = vpop.permute.xlu0 %5596
      %5598 = vrot.lane.b32.xlu0 %v5406, 64
      %v5599 = vpop.permute.xlu0 %5598
      %5600 = vrot.lane.b32.xlu0 %v5408, 64
      %v5601 = vpop.permute.xlu0 %5600
      %5602 = vrot.lane.b32.xlu0 %v5410, 64
      %v5603 = vpop.permute.xlu0 %5602
      %5604 = vrot.lane.b32.xlu0 %v5412, 64
      %v5605 = vpop.permute.xlu0 %5604
      %5606 = vrot.lane.b32.xlu0 %v5414, 64
      %v5607 = vpop.permute.xlu0 %5606
      %5608 = vrot.lane.b32.xlu0 %v5416, 64
      %v5609 = vpop.permute.xlu0 %5608
      %v5618 = vmul.f32 %v5578, %v5595
      %v5619 = vmul.f32 %v5579, %v5597
      %v5620 = vmul.f32 %v5580, %v5599
      %v5621 = vmul.f32 %v5581, %v5601
      %v5622 = vmul.f32 %v5582, %v5603
      %v5623 = vmul.f32 %v5583, %v5605
      %v5624 = vmul.f32 %v5584, %v5607
      %v5625 = vmul.f32 %v5585, %v5609
      %v5626 = vsel %vm1285, %v5618, 0.0
      %5627 = vadd.xlane.f32.xlu0 %v5626
      %v5628 = vpop.xlane.xlu0 %5627
      %v5629 = vsel %vm1285, %v5619, 0.0
      %5630 = vadd.xlane.f32.xlu0 %v5629
      %v5631 = vpop.xlane.xlu0 %5630
      %v5632 = vsel %vm1285, %v5620, 0.0
      %5633 = vadd.xlane.f32.xlu0 %v5632
      %v5634 = vpop.xlane.xlu0 %5633
      %v5635 = vsel %vm1285, %v5621, 0.0
      %5636 = vadd.xlane.f32.xlu0 %v5635
      %v5637 = vpop.xlane.xlu0 %5636
      %v5638 = vsel %vm1285, %v5622, 0.0
      %5639 = vadd.xlane.f32.xlu0 %v5638
      %v5640 = vpop.xlane.xlu0 %5639
      %v5641 = vsel %vm1285, %v5623, 0.0
      %5642 = vadd.xlane.f32.xlu0 %v5641
      %v5643 = vpop.xlane.xlu0 %5642
      %v5644 = vsel %vm1285, %v5624, 0.0
      %5645 = vadd.xlane.f32.xlu0 %v5644
      %v5646 = vpop.xlane.xlu0 %5645
      %v5647 = vsel %vm1285, %v5625, 0.0
      %5648 = vadd.xlane.f32.xlu0 %v5647
      %v5649 = vpop.xlane.xlu0 %5648
      %v5650 = vand.u32 2147483647, %v5628
      %v5651 = vand.u32 2147483647, %v5631
      %v5652 = vand.u32 2147483647, %v5634
      %v5653 = vand.u32 2147483647, %v5637
      %v5654 = vand.u32 2147483647, %v5640
      %v5655 = vand.u32 2147483647, %v5643
      %v5656 = vand.u32 2147483647, %v5646
      %v5657 = vand.u32 2147483647, %v5649
      %v5658 = vsub.f32 0.0, %v5371
      %v5659 = vsub.f32 0.0, %v5374
      %v5660 = vsub.f32 0.0, %v5377
      %v5661 = vsub.f32 0.0, %v5380
      %v5662 = vsub.f32 0.0, %v5383
      %v5663 = vsub.f32 0.0, %v5386
      %v5664 = vsub.f32 0.0, %v5389
      %v5665 = vsub.f32 0.0, %v5392
      %v5666 = vmul.f32 %v5658, 1.442695
      %v5667 = vpow.pop %v5666
      %v5668 = vmul.f32 %v5659, 1.442695
      %v5669 = vpow.pop %v5668
      %v5670 = vmul.f32 %v5660, 1.442695
      %v5671 = vpow.pop %v5670
      %v5672 = vmul.f32 %v5661, 1.442695
      %v5673 = vpow.pop %v5672
      %v5674 = vmul.f32 %v5662, 1.442695
      %v5675 = vpow.pop %v5674
      %v5676 = vmul.f32 %v5663, 1.442695
      %v5677 = vpow.pop %v5676
      %v5678 = vmul.f32 %v5664, 1.442695
      %v5679 = vpow.pop %v5678
      %v5680 = vmul.f32 %v5665, 1.442695
      %v5681 = vpow.pop %v5680
      %v5682 = vmax.f32 %v5650, %v5667
      %v5683 = vmax.f32 %v5651, %v5669
      %v5684 = vmax.f32 %v5652, %v5671
      %v5685 = vmax.f32 %v5653, %v5673
      %v5686 = vmax.f32 %v5654, %v5675
      %v5687 = vmax.f32 %v5655, %v5677
      %v5688 = vmax.f32 %v5656, %v5679
      %v5689 = vmax.f32 %v5657, %v5681
      %v5691 = vsel %vm1285, %v5618, 0
      %v5694 = vsel %vm1285, %v5619, 0
      %v5697 = vsel %vm1285, %v5620, 0
      %v5700 = vsel %vm1285, %v5621, 0
      %v5703 = vsel %vm1285, %v5622, 0
      %v5706 = vsel %vm1285, %v5623, 0
      %v5709 = vsel %vm1285, %v5624, 0
      %v5712 = vsel %vm1285, %v5625, 0
      %5714 = vmatprep.subr.mxu0 0.0
      %5715 = vmatpush1.msra.mxu0 %v2952
      %5716 = vmatprep.subr.mxu0 0.0
      %5717 = vmatpush1.msra.mxu0 %v2957
      %5718 = vmatprep.subr.mxu0 0.0
      %5719 = vmatpush1.msra.mxu0 %v2962
      %5720 = vmatprep.subr.mxu0 0.0
      %5721 = vmatpush1.msra.mxu0 %v2967
      %5722 = vmatprep.subr.mxu0 0.0
      %5723 = vmatpush1.msra.mxu0 %v2972
      %5724 = vmatprep.subr.mxu0 0.0
      %5725 = vmatpush1.msra.mxu0 %v2977
      %5726 = vmatprep.subr.mxu0 0.0
      %5727 = vmatpush1.msra.mxu0 %v2982
      %5728 = vmatprep.subr.mxu0 0.0
      %5729 = vmatpush1.msra.mxu0 %v2987
      %5730 = vmatprep.subr.mxu0 0.0
      %5731 = vmatpush1.msra.mxu0 0.0
      %5732 = vmatprep.subr.mxu0 0.0
      %5733 = vmatpush1.msra.mxu0 0.0
      %5734 = vmatprep.subr.mxu0 0.0
      %5735 = vmatpush1.msra.mxu0 0.0
      %5736 = vmatprep.subr.mxu0 0.0
      %5737 = vmatpush1.msra.mxu0 0.0
      %5738 = vmatprep.subr.mxu0 0.0
      %5739 = vmatpush1.msra.mxu0 0.0
      %5740 = vmatprep.subr.mxu0 0.0
      %5741 = vmatpush1.msra.mxu0 0.0
      %5742 = vmatprep.subr.mxu0 0.0
      %5743 = vmatpush1.msra.mxu0 0.0
      %5744 = vmatprep.subr.mxu0 0.0
      %5745 = vmatpush1.msra.mxu0 0.0
      %5746 = vmatprep.subr.mxu0 0.0
      %5747 = vmatpush1.msra.mxu0 0.0
      %5748 = vmatprep.subr.mxu0 0.0
      %5749 = vmatpush1.msra.mxu0 0.0
      %5750 = vmatprep.subr.mxu0 0.0
      %5751 = vmatpush1.msra.mxu0 0.0
      %5752 = vmatprep.subr.mxu0 0.0
      %5753 = vmatpush1.msra.mxu0 0.0
      %5754 = vmatprep.subr.mxu0 0.0
      %5755 = vmatpush1.msra.mxu0 0.0
      %5756 = vmatprep.subr.mxu0 0.0
      %5757 = vmatpush1.msra.mxu0 0.0
      %5758 = vmatprep.subr.mxu0 0.0
      %5759 = vmatpush1.msra.mxu0 0.0
      %5760 = vmatprep.subr.mxu0 0.0
      %5761 = vmatpush1.msra.mxu0 0.0
      %5762 = vmatprep.subr.mxu0 0.0
      %5763 = vmatpush1.msra.mxu0 0.0
      %5764 = vmatprep.subr.mxu0 0.0
      %5765 = vmatpush1.msra.mxu0 0.0
      %5766 = vmatprep.subr.mxu0 0.0
      %5767 = vmatpush1.msra.mxu0 0.0
      %5768 = vmatprep.subr.mxu0 0.0
      %5769 = vmatpush1.msra.mxu0 0.0
      %5770 = vmatprep.subr.mxu0 0.0
      %5771 = vmatpush1.msra.mxu0 0.0
      %5772 = vmatprep.subr.mxu0 0.0
      %5773 = vmatpush1.msra.mxu0 0.0
      %5774 = vmatprep.subr.mxu0 0.0
      %5775 = vmatpush1.msra.mxu0 0.0
      %5776 = vmatprep.subr.mxu0 0.0
      %5777 = vmatpush1.msra.mxu0 0.0
      %5778 = vmatprep.mubr.f32.mxu0 0.0
      %5779 = vmatmul.mubr.f32.gmra.mrb[0].mxu0 %v5691
      %v5780 = vpop.f32.mrb[0].mxu0
      %v5781 = vadd.f32 0.0, %v5780
      %v5782 = vpop.f32.mrb[0].mxu0
      %5783 = vmatprep.mubr.f32.mxu0 0.0
      %5784 = vmatmul.mubr.f32.gmra.mrb[0].mxu0 %v5694
      %v5785 = vpop.f32.mrb[0].mxu0
      %v5786 = vadd.f32 0.0, %v5785
      %v5787 = vpop.f32.mrb[0].mxu0
      %5788 = vmatprep.mubr.f32.mxu0 0.0
      %5789 = vmatmul.mubr.f32.gmra.mrb[0].mxu0 %v5697
      %v5790 = vpop.f32.mrb[0].mxu0
      %v5791 = vadd.f32 0.0, %v5790
      %v5792 = vpop.f32.mrb[0].mxu0
      %5793 = vmatprep.mubr.f32.mxu0 0.0
      %5794 = vmatmul.mubr.f32.gmra.mrb[0].mxu0 %v5700
      %v5795 = vpop.f32.mrb[0].mxu0
      %v5796 = vadd.f32 0.0, %v5795
      %v5797 = vpop.f32.mrb[0].mxu0
      %5798 = vmatprep.mubr.f32.mxu0 0.0
      %5799 = vmatmul.mubr.f32.gmra.mrb[0].mxu0 %v5703
      %v5800 = vpop.f32.mrb[0].mxu0
      %v5801 = vadd.f32 0.0, %v5800
      %v5802 = vpop.f32.mrb[0].mxu0
      %5803 = vmatprep.mubr.f32.mxu0 0.0
      %5804 = vmatmul.mubr.f32.gmra.mrb[0].mxu0 %v5706
      %v5805 = vpop.f32.mrb[0].mxu0
      %v5806 = vadd.f32 0.0, %v5805
      %v5807 = vpop.f32.mrb[0].mxu0
      %5808 = vmatprep.mubr.f32.mxu0 0.0
      %5809 = vmatmul.mubr.f32.gmra.mrb[0].mxu0 %v5709
      %v5810 = vpop.f32.mrb[0].mxu0
      %v5811 = vadd.f32 0.0, %v5810
      %v5812 = vpop.f32.mrb[0].mxu0
      %5813 = vmatprep.mubr.f32.mxu0 0.0
      %5814 = vmatmul.mubr.f32.gmra.mrb[0].mxu0 %v5712
      %v5815 = vpop.f32.mrb[0].mxu0
      %v5816 = vadd.f32 0.0, %v5815
      %v5817 = vpop.f32.mrb[0].mxu0
      %5818 = vdwg.mxu0
      %v5819 = vadd.f32 %v5682, 1e-06
      %v5820 = vadd.f32 %v5683, 1e-06
      %v5821 = vadd.f32 %v5684, 1e-06
      %v5822 = vadd.f32 %v5685, 1e-06
      %v5823 = vadd.f32 %v5686, 1e-06
      %v5824 = vadd.f32 %v5687, 1e-06
      %v5825 = vadd.f32 %v5688, 1e-06
      %v5826 = vadd.f32 %v5689, 1e-06
      %v5827 = vrcp.pop %v5819
      %v5828 = vmul.f32 %v5781, %v5827
      %v5829 = vrcp.pop %v5820
      %v5830 = vmul.f32 %v5786, %v5829
      %v5831 = vrcp.pop %v5821
      %v5832 = vmul.f32 %v5791, %v5831
      %v5833 = vrcp.pop %v5822
      %v5834 = vmul.f32 %v5796, %v5833
      %v5835 = vrcp.pop %v5823
      %v5836 = vmul.f32 %v5801, %v5835
      %v5837 = vrcp.pop %v5824
      %v5838 = vmul.f32 %v5806, %v5837
      %v5839 = vrcp.pop %v5825
      %v5840 = vmul.f32 %v5811, %v5839
      %v5841 = vrcp.pop %v5826
      %v5842 = vmul.f32 %v5816, %v5841
      %v5843 = vsel %vm3901, %v5828, 0.0
      %5844 = vadd.xlane.f32.xlu0 %v5843
      %v5845 = vpop.xlane.xlu0 %5844
      %v5846 = vsel %vm3901, %v5830, 0.0
      %5847 = vadd.xlane.f32.xlu0 %v5846
      %v5848 = vpop.xlane.xlu0 %5847
      %v5849 = vsel %vm3901, %v5832, 0.0
      %5850 = vadd.xlane.f32.xlu0 %v5849
      %v5851 = vpop.xlane.xlu0 %5850
      %v5852 = vsel %vm3901, %v5834, 0.0
      %5853 = vadd.xlane.f32.xlu0 %v5852
      %v5854 = vpop.xlane.xlu0 %5853
      %v5855 = vsel %vm3901, %v5836, 0.0
      %5856 = vadd.xlane.f32.xlu0 %v5855
      %v5857 = vpop.xlane.xlu0 %5856
      %v5858 = vsel %vm3901, %v5838, 0.0
      %5859 = vadd.xlane.f32.xlu0 %v5858
      %v5860 = vpop.xlane.xlu0 %5859
      %v5861 = vsel %vm3901, %v5840, 0.0
      %5862 = vadd.xlane.f32.xlu0 %v5861
      %v5863 = vpop.xlane.xlu0 %5862
      %v5864 = vsel %vm3901, %v5842, 0.0
      %5865 = vadd.xlane.f32.xlu0 %v5864
      %v5866 = vpop.xlane.xlu0 %5865
      %v5867 = vmul.f32 %v5845, %v3926
      %v5868 = vmul.f32 %v5848, %v3926
      %v5869 = vmul.f32 %v5851, %v3926
      %v5870 = vmul.f32 %v5854, %v3926
      %v5871 = vmul.f32 %v5857, %v3926
      %v5872 = vmul.f32 %v5860, %v3926
      %v5873 = vmul.f32 %v5863, %v3926
      %v5874 = vmul.f32 %v5866, %v3926
      %v5875 = vsub.f32 %v5828, %v5867
      %v5876 = vsub.f32 %v5830, %v5868
      %v5877 = vsub.f32 %v5832, %v5869
      %v5878 = vsub.f32 %v5834, %v5870
      %v5879 = vsub.f32 %v5836, %v5871
      %v5880 = vsub.f32 %v5838, %v5872
      %v5881 = vsub.f32 %v5840, %v5873
      %v5882 = vsub.f32 %v5842, %v5874
      %v5883 = vmul.f32 %v5875, %v5875
      %v5884 = vmul.f32 %v5876, %v5876
      %v5885 = vmul.f32 %v5877, %v5877
      %v5886 = vmul.f32 %v5878, %v5878
      %v5887 = vmul.f32 %v5879, %v5879
      %v5888 = vmul.f32 %v5880, %v5880
      %v5889 = vmul.f32 %v5881, %v5881
      %v5890 = vmul.f32 %v5882, %v5882
      %v5891 = vsel %vm3901, %v5883, 0.0
      %5892 = vadd.xlane.f32.xlu0 %v5891
      %v5893 = vpop.xlane.xlu0 %5892
      %v5894 = vsel %vm3901, %v5884, 0.0
      %5895 = vadd.xlane.f32.xlu0 %v5894
      %v5896 = vpop.xlane.xlu0 %5895
      %v5897 = vsel %vm3901, %v5885, 0.0
      %5898 = vadd.xlane.f32.xlu0 %v5897
      %v5899 = vpop.xlane.xlu0 %5898
      %v5900 = vsel %vm3901, %v5886, 0.0
      %5901 = vadd.xlane.f32.xlu0 %v5900
      %v5902 = vpop.xlane.xlu0 %5901
      %v5903 = vsel %vm3901, %v5887, 0.0
      %5904 = vadd.xlane.f32.xlu0 %v5903
      %v5905 = vpop.xlane.xlu0 %5904
      %v5906 = vsel %vm3901, %v5888, 0.0
      %5907 = vadd.xlane.f32.xlu0 %v5906
      %v5908 = vpop.xlane.xlu0 %5907
      %v5909 = vsel %vm3901, %v5889, 0.0
      %5910 = vadd.xlane.f32.xlu0 %v5909
      %v5911 = vpop.xlane.xlu0 %5910
      %v5912 = vsel %vm3901, %v5890, 0.0
      %5913 = vadd.xlane.f32.xlu0 %v5912
      %v5914 = vpop.xlane.xlu0 %5913
      %v5915 = vmul.f32 %v5893, %v3926
      %v5916 = vmul.f32 %v5896, %v3926
      %v5917 = vmul.f32 %v5899, %v3926
      %v5918 = vmul.f32 %v5902, %v3926
      %v5919 = vmul.f32 %v5905, %v3926
      %v5920 = vmul.f32 %v5908, %v3926
      %v5921 = vmul.f32 %v5911, %v3926
      %v5922 = vmul.f32 %v5914, %v3926
      %v5923 = vadd.f32 %v5915, 1e-06
      %v5924 = vadd.f32 %v5916, 1e-06
      %v5925 = vadd.f32 %v5917, 1e-06
      %v5926 = vadd.f32 %v5918, 1e-06
      %v5927 = vadd.f32 %v5919, 1e-06
      %v5928 = vadd.f32 %v5920, 1e-06
      %v5929 = vadd.f32 %v5921, 1e-06
      %v5930 = vadd.f32 %v5922, 1e-06
      %v5931 = vrsqrt.pop %v5923
      %v5932 = vrsqrt.pop %v5924
      %v5933 = vrsqrt.pop %v5925
      %v5934 = vrsqrt.pop %v5926
      %v5935 = vrsqrt.pop %v5927
      %v5936 = vrsqrt.pop %v5928
      %v5937 = vrsqrt.pop %v5929
      %v5938 = vrsqrt.pop %v5930
      %v5939 = vmul.f32 %v5875, %v5931
      %v5940 = vmul.f32 %v5876, %v5932
      %v5941 = vmul.f32 %v5877, %v5933
      %v5942 = vmul.f32 %v5878, %v5934
      %v5943 = vmul.f32 %v5879, %v5935
      %v5944 = vmul.f32 %v5880, %v5936
      %v5945 = vmul.f32 %v5881, %v5937
      %v5946 = vmul.f32 %v5882, %v5938
      %v5947 = vmul.f32 %v5939, %v4010
      %v5948 = vmul.f32 %v5940, %v4010
      %v5949 = vmul.f32 %v5941, %v4010
      %v5950 = vmul.f32 %v5942, %v4010
      %v5951 = vmul.f32 %v5943, %v4010
      %v5952 = vmul.f32 %v5944, %v4010
      %v5953 = vmul.f32 %v5945, %v4010
      %v5954 = vmul.f32 %v5946, %v4010
      %v5955 = vxor.u32 %v2952, 2147483648
      %v5956 = vxor.u32 %v2957, 2147483648
      %v5957 = vxor.u32 %v2962, 2147483648
      %v5958 = vxor.u32 %v2967, 2147483648
      %v5959 = vxor.u32 %v2972, 2147483648
      %v5960 = vxor.u32 %v2977, 2147483648
      %v5961 = vxor.u32 %v2982, 2147483648
      %v5962 = vxor.u32 %v2987, 2147483648
      %v5963 = vmul.f32 %v5955, 1.442695
      %v5964 = vpow.pop %v5963
      %v5965 = vmul.f32 %v5956, 1.442695
      %v5966 = vpow.pop %v5965
      %v5967 = vmul.f32 %v5957, 1.442695
      %v5968 = vpow.pop %v5967
      %v5969 = vmul.f32 %v5958, 1.442695
      %v5970 = vpow.pop %v5969
      %v5971 = vmul.f32 %v5959, 1.442695
      %v5972 = vpow.pop %v5971
      %v5973 = vmul.f32 %v5960, 1.442695
      %v5974 = vpow.pop %v5973
      %v5975 = vmul.f32 %v5961, 1.442695
      %v5976 = vpow.pop %v5975
      %v5977 = vmul.f32 %v5962, 1.442695
      %v5978 = vpow.pop %v5977
      %v5979 = vadd.f32 %v5964, 1.0
      %v5980 = vadd.f32 %v5966, 1.0
      %v5981 = vadd.f32 %v5968, 1.0
      %v5982 = vadd.f32 %v5970, 1.0
      %v5983 = vadd.f32 %v5972, 1.0
      %v5984 = vadd.f32 %v5974, 1.0
      %v5985 = vadd.f32 %v5976, 1.0
      %v5986 = vadd.f32 %v5978, 1.0
      %v5987 = vrcp.pop %v5979
      %v5988 = vmul.f32 1.0, %v5987
      %v5989 = vrcp.pop %v5980
      %v5990 = vmul.f32 1.0, %v5989
      %v5991 = vrcp.pop %v5981
      %v5992 = vmul.f32 1.0, %v5991
      %v5993 = vrcp.pop %v5982
      %v5994 = vmul.f32 1.0, %v5993
      %v5995 = vrcp.pop %v5983
      %v5996 = vmul.f32 1.0, %v5995
      %v5997 = vrcp.pop %v5984
      %v5998 = vmul.f32 1.0, %v5997
      %v5999 = vrcp.pop %v5985
      %v6000 = vmul.f32 1.0, %v5999
      %v6001 = vrcp.pop %v5986
      %v6002 = vmul.f32 1.0, %v6001
      %6011 = vrot.lane.b32.xlu0 %v5947, 32
      %v6012 = vpop.permute.xlu0 %6011
      %6013 = vrot.lane.b32.xlu0 %v5948, 32
      %v6014 = vpop.permute.xlu0 %6013
      %6015 = vrot.lane.b32.xlu0 %v5949, 32
      %v6016 = vpop.permute.xlu0 %6015
      %6017 = vrot.lane.b32.xlu0 %v5950, 32
      %v6018 = vpop.permute.xlu0 %6017
      %6019 = vrot.lane.b32.xlu0 %v5951, 32
      %v6020 = vpop.permute.xlu0 %6019
      %6021 = vrot.lane.b32.xlu0 %v5952, 32
      %v6022 = vpop.permute.xlu0 %6021
      %6023 = vrot.lane.b32.xlu0 %v5953, 32
      %v6024 = vpop.permute.xlu0 %6023
      %6025 = vrot.lane.b32.xlu0 %v5954, 32
      %v6026 = vpop.permute.xlu0 %6025
      %v6035 = vmul.f32 %v5988, %v6012
      %v6036 = vmul.f32 %v5990, %v6014
      %v6037 = vmul.f32 %v5992, %v6016
      %v6038 = vmul.f32 %v5994, %v6018
      %v6039 = vmul.f32 %v5996, %v6020
      %v6040 = vmul.f32 %v5998, %v6022
      %v6041 = vmul.f32 %v6000, %v6024
      %v6042 = vmul.f32 %v6002, %v6026
      %6043 = vset.pattern.permute.xlu0 3
      %6044 = vperm.xlu0 %6043, %v5162
      %v6045 = vpop.permute.xlu0 %6044
      %6047 = vset.pattern.permute.xlu0 3
      %6048 = vperm.xlu0 %6047, %v5167
      %v6049 = vpop.permute.xlu0 %6048
      %6051 = vset.pattern.permute.xlu0 3
      %6052 = vperm.xlu0 %6051, %v5172
      %v6053 = vpop.permute.xlu0 %6052
      %6055 = vset.pattern.permute.xlu0 3
      %6056 = vperm.xlu0 %6055, %v5177
      %v6057 = vpop.permute.xlu0 %6056
      %6059 = vset.pattern.permute.xlu0 3
      %6060 = vperm.xlu0 %6059, %v5182
      %v6061 = vpop.permute.xlu0 %6060
      %6063 = vset.pattern.permute.xlu0 3
      %6064 = vperm.xlu0 %6063, %v5187
      %v6065 = vpop.permute.xlu0 %6064
      %6067 = vset.pattern.permute.xlu0 3
      %6068 = vperm.xlu0 %6067, %v5192
      %v6069 = vpop.permute.xlu0 %6068
      %6071 = vset.pattern.permute.xlu0 3
      %6072 = vperm.xlu0 %6071, %v5197
      %v6073 = vpop.permute.xlu0 %6072
      %v6075 = vlaneseq
      %v6076 = vshrl.u32 %v6075, 7
      %v6077 = vsub.s32 1, %v6076
      %v6078 = vrot.slane %v5275, %v6077
      %v6079 = vadd.f32 %v6045, %v6078
      %v6080 = vadd.f32 %v6049, %v6078
      %v6081 = vadd.f32 %v6053, %v6078
      %v6082 = vadd.f32 %v6057, %v6078
      %v6083 = vadd.f32 %v6061, %v6078
      %v6084 = vadd.f32 %v6065, %v6078
      %v6085 = vadd.f32 %v6069, %v6078
      %v6086 = vadd.f32 %v6073, %v6078
      %v6087 = vadd.f32 %v6079, %v5337
      %v6088 = vadd.f32 %v6080, %v5339
      %v6089 = vadd.f32 %v6081, %v5341
      %v6090 = vadd.f32 %v6082, %v5343
      %v6091 = vadd.f32 %v6083, %v5345
      %v6092 = vadd.f32 %v6084, %v5347
      %v6093 = vadd.f32 %v6085, %v5349
      %v6094 = vadd.f32 %v6086, %v5351
      %v6095 = vsel %vm5368, %v6087, -inf
      %6096 = vmax.xlane.f32.xlu0 %v6095
      %v6097 = vpop.xlane.xlu0 %6096
      %v6098 = vsel %vm5368, %v6088, -inf
      %6099 = vmax.xlane.f32.xlu0 %v6098
      %v6100 = vpop.xlane.xlu0 %6099
      %v6101 = vsel %vm5368, %v6089, -inf
      %6102 = vmax.xlane.f32.xlu0 %v6101
      %v6103 = vpop.xlane.xlu0 %6102
      %v6104 = vsel %vm5368, %v6090, -inf
      %6105 = vmax.xlane.f32.xlu0 %v6104
      %v6106 = vpop.xlane.xlu0 %6105
      %v6107 = vsel %vm5368, %v6091, -inf
      %6108 = vmax.xlane.f32.xlu0 %v6107
      %v6109 = vpop.xlane.xlu0 %6108
      %v6110 = vsel %vm5368, %v6092, -inf
      %6111 = vmax.xlane.f32.xlu0 %v6110
      %v6112 = vpop.xlane.xlu0 %6111
      %v6113 = vsel %vm5368, %v6093, -inf
      %6114 = vmax.xlane.f32.xlu0 %v6113
      %v6115 = vpop.xlane.xlu0 %6114
      %v6116 = vsel %vm5368, %v6094, -inf
      %6117 = vmax.xlane.f32.xlu0 %v6116
      %v6118 = vpop.xlane.xlu0 %6117
      %v6119 = vsub.f32 %v6087, %v6097
      %v6120 = vsub.f32 %v6088, %v6100
      %v6121 = vsub.f32 %v6089, %v6103
      %v6122 = vsub.f32 %v6090, %v6106
      %v6123 = vsub.f32 %v6091, %v6109
      %v6124 = vsub.f32 %v6092, %v6112
      %v6125 = vsub.f32 %v6093, %v6115
      %v6126 = vsub.f32 %v6094, %v6118
      %v6127 = vmul.f32 %v6119, 1.442695
      %v6128 = vpow.pop %v6127
      %v6129 = vmul.f32 %v6120, 1.442695
      %v6130 = vpow.pop %v6129
      %v6131 = vmul.f32 %v6121, 1.442695
      %v6132 = vpow.pop %v6131
      %v6133 = vmul.f32 %v6122, 1.442695
      %v6134 = vpow.pop %v6133
      %v6135 = vmul.f32 %v6123, 1.442695
      %v6136 = vpow.pop %v6135
      %v6137 = vmul.f32 %v6124, 1.442695
      %v6138 = vpow.pop %v6137
      %v6139 = vmul.f32 %v6125, 1.442695
      %v6140 = vpow.pop %v6139
      %v6141 = vmul.f32 %v6126, 1.442695
      %v6142 = vpow.pop %v6141
      %6143 = vrot.lane.b32.xlu0 %v2659, 120
      %v6144 = vpop.permute.xlu0 %6143
      %6145 = vrot.lane.b32.xlu0 %v2664, 120
      %v6146 = vpop.permute.xlu0 %6145
      %6147 = vrot.lane.b32.xlu0 %v2669, 120
      %v6148 = vpop.permute.xlu0 %6147
      %6149 = vrot.lane.b32.xlu0 %v2674, 120
      %v6150 = vpop.permute.xlu0 %6149
      %6151 = vrot.lane.b32.xlu0 %v2679, 120
      %v6152 = vpop.permute.xlu0 %6151
      %6153 = vrot.lane.b32.xlu0 %v2684, 120
      %v6154 = vpop.permute.xlu0 %6153
      %6155 = vrot.lane.b32.xlu0 %v2689, 120
      %v6156 = vpop.permute.xlu0 %6155
      %6157 = vrot.lane.b32.xlu0 %v2694, 120
      %v6158 = vpop.permute.xlu0 %6157
      %6159 = vrot.lane.b32.xlu0 %v2659, 104
      %v6160 = vpop.permute.xlu0 %6159
      %6161 = vrot.lane.b32.xlu0 %v2664, 104
      %v6162 = vpop.permute.xlu0 %6161
      %6163 = vrot.lane.b32.xlu0 %v2669, 104
      %v6164 = vpop.permute.xlu0 %6163
      %6165 = vrot.lane.b32.xlu0 %v2674, 104
      %v6166 = vpop.permute.xlu0 %6165
      %6167 = vrot.lane.b32.xlu0 %v2679, 104
      %v6168 = vpop.permute.xlu0 %6167
      %6169 = vrot.lane.b32.xlu0 %v2684, 104
      %v6170 = vpop.permute.xlu0 %6169
      %6171 = vrot.lane.b32.xlu0 %v2689, 104
      %v6172 = vpop.permute.xlu0 %6171
      %6173 = vrot.lane.b32.xlu0 %v2694, 104
      %v6174 = vpop.permute.xlu0 %6173
      %v6175 = vsel %vm3530, %v6144, 0
      %v6177 = vsel %vm3530, %v6146, 0
      %v6179 = vsel %vm3530, %v6148, 0
      %v6181 = vsel %vm3530, %v6150, 0
      %v6183 = vsel %vm3530, %v6152, 0
      %v6185 = vsel %vm3530, %v6154, 0
      %v6187 = vsel %vm3530, %v6156, 0
      %v6189 = vsel %vm3530, %v6158, 0
      %v6191 = vsel %vm3530, %v6160, 0
      %v6193 = vsel %vm3530, %v6162, 0
      %v6195 = vsel %vm3530, %v6164, 0
      %v6197 = vsel %vm3530, %v6166, 0
      %v6199 = vsel %vm3530, %v6168, 0
      %v6201 = vsel %vm3530, %v6170, 0
      %v6203 = vsel %vm3530, %v6172, 0
      %v6205 = vsel %vm3530, %v6174, 0
      %6207 = vmatprep.subr.mxu0 0.0
      %6208 = vmatpush1.xpose.msra.mxu0 %v6191
      %6209 = vmatprep.subr.mxu0 0.0
      %6210 = vmatpush1.xpose.msra.mxu0 %v6193
      %6211 = vmatprep.subr.mxu0 0.0
      %6212 = vmatpush1.xpose.msra.mxu0 %v6195
      %6213 = vmatprep.subr.mxu0 0.0
      %6214 = vmatpush1.xpose.msra.mxu0 %v6197
      %6215 = vmatprep.subr.mxu0 0.0
      %6216 = vmatpush1.xpose.msra.mxu0 %v6199
      %6217 = vmatprep.subr.mxu0 0.0
      %6218 = vmatpush1.xpose.msra.mxu0 %v6201
      %6219 = vmatprep.subr.mxu0 0.0
      %6220 = vmatpush1.xpose.msra.mxu0 %v6203
      %6221 = vmatprep.subr.mxu0 0.0
      %6222 = vmatpush1.xpose.msra.mxu0 %v6205
      %6223 = vmatprep.subr.mxu0 0.0
      %6224 = vmatpush1.xpose.msra.mxu0 0.0
      %6225 = vmatprep.subr.mxu0 0.0
      %6226 = vmatpush1.xpose.msra.mxu0 0.0
      %6227 = vmatprep.subr.mxu0 0.0
      %6228 = vmatpush1.xpose.msra.mxu0 0.0
      %6229 = vmatprep.subr.mxu0 0.0
      %6230 = vmatpush1.xpose.msra.mxu0 0.0
      %6231 = vmatprep.subr.mxu0 0.0
      %6232 = vmatpush1.xpose.msra.mxu0 0.0
      %6233 = vmatprep.subr.mxu0 0.0
      %6234 = vmatpush1.xpose.msra.mxu0 0.0
      %6235 = vmatprep.subr.mxu0 0.0
      %6236 = vmatpush1.xpose.msra.mxu0 0.0
      %6237 = vmatprep.subr.mxu0 0.0
      %6238 = vmatpush1.xpose.msra.mxu0 0.0
      %6239 = vmatprep.subr.mxu0 0.0
      %6240 = vmatpush1.xpose.msra.mxu0 0.0
      %6241 = vmatprep.subr.mxu0 0.0
      %6242 = vmatpush1.xpose.msra.mxu0 0.0
      %6243 = vmatprep.subr.mxu0 0.0
      %6244 = vmatpush1.xpose.msra.mxu0 0.0
      %6245 = vmatprep.subr.mxu0 0.0
      %6246 = vmatpush1.xpose.msra.mxu0 0.0
      %6247 = vmatprep.subr.mxu0 0.0
      %6248 = vmatpush1.xpose.msra.mxu0 0.0
      %6249 = vmatprep.subr.mxu0 0.0
      %6250 = vmatpush1.xpose.msra.mxu0 0.0
      %6251 = vmatprep.subr.mxu0 0.0
      %6252 = vmatpush1.xpose.msra.mxu0 0.0
      %6253 = vmatprep.subr.mxu0 0.0
      %6254 = vmatpush1.xpose.msra.mxu0 0.0
      %6255 = vmatprep.subr.mxu0 0.0
      %6256 = vmatpush1.xpose.msra.mxu0 0.0
      %6257 = vmatprep.subr.mxu0 0.0
      %6258 = vmatpush1.xpose.msra.mxu0 0.0
      %6259 = vmatprep.subr.mxu0 0.0
      %6260 = vmatpush1.xpose.msra.mxu0 0.0
      %6261 = vmatprep.subr.mxu0 0.0
      %6262 = vmatpush1.xpose.msra.mxu0 0.0
      %6263 = vmatprep.subr.mxu0 0.0
      %6264 = vmatpush1.xpose.msra.mxu0 0.0
      %6265 = vmatprep.subr.mxu0 0.0
      %6266 = vmatpush1.xpose.msra.mxu0 0.0
      %6267 = vmatprep.subr.mxu0 0.0
      %6268 = vmatpush1.xpose.msra.mxu0 0.0
      %6269 = vmatprep.subr.mxu0 0.0
      %6270 = vmatpush1.xpose.msra.mxu0 0.0
      %6271 = vmatprep.mubr.f32.mxu0 0.0
      %6272 = vmatmul.mubr.f32.gmra.mrb[0].mxu0 %v6175
      %v6273 = vpop.f32.mrb[0].mxu0
      %v6274 = vadd.f32 0.0, %v6273
      %v6275 = vpop.f32.mrb[0].mxu0
      %6276 = vmatprep.mubr.f32.mxu0 0.0
      %6277 = vmatmul.mubr.f32.gmra.mrb[0].mxu0 %v6177
      %v6278 = vpop.f32.mrb[0].mxu0
      %v6279 = vadd.f32 0.0, %v6278
      %v6280 = vpop.f32.mrb[0].mxu0
      %6281 = vmatprep.mubr.f32.mxu0 0.0
      %6282 = vmatmul.mubr.f32.gmra.mrb[0].mxu0 %v6179
      %v6283 = vpop.f32.mrb[0].mxu0
      %v6284 = vadd.f32 0.0, %v6283
      %v6285 = vpop.f32.mrb[0].mxu0
      %6286 = vmatprep.mubr.f32.mxu0 0.0
      %6287 = vmatmul.mubr.f32.gmra.mrb[0].mxu0 %v6181
      %v6288 = vpop.f32.mrb[0].mxu0
      %v6289 = vadd.f32 0.0, %v6288
      %v6290 = vpop.f32.mrb[0].mxu0
      %6291 = vmatprep.mubr.f32.mxu0 0.0
      %6292 = vmatmul.mubr.f32.gmra.mrb[0].mxu0 %v6183
      %v6293 = vpop.f32.mrb[0].mxu0
      %v6294 = vadd.f32 0.0, %v6293
      %v6295 = vpop.f32.mrb[0].mxu0
      %6296 = vmatprep.mubr.f32.mxu0 0.0
      %6297 = vmatmul.mubr.f32.gmra.mrb[0].mxu0 %v6185
      %v6298 = vpop.f32.mrb[0].mxu0
      %v6299 = vadd.f32 0.0, %v6298
      %v6300 = vpop.f32.mrb[0].mxu0
      %6301 = vmatprep.mubr.f32.mxu0 0.0
      %6302 = vmatmul.mubr.f32.gmra.mrb[0].mxu0 %v6187
      %v6303 = vpop.f32.mrb[0].mxu0
      %v6304 = vadd.f32 0.0, %v6303
      %v6305 = vpop.f32.mrb[0].mxu0
      %6306 = vmatprep.mubr.f32.mxu0 0.0
      %6307 = vmatmul.mubr.f32.gmra.mrb[0].mxu0 %v6189
      %v6308 = vpop.f32.mrb[0].mxu0
      %v6309 = vadd.f32 0.0, %v6308
      %v6310 = vpop.f32.mrb[0].mxu0
      %6311 = vdwg.mxu0
      %v6312 = vmul.f32 %v6274, 0.35355338
      %v6313 = vmul.f32 %v6279, 0.35355338
      %v6314 = vmul.f32 %v6284, 0.35355338
      %v6315 = vmul.f32 %v6289, 0.35355338
      %v6316 = vmul.f32 %v6294, 0.35355338
      %v6317 = vmul.f32 %v6299, 0.35355338
      %v6318 = vmul.f32 %v6304, 0.35355338
      %v6319 = vmul.f32 %v6309, 0.35355338
      %6328 = vrot.lane.b32.xlu0 %v6128, 64
      %v6329 = vpop.permute.xlu0 %6328
      %6330 = vrot.lane.b32.xlu0 %v6130, 64
      %v6331 = vpop.permute.xlu0 %6330
      %6332 = vrot.lane.b32.xlu0 %v6132, 64
      %v6333 = vpop.permute.xlu0 %6332
      %6334 = vrot.lane.b32.xlu0 %v6134, 64
      %v6335 = vpop.permute.xlu0 %6334
      %6336 = vrot.lane.b32.xlu0 %v6136, 64
      %v6337 = vpop.permute.xlu0 %6336
      %6338 = vrot.lane.b32.xlu0 %v6138, 64
      %v6339 = vpop.permute.xlu0 %6338
      %6340 = vrot.lane.b32.xlu0 %v6140, 64
      %v6341 = vpop.permute.xlu0 %6340
      %6342 = vrot.lane.b32.xlu0 %v6142, 64
      %v6343 = vpop.permute.xlu0 %6342
      %v6352 = vmul.f32 %v6312, %v6329
      %v6353 = vmul.f32 %v6313, %v6331
      %v6354 = vmul.f32 %v6314, %v6333
      %v6355 = vmul.f32 %v6315, %v6335
      %v6356 = vmul.f32 %v6316, %v6337
      %v6357 = vmul.f32 %v6317, %v6339
      %v6358 = vmul.f32 %v6318, %v6341
      %v6359 = vmul.f32 %v6319, %v6343
      %v6360 = vsel %vm1285, %v6352, 0.0
      %6361 = vadd.xlane.f32.xlu0 %v6360
      %v6362 = vpop.xlane.xlu0 %6361
      %v6363 = vsel %vm1285, %v6353, 0.0
      %6364 = vadd.xlane.f32.xlu0 %v6363
      %v6365 = vpop.xlane.xlu0 %6364
      %v6366 = vsel %vm1285, %v6354, 0.0
      %6367 = vadd.xlane.f32.xlu0 %v6366
      %v6368 = vpop.xlane.xlu0 %6367
      %v6369 = vsel %vm1285, %v6355, 0.0
      %6370 = vadd.xlane.f32.xlu0 %v6369
      %v6371 = vpop.xlane.xlu0 %6370
      %v6372 = vsel %vm1285, %v6356, 0.0
      %6373 = vadd.xlane.f32.xlu0 %v6372
      %v6374 = vpop.xlane.xlu0 %6373
      %v6375 = vsel %vm1285, %v6357, 0.0
      %6376 = vadd.xlane.f32.xlu0 %v6375
      %v6377 = vpop.xlane.xlu0 %6376
      %v6378 = vsel %vm1285, %v6358, 0.0
      %6379 = vadd.xlane.f32.xlu0 %v6378
      %v6380 = vpop.xlane.xlu0 %6379
      %v6381 = vsel %vm1285, %v6359, 0.0
      %6382 = vadd.xlane.f32.xlu0 %v6381
      %v6383 = vpop.xlane.xlu0 %6382
      %v6384 = vand.u32 2147483647, %v6362
      %v6385 = vand.u32 2147483647, %v6365
      %v6386 = vand.u32 2147483647, %v6368
      %v6387 = vand.u32 2147483647, %v6371
      %v6388 = vand.u32 2147483647, %v6374
      %v6389 = vand.u32 2147483647, %v6377
      %v6390 = vand.u32 2147483647, %v6380
      %v6391 = vand.u32 2147483647, %v6383
      %v6392 = vsub.f32 0.0, %v6097
      %v6393 = vsub.f32 0.0, %v6100
      %v6394 = vsub.f32 0.0, %v6103
      %v6395 = vsub.f32 0.0, %v6106
      %v6396 = vsub.f32 0.0, %v6109
      %v6397 = vsub.f32 0.0, %v6112
      %v6398 = vsub.f32 0.0, %v6115
      %v6399 = vsub.f32 0.0, %v6118
      %v6400 = vmul.f32 %v6392, 1.442695
      %v6401 = vpow.pop %v6400
      %v6402 = vmul.f32 %v6393, 1.442695
      %v6403 = vpow.pop %v6402
      %v6404 = vmul.f32 %v6394, 1.442695
      %v6405 = vpow.pop %v6404
      %v6406 = vmul.f32 %v6395, 1.442695
      %v6407 = vpow.pop %v6406
      %v6408 = vmul.f32 %v6396, 1.442695
      %v6409 = vpow.pop %v6408
      %v6410 = vmul.f32 %v6397, 1.442695
      %v6411 = vpow.pop %v6410
      %v6412 = vmul.f32 %v6398, 1.442695
      %v6413 = vpow.pop %v6412
      %v6414 = vmul.f32 %v6399, 1.442695
      %v6415 = vpow.pop %v6414
      %v6416 = vmax.f32 %v6384, %v6401
      %v6417 = vmax.f32 %v6385, %v6403
      %v6418 = vmax.f32 %v6386, %v6405
      %v6419 = vmax.f32 %v6387, %v6407
      %v6420 = vmax.f32 %v6388, %v6409
      %v6421 = vmax.f32 %v6389, %v6411
      %v6422 = vmax.f32 %v6390, %v6413
      %v6423 = vmax.f32 %v6391, %v6415
      %6432 = vrot.lane.b32.xlu0 %v2952, 112
      %v6433 = vpop.permute.xlu0 %6432
      %6434 = vrot.lane.b32.xlu0 %v2957, 112
      %v6435 = vpop.permute.xlu0 %6434
      %6436 = vrot.lane.b32.xlu0 %v2962, 112
      %v6437 = vpop.permute.xlu0 %6436
      %6438 = vrot.lane.b32.xlu0 %v2967, 112
      %v6439 = vpop.permute.xlu0 %6438
      %6440 = vrot.lane.b32.xlu0 %v2972, 112
      %v6441 = vpop.permute.xlu0 %6440
      %6442 = vrot.lane.b32.xlu0 %v2977, 112
      %v6443 = vpop.permute.xlu0 %6442
      %6444 = vrot.lane.b32.xlu0 %v2982, 112
      %v6445 = vpop.permute.xlu0 %6444
      %6446 = vrot.lane.b32.xlu0 %v2987, 112
      %v6447 = vpop.permute.xlu0 %6446
      %v6457 = vsel %vm1285, %v6352, 0
      %v6460 = vsel %vm1285, %v6353, 0
      %v6463 = vsel %vm1285, %v6354, 0
      %v6466 = vsel %vm1285, %v6355, 0
      %v6469 = vsel %vm1285, %v6356, 0
      %v6472 = vsel %vm1285, %v6357, 0
      %v6475 = vsel %vm1285, %v6358, 0
      %v6478 = vsel %vm1285, %v6359, 0
      %6480 = vmatprep.subr.mxu0 0.0
      %6481 = vmatpush1.msra.mxu0 %v6433
      %6482 = vmatprep.subr.mxu0 0.0
      %6483 = vmatpush1.msra.mxu0 %v6435
      %6484 = vmatprep.subr.mxu0 0.0
      %6485 = vmatpush1.msra.mxu0 %v6437
      %6486 = vmatprep.subr.mxu0 0.0
      %6487 = vmatpush1.msra.mxu0 %v6439
      %6488 = vmatprep.subr.mxu0 0.0
      %6489 = vmatpush1.msra.mxu0 %v6441
      %6490 = vmatprep.subr.mxu0 0.0
      %6491 = vmatpush1.msra.mxu0 %v6443
      %6492 = vmatprep.subr.mxu0 0.0
      %6493 = vmatpush1.msra.mxu0 %v6445
      %6494 = vmatprep.subr.mxu0 0.0
      %6495 = vmatpush1.msra.mxu0 %v6447
      %6496 = vmatprep.subr.mxu0 0.0
      %6497 = vmatpush1.msra.mxu0 0.0
      %6498 = vmatprep.subr.mxu0 0.0
      %6499 = vmatpush1.msra.mxu0 0.0
      %6500 = vmatprep.subr.mxu0 0.0
      %6501 = vmatpush1.msra.mxu0 0.0
      %6502 = vmatprep.subr.mxu0 0.0
      %6503 = vmatpush1.msra.mxu0 0.0
      %6504 = vmatprep.subr.mxu0 0.0
      %6505 = vmatpush1.msra.mxu0 0.0
      %6506 = vmatprep.subr.mxu0 0.0
      %6507 = vmatpush1.msra.mxu0 0.0
      %6508 = vmatprep.subr.mxu0 0.0
      %6509 = vmatpush1.msra.mxu0 0.0
      %6510 = vmatprep.subr.mxu0 0.0
      %6511 = vmatpush1.msra.mxu0 0.0
      %6512 = vmatprep.subr.mxu0 0.0
      %6513 = vmatpush1.msra.mxu0 0.0
      %6514 = vmatprep.subr.mxu0 0.0
      %6515 = vmatpush1.msra.mxu0 0.0
      %6516 = vmatprep.subr.mxu0 0.0
      %6517 = vmatpush1.msra.mxu0 0.0
      %6518 = vmatprep.subr.mxu0 0.0
      %6519 = vmatpush1.msra.mxu0 0.0
      %6520 = vmatprep.subr.mxu0 0.0
      %6521 = vmatpush1.msra.mxu0 0.0
      %6522 = vmatprep.subr.mxu0 0.0
      %6523 = vmatpush1.msra.mxu0 0.0
      %6524 = vmatprep.subr.mxu0 0.0
      %6525 = vmatpush1.msra.mxu0 0.0
      %6526 = vmatprep.subr.mxu0 0.0
      %6527 = vmatpush1.msra.mxu0 0.0
      %6528 = vmatprep.subr.mxu0 0.0
      %6529 = vmatpush1.msra.mxu0 0.0
      %6530 = vmatprep.subr.mxu0 0.0
      %6531 = vmatpush1.msra.mxu0 0.0
      %6532 = vmatprep.subr.mxu0 0.0
      %6533 = vmatpush1.msra.mxu0 0.0
      %6534 = vmatprep.subr.mxu0 0.0
      %6535 = vmatpush1.msra.mxu0 0.0
      %6536 = vmatprep.subr.mxu0 0.0
      %6537 = vmatpush1.msra.mxu0 0.0
      %6538 = vmatprep.subr.mxu0 0.0
      %6539 = vmatpush1.msra.mxu0 0.0
      %6540 = vmatprep.subr.mxu0 0.0
      %6541 = vmatpush1.msra.mxu0 0.0
      %6542 = vmatprep.subr.mxu0 0.0
      %6543 = vmatpush1.msra.mxu0 0.0
      %6544 = vmatprep.mubr.f32.mxu0 0.0
      %6545 = vmatmul.mubr.f32.gmra.mrb[0].mxu0 %v6457
      %v6546 = vpop.f32.mrb[0].mxu0
      %v6547 = vadd.f32 0.0, %v6546
      %v6548 = vpop.f32.mrb[0].mxu0
      %6549 = vmatprep.mubr.f32.mxu0 0.0
      %6550 = vmatmul.mubr.f32.gmra.mrb[0].mxu0 %v6460
      %v6551 = vpop.f32.mrb[0].mxu0
      %v6552 = vadd.f32 0.0, %v6551
      %v6553 = vpop.f32.mrb[0].mxu0
      %6554 = vmatprep.mubr.f32.mxu0 0.0
      %6555 = vmatmul.mubr.f32.gmra.mrb[0].mxu0 %v6463
      %v6556 = vpop.f32.mrb[0].mxu0
      %v6557 = vadd.f32 0.0, %v6556
      %v6558 = vpop.f32.mrb[0].mxu0
      %6559 = vmatprep.mubr.f32.mxu0 0.0
      %6560 = vmatmul.mubr.f32.gmra.mrb[0].mxu0 %v6466
      %v6561 = vpop.f32.mrb[0].mxu0
      %v6562 = vadd.f32 0.0, %v6561
      %v6563 = vpop.f32.mrb[0].mxu0
      %6564 = vmatprep.mubr.f32.mxu0 0.0
      %6565 = vmatmul.mubr.f32.gmra.mrb[0].mxu0 %v6469
      %v6566 = vpop.f32.mrb[0].mxu0
      %v6567 = vadd.f32 0.0, %v6566
      %v6568 = vpop.f32.mrb[0].mxu0
      %6569 = vmatprep.mubr.f32.mxu0 0.0
      %6570 = vmatmul.mubr.f32.gmra.mrb[0].mxu0 %v6472
      %v6571 = vpop.f32.mrb[0].mxu0
      %v6572 = vadd.f32 0.0, %v6571
      %v6573 = vpop.f32.mrb[0].mxu0
      %6574 = vmatprep.mubr.f32.mxu0 0.0
      %6575 = vmatmul.mubr.f32.gmra.mrb[0].mxu0 %v6475
      %v6576 = vpop.f32.mrb[0].mxu0
      %v6577 = vadd.f32 0.0, %v6576
      %v6578 = vpop.f32.mrb[0].mxu0
      %6579 = vmatprep.mubr.f32.mxu0 0.0
      %6580 = vmatmul.mubr.f32.gmra.mrb[0].mxu0 %v6478
      %v6581 = vpop.f32.mrb[0].mxu0
      %v6582 = vadd.f32 0.0, %v6581
      %v6583 = vpop.f32.mrb[0].mxu0
      %6584 = vdwg.mxu0
      %v6585 = vadd.f32 %v6416, 1e-06
      %v6586 = vadd.f32 %v6417, 1e-06
      %v6587 = vadd.f32 %v6418, 1e-06
      %v6588 = vadd.f32 %v6419, 1e-06
      %v6589 = vadd.f32 %v6420, 1e-06
      %v6590 = vadd.f32 %v6421, 1e-06
      %v6591 = vadd.f32 %v6422, 1e-06
      %v6592 = vadd.f32 %v6423, 1e-06
      %v6593 = vrcp.pop %v6585
      %v6594 = vmul.f32 %v6547, %v6593
      %v6595 = vrcp.pop %v6586
      %v6596 = vmul.f32 %v6552, %v6595
      %v6597 = vrcp.pop %v6587
      %v6598 = vmul.f32 %v6557, %v6597
      %v6599 = vrcp.pop %v6588
      %v6600 = vmul.f32 %v6562, %v6599
      %v6601 = vrcp.pop %v6589
      %v6602 = vmul.f32 %v6567, %v6601
      %v6603 = vrcp.pop %v6590
      %v6604 = vmul.f32 %v6572, %v6603
      %v6605 = vrcp.pop %v6591
      %v6606 = vmul.f32 %v6577, %v6605
      %v6607 = vrcp.pop %v6592
      %v6608 = vmul.f32 %v6582, %v6607
      %v6609 = vsel %vm3901, %v6594, 0.0
      %6610 = vadd.xlane.f32.xlu0 %v6609
      %v6611 = vpop.xlane.xlu0 %6610
      %v6612 = vsel %vm3901, %v6596, 0.0
      %6613 = vadd.xlane.f32.xlu0 %v6612
      %v6614 = vpop.xlane.xlu0 %6613
      %v6615 = vsel %vm3901, %v6598, 0.0
      %6616 = vadd.xlane.f32.xlu0 %v6615
      %v6617 = vpop.xlane.xlu0 %6616
      %v6618 = vsel %vm3901, %v6600, 0.0
      %6619 = vadd.xlane.f32.xlu0 %v6618
      %v6620 = vpop.xlane.xlu0 %6619
      %v6621 = vsel %vm3901, %v6602, 0.0
      %6622 = vadd.xlane.f32.xlu0 %v6621
      %v6623 = vpop.xlane.xlu0 %6622
      %v6624 = vsel %vm3901, %v6604, 0.0
      %6625 = vadd.xlane.f32.xlu0 %v6624
      %v6626 = vpop.xlane.xlu0 %6625
      %v6627 = vsel %vm3901, %v6606, 0.0
      %6628 = vadd.xlane.f32.xlu0 %v6627
      %v6629 = vpop.xlane.xlu0 %6628
      %v6630 = vsel %vm3901, %v6608, 0.0
      %6631 = vadd.xlane.f32.xlu0 %v6630
      %v6632 = vpop.xlane.xlu0 %6631
      %v6633 = vmul.f32 %v6611, %v3926
      %v6634 = vmul.f32 %v6614, %v3926
      %v6635 = vmul.f32 %v6617, %v3926
      %v6636 = vmul.f32 %v6620, %v3926
      %v6637 = vmul.f32 %v6623, %v3926
      %v6638 = vmul.f32 %v6626, %v3926
      %v6639 = vmul.f32 %v6629, %v3926
      %v6640 = vmul.f32 %v6632, %v3926
      %v6641 = vsub.f32 %v6594, %v6633
      %v6642 = vsub.f32 %v6596, %v6634
      %v6643 = vsub.f32 %v6598, %v6635
      %v6644 = vsub.f32 %v6600, %v6636
      %v6645 = vsub.f32 %v6602, %v6637
      %v6646 = vsub.f32 %v6604, %v6638
      %v6647 = vsub.f32 %v6606, %v6639
      %v6648 = vsub.f32 %v6608, %v6640
      %v6649 = vmul.f32 %v6641, %v6641
      %v6650 = vmul.f32 %v6642, %v6642
      %v6651 = vmul.f32 %v6643, %v6643
      %v6652 = vmul.f32 %v6644, %v6644
      %v6653 = vmul.f32 %v6645, %v6645
      %v6654 = vmul.f32 %v6646, %v6646
      %v6655 = vmul.f32 %v6647, %v6647
      %v6656 = vmul.f32 %v6648, %v6648
      %v6657 = vsel %vm3901, %v6649, 0.0
      %6658 = vadd.xlane.f32.xlu0 %v6657
      %v6659 = vpop.xlane.xlu0 %6658
      %v6660 = vsel %vm3901, %v6650, 0.0
      %6661 = vadd.xlane.f32.xlu0 %v6660
      %v6662 = vpop.xlane.xlu0 %6661
      %v6663 = vsel %vm3901, %v6651, 0.0
      %6664 = vadd.xlane.f32.xlu0 %v6663
      %v6665 = vpop.xlane.xlu0 %6664
      %v6666 = vsel %vm3901, %v6652, 0.0
      %6667 = vadd.xlane.f32.xlu0 %v6666
      %v6668 = vpop.xlane.xlu0 %6667
      %v6669 = vsel %vm3901, %v6653, 0.0
      %6670 = vadd.xlane.f32.xlu0 %v6669
      %v6671 = vpop.xlane.xlu0 %6670
      %v6672 = vsel %vm3901, %v6654, 0.0
      %6673 = vadd.xlane.f32.xlu0 %v6672
      %v6674 = vpop.xlane.xlu0 %6673
      %v6675 = vsel %vm3901, %v6655, 0.0
      %6676 = vadd.xlane.f32.xlu0 %v6675
      %v6677 = vpop.xlane.xlu0 %6676
      %v6678 = vsel %vm3901, %v6656, 0.0
      %6679 = vadd.xlane.f32.xlu0 %v6678
      %v6680 = vpop.xlane.xlu0 %6679
      %v6681 = vmul.f32 %v6659, %v3926
      %v6682 = vmul.f32 %v6662, %v3926
      %v6683 = vmul.f32 %v6665, %v3926
      %v6684 = vmul.f32 %v6668, %v3926
      %v6685 = vmul.f32 %v6671, %v3926
      %v6686 = vmul.f32 %v6674, %v3926
      %v6687 = vmul.f32 %v6677, %v3926
      %v6688 = vmul.f32 %v6680, %v3926
      %v6689 = vadd.f32 %v6681, 1e-06
      %v6690 = vadd.f32 %v6682, 1e-06
      %v6691 = vadd.f32 %v6683, 1e-06
      %v6692 = vadd.f32 %v6684, 1e-06
      %v6693 = vadd.f32 %v6685, 1e-06
      %v6694 = vadd.f32 %v6686, 1e-06
      %v6695 = vadd.f32 %v6687, 1e-06
      %v6696 = vadd.f32 %v6688, 1e-06
      %v6697 = vrsqrt.pop %v6689
      %v6698 = vrsqrt.pop %v6690
      %v6699 = vrsqrt.pop %v6691
      %v6700 = vrsqrt.pop %v6692
      %v6701 = vrsqrt.pop %v6693
      %v6702 = vrsqrt.pop %v6694
      %v6703 = vrsqrt.pop %v6695
      %v6704 = vrsqrt.pop %v6696
      %v6705 = vmul.f32 %v6641, %v6697
      %v6706 = vmul.f32 %v6642, %v6698
      %v6707 = vmul.f32 %v6643, %v6699
      %v6708 = vmul.f32 %v6644, %v6700
      %v6709 = vmul.f32 %v6645, %v6701
      %v6710 = vmul.f32 %v6646, %v6702
      %v6711 = vmul.f32 %v6647, %v6703
      %v6712 = vmul.f32 %v6648, %v6704
      %v6713 = vmul.f32 %v6705, %v4750
      %v6714 = vmul.f32 %v6706, %v4750
      %v6715 = vmul.f32 %v6707, %v4750
      %v6716 = vmul.f32 %v6708, %v4750
      %v6717 = vmul.f32 %v6709, %v4750
      %v6718 = vmul.f32 %v6710, %v4750
      %v6719 = vmul.f32 %v6711, %v4750
      %v6720 = vmul.f32 %v6712, %v4750
      %6729 = vrot.lane.b32.xlu0 %v6713, 48
      %v6730 = vpop.permute.xlu0 %6729
      %6731 = vrot.lane.b32.xlu0 %v6714, 48
      %v6732 = vpop.permute.xlu0 %6731
      %6733 = vrot.lane.b32.xlu0 %v6715, 48
      %v6734 = vpop.permute.xlu0 %6733
      %6735 = vrot.lane.b32.xlu0 %v6716, 48
      %v6736 = vpop.permute.xlu0 %6735
      %6737 = vrot.lane.b32.xlu0 %v6717, 48
      %v6738 = vpop.permute.xlu0 %6737
      %6739 = vrot.lane.b32.xlu0 %v6718, 48
      %v6740 = vpop.permute.xlu0 %6739
      %6741 = vrot.lane.b32.xlu0 %v6719, 48
      %v6742 = vpop.permute.xlu0 %6741
      %6743 = vrot.lane.b32.xlu0 %v6720, 48
      %v6744 = vpop.permute.xlu0 %6743
      %v6753 = vmul.f32 %v5988, %v6730
      %v6754 = vmul.f32 %v5990, %v6732
      %v6755 = vmul.f32 %v5992, %v6734
      %v6756 = vmul.f32 %v5994, %v6736
      %v6757 = vmul.f32 %v5996, %v6738
      %v6758 = vmul.f32 %v5998, %v6740
      %v6759 = vmul.f32 %v6000, %v6742
      %v6760 = vmul.f32 %v6002, %v6744
      %6769 = vrot.lane.b32.xlu0 %v6753, 80
      %v6770 = vpop.permute.xlu0 %6769
      %6771 = vrot.lane.b32.xlu0 %v6754, 80
      %v6772 = vpop.permute.xlu0 %6771
      %6773 = vrot.lane.b32.xlu0 %v6755, 80
      %v6774 = vpop.permute.xlu0 %6773
      %6775 = vrot.lane.b32.xlu0 %v6756, 80
      %v6776 = vpop.permute.xlu0 %6775
      %6777 = vrot.lane.b32.xlu0 %v6757, 80
      %v6778 = vpop.permute.xlu0 %6777
      %6779 = vrot.lane.b32.xlu0 %v6758, 80
      %v6780 = vpop.permute.xlu0 %6779
      %6781 = vrot.lane.b32.xlu0 %v6759, 80
      %v6782 = vpop.permute.xlu0 %6781
      %6783 = vrot.lane.b32.xlu0 %v6760, 80
      %v6784 = vpop.permute.xlu0 %6783
      %v6785 = vsel %vm3901, %v6770, 0
      %v6787 = vsel %vm3901, %v6772, 0
      %v6789 = vsel %vm3901, %v6774, 0
      %v6791 = vsel %vm3901, %v6776, 0
      %v6793 = vsel %vm3901, %v6778, 0
      %v6795 = vsel %vm3901, %v6780, 0
      %v6797 = vsel %vm3901, %v6782, 0
      %v6799 = vsel %vm3901, %v6784, 0
      %6801 = vmatprep.subr.mxu0 0.0
      %6802 = vmatpush1.msra.mxu0 %v4799
      %6803 = vmatprep.subr.mxu0 0.0
      %6804 = vmatpush1.msra.mxu0 %v4800
      %6805 = vmatprep.subr.mxu0 0.0
      %6806 = vmatpush1.msra.mxu0 0.0
      %6807 = vmatprep.subr.mxu0 0.0
      %6808 = vmatpush1.msra.mxu0 0.0
      %6809 = vmatprep.subr.mxu0 0.0
      %6810 = vmatpush1.msra.mxu0 0.0
      %6811 = vmatprep.subr.mxu0 0.0
      %6812 = vmatpush1.msra.mxu0 0.0
      %6813 = vmatprep.subr.mxu0 0.0
      %6814 = vmatpush1.msra.mxu0 0.0
      %6815 = vmatprep.subr.mxu0 0.0
      %6816 = vmatpush1.msra.mxu0 0.0
      %6817 = vmatprep.subr.mxu0 0.0
      %6818 = vmatpush1.msra.mxu0 0.0
      %6819 = vmatprep.subr.mxu0 0.0
      %6820 = vmatpush1.msra.mxu0 0.0
      %6821 = vmatprep.subr.mxu0 0.0
      %6822 = vmatpush1.msra.mxu0 0.0
      %6823 = vmatprep.subr.mxu0 0.0
      %6824 = vmatpush1.msra.mxu0 0.0
      %6825 = vmatprep.subr.mxu0 0.0
      %6826 = vmatpush1.msra.mxu0 0.0
      %6827 = vmatprep.subr.mxu0 0.0
      %6828 = vmatpush1.msra.mxu0 0.0
      %6829 = vmatprep.subr.mxu0 0.0
      %6830 = vmatpush1.msra.mxu0 0.0
      %6831 = vmatprep.subr.mxu0 0.0
      %6832 = vmatpush1.msra.mxu0 0.0
      %6833 = vmatprep.subr.mxu0 0.0
      %6834 = vmatpush1.msra.mxu0 0.0
      %6835 = vmatprep.subr.mxu0 0.0
      %6836 = vmatpush1.msra.mxu0 0.0
      %6837 = vmatprep.subr.mxu0 0.0
      %6838 = vmatpush1.msra.mxu0 0.0
      %6839 = vmatprep.subr.mxu0 0.0
      %6840 = vmatpush1.msra.mxu0 0.0
      %6841 = vmatprep.subr.mxu0 0.0
      %6842 = vmatpush1.msra.mxu0 0.0
      %6843 = vmatprep.subr.mxu0 0.0
      %6844 = vmatpush1.msra.mxu0 0.0
      %6845 = vmatprep.subr.mxu0 0.0
      %6846 = vmatpush1.msra.mxu0 0.0
      %6847 = vmatprep.subr.mxu0 0.0
      %6848 = vmatpush1.msra.mxu0 0.0
      %6849 = vmatprep.subr.mxu0 0.0
      %6850 = vmatpush1.msra.mxu0 0.0
      %6851 = vmatprep.subr.mxu0 0.0
      %6852 = vmatpush1.msra.mxu0 0.0
      %6853 = vmatprep.subr.mxu0 0.0
      %6854 = vmatpush1.msra.mxu0 0.0
      %6855 = vmatprep.subr.mxu0 0.0
      %6856 = vmatpush1.msra.mxu0 0.0
      %6857 = vmatprep.subr.mxu0 0.0
      %6858 = vmatpush1.msra.mxu0 0.0
      %6859 = vmatprep.subr.mxu0 0.0
      %6860 = vmatpush1.msra.mxu0 0.0
      %6861 = vmatprep.subr.mxu0 0.0
      %6862 = vmatpush1.msra.mxu0 0.0
      %6863 = vmatprep.subr.mxu0 0.0
      %6864 = vmatpush1.msra.mxu0 0.0
      %6865 = vmatprep.mubr.f32.mxu0 0.0
      %6866 = vmatmul.mubr.f32.gmra.mrb[0].mxu0 %v6785
      %v6867 = vpop.f32.mrb[0].mxu0
      %v6868 = vadd.f32 0.0, %v6867
      %v6869 = vpop.f32.mrb[0].mxu0
      %6870 = vmatprep.mubr.f32.mxu0 0.0
      %6871 = vmatmul.mubr.f32.gmra.mrb[0].mxu0 %v6787
      %v6872 = vpop.f32.mrb[0].mxu0
      %v6873 = vadd.f32 0.0, %v6872
      %v6874 = vpop.f32.mrb[0].mxu0
      %6875 = vmatprep.mubr.f32.mxu0 0.0
      %6876 = vmatmul.mubr.f32.gmra.mrb[0].mxu0 %v6789
      %v6877 = vpop.f32.mrb[0].mxu0
      %v6878 = vadd.f32 0.0, %v6877
      %v6879 = vpop.f32.mrb[0].mxu0
      %6880 = vmatprep.mubr.f32.mxu0 0.0
      %6881 = vmatmul.mubr.f32.gmra.mrb[0].mxu0 %v6791
      %v6882 = vpop.f32.mrb[0].mxu0
      %v6883 = vadd.f32 0.0, %v6882
      %v6884 = vpop.f32.mrb[0].mxu0
      %6885 = vmatprep.mubr.f32.mxu0 0.0
      %6886 = vmatmul.mubr.f32.gmra.mrb[0].mxu0 %v6793
      %v6887 = vpop.f32.mrb[0].mxu0
      %v6888 = vadd.f32 0.0, %v6887
      %v6889 = vpop.f32.mrb[0].mxu0
      %6890 = vmatprep.mubr.f32.mxu0 0.0
      %6891 = vmatmul.mubr.f32.gmra.mrb[0].mxu0 %v6795
      %v6892 = vpop.f32.mrb[0].mxu0
      %v6893 = vadd.f32 0.0, %v6892
      %v6894 = vpop.f32.mrb[0].mxu0
      %6895 = vmatprep.mubr.f32.mxu0 0.0
      %6896 = vmatmul.mubr.f32.gmra.mrb[0].mxu0 %v6797
      %v6897 = vpop.f32.mrb[0].mxu0
      %v6898 = vadd.f32 0.0, %v6897
      %v6899 = vpop.f32.mrb[0].mxu0
      %6900 = vmatprep.mubr.f32.mxu0 0.0
      %6901 = vmatmul.mubr.f32.gmra.mrb[0].mxu0 %v6799
      %v6902 = vpop.f32.mrb[0].mxu0
      %v6903 = vadd.f32 0.0, %v6902
      %v6904 = vpop.f32.mrb[0].mxu0
      %6905 = vdwg.mxu0
      %6914 = vrot.lane.b32.xlu0 %v6035, 96
      %v6915 = vpop.permute.xlu0 %6914
      %6916 = vrot.lane.b32.xlu0 %v6036, 96
      %v6917 = vpop.permute.xlu0 %6916
      %6918 = vrot.lane.b32.xlu0 %v6037, 96
      %v6919 = vpop.permute.xlu0 %6918
      %6920 = vrot.lane.b32.xlu0 %v6038, 96
      %v6921 = vpop.permute.xlu0 %6920
      %6922 = vrot.lane.b32.xlu0 %v6039, 96
      %v6923 = vpop.permute.xlu0 %6922
      %6924 = vrot.lane.b32.xlu0 %v6040, 96
      %v6925 = vpop.permute.xlu0 %6924
      %6926 = vrot.lane.b32.xlu0 %v6041, 96
      %v6927 = vpop.permute.xlu0 %6926
      %6928 = vrot.lane.b32.xlu0 %v6042, 96
      %v6929 = vpop.permute.xlu0 %6928
      %v6930 = vsel %vm3901, %v6915, 0
      %v6932 = vsel %vm3901, %v6917, 0
      %v6934 = vsel %vm3901, %v6919, 0
      %v6936 = vsel %vm3901, %v6921, 0
      %v6938 = vsel %vm3901, %v6923, 0
      %v6940 = vsel %vm3901, %v6925, 0
      %v6942 = vsel %vm3901, %v6927, 0
      %v6944 = vsel %vm3901, %v6929, 0
      %6946 = vmatprep.subr.mxu0 0.0
      %6947 = vmatpush1.msra.mxu0 %v4107
      %6948 = vmatprep.subr.mxu0 0.0
      %6949 = vmatpush1.msra.mxu0 %v4108
      %6950 = vmatprep.subr.mxu0 0.0
      %6951 = vmatpush1.msra.mxu0 0.0
      %6952 = vmatprep.subr.mxu0 0.0
      %6953 = vmatpush1.msra.mxu0 0.0
      %6954 = vmatprep.subr.mxu0 0.0
      %6955 = vmatpush1.msra.mxu0 0.0
      %6956 = vmatprep.subr.mxu0 0.0
      %6957 = vmatpush1.msra.mxu0 0.0
      %6958 = vmatprep.subr.mxu0 0.0
      %6959 = vmatpush1.msra.mxu0 0.0
      %6960 = vmatprep.subr.mxu0 0.0
      %6961 = vmatpush1.msra.mxu0 0.0
      %6962 = vmatprep.subr.mxu0 0.0
      %6963 = vmatpush1.msra.mxu0 0.0
      %6964 = vmatprep.subr.mxu0 0.0
      %6965 = vmatpush1.msra.mxu0 0.0
      %6966 = vmatprep.subr.mxu0 0.0
      %6967 = vmatpush1.msra.mxu0 0.0
      %6968 = vmatprep.subr.mxu0 0.0
      %6969 = vmatpush1.msra.mxu0 0.0
      %6970 = vmatprep.subr.mxu0 0.0
      %6971 = vmatpush1.msra.mxu0 0.0
      %6972 = vmatprep.subr.mxu0 0.0
      %6973 = vmatpush1.msra.mxu0 0.0
      %6974 = vmatprep.subr.mxu0 0.0
      %6975 = vmatpush1.msra.mxu0 0.0
      %6976 = vmatprep.subr.mxu0 0.0
      %6977 = vmatpush1.msra.mxu0 0.0
      %6978 = vmatprep.subr.mxu0 0.0
      %6979 = vmatpush1.msra.mxu0 0.0
      %6980 = vmatprep.subr.mxu0 0.0
      %6981 = vmatpush1.msra.mxu0 0.0
      %6982 = vmatprep.subr.mxu0 0.0
      %6983 = vmatpush1.msra.mxu0 0.0
      %6984 = vmatprep.subr.mxu0 0.0
      %6985 = vmatpush1.msra.mxu0 0.0
      %6986 = vmatprep.subr.mxu0 0.0
      %6987 = vmatpush1.msra.mxu0 0.0
      %6988 = vmatprep.subr.mxu0 0.0
      %6989 = vmatpush1.msra.mxu0 0.0
      %6990 = vmatprep.subr.mxu0 0.0
      %6991 = vmatpush1.msra.mxu0 0.0
      %6992 = vmatprep.subr.mxu0 0.0
      %6993 = vmatpush1.msra.mxu0 0.0
      %6994 = vmatprep.subr.mxu0 0.0
      %6995 = vmatpush1.msra.mxu0 0.0
      %6996 = vmatprep.subr.mxu0 0.0
      %6997 = vmatpush1.msra.mxu0 0.0
      %6998 = vmatprep.subr.mxu0 0.0
      %6999 = vmatpush1.msra.mxu0 0.0
      %7000 = vmatprep.subr.mxu0 0.0
      %7001 = vmatpush1.msra.mxu0 0.0
      %7002 = vmatprep.subr.mxu0 0.0
      %7003 = vmatpush1.msra.mxu0 0.0
      %7004 = vmatprep.subr.mxu0 0.0
      %7005 = vmatpush1.msra.mxu0 0.0
      %7006 = vmatprep.subr.mxu0 0.0
      %7007 = vmatpush1.msra.mxu0 0.0
      %7008 = vmatprep.subr.mxu0 0.0
      %7009 = vmatpush1.msra.mxu0 0.0
      %7010 = vmatprep.mubr.f32.mxu0 0.0
      %7011 = vmatmul.mubr.f32.gmra.mrb[0].mxu0 %v6930
      %v7012 = vpop.f32.mrb[0].mxu0
      %v7013 = vadd.f32 %v6868, %v7012
      %v7014 = vpop.f32.mrb[0].mxu0
      %7015 = vmatprep.mubr.f32.mxu0 0.0
      %7016 = vmatmul.mubr.f32.gmra.mrb[0].mxu0 %v6932
      %v7017 = vpop.f32.mrb[0].mxu0
      %v7018 = vadd.f32 %v6873, %v7017
      %v7019 = vpop.f32.mrb[0].mxu0
      %7020 = vmatprep.mubr.f32.mxu0 0.0
      %7021 = vmatmul.mubr.f32.gmra.mrb[0].mxu0 %v6934
      %v7022 = vpop.f32.mrb[0].mxu0
      %v7023 = vadd.f32 %v6878, %v7022
      %v7024 = vpop.f32.mrb[0].mxu0
      %7025 = vmatprep.mubr.f32.mxu0 0.0
      %7026 = vmatmul.mubr.f32.gmra.mrb[0].mxu0 %v6936
      %v7027 = vpop.f32.mrb[0].mxu0
      %v7028 = vadd.f32 %v6883, %v7027
      %v7029 = vpop.f32.mrb[0].mxu0
      %7030 = vmatprep.mubr.f32.mxu0 0.0
      %7031 = vmatmul.mubr.f32.gmra.mrb[0].mxu0 %v6938
      %v7032 = vpop.f32.mrb[0].mxu0
      %v7033 = vadd.f32 %v6888, %v7032
      %v7034 = vpop.f32.mrb[0].mxu0
      %7035 = vmatprep.mubr.f32.mxu0 0.0
      %7036 = vmatmul.mubr.f32.gmra.mrb[0].mxu0 %v6940
      %v7037 = vpop.f32.mrb[0].mxu0
      %v7038 = vadd.f32 %v6893, %v7037
      %v7039 = vpop.f32.mrb[0].mxu0
      %7040 = vmatprep.mubr.f32.mxu0 0.0
      %7041 = vmatmul.mubr.f32.gmra.mrb[0].mxu0 %v6942
      %v7042 = vpop.f32.mrb[0].mxu0
      %v7043 = vadd.f32 %v6898, %v7042
      %v7044 = vpop.f32.mrb[0].mxu0
      %7045 = vmatprep.mubr.f32.mxu0 0.0
      %7046 = vmatmul.mubr.f32.gmra.mrb[0].mxu0 %v6944
      %v7047 = vpop.f32.mrb[0].mxu0
      %v7048 = vadd.f32 %v6903, %v7047
      %v7049 = vpop.f32.mrb[0].mxu0
      %7050 = vdwg.mxu0
      %v7052 = vsel %vm1285, %v3174, 0
      %7054 = vmatprep.subr.mxu0 0.0
      %7055 = vmatpush1.xpose.msra.mxu0 %v7052
      %7056 = vmatprep.subr.mxu0 0.0
      %7057 = vmatpush1.xpose.msra.mxu0 0.0
      %7058 = vmatprep.subr.mxu0 0.0
      %7059 = vmatpush1.xpose.msra.mxu0 0.0
      %7060 = vmatprep.subr.mxu0 0.0
      %7061 = vmatpush1.xpose.msra.mxu0 0.0
      %7062 = vmatprep.subr.mxu0 0.0
      %7063 = vmatpush1.xpose.msra.mxu0 0.0
      %7064 = vmatprep.subr.mxu0 0.0
      %7065 = vmatpush1.xpose.msra.mxu0 0.0
      %7066 = vmatprep.subr.mxu0 0.0
      %7067 = vmatpush1.xpose.msra.mxu0 0.0
      %7068 = vmatprep.subr.mxu0 0.0
      %7069 = vmatpush1.xpose.msra.mxu0 0.0
      %7070 = vmatprep.subr.mxu0 0.0
      %7071 = vmatpush1.xpose.msra.mxu0 0.0
      %7072 = vmatprep.subr.mxu0 0.0
      %7073 = vmatpush1.xpose.msra.mxu0 0.0
      %7074 = vmatprep.subr.mxu0 0.0
      %7075 = vmatpush1.xpose.msra.mxu0 0.0
      %7076 = vmatprep.subr.mxu0 0.0
      %7077 = vmatpush1.xpose.msra.mxu0 0.0
      %7078 = vmatprep.subr.mxu0 0.0
      %7079 = vmatpush1.xpose.msra.mxu0 0.0
      %7080 = vmatprep.subr.mxu0 0.0
      %7081 = vmatpush1.xpose.msra.mxu0 0.0
      %7082 = vmatprep.subr.mxu0 0.0
      %7083 = vmatpush1.xpose.msra.mxu0 0.0
      %7084 = vmatprep.subr.mxu0 0.0
      %7085 = vmatpush1.xpose.msra.mxu0 0.0
      %7086 = vmatprep.subr.mxu0 0.0
      %7087 = vmatpush1.xpose.msra.mxu0 0.0
      %7088 = vmatprep.subr.mxu0 0.0
      %7089 = vmatpush1.xpose.msra.mxu0 0.0
      %7090 = vmatprep.subr.mxu0 0.0
      %7091 = vmatpush1.xpose.msra.mxu0 0.0
      %7092 = vmatprep.subr.mxu0 0.0
      %7093 = vmatpush1.xpose.msra.mxu0 0.0
      %7094 = vmatprep.subr.mxu0 0.0
      %7095 = vmatpush1.xpose.msra.mxu0 0.0
      %7096 = vmatprep.subr.mxu0 0.0
      %7097 = vmatpush1.xpose.msra.mxu0 0.0
      %7098 = vmatprep.subr.mxu0 0.0
      %7099 = vmatpush1.xpose.msra.mxu0 0.0
      %7100 = vmatprep.subr.mxu0 0.0
      %7101 = vmatpush1.xpose.msra.mxu0 0.0
      %7102 = vmatprep.subr.mxu0 0.0
      %7103 = vmatpush1.xpose.msra.mxu0 0.0
      %7104 = vmatprep.subr.mxu0 0.0
      %7105 = vmatpush1.xpose.msra.mxu0 0.0
      %7106 = vmatprep.subr.mxu0 0.0
      %7107 = vmatpush1.xpose.msra.mxu0 0.0
      %7108 = vmatprep.subr.mxu0 0.0
      %7109 = vmatpush1.xpose.msra.mxu0 0.0
      %7110 = vmatprep.subr.mxu0 0.0
      %7111 = vmatpush1.xpose.msra.mxu0 0.0
      %7112 = vmatprep.subr.mxu0 0.0
      %7113 = vmatpush1.xpose.msra.mxu0 0.0
      %7114 = vmatprep.subr.mxu0 0.0
      %7115 = vmatpush1.xpose.msra.mxu0 0.0
      %7116 = vmatprep.subr.mxu0 0.0
      %7117 = vmatpush1.xpose.msra.mxu0 0.0
      %7118 = vmatprep.mubr.f32.mxu0 0.0
      %7119 = vmatmul.mubr.f32.gmra.mrb[0].mxu0 %v3193
      %v7120 = vpop.f32.mrb[0].mxu0
      %v7121 = vadd.f32 0.0, %v7120
      %v7122 = vpop.f32.mrb[0].mxu0
      %7123 = vmatprep.mubr.f32.mxu0 0.0
      %7124 = vmatmul.mubr.f32.gmra.mrb[0].mxu0 %v3196
      %v7125 = vpop.f32.mrb[0].mxu0
      %v7126 = vadd.f32 0.0, %v7125
      %v7127 = vpop.f32.mrb[0].mxu0
      %7128 = vmatprep.mubr.f32.mxu0 0.0
      %7129 = vmatmul.mubr.f32.gmra.mrb[0].mxu0 %v3199
      %v7130 = vpop.f32.mrb[0].mxu0
      %v7131 = vadd.f32 0.0, %v7130
      %v7132 = vpop.f32.mrb[0].mxu0
      %7133 = vmatprep.mubr.f32.mxu0 0.0
      %7134 = vmatmul.mubr.f32.gmra.mrb[0].mxu0 %v3202
      %v7135 = vpop.f32.mrb[0].mxu0
      %v7136 = vadd.f32 0.0, %v7135
      %v7137 = vpop.f32.mrb[0].mxu0
      %7138 = vmatprep.mubr.f32.mxu0 0.0
      %7139 = vmatmul.mubr.f32.gmra.mrb[0].mxu0 %v3205
      %v7140 = vpop.f32.mrb[0].mxu0
      %v7141 = vadd.f32 0.0, %v7140
      %v7142 = vpop.f32.mrb[0].mxu0
      %7143 = vmatprep.mubr.f32.mxu0 0.0
      %7144 = vmatmul.mubr.f32.gmra.mrb[0].mxu0 %v3208
      %v7145 = vpop.f32.mrb[0].mxu0
      %v7146 = vadd.f32 0.0, %v7145
      %v7147 = vpop.f32.mrb[0].mxu0
      %7148 = vmatprep.mubr.f32.mxu0 0.0
      %7149 = vmatmul.mubr.f32.gmra.mrb[0].mxu0 %v3211
      %v7150 = vpop.f32.mrb[0].mxu0
      %v7151 = vadd.f32 0.0, %v7150
      %v7152 = vpop.f32.mrb[0].mxu0
      %7153 = vmatprep.mubr.f32.mxu0 0.0
      %7154 = vmatmul.mubr.f32.gmra.mrb[0].mxu0 %v3214
      %v7155 = vpop.f32.mrb[0].mxu0
      %v7156 = vadd.f32 0.0, %v7155
      %v7157 = vpop.f32.mrb[0].mxu0
      %7158 = vdwg.mxu0
      %7159 = vmatprep.subr.mxu0 0.0
      %7160 = vmatpush1.xpose.msra.mxu0 %v3193
      %7161 = vmatprep.subr.mxu0 0.0
      %7162 = vmatpush1.xpose.msra.mxu0 %v3196
      %7163 = vmatprep.subr.mxu0 0.0
      %7164 = vmatpush1.xpose.msra.mxu0 %v3199
      %7165 = vmatprep.subr.mxu0 0.0
      %7166 = vmatpush1.xpose.msra.mxu0 %v3202
      %7167 = vmatprep.subr.mxu0 0.0
      %7168 = vmatpush1.xpose.msra.mxu0 %v3205
      %7169 = vmatprep.subr.mxu0 0.0
      %7170 = vmatpush1.xpose.msra.mxu0 %v3208
      %7171 = vmatprep.subr.mxu0 0.0
      %7172 = vmatpush1.xpose.msra.mxu0 %v3211
      %7173 = vmatprep.subr.mxu0 0.0
      %7174 = vmatpush1.xpose.msra.mxu0 %v3214
      %7175 = vmatprep.subr.mxu0 0.0
      %7176 = vmatpush1.xpose.msra.mxu0 0.0
      %7177 = vmatprep.subr.mxu0 0.0
      %7178 = vmatpush1.xpose.msra.mxu0 0.0
      %7179 = vmatprep.subr.mxu0 0.0
      %7180 = vmatpush1.xpose.msra.mxu0 0.0
      %7181 = vmatprep.subr.mxu0 0.0
      %7182 = vmatpush1.xpose.msra.mxu0 0.0
      %7183 = vmatprep.subr.mxu0 0.0
      %7184 = vmatpush1.xpose.msra.mxu0 0.0
      %7185 = vmatprep.subr.mxu0 0.0
      %7186 = vmatpush1.xpose.msra.mxu0 0.0
      %7187 = vmatprep.subr.mxu0 0.0
      %7188 = vmatpush1.xpose.msra.mxu0 0.0
      %7189 = vmatprep.subr.mxu0 0.0
      %7190 = vmatpush1.xpose.msra.mxu0 0.0
      %7191 = vmatprep.subr.mxu0 0.0
      %7192 = vmatpush1.xpose.msra.mxu0 0.0
      %7193 = vmatprep.subr.mxu0 0.0
      %7194 = vmatpush1.xpose.msra.mxu0 0.0
      %7195 = vmatprep.subr.mxu0 0.0
      %7196 = vmatpush1.xpose.msra.mxu0 0.0
      %7197 = vmatprep.subr.mxu0 0.0
      %7198 = vmatpush1.xpose.msra.mxu0 0.0
      %7199 = vmatprep.subr.mxu0 0.0
      %7200 = vmatpush1.xpose.msra.mxu0 0.0
      %7201 = vmatprep.subr.mxu0 0.0
      %7202 = vmatpush1.xpose.msra.mxu0 0.0
      %7203 = vmatprep.subr.mxu0 0.0
      %7204 = vmatpush1.xpose.msra.mxu0 0.0
      %7205 = vmatprep.subr.mxu0 0.0
      %7206 = vmatpush1.xpose.msra.mxu0 0.0
      %7207 = vmatprep.subr.mxu0 0.0
      %7208 = vmatpush1.xpose.msra.mxu0 0.0
      %7209 = vmatprep.subr.mxu0 0.0
      %7210 = vmatpush1.xpose.msra.mxu0 0.0
      %7211 = vmatprep.subr.mxu0 0.0
      %7212 = vmatpush1.xpose.msra.mxu0 0.0
      %7213 = vmatprep.subr.mxu0 0.0
      %7214 = vmatpush1.xpose.msra.mxu0 0.0
      %7215 = vmatprep.subr.mxu0 0.0
      %7216 = vmatpush1.xpose.msra.mxu0 0.0
      %7217 = vmatprep.subr.mxu0 0.0
      %7218 = vmatpush1.xpose.msra.mxu0 0.0
      %7219 = vmatprep.subr.mxu0 0.0
      %7220 = vmatpush1.xpose.msra.mxu0 0.0
      %7221 = vmatprep.subr.mxu0 0.0
      %7222 = vmatpush1.xpose.msra.mxu0 0.0
      %7223 = vmatprep.mubr.f32.mxu0 0.0
      %7224 = vmatmul.mubr.f32.gmra.mrb[0].mxu0 %v7052
      %v7225 = vpop.f32.mrb[0].mxu0
      %v7226 = vadd.f32 0.0, %v7225
      %v7227 = vpop.f32.mrb[0].mxu0
      %7228 = vdwg.mxu0
      %v7230 = vrot.slane %v7226, 2
      %v7232 = vsub.f32 %v3156, %v7230
      %7234 = vset.pattern.permute.xlu0 2
      %7235 = vperm.xlu0 %7234, %v7121
      %v7236 = vpop.permute.xlu0 %7235
      %7239 = vset.pattern.permute.xlu0 2
      %7240 = vperm.xlu0 %7239, %v7126
      %v7241 = vpop.permute.xlu0 %7240
      %7244 = vset.pattern.permute.xlu0 2
      %7245 = vperm.xlu0 %7244, %v7131
      %v7246 = vpop.permute.xlu0 %7245
      %7249 = vset.pattern.permute.xlu0 2
      %7250 = vperm.xlu0 %7249, %v7136
      %v7251 = vpop.permute.xlu0 %7250
      %7254 = vset.pattern.permute.xlu0 2
      %7255 = vperm.xlu0 %7254, %v7141
      %v7256 = vpop.permute.xlu0 %7255
      %7259 = vset.pattern.permute.xlu0 2
      %7260 = vperm.xlu0 %7259, %v7146
      %v7261 = vpop.permute.xlu0 %7260
      %7264 = vset.pattern.permute.xlu0 2
      %7265 = vperm.xlu0 %7264, %v7151
      %v7266 = vpop.permute.xlu0 %7265
      %7269 = vset.pattern.permute.xlu0 2
      %7270 = vperm.xlu0 %7269, %v7156
      %v7271 = vpop.permute.xlu0 %7270
      %v7273 = vlaneseq
      %v7274 = vshrl.u32 %v7273, 7
      %v7275 = vsub.s32 0, %v7274
      %v7276 = vrot.slane %v7232, %v7275
      %v7277 = vadd.f32 %v7236, %v7276
      %v7278 = vadd.f32 %v7241, %v7276
      %v7279 = vadd.f32 %v7246, %v7276
      %v7280 = vadd.f32 %v7251, %v7276
      %v7281 = vadd.f32 %v7256, %v7276
      %v7282 = vadd.f32 %v7261, %v7276
      %v7283 = vadd.f32 %v7266, %v7276
      %v7284 = vadd.f32 %v7271, %v7276
      %v7285 = vadd.f32 %v7277, %v3183
      %v7286 = vadd.f32 %v7278, %v3184
      %v7287 = vadd.f32 %v7279, %v3185
      %v7288 = vadd.f32 %v7280, %v3186
      %v7289 = vadd.f32 %v7281, %v3187
      %v7290 = vadd.f32 %v7282, %v3188
      %v7291 = vadd.f32 %v7283, %v3189
      %v7292 = vadd.f32 %v7284, %v3190
      %v7293 = vsel %vm1285, %v7285, -inf
      %7294 = vmax.xlane.f32.xlu0 %v7293
      %v7295 = vpop.xlane.xlu0 %7294
      %v7296 = vsel %vm1285, %v7286, -inf
      %7297 = vmax.xlane.f32.xlu0 %v7296
      %v7298 = vpop.xlane.xlu0 %7297
      %v7299 = vsel %vm1285, %v7287, -inf
      %7300 = vmax.xlane.f32.xlu0 %v7299
      %v7301 = vpop.xlane.xlu0 %7300
      %v7302 = vsel %vm1285, %v7288, -inf
      %7303 = vmax.xlane.f32.xlu0 %v7302
      %v7304 = vpop.xlane.xlu0 %7303
      %v7305 = vsel %vm1285, %v7289, -inf
      %7306 = vmax.xlane.f32.xlu0 %v7305
      %v7307 = vpop.xlane.xlu0 %7306
      %v7308 = vsel %vm1285, %v7290, -inf
      %7309 = vmax.xlane.f32.xlu0 %v7308
      %v7310 = vpop.xlane.xlu0 %7309
      %v7311 = vsel %vm1285, %v7291, -inf
      %7312 = vmax.xlane.f32.xlu0 %v7311
      %v7313 = vpop.xlane.xlu0 %7312
      %v7314 = vsel %vm1285, %v7292, -inf
      %7315 = vmax.xlane.f32.xlu0 %v7314
      %v7316 = vpop.xlane.xlu0 %7315
      %v7317 = vsub.f32 %v7285, %v7295
      %v7318 = vsub.f32 %v7286, %v7298
      %v7319 = vsub.f32 %v7287, %v7301
      %v7320 = vsub.f32 %v7288, %v7304
      %v7321 = vsub.f32 %v7289, %v7307
      %v7322 = vsub.f32 %v7290, %v7310
      %v7323 = vsub.f32 %v7291, %v7313
      %v7324 = vsub.f32 %v7292, %v7316
      %v7325 = vmul.f32 %v7317, 1.442695
      %v7326 = vpow.pop %v7325
      %v7327 = vmul.f32 %v7318, 1.442695
      %v7328 = vpow.pop %v7327
      %v7329 = vmul.f32 %v7319, 1.442695
      %v7330 = vpow.pop %v7329
      %v7331 = vmul.f32 %v7320, 1.442695
      %v7332 = vpow.pop %v7331
      %v7333 = vmul.f32 %v7321, 1.442695
      %v7334 = vpow.pop %v7333
      %v7335 = vmul.f32 %v7322, 1.442695
      %v7336 = vpow.pop %v7335
      %v7337 = vmul.f32 %v7323, 1.442695
      %v7338 = vpow.pop %v7337
      %v7339 = vmul.f32 %v7324, 1.442695
      %v7340 = vpow.pop %v7339
      %7349 = vrot.lane.b32.xlu0 %v2699, 112
      %v7350 = vpop.permute.xlu0 %7349
      %7351 = vrot.lane.b32.xlu0 %v2704, 112
      %v7352 = vpop.permute.xlu0 %7351
      %7353 = vrot.lane.b32.xlu0 %v2709, 112
      %v7354 = vpop.permute.xlu0 %7353
      %7355 = vrot.lane.b32.xlu0 %v2714, 112
      %v7356 = vpop.permute.xlu0 %7355
      %7357 = vrot.lane.b32.xlu0 %v2719, 112
      %v7358 = vpop.permute.xlu0 %7357
      %7359 = vrot.lane.b32.xlu0 %v2724, 112
      %v7360 = vpop.permute.xlu0 %7359
      %7361 = vrot.lane.b32.xlu0 %v2729, 112
      %v7362 = vpop.permute.xlu0 %7361
      %7363 = vrot.lane.b32.xlu0 %v2734, 112
      %v7364 = vpop.permute.xlu0 %7363
      %v7365 = vsel %vm3530, %v2699, 0
      %v7367 = vsel %vm3530, %v2704, 0
      %v7369 = vsel %vm3530, %v2709, 0
      %v7371 = vsel %vm3530, %v2714, 0
      %v7373 = vsel %vm3530, %v2719, 0
      %v7375 = vsel %vm3530, %v2724, 0
      %v7377 = vsel %vm3530, %v2729, 0
      %v7379 = vsel %vm3530, %v2734, 0
      %v7381 = vsel %vm3530, %v7350, 0
      %v7383 = vsel %vm3530, %v7352, 0
      %v7385 = vsel %vm3530, %v7354, 0
      %v7387 = vsel %vm3530, %v7356, 0
      %v7389 = vsel %vm3530, %v7358, 0
      %v7391 = vsel %vm3530, %v7360, 0
      %v7393 = vsel %vm3530, %v7362, 0
      %v7395 = vsel %vm3530, %v7364, 0
      %7397 = vmatprep.subr.mxu0 0.0
      %7398 = vmatpush1.xpose.msra.mxu0 %v7381
      %7399 = vmatprep.subr.mxu0 0.0
      %7400 = vmatpush1.xpose.msra.mxu0 %v7383
      %7401 = vmatprep.subr.mxu0 0.0
      %7402 = vmatpush1.xpose.msra.mxu0 %v7385
      %7403 = vmatprep.subr.mxu0 0.0
      %7404 = vmatpush1.xpose.msra.mxu0 %v7387
      %7405 = vmatprep.subr.mxu0 0.0
      %7406 = vmatpush1.xpose.msra.mxu0 %v7389
      %7407 = vmatprep.subr.mxu0 0.0
      %7408 = vmatpush1.xpose.msra.mxu0 %v7391
      %7409 = vmatprep.subr.mxu0 0.0
      %7410 = vmatpush1.xpose.msra.mxu0 %v7393
      %7411 = vmatprep.subr.mxu0 0.0
      %7412 = vmatpush1.xpose.msra.mxu0 %v7395
      %7413 = vmatprep.subr.mxu0 0.0
      %7414 = vmatpush1.xpose.msra.mxu0 0.0
      %7415 = vmatprep.subr.mxu0 0.0
      %7416 = vmatpush1.xpose.msra.mxu0 0.0
      %7417 = vmatprep.subr.mxu0 0.0
      %7418 = vmatpush1.xpose.msra.mxu0 0.0
      %7419 = vmatprep.subr.mxu0 0.0
      %7420 = vmatpush1.xpose.msra.mxu0 0.0
      %7421 = vmatprep.subr.mxu0 0.0
      %7422 = vmatpush1.xpose.msra.mxu0 0.0
      %7423 = vmatprep.subr.mxu0 0.0
      %7424 = vmatpush1.xpose.msra.mxu0 0.0
      %7425 = vmatprep.subr.mxu0 0.0
      %7426 = vmatpush1.xpose.msra.mxu0 0.0
      %7427 = vmatprep.subr.mxu0 0.0
      %7428 = vmatpush1.xpose.msra.mxu0 0.0
      %7429 = vmatprep.subr.mxu0 0.0
      %7430 = vmatpush1.xpose.msra.mxu0 0.0
      %7431 = vmatprep.subr.mxu0 0.0
      %7432 = vmatpush1.xpose.msra.mxu0 0.0
      %7433 = vmatprep.subr.mxu0 0.0
      %7434 = vmatpush1.xpose.msra.mxu0 0.0
      %7435 = vmatprep.subr.mxu0 0.0
      %7436 = vmatpush1.xpose.msra.mxu0 0.0
      %7437 = vmatprep.subr.mxu0 0.0
      %7438 = vmatpush1.xpose.msra.mxu0 0.0
      %7439 = vmatprep.subr.mxu0 0.0
      %7440 = vmatpush1.xpose.msra.mxu0 0.0
      %7441 = vmatprep.subr.mxu0 0.0
      %7442 = vmatpush1.xpose.msra.mxu0 0.0
      %7443 = vmatprep.subr.mxu0 0.0
      %7444 = vmatpush1.xpose.msra.mxu0 0.0
      %7445 = vmatprep.subr.mxu0 0.0
      %7446 = vmatpush1.xpose.msra.mxu0 0.0
      %7447 = vmatprep.subr.mxu0 0.0
      %7448 = vmatpush1.xpose.msra.mxu0 0.0
      %7449 = vmatprep.subr.mxu0 0.0
      %7450 = vmatpush1.xpose.msra.mxu0 0.0
      %7451 = vmatprep.subr.mxu0 0.0
      %7452 = vmatpush1.xpose.msra.mxu0 0.0
      %7453 = vmatprep.subr.mxu0 0.0
      %7454 = vmatpush1.xpose.msra.mxu0 0.0
      %7455 = vmatprep.subr.mxu0 0.0
      %7456 = vmatpush1.xpose.msra.mxu0 0.0
      %7457 = vmatprep.subr.mxu0 0.0
      %7458 = vmatpush1.xpose.msra.mxu0 0.0
      %7459 = vmatprep.subr.mxu0 0.0
      %7460 = vmatpush1.xpose.msra.mxu0 0.0
      %7461 = vmatprep.mubr.f32.mxu0 0.0
      %7462 = vmatmul.mubr.f32.gmra.mrb[0].mxu0 %v7365
      %v7463 = vpop.f32.mrb[0].mxu0
      %v7464 = vadd.f32 0.0, %v7463
      %v7465 = vpop.f32.mrb[0].mxu0
      %7466 = vmatprep.mubr.f32.mxu0 0.0
      %7467 = vmatmul.mubr.f32.gmra.mrb[0].mxu0 %v7367
      %v7468 = vpop.f32.mrb[0].mxu0
      %v7469 = vadd.f32 0.0, %v7468
      %v7470 = vpop.f32.mrb[0].mxu0
      %7471 = vmatprep.mubr.f32.mxu0 0.0
      %7472 = vmatmul.mubr.f32.gmra.mrb[0].mxu0 %v7369
      %v7473 = vpop.f32.mrb[0].mxu0
      %v7474 = vadd.f32 0.0, %v7473
      %v7475 = vpop.f32.mrb[0].mxu0
      %7476 = vmatprep.mubr.f32.mxu0 0.0
      %7477 = vmatmul.mubr.f32.gmra.mrb[0].mxu0 %v7371
      %v7478 = vpop.f32.mrb[0].mxu0
      %v7479 = vadd.f32 0.0, %v7478
      %v7480 = vpop.f32.mrb[0].mxu0
      %7481 = vmatprep.mubr.f32.mxu0 0.0
      %7482 = vmatmul.mubr.f32.gmra.mrb[0].mxu0 %v7373
      %v7483 = vpop.f32.mrb[0].mxu0
      %v7484 = vadd.f32 0.0, %v7483
      %v7485 = vpop.f32.mrb[0].mxu0
      %7486 = vmatprep.mubr.f32.mxu0 0.0
      %7487 = vmatmul.mubr.f32.gmra.mrb[0].mxu0 %v7375
      %v7488 = vpop.f32.mrb[0].mxu0
      %v7489 = vadd.f32 0.0, %v7488
      %v7490 = vpop.f32.mrb[0].mxu0
      %7491 = vmatprep.mubr.f32.mxu0 0.0
      %7492 = vmatmul.mubr.f32.gmra.mrb[0].mxu0 %v7377
      %v7493 = vpop.f32.mrb[0].mxu0
      %v7494 = vadd.f32 0.0, %v7493
      %v7495 = vpop.f32.mrb[0].mxu0
      %7496 = vmatprep.mubr.f32.mxu0 0.0
      %7497 = vmatmul.mubr.f32.gmra.mrb[0].mxu0 %v7379
      %v7498 = vpop.f32.mrb[0].mxu0
      %v7499 = vadd.f32 0.0, %v7498
      %v7500 = vpop.f32.mrb[0].mxu0
      %7501 = vdwg.mxu0
      %v7502 = vmul.f32 %v7464, 0.35355338
      %v7503 = vmul.f32 %v7469, 0.35355338
      %v7504 = vmul.f32 %v7474, 0.35355338
      %v7505 = vmul.f32 %v7479, 0.35355338
      %v7506 = vmul.f32 %v7484, 0.35355338
      %v7507 = vmul.f32 %v7489, 0.35355338
      %v7508 = vmul.f32 %v7494, 0.35355338
      %v7509 = vmul.f32 %v7499, 0.35355338
      %v7510 = vmul.f32 %v7502, %v7326
      %v7511 = vmul.f32 %v7503, %v7328
      %v7512 = vmul.f32 %v7504, %v7330
      %v7513 = vmul.f32 %v7505, %v7332
      %v7514 = vmul.f32 %v7506, %v7334
      %v7515 = vmul.f32 %v7507, %v7336
      %v7516 = vmul.f32 %v7508, %v7338
      %v7517 = vmul.f32 %v7509, %v7340
      %v7518 = vsel %vm1285, %v7510, 0.0
      %7519 = vadd.xlane.f32.xlu0 %v7518
      %v7520 = vpop.xlane.xlu0 %7519
      %v7521 = vsel %vm1285, %v7511, 0.0
      %7522 = vadd.xlane.f32.xlu0 %v7521
      %v7523 = vpop.xlane.xlu0 %7522
      %v7524 = vsel %vm1285, %v7512, 0.0
      %7525 = vadd.xlane.f32.xlu0 %v7524
      %v7526 = vpop.xlane.xlu0 %7525
      %v7527 = vsel %vm1285, %v7513, 0.0
      %7528 = vadd.xlane.f32.xlu0 %v7527
      %v7529 = vpop.xlane.xlu0 %7528
      %v7530 = vsel %vm1285, %v7514, 0.0
      %7531 = vadd.xlane.f32.xlu0 %v7530
      %v7532 = vpop.xlane.xlu0 %7531
      %v7533 = vsel %vm1285, %v7515, 0.0
      %7534 = vadd.xlane.f32.xlu0 %v7533
      %v7535 = vpop.xlane.xlu0 %7534
      %v7536 = vsel %vm1285, %v7516, 0.0
      %7537 = vadd.xlane.f32.xlu0 %v7536
      %v7538 = vpop.xlane.xlu0 %7537
      %v7539 = vsel %vm1285, %v7517, 0.0
      %7540 = vadd.xlane.f32.xlu0 %v7539
      %v7541 = vpop.xlane.xlu0 %7540
      %v7542 = vand.u32 2147483647, %v7520
      %v7543 = vand.u32 2147483647, %v7523
      %v7544 = vand.u32 2147483647, %v7526
      %v7545 = vand.u32 2147483647, %v7529
      %v7546 = vand.u32 2147483647, %v7532
      %v7547 = vand.u32 2147483647, %v7535
      %v7548 = vand.u32 2147483647, %v7538
      %v7549 = vand.u32 2147483647, %v7541
      %v7550 = vsub.f32 0.0, %v7295
      %v7551 = vsub.f32 0.0, %v7298
      %v7552 = vsub.f32 0.0, %v7301
      %v7553 = vsub.f32 0.0, %v7304
      %v7554 = vsub.f32 0.0, %v7307
      %v7555 = vsub.f32 0.0, %v7310
      %v7556 = vsub.f32 0.0, %v7313
      %v7557 = vsub.f32 0.0, %v7316
      %v7558 = vmul.f32 %v7550, 1.442695
      %v7559 = vpow.pop %v7558
      %v7560 = vmul.f32 %v7551, 1.442695
      %v7561 = vpow.pop %v7560
      %v7562 = vmul.f32 %v7552, 1.442695
      %v7563 = vpow.pop %v7562
      %v7564 = vmul.f32 %v7553, 1.442695
      %v7565 = vpow.pop %v7564
      %v7566 = vmul.f32 %v7554, 1.442695
      %v7567 = vpow.pop %v7566
      %v7568 = vmul.f32 %v7555, 1.442695
      %v7569 = vpow.pop %v7568
      %v7570 = vmul.f32 %v7556, 1.442695
      %v7571 = vpow.pop %v7570
      %v7572 = vmul.f32 %v7557, 1.442695
      %v7573 = vpow.pop %v7572
      %v7574 = vmax.f32 %v7542, %v7559
      %v7575 = vmax.f32 %v7543, %v7561
      %v7576 = vmax.f32 %v7544, %v7563
      %v7577 = vmax.f32 %v7545, %v7565
      %v7578 = vmax.f32 %v7546, %v7567
      %v7579 = vmax.f32 %v7547, %v7569
      %v7580 = vmax.f32 %v7548, %v7571
      %v7581 = vmax.f32 %v7549, %v7573
      %v7583 = vsel %vm1285, %v7510, 0
      %v7586 = vsel %vm1285, %v7511, 0
      %v7589 = vsel %vm1285, %v7512, 0
      %v7592 = vsel %vm1285, %v7513, 0
      %v7595 = vsel %vm1285, %v7514, 0
      %v7598 = vsel %vm1285, %v7515, 0
      %v7601 = vsel %vm1285, %v7516, 0
      %v7604 = vsel %vm1285, %v7517, 0
      %7606 = vmatprep.subr.mxu0 0.0
      %7607 = vmatpush1.msra.mxu0 %v2992
      %7608 = vmatprep.subr.mxu0 0.0
      %7609 = vmatpush1.msra.mxu0 %v2997
      %7610 = vmatprep.subr.mxu0 0.0
      %7611 = vmatpush1.msra.mxu0 %v3002
      %7612 = vmatprep.subr.mxu0 0.0
      %7613 = vmatpush1.msra.mxu0 %v3007
      %7614 = vmatprep.subr.mxu0 0.0
      %7615 = vmatpush1.msra.mxu0 %v3012
      %7616 = vmatprep.subr.mxu0 0.0
      %7617 = vmatpush1.msra.mxu0 %v3017
      %7618 = vmatprep.subr.mxu0 0.0
      %7619 = vmatpush1.msra.mxu0 %v3022
      %7620 = vmatprep.subr.mxu0 0.0
      %7621 = vmatpush1.msra.mxu0 %v3027
      %7622 = vmatprep.subr.mxu0 0.0
      %7623 = vmatpush1.msra.mxu0 0.0
      %7624 = vmatprep.subr.mxu0 0.0
      %7625 = vmatpush1.msra.mxu0 0.0
      %7626 = vmatprep.subr.mxu0 0.0
      %7627 = vmatpush1.msra.mxu0 0.0
      %7628 = vmatprep.subr.mxu0 0.0
      %7629 = vmatpush1.msra.mxu0 0.0
      %7630 = vmatprep.subr.mxu0 0.0
      %7631 = vmatpush1.msra.mxu0 0.0
      %7632 = vmatprep.subr.mxu0 0.0
      %7633 = vmatpush1.msra.mxu0 0.0
      %7634 = vmatprep.subr.mxu0 0.0
      %7635 = vmatpush1.msra.mxu0 0.0
      %7636 = vmatprep.subr.mxu0 0.0
      %7637 = vmatpush1.msra.mxu0 0.0
      %7638 = vmatprep.subr.mxu0 0.0
      %7639 = vmatpush1.msra.mxu0 0.0
      %7640 = vmatprep.subr.mxu0 0.0
      %7641 = vmatpush1.msra.mxu0 0.0
      %7642 = vmatprep.subr.mxu0 0.0
      %7643 = vmatpush1.msra.mxu0 0.0
      %7644 = vmatprep.subr.mxu0 0.0
      %7645 = vmatpush1.msra.mxu0 0.0
      %7646 = vmatprep.subr.mxu0 0.0
      %7647 = vmatpush1.msra.mxu0 0.0
      %7648 = vmatprep.subr.mxu0 0.0
      %7649 = vmatpush1.msra.mxu0 0.0
      %7650 = vmatprep.subr.mxu0 0.0
      %7651 = vmatpush1.msra.mxu0 0.0
      %7652 = vmatprep.subr.mxu0 0.0
      %7653 = vmatpush1.msra.mxu0 0.0
      %7654 = vmatprep.subr.mxu0 0.0
      %7655 = vmatpush1.msra.mxu0 0.0
      %7656 = vmatprep.subr.mxu0 0.0
      %7657 = vmatpush1.msra.mxu0 0.0
      %7658 = vmatprep.subr.mxu0 0.0
      %7659 = vmatpush1.msra.mxu0 0.0
      %7660 = vmatprep.subr.mxu0 0.0
      %7661 = vmatpush1.msra.mxu0 0.0
      %7662 = vmatprep.subr.mxu0 0.0
      %7663 = vmatpush1.msra.mxu0 0.0
      %7664 = vmatprep.subr.mxu0 0.0
      %7665 = vmatpush1.msra.mxu0 0.0
      %7666 = vmatprep.subr.mxu0 0.0
      %7667 = vmatpush1.msra.mxu0 0.0
      %7668 = vmatprep.subr.mxu0 0.0
      %7669 = vmatpush1.msra.mxu0 0.0
      %7670 = vmatprep.mubr.f32.mxu0 0.0
      %7671 = vmatmul.mubr.f32.gmra.mrb[0].mxu0 %v7583
      %v7672 = vpop.f32.mrb[0].mxu0
      %v7673 = vadd.f32 0.0, %v7672
      %v7674 = vpop.f32.mrb[0].mxu0
      %7675 = vmatprep.mubr.f32.mxu0 0.0
      %7676 = vmatmul.mubr.f32.gmra.mrb[0].mxu0 %v7586
      %v7677 = vpop.f32.mrb[0].mxu0
      %v7678 = vadd.f32 0.0, %v7677
      %v7679 = vpop.f32.mrb[0].mxu0
      %7680 = vmatprep.mubr.f32.mxu0 0.0
      %7681 = vmatmul.mubr.f32.gmra.mrb[0].mxu0 %v7589
      %v7682 = vpop.f32.mrb[0].mxu0
      %v7683 = vadd.f32 0.0, %v7682
      %v7684 = vpop.f32.mrb[0].mxu0
      %7685 = vmatprep.mubr.f32.mxu0 0.0
      %7686 = vmatmul.mubr.f32.gmra.mrb[0].mxu0 %v7592
      %v7687 = vpop.f32.mrb[0].mxu0
      %v7688 = vadd.f32 0.0, %v7687
      %v7689 = vpop.f32.mrb[0].mxu0
      %7690 = vmatprep.mubr.f32.mxu0 0.0
      %7691 = vmatmul.mubr.f32.gmra.mrb[0].mxu0 %v7595
      %v7692 = vpop.f32.mrb[0].mxu0
      %v7693 = vadd.f32 0.0, %v7692
      %v7694 = vpop.f32.mrb[0].mxu0
      %7695 = vmatprep.mubr.f32.mxu0 0.0
      %7696 = vmatmul.mubr.f32.gmra.mrb[0].mxu0 %v7598
      %v7697 = vpop.f32.mrb[0].mxu0
      %v7698 = vadd.f32 0.0, %v7697
      %v7699 = vpop.f32.mrb[0].mxu0
      %7700 = vmatprep.mubr.f32.mxu0 0.0
      %7701 = vmatmul.mubr.f32.gmra.mrb[0].mxu0 %v7601
      %v7702 = vpop.f32.mrb[0].mxu0
      %v7703 = vadd.f32 0.0, %v7702
      %v7704 = vpop.f32.mrb[0].mxu0
      %7705 = vmatprep.mubr.f32.mxu0 0.0
      %7706 = vmatmul.mubr.f32.gmra.mrb[0].mxu0 %v7604
      %v7707 = vpop.f32.mrb[0].mxu0
      %v7708 = vadd.f32 0.0, %v7707
      %v7709 = vpop.f32.mrb[0].mxu0
      %7710 = vdwg.mxu0
      %v7711 = vadd.f32 %v7574, 1e-06
      %v7712 = vadd.f32 %v7575, 1e-06
      %v7713 = vadd.f32 %v7576, 1e-06
      %v7714 = vadd.f32 %v7577, 1e-06
      %v7715 = vadd.f32 %v7578, 1e-06
      %v7716 = vadd.f32 %v7579, 1e-06
      %v7717 = vadd.f32 %v7580, 1e-06
      %v7718 = vadd.f32 %v7581, 1e-06
      %v7719 = vrcp.pop %v7711
      %v7720 = vmul.f32 %v7673, %v7719
      %v7721 = vrcp.pop %v7712
      %v7722 = vmul.f32 %v7678, %v7721
      %v7723 = vrcp.pop %v7713
      %v7724 = vmul.f32 %v7683, %v7723
      %v7725 = vrcp.pop %v7714
      %v7726 = vmul.f32 %v7688, %v7725
      %v7727 = vrcp.pop %v7715
      %v7728 = vmul.f32 %v7693, %v7727
      %v7729 = vrcp.pop %v7716
      %v7730 = vmul.f32 %v7698, %v7729
      %v7731 = vrcp.pop %v7717
      %v7732 = vmul.f32 %v7703, %v7731
      %v7733 = vrcp.pop %v7718
      %v7734 = vmul.f32 %v7708, %v7733
      %v7735 = vsel %vm3901, %v7720, 0.0
      %7736 = vadd.xlane.f32.xlu0 %v7735
      %v7737 = vpop.xlane.xlu0 %7736
      %v7738 = vsel %vm3901, %v7722, 0.0
      %7739 = vadd.xlane.f32.xlu0 %v7738
      %v7740 = vpop.xlane.xlu0 %7739
      %v7741 = vsel %vm3901, %v7724, 0.0
      %7742 = vadd.xlane.f32.xlu0 %v7741
      %v7743 = vpop.xlane.xlu0 %7742
      %v7744 = vsel %vm3901, %v7726, 0.0
      %7745 = vadd.xlane.f32.xlu0 %v7744
      %v7746 = vpop.xlane.xlu0 %7745
      %v7747 = vsel %vm3901, %v7728, 0.0
      %7748 = vadd.xlane.f32.xlu0 %v7747
      %v7749 = vpop.xlane.xlu0 %7748
      %v7750 = vsel %vm3901, %v7730, 0.0
      %7751 = vadd.xlane.f32.xlu0 %v7750
      %v7752 = vpop.xlane.xlu0 %7751
      %v7753 = vsel %vm3901, %v7732, 0.0
      %7754 = vadd.xlane.f32.xlu0 %v7753
      %v7755 = vpop.xlane.xlu0 %7754
      %v7756 = vsel %vm3901, %v7734, 0.0
      %7757 = vadd.xlane.f32.xlu0 %v7756
      %v7758 = vpop.xlane.xlu0 %7757
      %v7759 = vmul.f32 %v7737, %v3926
      %v7760 = vmul.f32 %v7740, %v3926
      %v7761 = vmul.f32 %v7743, %v3926
      %v7762 = vmul.f32 %v7746, %v3926
      %v7763 = vmul.f32 %v7749, %v3926
      %v7764 = vmul.f32 %v7752, %v3926
      %v7765 = vmul.f32 %v7755, %v3926
      %v7766 = vmul.f32 %v7758, %v3926
      %v7767 = vsub.f32 %v7720, %v7759
      %v7768 = vsub.f32 %v7722, %v7760
      %v7769 = vsub.f32 %v7724, %v7761
      %v7770 = vsub.f32 %v7726, %v7762
      %v7771 = vsub.f32 %v7728, %v7763
      %v7772 = vsub.f32 %v7730, %v7764
      %v7773 = vsub.f32 %v7732, %v7765
      %v7774 = vsub.f32 %v7734, %v7766
      %v7775 = vmul.f32 %v7767, %v7767
      %v7776 = vmul.f32 %v7768, %v7768
      %v7777 = vmul.f32 %v7769, %v7769
      %v7778 = vmul.f32 %v7770, %v7770
      %v7779 = vmul.f32 %v7771, %v7771
      %v7780 = vmul.f32 %v7772, %v7772
      %v7781 = vmul.f32 %v7773, %v7773
      %v7782 = vmul.f32 %v7774, %v7774
      %v7783 = vsel %vm3901, %v7775, 0.0
      %7784 = vadd.xlane.f32.xlu0 %v7783
      %v7785 = vpop.xlane.xlu0 %7784
      %v7786 = vsel %vm3901, %v7776, 0.0
      %7787 = vadd.xlane.f32.xlu0 %v7786
      %v7788 = vpop.xlane.xlu0 %7787
      %v7789 = vsel %vm3901, %v7777, 0.0
      %7790 = vadd.xlane.f32.xlu0 %v7789
      %v7791 = vpop.xlane.xlu0 %7790
      %v7792 = vsel %vm3901, %v7778, 0.0
      %7793 = vadd.xlane.f32.xlu0 %v7792
      %v7794 = vpop.xlane.xlu0 %7793
      %v7795 = vsel %vm3901, %v7779, 0.0
      %7796 = vadd.xlane.f32.xlu0 %v7795
      %v7797 = vpop.xlane.xlu0 %7796
      %v7798 = vsel %vm3901, %v7780, 0.0
      %7799 = vadd.xlane.f32.xlu0 %v7798
      %v7800 = vpop.xlane.xlu0 %7799
      %v7801 = vsel %vm3901, %v7781, 0.0
      %7802 = vadd.xlane.f32.xlu0 %v7801
      %v7803 = vpop.xlane.xlu0 %7802
      %v7804 = vsel %vm3901, %v7782, 0.0
      %7805 = vadd.xlane.f32.xlu0 %v7804
      %v7806 = vpop.xlane.xlu0 %7805
      %v7807 = vmul.f32 %v7785, %v3926
      %v7808 = vmul.f32 %v7788, %v3926
      %v7809 = vmul.f32 %v7791, %v3926
      %v7810 = vmul.f32 %v7794, %v3926
      %v7811 = vmul.f32 %v7797, %v3926
      %v7812 = vmul.f32 %v7800, %v3926
      %v7813 = vmul.f32 %v7803, %v3926
      %v7814 = vmul.f32 %v7806, %v3926
      %v7815 = vadd.f32 %v7807, 1e-06
      %v7816 = vadd.f32 %v7808, 1e-06
      %v7817 = vadd.f32 %v7809, 1e-06
      %v7818 = vadd.f32 %v7810, 1e-06
      %v7819 = vadd.f32 %v7811, 1e-06
      %v7820 = vadd.f32 %v7812, 1e-06
      %v7821 = vadd.f32 %v7813, 1e-06
      %v7822 = vadd.f32 %v7814, 1e-06
      %v7823 = vrsqrt.pop %v7815
      %v7824 = vrsqrt.pop %v7816
      %v7825 = vrsqrt.pop %v7817
      %v7826 = vrsqrt.pop %v7818
      %v7827 = vrsqrt.pop %v7819
      %v7828 = vrsqrt.pop %v7820
      %v7829 = vrsqrt.pop %v7821
      %v7830 = vrsqrt.pop %v7822
      %v7831 = vmul.f32 %v7767, %v7823
      %v7832 = vmul.f32 %v7768, %v7824
      %v7833 = vmul.f32 %v7769, %v7825
      %v7834 = vmul.f32 %v7770, %v7826
      %v7835 = vmul.f32 %v7771, %v7827
      %v7836 = vmul.f32 %v7772, %v7828
      %v7837 = vmul.f32 %v7773, %v7829
      %v7838 = vmul.f32 %v7774, %v7830
      %v7839 = vmul.f32 %v7831, %v4010
      %v7840 = vmul.f32 %v7832, %v4010
      %v7841 = vmul.f32 %v7833, %v4010
      %v7842 = vmul.f32 %v7834, %v4010
      %v7843 = vmul.f32 %v7835, %v4010
      %v7844 = vmul.f32 %v7836, %v4010
      %v7845 = vmul.f32 %v7837, %v4010
      %v7846 = vmul.f32 %v7838, %v4010
      %v7847 = vxor.u32 %v2992, 2147483648
      %v7848 = vxor.u32 %v2997, 2147483648
      %v7849 = vxor.u32 %v3002, 2147483648
      %v7850 = vxor.u32 %v3007, 2147483648
      %v7851 = vxor.u32 %v3012, 2147483648
      %v7852 = vxor.u32 %v3017, 2147483648
      %v7853 = vxor.u32 %v3022, 2147483648
      %v7854 = vxor.u32 %v3027, 2147483648
      %v7855 = vmul.f32 %v7847, 1.442695
      %v7856 = vpow.pop %v7855
      %v7857 = vmul.f32 %v7848, 1.442695
      %v7858 = vpow.pop %v7857
      %v7859 = vmul.f32 %v7849, 1.442695
      %v7860 = vpow.pop %v7859
      %v7861 = vmul.f32 %v7850, 1.442695
      %v7862 = vpow.pop %v7861
      %v7863 = vmul.f32 %v7851, 1.442695
      %v7864 = vpow.pop %v7863
      %v7865 = vmul.f32 %v7852, 1.442695
      %v7866 = vpow.pop %v7865
      %v7867 = vmul.f32 %v7853, 1.442695
      %v7868 = vpow.pop %v7867
      %v7869 = vmul.f32 %v7854, 1.442695
      %v7870 = vpow.pop %v7869
      %v7871 = vadd.f32 %v7856, 1.0
      %v7872 = vadd.f32 %v7858, 1.0
      %v7873 = vadd.f32 %v7860, 1.0
      %v7874 = vadd.f32 %v7862, 1.0
      %v7875 = vadd.f32 %v7864, 1.0
      %v7876 = vadd.f32 %v7866, 1.0
      %v7877 = vadd.f32 %v7868, 1.0
      %v7878 = vadd.f32 %v7870, 1.0
      %v7879 = vrcp.pop %v7871
      %v7880 = vmul.f32 1.0, %v7879
      %v7881 = vrcp.pop %v7872
      %v7882 = vmul.f32 1.0, %v7881
      %v7883 = vrcp.pop %v7873
      %v7884 = vmul.f32 1.0, %v7883
      %v7885 = vrcp.pop %v7874
      %v7886 = vmul.f32 1.0, %v7885
      %v7887 = vrcp.pop %v7875
      %v7888 = vmul.f32 1.0, %v7887
      %v7889 = vrcp.pop %v7876
      %v7890 = vmul.f32 1.0, %v7889
      %v7891 = vrcp.pop %v7877
      %v7892 = vmul.f32 1.0, %v7891
      %v7893 = vrcp.pop %v7878
      %v7894 = vmul.f32 1.0, %v7893
      %7903 = vrot.lane.b32.xlu0 %v7839, 32
      %v7904 = vpop.permute.xlu0 %7903
      %7905 = vrot.lane.b32.xlu0 %v7840, 32
      %v7906 = vpop.permute.xlu0 %7905
      %7907 = vrot.lane.b32.xlu0 %v7841, 32
      %v7908 = vpop.permute.xlu0 %7907
      %7909 = vrot.lane.b32.xlu0 %v7842, 32
      %v7910 = vpop.permute.xlu0 %7909
      %7911 = vrot.lane.b32.xlu0 %v7843, 32
      %v7912 = vpop.permute.xlu0 %7911
      %7913 = vrot.lane.b32.xlu0 %v7844, 32
      %v7914 = vpop.permute.xlu0 %7913
      %7915 = vrot.lane.b32.xlu0 %v7845, 32
      %v7916 = vpop.permute.xlu0 %7915
      %7917 = vrot.lane.b32.xlu0 %v7846, 32
      %v7918 = vpop.permute.xlu0 %7917
      %v7927 = vmul.f32 %v7880, %v7904
      %v7928 = vmul.f32 %v7882, %v7906
      %v7929 = vmul.f32 %v7884, %v7908
      %v7930 = vmul.f32 %v7886, %v7910
      %v7931 = vmul.f32 %v7888, %v7912
      %v7932 = vmul.f32 %v7890, %v7914
      %v7933 = vmul.f32 %v7892, %v7916
      %v7934 = vmul.f32 %v7894, %v7918
      %7935 = vset.pattern.permute.xlu0 3
      %7936 = vperm.xlu0 %7935, %v7121
      %v7937 = vpop.permute.xlu0 %7936
      %7939 = vset.pattern.permute.xlu0 3
      %7940 = vperm.xlu0 %7939, %v7126
      %v7941 = vpop.permute.xlu0 %7940
      %7943 = vset.pattern.permute.xlu0 3
      %7944 = vperm.xlu0 %7943, %v7131
      %v7945 = vpop.permute.xlu0 %7944
      %7947 = vset.pattern.permute.xlu0 3
      %7948 = vperm.xlu0 %7947, %v7136
      %v7949 = vpop.permute.xlu0 %7948
      %7951 = vset.pattern.permute.xlu0 3
      %7952 = vperm.xlu0 %7951, %v7141
      %v7953 = vpop.permute.xlu0 %7952
      %7955 = vset.pattern.permute.xlu0 3
      %7956 = vperm.xlu0 %7955, %v7146
      %v7957 = vpop.permute.xlu0 %7956
      %7959 = vset.pattern.permute.xlu0 3
      %7960 = vperm.xlu0 %7959, %v7151
      %v7961 = vpop.permute.xlu0 %7960
      %7963 = vset.pattern.permute.xlu0 3
      %7964 = vperm.xlu0 %7963, %v7156
      %v7965 = vpop.permute.xlu0 %7964
      %v7967 = vlaneseq
      %v7968 = vshrl.u32 %v7967, 7
      %v7969 = vsub.s32 1, %v7968
      %v7970 = vrot.slane %v7232, %v7969
      %v7971 = vadd.f32 %v7937, %v7970
      %v7972 = vadd.f32 %v7941, %v7970
      %v7973 = vadd.f32 %v7945, %v7970
      %v7974 = vadd.f32 %v7949, %v7970
      %v7975 = vadd.f32 %v7953, %v7970
      %v7976 = vadd.f32 %v7957, %v7970
      %v7977 = vadd.f32 %v7961, %v7970
      %v7978 = vadd.f32 %v7965, %v7970
      %v7979 = vadd.f32 %v7971, %v3183
      %v7980 = vadd.f32 %v7972, %v3184
      %v7981 = vadd.f32 %v7973, %v3185
      %v7982 = vadd.f32 %v7974, %v3186
      %v7983 = vadd.f32 %v7975, %v3187
      %v7984 = vadd.f32 %v7976, %v3188
      %v7985 = vadd.f32 %v7977, %v3189
      %v7986 = vadd.f32 %v7978, %v3190
      %v7987 = vsel %vm1285, %v7979, -inf
      %7988 = vmax.xlane.f32.xlu0 %v7987
      %v7989 = vpop.xlane.xlu0 %7988
      %v7990 = vsel %vm1285, %v7980, -inf
      %7991 = vmax.xlane.f32.xlu0 %v7990
      %v7992 = vpop.xlane.xlu0 %7991
      %v7993 = vsel %vm1285, %v7981, -inf
      %7994 = vmax.xlane.f32.xlu0 %v7993
      %v7995 = vpop.xlane.xlu0 %7994
      %v7996 = vsel %vm1285, %v7982, -inf
      %7997 = vmax.xlane.f32.xlu0 %v7996
      %v7998 = vpop.xlane.xlu0 %7997
      %v7999 = vsel %vm1285, %v7983, -inf
      %8000 = vmax.xlane.f32.xlu0 %v7999
      %v8001 = vpop.xlane.xlu0 %8000
      %v8002 = vsel %vm1285, %v7984, -inf
      %8003 = vmax.xlane.f32.xlu0 %v8002
      %v8004 = vpop.xlane.xlu0 %8003
      %v8005 = vsel %vm1285, %v7985, -inf
      %8006 = vmax.xlane.f32.xlu0 %v8005
      %v8007 = vpop.xlane.xlu0 %8006
      %v8008 = vsel %vm1285, %v7986, -inf
      %8009 = vmax.xlane.f32.xlu0 %v8008
      %v8010 = vpop.xlane.xlu0 %8009
      %v8011 = vsub.f32 %v7979, %v7989
      %v8012 = vsub.f32 %v7980, %v7992
      %v8013 = vsub.f32 %v7981, %v7995
      %v8014 = vsub.f32 %v7982, %v7998
      %v8015 = vsub.f32 %v7983, %v8001
      %v8016 = vsub.f32 %v7984, %v8004
      %v8017 = vsub.f32 %v7985, %v8007
      %v8018 = vsub.f32 %v7986, %v8010
      %v8019 = vmul.f32 %v8011, 1.442695
      %v8020 = vpow.pop %v8019
      %v8021 = vmul.f32 %v8012, 1.442695
      %v8022 = vpow.pop %v8021
      %v8023 = vmul.f32 %v8013, 1.442695
      %v8024 = vpow.pop %v8023
      %v8025 = vmul.f32 %v8014, 1.442695
      %v8026 = vpow.pop %v8025
      %v8027 = vmul.f32 %v8015, 1.442695
      %v8028 = vpow.pop %v8027
      %v8029 = vmul.f32 %v8016, 1.442695
      %v8030 = vpow.pop %v8029
      %v8031 = vmul.f32 %v8017, 1.442695
      %v8032 = vpow.pop %v8031
      %v8033 = vmul.f32 %v8018, 1.442695
      %v8034 = vpow.pop %v8033
      %8035 = vrot.lane.b32.xlu0 %v2699, 120
      %v8036 = vpop.permute.xlu0 %8035
      %8037 = vrot.lane.b32.xlu0 %v2704, 120
      %v8038 = vpop.permute.xlu0 %8037
      %8039 = vrot.lane.b32.xlu0 %v2709, 120
      %v8040 = vpop.permute.xlu0 %8039
      %8041 = vrot.lane.b32.xlu0 %v2714, 120
      %v8042 = vpop.permute.xlu0 %8041
      %8043 = vrot.lane.b32.xlu0 %v2719, 120
      %v8044 = vpop.permute.xlu0 %8043
      %8045 = vrot.lane.b32.xlu0 %v2724, 120
      %v8046 = vpop.permute.xlu0 %8045
      %8047 = vrot.lane.b32.xlu0 %v2729, 120
      %v8048 = vpop.permute.xlu0 %8047
      %8049 = vrot.lane.b32.xlu0 %v2734, 120
      %v8050 = vpop.permute.xlu0 %8049
      %8051 = vrot.lane.b32.xlu0 %v2699, 104
      %v8052 = vpop.permute.xlu0 %8051
      %8053 = vrot.lane.b32.xlu0 %v2704, 104
      %v8054 = vpop.permute.xlu0 %8053
      %8055 = vrot.lane.b32.xlu0 %v2709, 104
      %v8056 = vpop.permute.xlu0 %8055
      %8057 = vrot.lane.b32.xlu0 %v2714, 104
      %v8058 = vpop.permute.xlu0 %8057
      %8059 = vrot.lane.b32.xlu0 %v2719, 104
      %v8060 = vpop.permute.xlu0 %8059
      %8061 = vrot.lane.b32.xlu0 %v2724, 104
      %v8062 = vpop.permute.xlu0 %8061
      %8063 = vrot.lane.b32.xlu0 %v2729, 104
      %v8064 = vpop.permute.xlu0 %8063
      %8065 = vrot.lane.b32.xlu0 %v2734, 104
      %v8066 = vpop.permute.xlu0 %8065
      %v8067 = vsel %vm3530, %v8036, 0
      %v8069 = vsel %vm3530, %v8038, 0
      %v8071 = vsel %vm3530, %v8040, 0
      %v8073 = vsel %vm3530, %v8042, 0
      %v8075 = vsel %vm3530, %v8044, 0
      %v8077 = vsel %vm3530, %v8046, 0
      %v8079 = vsel %vm3530, %v8048, 0
      %v8081 = vsel %vm3530, %v8050, 0
      %v8083 = vsel %vm3530, %v8052, 0
      %v8085 = vsel %vm3530, %v8054, 0
      %v8087 = vsel %vm3530, %v8056, 0
      %v8089 = vsel %vm3530, %v8058, 0
      %v8091 = vsel %vm3530, %v8060, 0
      %v8093 = vsel %vm3530, %v8062, 0
      %v8095 = vsel %vm3530, %v8064, 0
      %v8097 = vsel %vm3530, %v8066, 0
      %8099 = vmatprep.subr.mxu0 0.0
      %8100 = vmatpush1.xpose.msra.mxu0 %v8083
      %8101 = vmatprep.subr.mxu0 0.0
      %8102 = vmatpush1.xpose.msra.mxu0 %v8085
      %8103 = vmatprep.subr.mxu0 0.0
      %8104 = vmatpush1.xpose.msra.mxu0 %v8087
      %8105 = vmatprep.subr.mxu0 0.0
      %8106 = vmatpush1.xpose.msra.mxu0 %v8089
      %8107 = vmatprep.subr.mxu0 0.0
      %8108 = vmatpush1.xpose.msra.mxu0 %v8091
      %8109 = vmatprep.subr.mxu0 0.0
      %8110 = vmatpush1.xpose.msra.mxu0 %v8093
      %8111 = vmatprep.subr.mxu0 0.0
      %8112 = vmatpush1.xpose.msra.mxu0 %v8095
      %8113 = vmatprep.subr.mxu0 0.0
      %8114 = vmatpush1.xpose.msra.mxu0 %v8097
      %8115 = vmatprep.subr.mxu0 0.0
      %8116 = vmatpush1.xpose.msra.mxu0 0.0
      %8117 = vmatprep.subr.mxu0 0.0
      %8118 = vmatpush1.xpose.msra.mxu0 0.0
      %8119 = vmatprep.subr.mxu0 0.0
      %8120 = vmatpush1.xpose.msra.mxu0 0.0
      %8121 = vmatprep.subr.mxu0 0.0
      %8122 = vmatpush1.xpose.msra.mxu0 0.0
      %8123 = vmatprep.subr.mxu0 0.0
      %8124 = vmatpush1.xpose.msra.mxu0 0.0
      %8125 = vmatprep.subr.mxu0 0.0
      %8126 = vmatpush1.xpose.msra.mxu0 0.0
      %8127 = vmatprep.subr.mxu0 0.0
      %8128 = vmatpush1.xpose.msra.mxu0 0.0
      %8129 = vmatprep.subr.mxu0 0.0
      %8130 = vmatpush1.xpose.msra.mxu0 0.0
      %8131 = vmatprep.subr.mxu0 0.0
      %8132 = vmatpush1.xpose.msra.mxu0 0.0
      %8133 = vmatprep.subr.mxu0 0.0
      %8134 = vmatpush1.xpose.msra.mxu0 0.0
      %8135 = vmatprep.subr.mxu0 0.0
      %8136 = vmatpush1.xpose.msra.mxu0 0.0
      %8137 = vmatprep.subr.mxu0 0.0
      %8138 = vmatpush1.xpose.msra.mxu0 0.0
      %8139 = vmatprep.subr.mxu0 0.0
      %8140 = vmatpush1.xpose.msra.mxu0 0.0
      %8141 = vmatprep.subr.mxu0 0.0
      %8142 = vmatpush1.xpose.msra.mxu0 0.0
      %8143 = vmatprep.subr.mxu0 0.0
      %8144 = vmatpush1.xpose.msra.mxu0 0.0
      %8145 = vmatprep.subr.mxu0 0.0
      %8146 = vmatpush1.xpose.msra.mxu0 0.0
      %8147 = vmatprep.subr.mxu0 0.0
      %8148 = vmatpush1.xpose.msra.mxu0 0.0
      %8149 = vmatprep.subr.mxu0 0.0
      %8150 = vmatpush1.xpose.msra.mxu0 0.0
      %8151 = vmatprep.subr.mxu0 0.0
      %8152 = vmatpush1.xpose.msra.mxu0 0.0
      %8153 = vmatprep.subr.mxu0 0.0
      %8154 = vmatpush1.xpose.msra.mxu0 0.0
      %8155 = vmatprep.subr.mxu0 0.0
      %8156 = vmatpush1.xpose.msra.mxu0 0.0
      %8157 = vmatprep.subr.mxu0 0.0
      %8158 = vmatpush1.xpose.msra.mxu0 0.0
      %8159 = vmatprep.subr.mxu0 0.0
      %8160 = vmatpush1.xpose.msra.mxu0 0.0
      %8161 = vmatprep.subr.mxu0 0.0
      %8162 = vmatpush1.xpose.msra.mxu0 0.0
      %8163 = vmatprep.mubr.f32.mxu0 0.0
      %8164 = vmatmul.mubr.f32.gmra.mrb[0].mxu0 %v8067
      %v8165 = vpop.f32.mrb[0].mxu0
      %v8166 = vadd.f32 0.0, %v8165
      %v8167 = vpop.f32.mrb[0].mxu0
      %8168 = vmatprep.mubr.f32.mxu0 0.0
      %8169 = vmatmul.mubr.f32.gmra.mrb[0].mxu0 %v8069
      %v8170 = vpop.f32.mrb[0].mxu0
      %v8171 = vadd.f32 0.0, %v8170
      %v8172 = vpop.f32.mrb[0].mxu0
      %8173 = vmatprep.mubr.f32.mxu0 0.0
      %8174 = vmatmul.mubr.f32.gmra.mrb[0].mxu0 %v8071
      %v8175 = vpop.f32.mrb[0].mxu0
      %v8176 = vadd.f32 0.0, %v8175
      %v8177 = vpop.f32.mrb[0].mxu0
      %8178 = vmatprep.mubr.f32.mxu0 0.0
      %8179 = vmatmul.mubr.f32.gmra.mrb[0].mxu0 %v8073
      %v8180 = vpop.f32.mrb[0].mxu0
      %v8181 = vadd.f32 0.0, %v8180
      %v8182 = vpop.f32.mrb[0].mxu0
      %8183 = vmatprep.mubr.f32.mxu0 0.0
      %8184 = vmatmul.mubr.f32.gmra.mrb[0].mxu0 %v8075
      %v8185 = vpop.f32.mrb[0].mxu0
      %v8186 = vadd.f32 0.0, %v8185
      %v8187 = vpop.f32.mrb[0].mxu0
      %8188 = vmatprep.mubr.f32.mxu0 0.0
      %8189 = vmatmul.mubr.f32.gmra.mrb[0].mxu0 %v8077
      %v8190 = vpop.f32.mrb[0].mxu0
      %v8191 = vadd.f32 0.0, %v8190
      %v8192 = vpop.f32.mrb[0].mxu0
      %8193 = vmatprep.mubr.f32.mxu0 0.0
      %8194 = vmatmul.mubr.f32.gmra.mrb[0].mxu0 %v8079
      %v8195 = vpop.f32.mrb[0].mxu0
      %v8196 = vadd.f32 0.0, %v8195
      %v8197 = vpop.f32.mrb[0].mxu0
      %8198 = vmatprep.mubr.f32.mxu0 0.0
      %8199 = vmatmul.mubr.f32.gmra.mrb[0].mxu0 %v8081
      %v8200 = vpop.f32.mrb[0].mxu0
      %v8201 = vadd.f32 0.0, %v8200
      %v8202 = vpop.f32.mrb[0].mxu0
      %8203 = vdwg.mxu0
      %v8204 = vmul.f32 %v8166, 0.35355338
      %v8205 = vmul.f32 %v8171, 0.35355338
      %v8206 = vmul.f32 %v8176, 0.35355338
      %v8207 = vmul.f32 %v8181, 0.35355338
      %v8208 = vmul.f32 %v8186, 0.35355338
      %v8209 = vmul.f32 %v8191, 0.35355338
      %v8210 = vmul.f32 %v8196, 0.35355338
      %v8211 = vmul.f32 %v8201, 0.35355338
      %v8212 = vmul.f32 %v8204, %v8020
      %v8213 = vmul.f32 %v8205, %v8022
      %v8214 = vmul.f32 %v8206, %v8024
      %v8215 = vmul.f32 %v8207, %v8026
      %v8216 = vmul.f32 %v8208, %v8028
      %v8217 = vmul.f32 %v8209, %v8030
      %v8218 = vmul.f32 %v8210, %v8032
      %v8219 = vmul.f32 %v8211, %v8034
      %v8220 = vsel %vm1285, %v8212, 0.0
      %8221 = vadd.xlane.f32.xlu0 %v8220
      %v8222 = vpop.xlane.xlu0 %8221
      %v8223 = vsel %vm1285, %v8213, 0.0
      %8224 = vadd.xlane.f32.xlu0 %v8223
      %v8225 = vpop.xlane.xlu0 %8224
      %v8226 = vsel %vm1285, %v8214, 0.0
      %8227 = vadd.xlane.f32.xlu0 %v8226
      %v8228 = vpop.xlane.xlu0 %8227
      %v8229 = vsel %vm1285, %v8215, 0.0
      %8230 = vadd.xlane.f32.xlu0 %v8229
      %v8231 = vpop.xlane.xlu0 %8230
      %v8232 = vsel %vm1285, %v8216, 0.0
      %8233 = vadd.xlane.f32.xlu0 %v8232
      %v8234 = vpop.xlane.xlu0 %8233
      %v8235 = vsel %vm1285, %v8217, 0.0
      %8236 = vadd.xlane.f32.xlu0 %v8235
      %v8237 = vpop.xlane.xlu0 %8236
      %v8238 = vsel %vm1285, %v8218, 0.0
      %8239 = vadd.xlane.f32.xlu0 %v8238
      %v8240 = vpop.xlane.xlu0 %8239
      %v8241 = vsel %vm1285, %v8219, 0.0
      %8242 = vadd.xlane.f32.xlu0 %v8241
      %v8243 = vpop.xlane.xlu0 %8242
      %v8244 = vand.u32 2147483647, %v8222
      %v8245 = vand.u32 2147483647, %v8225
      %v8246 = vand.u32 2147483647, %v8228
      %v8247 = vand.u32 2147483647, %v8231
      %v8248 = vand.u32 2147483647, %v8234
      %v8249 = vand.u32 2147483647, %v8237
      %v8250 = vand.u32 2147483647, %v8240
      %v8251 = vand.u32 2147483647, %v8243
      %v8252 = vsub.f32 0.0, %v7989
      %v8253 = vsub.f32 0.0, %v7992
      %v8254 = vsub.f32 0.0, %v7995
      %v8255 = vsub.f32 0.0, %v7998
      %v8256 = vsub.f32 0.0, %v8001
      %v8257 = vsub.f32 0.0, %v8004
      %v8258 = vsub.f32 0.0, %v8007
      %v8259 = vsub.f32 0.0, %v8010
      %v8260 = vmul.f32 %v8252, 1.442695
      %v8261 = vpow.pop %v8260
      %v8262 = vmul.f32 %v8253, 1.442695
      %v8263 = vpow.pop %v8262
      %v8264 = vmul.f32 %v8254, 1.442695
      %v8265 = vpow.pop %v8264
      %v8266 = vmul.f32 %v8255, 1.442695
      %v8267 = vpow.pop %v8266
      %v8268 = vmul.f32 %v8256, 1.442695
      %v8269 = vpow.pop %v8268
      %v8270 = vmul.f32 %v8257, 1.442695
      %v8271 = vpow.pop %v8270
      %v8272 = vmul.f32 %v8258, 1.442695
      %v8273 = vpow.pop %v8272
      %v8274 = vmul.f32 %v8259, 1.442695
      %v8275 = vpow.pop %v8274
      %v8276 = vmax.f32 %v8244, %v8261
      %v8277 = vmax.f32 %v8245, %v8263
      %v8278 = vmax.f32 %v8246, %v8265
      %v8279 = vmax.f32 %v8247, %v8267
      %v8280 = vmax.f32 %v8248, %v8269
      %v8281 = vmax.f32 %v8249, %v8271
      %v8282 = vmax.f32 %v8250, %v8273
      %v8283 = vmax.f32 %v8251, %v8275
      %8292 = vrot.lane.b32.xlu0 %v2992, 112
      %v8293 = vpop.permute.xlu0 %8292
      %8294 = vrot.lane.b32.xlu0 %v2997, 112
      %v8295 = vpop.permute.xlu0 %8294
      %8296 = vrot.lane.b32.xlu0 %v3002, 112
      %v8297 = vpop.permute.xlu0 %8296
      %8298 = vrot.lane.b32.xlu0 %v3007, 112
      %v8299 = vpop.permute.xlu0 %8298
      %8300 = vrot.lane.b32.xlu0 %v3012, 112
      %v8301 = vpop.permute.xlu0 %8300
      %8302 = vrot.lane.b32.xlu0 %v3017, 112
      %v8303 = vpop.permute.xlu0 %8302
      %8304 = vrot.lane.b32.xlu0 %v3022, 112
      %v8305 = vpop.permute.xlu0 %8304
      %8306 = vrot.lane.b32.xlu0 %v3027, 112
      %v8307 = vpop.permute.xlu0 %8306
      %v8317 = vsel %vm1285, %v8212, 0
      %v8320 = vsel %vm1285, %v8213, 0
      %v8323 = vsel %vm1285, %v8214, 0
      %v8326 = vsel %vm1285, %v8215, 0
      %v8329 = vsel %vm1285, %v8216, 0
      %v8332 = vsel %vm1285, %v8217, 0
      %v8335 = vsel %vm1285, %v8218, 0
      %v8338 = vsel %vm1285, %v8219, 0
      %8340 = vmatprep.subr.mxu0 0.0
      %8341 = vmatpush1.msra.mxu0 %v8293
      %8342 = vmatprep.subr.mxu0 0.0
      %8343 = vmatpush1.msra.mxu0 %v8295
      %8344 = vmatprep.subr.mxu0 0.0
      %8345 = vmatpush1.msra.mxu0 %v8297
      %8346 = vmatprep.subr.mxu0 0.0
      %8347 = vmatpush1.msra.mxu0 %v8299
      %8348 = vmatprep.subr.mxu0 0.0
      %8349 = vmatpush1.msra.mxu0 %v8301
      %8350 = vmatprep.subr.mxu0 0.0
      %8351 = vmatpush1.msra.mxu0 %v8303
      %8352 = vmatprep.subr.mxu0 0.0
      %8353 = vmatpush1.msra.mxu0 %v8305
      %8354 = vmatprep.subr.mxu0 0.0
      %8355 = vmatpush1.msra.mxu0 %v8307
      %8356 = vmatprep.subr.mxu0 0.0
      %8357 = vmatpush1.msra.mxu0 0.0
      %8358 = vmatprep.subr.mxu0 0.0
      %8359 = vmatpush1.msra.mxu0 0.0
      %8360 = vmatprep.subr.mxu0 0.0
      %8361 = vmatpush1.msra.mxu0 0.0
      %8362 = vmatprep.subr.mxu0 0.0
      %8363 = vmatpush1.msra.mxu0 0.0
      %8364 = vmatprep.subr.mxu0 0.0
      %8365 = vmatpush1.msra.mxu0 0.0
      %8366 = vmatprep.subr.mxu0 0.0
      %8367 = vmatpush1.msra.mxu0 0.0
      %8368 = vmatprep.subr.mxu0 0.0
      %8369 = vmatpush1.msra.mxu0 0.0
      %8370 = vmatprep.subr.mxu0 0.0
      %8371 = vmatpush1.msra.mxu0 0.0
      %8372 = vmatprep.subr.mxu0 0.0
      %8373 = vmatpush1.msra.mxu0 0.0
      %8374 = vmatprep.subr.mxu0 0.0
      %8375 = vmatpush1.msra.mxu0 0.0
      %8376 = vmatprep.subr.mxu0 0.0
      %8377 = vmatpush1.msra.mxu0 0.0
      %8378 = vmatprep.subr.mxu0 0.0
      %8379 = vmatpush1.msra.mxu0 0.0
      %8380 = vmatprep.subr.mxu0 0.0
      %8381 = vmatpush1.msra.mxu0 0.0
      %8382 = vmatprep.subr.mxu0 0.0
      %8383 = vmatpush1.msra.mxu0 0.0
      %8384 = vmatprep.subr.mxu0 0.0
      %8385 = vmatpush1.msra.mxu0 0.0
      %8386 = vmatprep.subr.mxu0 0.0
      %8387 = vmatpush1.msra.mxu0 0.0
      %8388 = vmatprep.subr.mxu0 0.0
      %8389 = vmatpush1.msra.mxu0 0.0
      %8390 = vmatprep.subr.mxu0 0.0
      %8391 = vmatpush1.msra.mxu0 0.0
      %8392 = vmatprep.subr.mxu0 0.0
      %8393 = vmatpush1.msra.mxu0 0.0
      %8394 = vmatprep.subr.mxu0 0.0
      %8395 = vmatpush1.msra.mxu0 0.0
      %8396 = vmatprep.subr.mxu0 0.0
      %8397 = vmatpush1.msra.mxu0 0.0
      %8398 = vmatprep.subr.mxu0 0.0
      %8399 = vmatpush1.msra.mxu0 0.0
      %8400 = vmatprep.subr.mxu0 0.0
      %8401 = vmatpush1.msra.mxu0 0.0
      %8402 = vmatprep.subr.mxu0 0.0
      %8403 = vmatpush1.msra.mxu0 0.0
      %8404 = vmatprep.mubr.f32.mxu0 0.0
      %8405 = vmatmul.mubr.f32.gmra.mrb[0].mxu0 %v8317
      %v8406 = vpop.f32.mrb[0].mxu0
      %v8407 = vadd.f32 0.0, %v8406
      %v8408 = vpop.f32.mrb[0].mxu0
      %8409 = vmatprep.mubr.f32.mxu0 0.0
      %8410 = vmatmul.mubr.f32.gmra.mrb[0].mxu0 %v8320
      %v8411 = vpop.f32.mrb[0].mxu0
      %v8412 = vadd.f32 0.0, %v8411
      %v8413 = vpop.f32.mrb[0].mxu0
      %8414 = vmatprep.mubr.f32.mxu0 0.0
      %8415 = vmatmul.mubr.f32.gmra.mrb[0].mxu0 %v8323
      %v8416 = vpop.f32.mrb[0].mxu0
      %v8417 = vadd.f32 0.0, %v8416
      %v8418 = vpop.f32.mrb[0].mxu0
      %8419 = vmatprep.mubr.f32.mxu0 0.0
      %8420 = vmatmul.mubr.f32.gmra.mrb[0].mxu0 %v8326
      %v8421 = vpop.f32.mrb[0].mxu0
      %v8422 = vadd.f32 0.0, %v8421
      %v8423 = vpop.f32.mrb[0].mxu0
      %8424 = vmatprep.mubr.f32.mxu0 0.0
      %8425 = vmatmul.mubr.f32.gmra.mrb[0].mxu0 %v8329
      %v8426 = vpop.f32.mrb[0].mxu0
      %v8427 = vadd.f32 0.0, %v8426
      %v8428 = vpop.f32.mrb[0].mxu0
      %8429 = vmatprep.mubr.f32.mxu0 0.0
      %8430 = vmatmul.mubr.f32.gmra.mrb[0].mxu0 %v8332
      %v8431 = vpop.f32.mrb[0].mxu0
      %v8432 = vadd.f32 0.0, %v8431
      %v8433 = vpop.f32.mrb[0].mxu0
      %8434 = vmatprep.mubr.f32.mxu0 0.0
      %8435 = vmatmul.mubr.f32.gmra.mrb[0].mxu0 %v8335
      %v8436 = vpop.f32.mrb[0].mxu0
      %v8437 = vadd.f32 0.0, %v8436
      %v8438 = vpop.f32.mrb[0].mxu0
      %8439 = vmatprep.mubr.f32.mxu0 0.0
      %8440 = vmatmul.mubr.f32.gmra.mrb[0].mxu0 %v8338
      %v8441 = vpop.f32.mrb[0].mxu0
      %v8442 = vadd.f32 0.0, %v8441
      %v8443 = vpop.f32.mrb[0].mxu0
      %8444 = vdwg.mxu0
      %v8445 = vadd.f32 %v8276, 1e-06
      %v8446 = vadd.f32 %v8277, 1e-06
      %v8447 = vadd.f32 %v8278, 1e-06
      %v8448 = vadd.f32 %v8279, 1e-06
      %v8449 = vadd.f32 %v8280, 1e-06
      %v8450 = vadd.f32 %v8281, 1e-06
      %v8451 = vadd.f32 %v8282, 1e-06
      %v8452 = vadd.f32 %v8283, 1e-06
      %v8453 = vrcp.pop %v8445
      %v8454 = vmul.f32 %v8407, %v8453
      %v8455 = vrcp.pop %v8446
      %v8456 = vmul.f32 %v8412, %v8455
      %v8457 = vrcp.pop %v8447
      %v8458 = vmul.f32 %v8417, %v8457
      %v8459 = vrcp.pop %v8448
      %v8460 = vmul.f32 %v8422, %v8459
      %v8461 = vrcp.pop %v8449
      %v8462 = vmul.f32 %v8427, %v8461
      %v8463 = vrcp.pop %v8450
      %v8464 = vmul.f32 %v8432, %v8463
      %v8465 = vrcp.pop %v8451
      %v8466 = vmul.f32 %v8437, %v8465
      %v8467 = vrcp.pop %v8452
      %v8468 = vmul.f32 %v8442, %v8467
      %v8469 = vsel %vm3901, %v8454, 0.0
      %8470 = vadd.xlane.f32.xlu0 %v8469
      %v8471 = vpop.xlane.xlu0 %8470
      %v8472 = vsel %vm3901, %v8456, 0.0
      %8473 = vadd.xlane.f32.xlu0 %v8472
      %v8474 = vpop.xlane.xlu0 %8473
      %v8475 = vsel %vm3901, %v8458, 0.0
      %8476 = vadd.xlane.f32.xlu0 %v8475
      %v8477 = vpop.xlane.xlu0 %8476
      %v8478 = vsel %vm3901, %v8460, 0.0
      %8479 = vadd.xlane.f32.xlu0 %v8478
      %v8480 = vpop.xlane.xlu0 %8479
      %v8481 = vsel %vm3901, %v8462, 0.0
      %8482 = vadd.xlane.f32.xlu0 %v8481
      %v8483 = vpop.xlane.xlu0 %8482
      %v8484 = vsel %vm3901, %v8464, 0.0
      %8485 = vadd.xlane.f32.xlu0 %v8484
      %v8486 = vpop.xlane.xlu0 %8485
      %v8487 = vsel %vm3901, %v8466, 0.0
      %8488 = vadd.xlane.f32.xlu0 %v8487
      %v8489 = vpop.xlane.xlu0 %8488
      %v8490 = vsel %vm3901, %v8468, 0.0
      %8491 = vadd.xlane.f32.xlu0 %v8490
      %v8492 = vpop.xlane.xlu0 %8491
      %v8493 = vmul.f32 %v8471, %v3926
      %v8494 = vmul.f32 %v8474, %v3926
      %v8495 = vmul.f32 %v8477, %v3926
      %v8496 = vmul.f32 %v8480, %v3926
      %v8497 = vmul.f32 %v8483, %v3926
      %v8498 = vmul.f32 %v8486, %v3926
      %v8499 = vmul.f32 %v8489, %v3926
      %v8500 = vmul.f32 %v8492, %v3926
      %v8501 = vsub.f32 %v8454, %v8493
      %v8502 = vsub.f32 %v8456, %v8494
      %v8503 = vsub.f32 %v8458, %v8495
      %v8504 = vsub.f32 %v8460, %v8496
      %v8505 = vsub.f32 %v8462, %v8497
      %v8506 = vsub.f32 %v8464, %v8498
      %v8507 = vsub.f32 %v8466, %v8499
      %v8508 = vsub.f32 %v8468, %v8500
      %v8509 = vmul.f32 %v8501, %v8501
      %v8510 = vmul.f32 %v8502, %v8502
      %v8511 = vmul.f32 %v8503, %v8503
      %v8512 = vmul.f32 %v8504, %v8504
      %v8513 = vmul.f32 %v8505, %v8505
      %v8514 = vmul.f32 %v8506, %v8506
      %v8515 = vmul.f32 %v8507, %v8507
      %v8516 = vmul.f32 %v8508, %v8508
      %v8517 = vsel %vm3901, %v8509, 0.0
      %8518 = vadd.xlane.f32.xlu0 %v8517
      %v8519 = vpop.xlane.xlu0 %8518
      %v8520 = vsel %vm3901, %v8510, 0.0
      %8521 = vadd.xlane.f32.xlu0 %v8520
      %v8522 = vpop.xlane.xlu0 %8521
      %v8523 = vsel %vm3901, %v8511, 0.0
      %8524 = vadd.xlane.f32.xlu0 %v8523
      %v8525 = vpop.xlane.xlu0 %8524
      %v8526 = vsel %vm3901, %v8512, 0.0
      %8527 = vadd.xlane.f32.xlu0 %v8526
      %v8528 = vpop.xlane.xlu0 %8527
      %v8529 = vsel %vm3901, %v8513, 0.0
      %8530 = vadd.xlane.f32.xlu0 %v8529
      %v8531 = vpop.xlane.xlu0 %8530
      %v8532 = vsel %vm3901, %v8514, 0.0
      %8533 = vadd.xlane.f32.xlu0 %v8532
      %v8534 = vpop.xlane.xlu0 %8533
      %v8535 = vsel %vm3901, %v8515, 0.0
      %8536 = vadd.xlane.f32.xlu0 %v8535
      %v8537 = vpop.xlane.xlu0 %8536
      %v8538 = vsel %vm3901, %v8516, 0.0
      %8539 = vadd.xlane.f32.xlu0 %v8538
      %v8540 = vpop.xlane.xlu0 %8539
      %v8541 = vmul.f32 %v8519, %v3926
      %v8542 = vmul.f32 %v8522, %v3926
      %v8543 = vmul.f32 %v8525, %v3926
      %v8544 = vmul.f32 %v8528, %v3926
      %v8545 = vmul.f32 %v8531, %v3926
      %v8546 = vmul.f32 %v8534, %v3926
      %v8547 = vmul.f32 %v8537, %v3926
      %v8548 = vmul.f32 %v8540, %v3926
      %v8549 = vadd.f32 %v8541, 1e-06
      %v8550 = vadd.f32 %v8542, 1e-06
      %v8551 = vadd.f32 %v8543, 1e-06
      %v8552 = vadd.f32 %v8544, 1e-06
      %v8553 = vadd.f32 %v8545, 1e-06
      %v8554 = vadd.f32 %v8546, 1e-06
      %v8555 = vadd.f32 %v8547, 1e-06
      %v8556 = vadd.f32 %v8548, 1e-06
      %v8557 = vrsqrt.pop %v8549
      %v8558 = vrsqrt.pop %v8550
      %v8559 = vrsqrt.pop %v8551
      %v8560 = vrsqrt.pop %v8552
      %v8561 = vrsqrt.pop %v8553
      %v8562 = vrsqrt.pop %v8554
      %v8563 = vrsqrt.pop %v8555
      %v8564 = vrsqrt.pop %v8556
      %v8565 = vmul.f32 %v8501, %v8557
      %v8566 = vmul.f32 %v8502, %v8558
      %v8567 = vmul.f32 %v8503, %v8559
      %v8568 = vmul.f32 %v8504, %v8560
      %v8569 = vmul.f32 %v8505, %v8561
      %v8570 = vmul.f32 %v8506, %v8562
      %v8571 = vmul.f32 %v8507, %v8563
      %v8572 = vmul.f32 %v8508, %v8564
      %v8573 = vmul.f32 %v8565, %v4750
      %v8574 = vmul.f32 %v8566, %v4750
      %v8575 = vmul.f32 %v8567, %v4750
      %v8576 = vmul.f32 %v8568, %v4750
      %v8577 = vmul.f32 %v8569, %v4750
      %v8578 = vmul.f32 %v8570, %v4750
      %v8579 = vmul.f32 %v8571, %v4750
      %v8580 = vmul.f32 %v8572, %v4750
      %8589 = vrot.lane.b32.xlu0 %v8573, 48
      %v8590 = vpop.permute.xlu0 %8589
      %8591 = vrot.lane.b32.xlu0 %v8574, 48
      %v8592 = vpop.permute.xlu0 %8591
      %8593 = vrot.lane.b32.xlu0 %v8575, 48
      %v8594 = vpop.permute.xlu0 %8593
      %8595 = vrot.lane.b32.xlu0 %v8576, 48
      %v8596 = vpop.permute.xlu0 %8595
      %8597 = vrot.lane.b32.xlu0 %v8577, 48
      %v8598 = vpop.permute.xlu0 %8597
      %8599 = vrot.lane.b32.xlu0 %v8578, 48
      %v8600 = vpop.permute.xlu0 %8599
      %8601 = vrot.lane.b32.xlu0 %v8579, 48
      %v8602 = vpop.permute.xlu0 %8601
      %8603 = vrot.lane.b32.xlu0 %v8580, 48
      %v8604 = vpop.permute.xlu0 %8603
      %v8613 = vmul.f32 %v7880, %v8590
      %v8614 = vmul.f32 %v7882, %v8592
      %v8615 = vmul.f32 %v7884, %v8594
      %v8616 = vmul.f32 %v7886, %v8596
      %v8617 = vmul.f32 %v7888, %v8598
      %v8618 = vmul.f32 %v7890, %v8600
      %v8619 = vmul.f32 %v7892, %v8602
      %v8620 = vmul.f32 %v7894, %v8604
      %8629 = vrot.lane.b32.xlu0 %v8613, 80
      %v8630 = vpop.permute.xlu0 %8629
      %8631 = vrot.lane.b32.xlu0 %v8614, 80
      %v8632 = vpop.permute.xlu0 %8631
      %8633 = vrot.lane.b32.xlu0 %v8615, 80
      %v8634 = vpop.permute.xlu0 %8633
      %8635 = vrot.lane.b32.xlu0 %v8616, 80
      %v8636 = vpop.permute.xlu0 %8635
      %8637 = vrot.lane.b32.xlu0 %v8617, 80
      %v8638 = vpop.permute.xlu0 %8637
      %8639 = vrot.lane.b32.xlu0 %v8618, 80
      %v8640 = vpop.permute.xlu0 %8639
      %8641 = vrot.lane.b32.xlu0 %v8619, 80
      %v8642 = vpop.permute.xlu0 %8641
      %8643 = vrot.lane.b32.xlu0 %v8620, 80
      %v8644 = vpop.permute.xlu0 %8643
      %v8645 = vsel %vm3901, %v8630, 0
      %v8647 = vsel %vm3901, %v8632, 0
      %v8649 = vsel %vm3901, %v8634, 0
      %v8651 = vsel %vm3901, %v8636, 0
      %v8653 = vsel %vm3901, %v8638, 0
      %v8655 = vsel %vm3901, %v8640, 0
      %v8657 = vsel %vm3901, %v8642, 0
      %v8659 = vsel %vm3901, %v8644, 0
      %8661 = vmatprep.subr.mxu0 0.0
      %8662 = vmatpush1.msra.mxu0 %v4799
      %8663 = vmatprep.subr.mxu0 0.0
      %8664 = vmatpush1.msra.mxu0 %v4800
      %8665 = vmatprep.subr.mxu0 0.0
      %8666 = vmatpush1.msra.mxu0 0.0
      %8667 = vmatprep.subr.mxu0 0.0
      %8668 = vmatpush1.msra.mxu0 0.0
      %8669 = vmatprep.subr.mxu0 0.0
      %8670 = vmatpush1.msra.mxu0 0.0
      %8671 = vmatprep.subr.mxu0 0.0
      %8672 = vmatpush1.msra.mxu0 0.0
      %8673 = vmatprep.subr.mxu0 0.0
      %8674 = vmatpush1.msra.mxu0 0.0
      %8675 = vmatprep.subr.mxu0 0.0
      %8676 = vmatpush1.msra.mxu0 0.0
      %8677 = vmatprep.subr.mxu0 0.0
      %8678 = vmatpush1.msra.mxu0 0.0
      %8679 = vmatprep.subr.mxu0 0.0
      %8680 = vmatpush1.msra.mxu0 0.0
      %8681 = vmatprep.subr.mxu0 0.0
      %8682 = vmatpush1.msra.mxu0 0.0
      %8683 = vmatprep.subr.mxu0 0.0
      %8684 = vmatpush1.msra.mxu0 0.0
      %8685 = vmatprep.subr.mxu0 0.0
      %8686 = vmatpush1.msra.mxu0 0.0
      %8687 = vmatprep.subr.mxu0 0.0
      %8688 = vmatpush1.msra.mxu0 0.0
      %8689 = vmatprep.subr.mxu0 0.0
      %8690 = vmatpush1.msra.mxu0 0.0
      %8691 = vmatprep.subr.mxu0 0.0
      %8692 = vmatpush1.msra.mxu0 0.0
      %8693 = vmatprep.subr.mxu0 0.0
      %8694 = vmatpush1.msra.mxu0 0.0
      %8695 = vmatprep.subr.mxu0 0.0
      %8696 = vmatpush1.msra.mxu0 0.0
      %8697 = vmatprep.subr.mxu0 0.0
      %8698 = vmatpush1.msra.mxu0 0.0
      %8699 = vmatprep.subr.mxu0 0.0
      %8700 = vmatpush1.msra.mxu0 0.0
      %8701 = vmatprep.subr.mxu0 0.0
      %8702 = vmatpush1.msra.mxu0 0.0
      %8703 = vmatprep.subr.mxu0 0.0
      %8704 = vmatpush1.msra.mxu0 0.0
      %8705 = vmatprep.subr.mxu0 0.0
      %8706 = vmatpush1.msra.mxu0 0.0
      %8707 = vmatprep.subr.mxu0 0.0
      %8708 = vmatpush1.msra.mxu0 0.0
      %8709 = vmatprep.subr.mxu0 0.0
      %8710 = vmatpush1.msra.mxu0 0.0
      %8711 = vmatprep.subr.mxu0 0.0
      %8712 = vmatpush1.msra.mxu0 0.0
      %8713 = vmatprep.subr.mxu0 0.0
      %8714 = vmatpush1.msra.mxu0 0.0
      %8715 = vmatprep.subr.mxu0 0.0
      %8716 = vmatpush1.msra.mxu0 0.0
      %8717 = vmatprep.subr.mxu0 0.0
      %8718 = vmatpush1.msra.mxu0 0.0
      %8719 = vmatprep.subr.mxu0 0.0
      %8720 = vmatpush1.msra.mxu0 0.0
      %8721 = vmatprep.subr.mxu0 0.0
      %8722 = vmatpush1.msra.mxu0 0.0
      %8723 = vmatprep.subr.mxu0 0.0
      %8724 = vmatpush1.msra.mxu0 0.0
      %8725 = vmatprep.mubr.f32.mxu0 0.0
      %8726 = vmatmul.mubr.f32.gmra.mrb[0].mxu0 %v8645
      %v8727 = vpop.f32.mrb[0].mxu0
      %v8728 = vadd.f32 0.0, %v8727
      %v8729 = vpop.f32.mrb[0].mxu0
      %8730 = vmatprep.mubr.f32.mxu0 0.0
      %8731 = vmatmul.mubr.f32.gmra.mrb[0].mxu0 %v8647
      %v8732 = vpop.f32.mrb[0].mxu0
      %v8733 = vadd.f32 0.0, %v8732
      %v8734 = vpop.f32.mrb[0].mxu0
      %8735 = vmatprep.mubr.f32.mxu0 0.0
      %8736 = vmatmul.mubr.f32.gmra.mrb[0].mxu0 %v8649
      %v8737 = vpop.f32.mrb[0].mxu0
      %v8738 = vadd.f32 0.0, %v8737
      %v8739 = vpop.f32.mrb[0].mxu0
      %8740 = vmatprep.mubr.f32.mxu0 0.0
      %8741 = vmatmul.mubr.f32.gmra.mrb[0].mxu0 %v8651
      %v8742 = vpop.f32.mrb[0].mxu0
      %v8743 = vadd.f32 0.0, %v8742
      %v8744 = vpop.f32.mrb[0].mxu0
      %8745 = vmatprep.mubr.f32.mxu0 0.0
      %8746 = vmatmul.mubr.f32.gmra.mrb[0].mxu0 %v8653
      %v8747 = vpop.f32.mrb[0].mxu0
      %v8748 = vadd.f32 0.0, %v8747
      %v8749 = vpop.f32.mrb[0].mxu0
      %8750 = vmatprep.mubr.f32.mxu0 0.0
      %8751 = vmatmul.mubr.f32.gmra.mrb[0].mxu0 %v8655
      %v8752 = vpop.f32.mrb[0].mxu0
      %v8753 = vadd.f32 0.0, %v8752
      %v8754 = vpop.f32.mrb[0].mxu0
      %8755 = vmatprep.mubr.f32.mxu0 0.0
      %8756 = vmatmul.mubr.f32.gmra.mrb[0].mxu0 %v8657
      %v8757 = vpop.f32.mrb[0].mxu0
      %v8758 = vadd.f32 0.0, %v8757
      %v8759 = vpop.f32.mrb[0].mxu0
      %8760 = vmatprep.mubr.f32.mxu0 0.0
      %8761 = vmatmul.mubr.f32.gmra.mrb[0].mxu0 %v8659
      %v8762 = vpop.f32.mrb[0].mxu0
      %v8763 = vadd.f32 0.0, %v8762
      %v8764 = vpop.f32.mrb[0].mxu0
      %8765 = vdwg.mxu0
      %8774 = vrot.lane.b32.xlu0 %v7927, 96
      %v8775 = vpop.permute.xlu0 %8774
      %8776 = vrot.lane.b32.xlu0 %v7928, 96
      %v8777 = vpop.permute.xlu0 %8776
      %8778 = vrot.lane.b32.xlu0 %v7929, 96
      %v8779 = vpop.permute.xlu0 %8778
      %8780 = vrot.lane.b32.xlu0 %v7930, 96
      %v8781 = vpop.permute.xlu0 %8780
      %8782 = vrot.lane.b32.xlu0 %v7931, 96
      %v8783 = vpop.permute.xlu0 %8782
      %8784 = vrot.lane.b32.xlu0 %v7932, 96
      %v8785 = vpop.permute.xlu0 %8784
      %8786 = vrot.lane.b32.xlu0 %v7933, 96
      %v8787 = vpop.permute.xlu0 %8786
      %8788 = vrot.lane.b32.xlu0 %v7934, 96
      %v8789 = vpop.permute.xlu0 %8788
      %v8790 = vsel %vm3901, %v8775, 0
      %v8792 = vsel %vm3901, %v8777, 0
      %v8794 = vsel %vm3901, %v8779, 0
      %v8796 = vsel %vm3901, %v8781, 0
      %v8798 = vsel %vm3901, %v8783, 0
      %v8800 = vsel %vm3901, %v8785, 0
      %v8802 = vsel %vm3901, %v8787, 0
      %v8804 = vsel %vm3901, %v8789, 0
      %8806 = vmatprep.subr.mxu0 0.0
      %8807 = vmatpush1.msra.mxu0 %v4107
      %8808 = vmatprep.subr.mxu0 0.0
      %8809 = vmatpush1.msra.mxu0 %v4108
      %8810 = vmatprep.subr.mxu0 0.0
      %8811 = vmatpush1.msra.mxu0 0.0
      %8812 = vmatprep.subr.mxu0 0.0
      %8813 = vmatpush1.msra.mxu0 0.0
      %8814 = vmatprep.subr.mxu0 0.0
      %8815 = vmatpush1.msra.mxu0 0.0
      %8816 = vmatprep.subr.mxu0 0.0
      %8817 = vmatpush1.msra.mxu0 0.0
      %8818 = vmatprep.subr.mxu0 0.0
      %8819 = vmatpush1.msra.mxu0 0.0
      %8820 = vmatprep.subr.mxu0 0.0
      %8821 = vmatpush1.msra.mxu0 0.0
      %8822 = vmatprep.subr.mxu0 0.0
      %8823 = vmatpush1.msra.mxu0 0.0
      %8824 = vmatprep.subr.mxu0 0.0
      %8825 = vmatpush1.msra.mxu0 0.0
      %8826 = vmatprep.subr.mxu0 0.0
      %8827 = vmatpush1.msra.mxu0 0.0
      %8828 = vmatprep.subr.mxu0 0.0
      %8829 = vmatpush1.msra.mxu0 0.0
      %8830 = vmatprep.subr.mxu0 0.0
      %8831 = vmatpush1.msra.mxu0 0.0
      %8832 = vmatprep.subr.mxu0 0.0
      %8833 = vmatpush1.msra.mxu0 0.0
      %8834 = vmatprep.subr.mxu0 0.0
      %8835 = vmatpush1.msra.mxu0 0.0
      %8836 = vmatprep.subr.mxu0 0.0
      %8837 = vmatpush1.msra.mxu0 0.0
      %8838 = vmatprep.subr.mxu0 0.0
      %8839 = vmatpush1.msra.mxu0 0.0
      %8840 = vmatprep.subr.mxu0 0.0
      %8841 = vmatpush1.msra.mxu0 0.0
      %8842 = vmatprep.subr.mxu0 0.0
      %8843 = vmatpush1.msra.mxu0 0.0
      %8844 = vmatprep.subr.mxu0 0.0
      %8845 = vmatpush1.msra.mxu0 0.0
      %8846 = vmatprep.subr.mxu0 0.0
      %8847 = vmatpush1.msra.mxu0 0.0
      %8848 = vmatprep.subr.mxu0 0.0
      %8849 = vmatpush1.msra.mxu0 0.0
      %8850 = vmatprep.subr.mxu0 0.0
      %8851 = vmatpush1.msra.mxu0 0.0
      %8852 = vmatprep.subr.mxu0 0.0
      %8853 = vmatpush1.msra.mxu0 0.0
      %8854 = vmatprep.subr.mxu0 0.0
      %8855 = vmatpush1.msra.mxu0 0.0
      %8856 = vmatprep.subr.mxu0 0.0
      %8857 = vmatpush1.msra.mxu0 0.0
      %8858 = vmatprep.subr.mxu0 0.0
      %8859 = vmatpush1.msra.mxu0 0.0
      %8860 = vmatprep.subr.mxu0 0.0
      %8861 = vmatpush1.msra.mxu0 0.0
      %8862 = vmatprep.subr.mxu0 0.0
      %8863 = vmatpush1.msra.mxu0 0.0
      %8864 = vmatprep.subr.mxu0 0.0
      %8865 = vmatpush1.msra.mxu0 0.0
      %8866 = vmatprep.subr.mxu0 0.0
      %8867 = vmatpush1.msra.mxu0 0.0
      %8868 = vmatprep.subr.mxu0 0.0
      %8869 = vmatpush1.msra.mxu0 0.0
      %8870 = vmatprep.mubr.f32.mxu0 0.0
      %8871 = vmatmul.mubr.f32.gmra.mrb[0].mxu0 %v8790
      %v8872 = vpop.f32.mrb[0].mxu0
      %v8873 = vadd.f32 %v8728, %v8872
      %v8874 = vpop.f32.mrb[0].mxu0
      %8875 = vmatprep.mubr.f32.mxu0 0.0
      %8876 = vmatmul.mubr.f32.gmra.mrb[0].mxu0 %v8792
      %v8877 = vpop.f32.mrb[0].mxu0
      %v8878 = vadd.f32 %v8733, %v8877
      %v8879 = vpop.f32.mrb[0].mxu0
      %8880 = vmatprep.mubr.f32.mxu0 0.0
      %8881 = vmatmul.mubr.f32.gmra.mrb[0].mxu0 %v8794
      %v8882 = vpop.f32.mrb[0].mxu0
      %v8883 = vadd.f32 %v8738, %v8882
      %v8884 = vpop.f32.mrb[0].mxu0
      %8885 = vmatprep.mubr.f32.mxu0 0.0
      %8886 = vmatmul.mubr.f32.gmra.mrb[0].mxu0 %v8796
      %v8887 = vpop.f32.mrb[0].mxu0
      %v8888 = vadd.f32 %v8743, %v8887
      %v8889 = vpop.f32.mrb[0].mxu0
      %8890 = vmatprep.mubr.f32.mxu0 0.0
      %8891 = vmatmul.mubr.f32.gmra.mrb[0].mxu0 %v8798
      %v8892 = vpop.f32.mrb[0].mxu0
      %v8893 = vadd.f32 %v8748, %v8892
      %v8894 = vpop.f32.mrb[0].mxu0
      %8895 = vmatprep.mubr.f32.mxu0 0.0
      %8896 = vmatmul.mubr.f32.gmra.mrb[0].mxu0 %v8800
      %v8897 = vpop.f32.mrb[0].mxu0
      %v8898 = vadd.f32 %v8753, %v8897
      %v8899 = vpop.f32.mrb[0].mxu0
      %8900 = vmatprep.mubr.f32.mxu0 0.0
      %8901 = vmatmul.mubr.f32.gmra.mrb[0].mxu0 %v8802
      %v8902 = vpop.f32.mrb[0].mxu0
      %v8903 = vadd.f32 %v8758, %v8902
      %v8904 = vpop.f32.mrb[0].mxu0
      %8905 = vmatprep.mubr.f32.mxu0 0.0
      %8906 = vmatmul.mubr.f32.gmra.mrb[0].mxu0 %v8804
      %v8907 = vpop.f32.mrb[0].mxu0
      %v8908 = vadd.f32 %v8763, %v8907
      %v8909 = vpop.f32.mrb[0].mxu0
      %8910 = vdwg.mxu0
      %8911 = vrot.lane.b32.xlu0 %v3174, 64
      %v8912 = vpop.permute.xlu0 %8911
      %v8913 = vsel %vm1285, %v8912, 0
      %8915 = vmatprep.subr.mxu0 0.0
      %8916 = vmatpush1.xpose.msra.mxu0 %v8913
      %8917 = vmatprep.subr.mxu0 0.0
      %8918 = vmatpush1.xpose.msra.mxu0 0.0
      %8919 = vmatprep.subr.mxu0 0.0
      %8920 = vmatpush1.xpose.msra.mxu0 0.0
      %8921 = vmatprep.subr.mxu0 0.0
      %8922 = vmatpush1.xpose.msra.mxu0 0.0
      %8923 = vmatprep.subr.mxu0 0.0
      %8924 = vmatpush1.xpose.msra.mxu0 0.0
      %8925 = vmatprep.subr.mxu0 0.0
      %8926 = vmatpush1.xpose.msra.mxu0 0.0
      %8927 = vmatprep.subr.mxu0 0.0
      %8928 = vmatpush1.xpose.msra.mxu0 0.0
      %8929 = vmatprep.subr.mxu0 0.0
      %8930 = vmatpush1.xpose.msra.mxu0 0.0
      %8931 = vmatprep.subr.mxu0 0.0
      %8932 = vmatpush1.xpose.msra.mxu0 0.0
      %8933 = vmatprep.subr.mxu0 0.0
      %8934 = vmatpush1.xpose.msra.mxu0 0.0
      %8935 = vmatprep.subr.mxu0 0.0
      %8936 = vmatpush1.xpose.msra.mxu0 0.0
      %8937 = vmatprep.subr.mxu0 0.0
      %8938 = vmatpush1.xpose.msra.mxu0 0.0
      %8939 = vmatprep.subr.mxu0 0.0
      %8940 = vmatpush1.xpose.msra.mxu0 0.0
      %8941 = vmatprep.subr.mxu0 0.0
      %8942 = vmatpush1.xpose.msra.mxu0 0.0
      %8943 = vmatprep.subr.mxu0 0.0
      %8944 = vmatpush1.xpose.msra.mxu0 0.0
      %8945 = vmatprep.subr.mxu0 0.0
      %8946 = vmatpush1.xpose.msra.mxu0 0.0
      %8947 = vmatprep.subr.mxu0 0.0
      %8948 = vmatpush1.xpose.msra.mxu0 0.0
      %8949 = vmatprep.subr.mxu0 0.0
      %8950 = vmatpush1.xpose.msra.mxu0 0.0
      %8951 = vmatprep.subr.mxu0 0.0
      %8952 = vmatpush1.xpose.msra.mxu0 0.0
      %8953 = vmatprep.subr.mxu0 0.0
      %8954 = vmatpush1.xpose.msra.mxu0 0.0
      %8955 = vmatprep.subr.mxu0 0.0
      %8956 = vmatpush1.xpose.msra.mxu0 0.0
      %8957 = vmatprep.subr.mxu0 0.0
      %8958 = vmatpush1.xpose.msra.mxu0 0.0
      %8959 = vmatprep.subr.mxu0 0.0
      %8960 = vmatpush1.xpose.msra.mxu0 0.0
      %8961 = vmatprep.subr.mxu0 0.0
      %8962 = vmatpush1.xpose.msra.mxu0 0.0
      %8963 = vmatprep.subr.mxu0 0.0
      %8964 = vmatpush1.xpose.msra.mxu0 0.0
      %8965 = vmatprep.subr.mxu0 0.0
      %8966 = vmatpush1.xpose.msra.mxu0 0.0
      %8967 = vmatprep.subr.mxu0 0.0
      %8968 = vmatpush1.xpose.msra.mxu0 0.0
      %8969 = vmatprep.subr.mxu0 0.0
      %8970 = vmatpush1.xpose.msra.mxu0 0.0
      %8971 = vmatprep.subr.mxu0 0.0
      %8972 = vmatpush1.xpose.msra.mxu0 0.0
      %8973 = vmatprep.subr.mxu0 0.0
      %8974 = vmatpush1.xpose.msra.mxu0 0.0
      %8975 = vmatprep.subr.mxu0 0.0
      %8976 = vmatpush1.xpose.msra.mxu0 0.0
      %8977 = vmatprep.subr.mxu0 0.0
      %8978 = vmatpush1.xpose.msra.mxu0 0.0
      %8979 = vmatprep.mubr.f32.mxu0 0.0
      %8980 = vmatmul.mubr.f32.gmra.mrb[0].mxu0 %v3193
      %v8981 = vpop.f32.mrb[0].mxu0
      %v8982 = vadd.f32 0.0, %v8981
      %v8983 = vpop.f32.mrb[0].mxu0
      %8984 = vmatprep.mubr.f32.mxu0 0.0
      %8985 = vmatmul.mubr.f32.gmra.mrb[0].mxu0 %v3196
      %v8986 = vpop.f32.mrb[0].mxu0
      %v8987 = vadd.f32 0.0, %v8986
      %v8988 = vpop.f32.mrb[0].mxu0
      %8989 = vmatprep.mubr.f32.mxu0 0.0
      %8990 = vmatmul.mubr.f32.gmra.mrb[0].mxu0 %v3199
      %v8991 = vpop.f32.mrb[0].mxu0
      %v8992 = vadd.f32 0.0, %v8991
      %v8993 = vpop.f32.mrb[0].mxu0
      %8994 = vmatprep.mubr.f32.mxu0 0.0
      %8995 = vmatmul.mubr.f32.gmra.mrb[0].mxu0 %v3202
      %v8996 = vpop.f32.mrb[0].mxu0
      %v8997 = vadd.f32 0.0, %v8996
      %v8998 = vpop.f32.mrb[0].mxu0
      %8999 = vmatprep.mubr.f32.mxu0 0.0
      %9000 = vmatmul.mubr.f32.gmra.mrb[0].mxu0 %v3205
      %v9001 = vpop.f32.mrb[0].mxu0
      %v9002 = vadd.f32 0.0, %v9001
      %v9003 = vpop.f32.mrb[0].mxu0
      %9004 = vmatprep.mubr.f32.mxu0 0.0
      %9005 = vmatmul.mubr.f32.gmra.mrb[0].mxu0 %v3208
      %v9006 = vpop.f32.mrb[0].mxu0
      %v9007 = vadd.f32 0.0, %v9006
      %v9008 = vpop.f32.mrb[0].mxu0
      %9009 = vmatprep.mubr.f32.mxu0 0.0
      %9010 = vmatmul.mubr.f32.gmra.mrb[0].mxu0 %v3211
      %v9011 = vpop.f32.mrb[0].mxu0
      %v9012 = vadd.f32 0.0, %v9011
      %v9013 = vpop.f32.mrb[0].mxu0
      %9014 = vmatprep.mubr.f32.mxu0 0.0
      %9015 = vmatmul.mubr.f32.gmra.mrb[0].mxu0 %v3214
      %v9016 = vpop.f32.mrb[0].mxu0
      %v9017 = vadd.f32 0.0, %v9016
      %v9018 = vpop.f32.mrb[0].mxu0
      %9019 = vdwg.mxu0
      %9020 = vmatprep.subr.mxu0 0.0
      %9021 = vmatpush1.xpose.msra.mxu0 %v3193
      %9022 = vmatprep.subr.mxu0 0.0
      %9023 = vmatpush1.xpose.msra.mxu0 %v3196
      %9024 = vmatprep.subr.mxu0 0.0
      %9025 = vmatpush1.xpose.msra.mxu0 %v3199
      %9026 = vmatprep.subr.mxu0 0.0
      %9027 = vmatpush1.xpose.msra.mxu0 %v3202
      %9028 = vmatprep.subr.mxu0 0.0
      %9029 = vmatpush1.xpose.msra.mxu0 %v3205
      %9030 = vmatprep.subr.mxu0 0.0
      %9031 = vmatpush1.xpose.msra.mxu0 %v3208
      %9032 = vmatprep.subr.mxu0 0.0
      %9033 = vmatpush1.xpose.msra.mxu0 %v3211
      %9034 = vmatprep.subr.mxu0 0.0
      %9035 = vmatpush1.xpose.msra.mxu0 %v3214
      %9036 = vmatprep.subr.mxu0 0.0
      %9037 = vmatpush1.xpose.msra.mxu0 0.0
      %9038 = vmatprep.subr.mxu0 0.0
      %9039 = vmatpush1.xpose.msra.mxu0 0.0
      %9040 = vmatprep.subr.mxu0 0.0
      %9041 = vmatpush1.xpose.msra.mxu0 0.0
      %9042 = vmatprep.subr.mxu0 0.0
      %9043 = vmatpush1.xpose.msra.mxu0 0.0
      %9044 = vmatprep.subr.mxu0 0.0
      %9045 = vmatpush1.xpose.msra.mxu0 0.0
      %9046 = vmatprep.subr.mxu0 0.0
      %9047 = vmatpush1.xpose.msra.mxu0 0.0
      %9048 = vmatprep.subr.mxu0 0.0
      %9049 = vmatpush1.xpose.msra.mxu0 0.0
      %9050 = vmatprep.subr.mxu0 0.0
      %9051 = vmatpush1.xpose.msra.mxu0 0.0
      %9052 = vmatprep.subr.mxu0 0.0
      %9053 = vmatpush1.xpose.msra.mxu0 0.0
      %9054 = vmatprep.subr.mxu0 0.0
      %9055 = vmatpush1.xpose.msra.mxu0 0.0
      %9056 = vmatprep.subr.mxu0 0.0
      %9057 = vmatpush1.xpose.msra.mxu0 0.0
      %9058 = vmatprep.subr.mxu0 0.0
      %9059 = vmatpush1.xpose.msra.mxu0 0.0
      %9060 = vmatprep.subr.mxu0 0.0
      %9061 = vmatpush1.xpose.msra.mxu0 0.0
      %9062 = vmatprep.subr.mxu0 0.0
      %9063 = vmatpush1.xpose.msra.mxu0 0.0
      %9064 = vmatprep.subr.mxu0 0.0
      %9065 = vmatpush1.xpose.msra.mxu0 0.0
      %9066 = vmatprep.subr.mxu0 0.0
      %9067 = vmatpush1.xpose.msra.mxu0 0.0
      %9068 = vmatprep.subr.mxu0 0.0
      %9069 = vmatpush1.xpose.msra.mxu0 0.0
      %9070 = vmatprep.subr.mxu0 0.0
      %9071 = vmatpush1.xpose.msra.mxu0 0.0
      %9072 = vmatprep.subr.mxu0 0.0
      %9073 = vmatpush1.xpose.msra.mxu0 0.0
      %9074 = vmatprep.subr.mxu0 0.0
      %9075 = vmatpush1.xpose.msra.mxu0 0.0
      %9076 = vmatprep.subr.mxu0 0.0
      %9077 = vmatpush1.xpose.msra.mxu0 0.0
      %9078 = vmatprep.subr.mxu0 0.0
      %9079 = vmatpush1.xpose.msra.mxu0 0.0
      %9080 = vmatprep.subr.mxu0 0.0
      %9081 = vmatpush1.xpose.msra.mxu0 0.0
      %9082 = vmatprep.subr.mxu0 0.0
      %9083 = vmatpush1.xpose.msra.mxu0 0.0
      %9084 = vmatprep.mubr.f32.mxu0 0.0
      %9085 = vmatmul.mubr.f32.gmra.mrb[0].mxu0 %v8913
      %v9086 = vpop.f32.mrb[0].mxu0
      %v9087 = vadd.f32 0.0, %v9086
      %v9088 = vpop.f32.mrb[0].mxu0
      %9089 = vdwg.mxu0
      %v9091 = vrot.slane %v9087, 2
      %9092 = vrot.lane.b32.xlu0 %v9091, 64
      %v9093 = vpop.permute.xlu0 %9092
      %v9095 = vsub.f32 %v3156, %v9093
      %9097 = vset.pattern.permute.xlu0 2
      %9098 = vperm.xlu0 %9097, %v8982
      %v9099 = vpop.permute.xlu0 %9098
      %9102 = vset.pattern.permute.xlu0 2
      %9103 = vperm.xlu0 %9102, %v8987
      %v9104 = vpop.permute.xlu0 %9103
      %9107 = vset.pattern.permute.xlu0 2
      %9108 = vperm.xlu0 %9107, %v8992
      %v9109 = vpop.permute.xlu0 %9108
      %9112 = vset.pattern.permute.xlu0 2
      %9113 = vperm.xlu0 %9112, %v8997
      %v9114 = vpop.permute.xlu0 %9113
      %9117 = vset.pattern.permute.xlu0 2
      %9118 = vperm.xlu0 %9117, %v9002
      %v9119 = vpop.permute.xlu0 %9118
      %9122 = vset.pattern.permute.xlu0 2
      %9123 = vperm.xlu0 %9122, %v9007
      %v9124 = vpop.permute.xlu0 %9123
      %9127 = vset.pattern.permute.xlu0 2
      %9128 = vperm.xlu0 %9127, %v9012
      %v9129 = vpop.permute.xlu0 %9128
      %9132 = vset.pattern.permute.xlu0 2
      %9133 = vperm.xlu0 %9132, %v9017
      %v9134 = vpop.permute.xlu0 %9133
      %v9136 = vlaneseq
      %v9137 = vshrl.u32 %v9136, 7
      %v9138 = vsub.s32 0, %v9137
      %v9139 = vrot.slane %v9095, %v9138
      %v9140 = vadd.f32 %v9099, %v9139
      %v9141 = vadd.f32 %v9104, %v9139
      %v9142 = vadd.f32 %v9109, %v9139
      %v9143 = vadd.f32 %v9114, %v9139
      %v9144 = vadd.f32 %v9119, %v9139
      %v9145 = vadd.f32 %v9124, %v9139
      %v9146 = vadd.f32 %v9129, %v9139
      %v9147 = vadd.f32 %v9134, %v9139
      %v9148 = vadd.f32 %v9140, %v5337
      %v9149 = vadd.f32 %v9141, %v5339
      %v9150 = vadd.f32 %v9142, %v5341
      %v9151 = vadd.f32 %v9143, %v5343
      %v9152 = vadd.f32 %v9144, %v5345
      %v9153 = vadd.f32 %v9145, %v5347
      %v9154 = vadd.f32 %v9146, %v5349
      %v9155 = vadd.f32 %v9147, %v5351
      %v9156 = vsel %vm5368, %v9148, -inf
      %9157 = vmax.xlane.f32.xlu0 %v9156
      %v9158 = vpop.xlane.xlu0 %9157
      %v9159 = vsel %vm5368, %v9149, -inf
      %9160 = vmax.xlane.f32.xlu0 %v9159
      %v9161 = vpop.xlane.xlu0 %9160
      %v9162 = vsel %vm5368, %v9150, -inf
      %9163 = vmax.xlane.f32.xlu0 %v9162
      %v9164 = vpop.xlane.xlu0 %9163
      %v9165 = vsel %vm5368, %v9151, -inf
      %9166 = vmax.xlane.f32.xlu0 %v9165
      %v9167 = vpop.xlane.xlu0 %9166
      %v9168 = vsel %vm5368, %v9152, -inf
      %9169 = vmax.xlane.f32.xlu0 %v9168
      %v9170 = vpop.xlane.xlu0 %9169
      %v9171 = vsel %vm5368, %v9153, -inf
      %9172 = vmax.xlane.f32.xlu0 %v9171
      %v9173 = vpop.xlane.xlu0 %9172
      %v9174 = vsel %vm5368, %v9154, -inf
      %9175 = vmax.xlane.f32.xlu0 %v9174
      %v9176 = vpop.xlane.xlu0 %9175
      %v9177 = vsel %vm5368, %v9155, -inf
      %9178 = vmax.xlane.f32.xlu0 %v9177
      %v9179 = vpop.xlane.xlu0 %9178
      %v9180 = vsub.f32 %v9148, %v9158
      %v9181 = vsub.f32 %v9149, %v9161
      %v9182 = vsub.f32 %v9150, %v9164
      %v9183 = vsub.f32 %v9151, %v9167
      %v9184 = vsub.f32 %v9152, %v9170
      %v9185 = vsub.f32 %v9153, %v9173
      %v9186 = vsub.f32 %v9154, %v9176
      %v9187 = vsub.f32 %v9155, %v9179
      %v9188 = vmul.f32 %v9180, 1.442695
      %v9189 = vpow.pop %v9188
      %v9190 = vmul.f32 %v9181, 1.442695
      %v9191 = vpow.pop %v9190
      %v9192 = vmul.f32 %v9182, 1.442695
      %v9193 = vpow.pop %v9192
      %v9194 = vmul.f32 %v9183, 1.442695
      %v9195 = vpow.pop %v9194
      %v9196 = vmul.f32 %v9184, 1.442695
      %v9197 = vpow.pop %v9196
      %v9198 = vmul.f32 %v9185, 1.442695
      %v9199 = vpow.pop %v9198
      %v9200 = vmul.f32 %v9186, 1.442695
      %v9201 = vpow.pop %v9200
      %v9202 = vmul.f32 %v9187, 1.442695
      %v9203 = vpow.pop %v9202
      %9212 = vrot.lane.b32.xlu0 %v2739, 112
      %v9213 = vpop.permute.xlu0 %9212
      %9214 = vrot.lane.b32.xlu0 %v2744, 112
      %v9215 = vpop.permute.xlu0 %9214
      %9216 = vrot.lane.b32.xlu0 %v2749, 112
      %v9217 = vpop.permute.xlu0 %9216
      %9218 = vrot.lane.b32.xlu0 %v2754, 112
      %v9219 = vpop.permute.xlu0 %9218
      %9220 = vrot.lane.b32.xlu0 %v2759, 112
      %v9221 = vpop.permute.xlu0 %9220
      %9222 = vrot.lane.b32.xlu0 %v2764, 112
      %v9223 = vpop.permute.xlu0 %9222
      %9224 = vrot.lane.b32.xlu0 %v2769, 112
      %v9225 = vpop.permute.xlu0 %9224
      %9226 = vrot.lane.b32.xlu0 %v2774, 112
      %v9227 = vpop.permute.xlu0 %9226
      %v9228 = vsel %vm3530, %v2739, 0
      %v9230 = vsel %vm3530, %v2744, 0
      %v9232 = vsel %vm3530, %v2749, 0
      %v9234 = vsel %vm3530, %v2754, 0
      %v9236 = vsel %vm3530, %v2759, 0
      %v9238 = vsel %vm3530, %v2764, 0
      %v9240 = vsel %vm3530, %v2769, 0
      %v9242 = vsel %vm3530, %v2774, 0
      %v9244 = vsel %vm3530, %v9213, 0
      %v9246 = vsel %vm3530, %v9215, 0
      %v9248 = vsel %vm3530, %v9217, 0
      %v9250 = vsel %vm3530, %v9219, 0
      %v9252 = vsel %vm3530, %v9221, 0
      %v9254 = vsel %vm3530, %v9223, 0
      %v9256 = vsel %vm3530, %v9225, 0
      %v9258 = vsel %vm3530, %v9227, 0
      %9260 = vmatprep.subr.mxu0 0.0
      %9261 = vmatpush1.xpose.msra.mxu0 %v9244
      %9262 = vmatprep.subr.mxu0 0.0
      %9263 = vmatpush1.xpose.msra.mxu0 %v9246
      %9264 = vmatprep.subr.mxu0 0.0
      %9265 = vmatpush1.xpose.msra.mxu0 %v9248
      %9266 = vmatprep.subr.mxu0 0.0
      %9267 = vmatpush1.xpose.msra.mxu0 %v9250
      %9268 = vmatprep.subr.mxu0 0.0
      %9269 = vmatpush1.xpose.msra.mxu0 %v9252
      %9270 = vmatprep.subr.mxu0 0.0
      %9271 = vmatpush1.xpose.msra.mxu0 %v9254
      %9272 = vmatprep.subr.mxu0 0.0
      %9273 = vmatpush1.xpose.msra.mxu0 %v9256
      %9274 = vmatprep.subr.mxu0 0.0
      %9275 = vmatpush1.xpose.msra.mxu0 %v9258
      %9276 = vmatprep.subr.mxu0 0.0
      %9277 = vmatpush1.xpose.msra.mxu0 0.0
      %9278 = vmatprep.subr.mxu0 0.0
      %9279 = vmatpush1.xpose.msra.mxu0 0.0
      %9280 = vmatprep.subr.mxu0 0.0
      %9281 = vmatpush1.xpose.msra.mxu0 0.0
      %9282 = vmatprep.subr.mxu0 0.0
      %9283 = vmatpush1.xpose.msra.mxu0 0.0
      %9284 = vmatprep.subr.mxu0 0.0
      %9285 = vmatpush1.xpose.msra.mxu0 0.0
      %9286 = vmatprep.subr.mxu0 0.0
      %9287 = vmatpush1.xpose.msra.mxu0 0.0
      %9288 = vmatprep.subr.mxu0 0.0
      %9289 = vmatpush1.xpose.msra.mxu0 0.0
      %9290 = vmatprep.subr.mxu0 0.0
      %9291 = vmatpush1.xpose.msra.mxu0 0.0
      %9292 = vmatprep.subr.mxu0 0.0
      %9293 = vmatpush1.xpose.msra.mxu0 0.0
      %9294 = vmatprep.subr.mxu0 0.0
      %9295 = vmatpush1.xpose.msra.mxu0 0.0
      %9296 = vmatprep.subr.mxu0 0.0
      %9297 = vmatpush1.xpose.msra.mxu0 0.0
      %9298 = vmatprep.subr.mxu0 0.0
      %9299 = vmatpush1.xpose.msra.mxu0 0.0
      %9300 = vmatprep.subr.mxu0 0.0
      %9301 = vmatpush1.xpose.msra.mxu0 0.0
      %9302 = vmatprep.subr.mxu0 0.0
      %9303 = vmatpush1.xpose.msra.mxu0 0.0
      %9304 = vmatprep.subr.mxu0 0.0
      %9305 = vmatpush1.xpose.msra.mxu0 0.0
      %9306 = vmatprep.subr.mxu0 0.0
      %9307 = vmatpush1.xpose.msra.mxu0 0.0
      %9308 = vmatprep.subr.mxu0 0.0
      %9309 = vmatpush1.xpose.msra.mxu0 0.0
      %9310 = vmatprep.subr.mxu0 0.0
      %9311 = vmatpush1.xpose.msra.mxu0 0.0
      %9312 = vmatprep.subr.mxu0 0.0
      %9313 = vmatpush1.xpose.msra.mxu0 0.0
      %9314 = vmatprep.subr.mxu0 0.0
      %9315 = vmatpush1.xpose.msra.mxu0 0.0
      %9316 = vmatprep.subr.mxu0 0.0
      %9317 = vmatpush1.xpose.msra.mxu0 0.0
      %9318 = vmatprep.subr.mxu0 0.0
      %9319 = vmatpush1.xpose.msra.mxu0 0.0
      %9320 = vmatprep.subr.mxu0 0.0
      %9321 = vmatpush1.xpose.msra.mxu0 0.0
      %9322 = vmatprep.subr.mxu0 0.0
      %9323 = vmatpush1.xpose.msra.mxu0 0.0
      %9324 = vmatprep.mubr.f32.mxu0 0.0
      %9325 = vmatmul.mubr.f32.gmra.mrb[0].mxu0 %v9228
      %v9326 = vpop.f32.mrb[0].mxu0
      %v9327 = vadd.f32 0.0, %v9326
      %v9328 = vpop.f32.mrb[0].mxu0
      %9329 = vmatprep.mubr.f32.mxu0 0.0
      %9330 = vmatmul.mubr.f32.gmra.mrb[0].mxu0 %v9230
      %v9331 = vpop.f32.mrb[0].mxu0
      %v9332 = vadd.f32 0.0, %v9331
      %v9333 = vpop.f32.mrb[0].mxu0
      %9334 = vmatprep.mubr.f32.mxu0 0.0
      %9335 = vmatmul.mubr.f32.gmra.mrb[0].mxu0 %v9232
      %v9336 = vpop.f32.mrb[0].mxu0
      %v9337 = vadd.f32 0.0, %v9336
      %v9338 = vpop.f32.mrb[0].mxu0
      %9339 = vmatprep.mubr.f32.mxu0 0.0
      %9340 = vmatmul.mubr.f32.gmra.mrb[0].mxu0 %v9234
      %v9341 = vpop.f32.mrb[0].mxu0
      %v9342 = vadd.f32 0.0, %v9341
      %v9343 = vpop.f32.mrb[0].mxu0
      %9344 = vmatprep.mubr.f32.mxu0 0.0
      %9345 = vmatmul.mubr.f32.gmra.mrb[0].mxu0 %v9236
      %v9346 = vpop.f32.mrb[0].mxu0
      %v9347 = vadd.f32 0.0, %v9346
      %v9348 = vpop.f32.mrb[0].mxu0
      %9349 = vmatprep.mubr.f32.mxu0 0.0
      %9350 = vmatmul.mubr.f32.gmra.mrb[0].mxu0 %v9238
      %v9351 = vpop.f32.mrb[0].mxu0
      %v9352 = vadd.f32 0.0, %v9351
      %v9353 = vpop.f32.mrb[0].mxu0
      %9354 = vmatprep.mubr.f32.mxu0 0.0
      %9355 = vmatmul.mubr.f32.gmra.mrb[0].mxu0 %v9240
      %v9356 = vpop.f32.mrb[0].mxu0
      %v9357 = vadd.f32 0.0, %v9356
      %v9358 = vpop.f32.mrb[0].mxu0
      %9359 = vmatprep.mubr.f32.mxu0 0.0
      %9360 = vmatmul.mubr.f32.gmra.mrb[0].mxu0 %v9242
      %v9361 = vpop.f32.mrb[0].mxu0
      %v9362 = vadd.f32 0.0, %v9361
      %v9363 = vpop.f32.mrb[0].mxu0
      %9364 = vdwg.mxu0
      %v9365 = vmul.f32 %v9327, 0.35355338
      %v9366 = vmul.f32 %v9332, 0.35355338
      %v9367 = vmul.f32 %v9337, 0.35355338
      %v9368 = vmul.f32 %v9342, 0.35355338
      %v9369 = vmul.f32 %v9347, 0.35355338
      %v9370 = vmul.f32 %v9352, 0.35355338
      %v9371 = vmul.f32 %v9357, 0.35355338
      %v9372 = vmul.f32 %v9362, 0.35355338
      %9381 = vrot.lane.b32.xlu0 %v9189, 64
      %v9382 = vpop.permute.xlu0 %9381
      %9383 = vrot.lane.b32.xlu0 %v9191, 64
      %v9384 = vpop.permute.xlu0 %9383
      %9385 = vrot.lane.b32.xlu0 %v9193, 64
      %v9386 = vpop.permute.xlu0 %9385
      %9387 = vrot.lane.b32.xlu0 %v9195, 64
      %v9388 = vpop.permute.xlu0 %9387
      %9389 = vrot.lane.b32.xlu0 %v9197, 64
      %v9390 = vpop.permute.xlu0 %9389
      %9391 = vrot.lane.b32.xlu0 %v9199, 64
      %v9392 = vpop.permute.xlu0 %9391
      %9393 = vrot.lane.b32.xlu0 %v9201, 64
      %v9394 = vpop.permute.xlu0 %9393
      %9395 = vrot.lane.b32.xlu0 %v9203, 64
      %v9396 = vpop.permute.xlu0 %9395
      %v9405 = vmul.f32 %v9365, %v9382
      %v9406 = vmul.f32 %v9366, %v9384
      %v9407 = vmul.f32 %v9367, %v9386
      %v9408 = vmul.f32 %v9368, %v9388
      %v9409 = vmul.f32 %v9369, %v9390
      %v9410 = vmul.f32 %v9370, %v9392
      %v9411 = vmul.f32 %v9371, %v9394
      %v9412 = vmul.f32 %v9372, %v9396
      %v9413 = vsel %vm1285, %v9405, 0.0
      %9414 = vadd.xlane.f32.xlu0 %v9413
      %v9415 = vpop.xlane.xlu0 %9414
      %v9416 = vsel %vm1285, %v9406, 0.0
      %9417 = vadd.xlane.f32.xlu0 %v9416
      %v9418 = vpop.xlane.xlu0 %9417
      %v9419 = vsel %vm1285, %v9407, 0.0
      %9420 = vadd.xlane.f32.xlu0 %v9419
      %v9421 = vpop.xlane.xlu0 %9420
      %v9422 = vsel %vm1285, %v9408, 0.0
      %9423 = vadd.xlane.f32.xlu0 %v9422
      %v9424 = vpop.xlane.xlu0 %9423
      %v9425 = vsel %vm1285, %v9409, 0.0
      %9426 = vadd.xlane.f32.xlu0 %v9425
      %v9427 = vpop.xlane.xlu0 %9426
      %v9428 = vsel %vm1285, %v9410, 0.0
      %9429 = vadd.xlane.f32.xlu0 %v9428
      %v9430 = vpop.xlane.xlu0 %9429
      %v9431 = vsel %vm1285, %v9411, 0.0
      %9432 = vadd.xlane.f32.xlu0 %v9431
      %v9433 = vpop.xlane.xlu0 %9432
      %v9434 = vsel %vm1285, %v9412, 0.0
      %9435 = vadd.xlane.f32.xlu0 %v9434
      %v9436 = vpop.xlane.xlu0 %9435
      %v9437 = vand.u32 2147483647, %v9415
      %v9438 = vand.u32 2147483647, %v9418
      %v9439 = vand.u32 2147483647, %v9421
      %v9440 = vand.u32 2147483647, %v9424
      %v9441 = vand.u32 2147483647, %v9427
      %v9442 = vand.u32 2147483647, %v9430
      %v9443 = vand.u32 2147483647, %v9433
      %v9444 = vand.u32 2147483647, %v9436
      %v9445 = vsub.f32 0.0, %v9158
      %v9446 = vsub.f32 0.0, %v9161
      %v9447 = vsub.f32 0.0, %v9164
      %v9448 = vsub.f32 0.0, %v9167
      %v9449 = vsub.f32 0.0, %v9170
      %v9450 = vsub.f32 0.0, %v9173
      %v9451 = vsub.f32 0.0, %v9176
      %v9452 = vsub.f32 0.0, %v9179
      %v9453 = vmul.f32 %v9445, 1.442695
      %v9454 = vpow.pop %v9453
      %v9455 = vmul.f32 %v9446, 1.442695
      %v9456 = vpow.pop %v9455
      %v9457 = vmul.f32 %v9447, 1.442695
      %v9458 = vpow.pop %v9457
      %v9459 = vmul.f32 %v9448, 1.442695
      %v9460 = vpow.pop %v9459
      %v9461 = vmul.f32 %v9449, 1.442695
      %v9462 = vpow.pop %v9461
      %v9463 = vmul.f32 %v9450, 1.442695
      %v9464 = vpow.pop %v9463
      %v9465 = vmul.f32 %v9451, 1.442695
      %v9466 = vpow.pop %v9465
      %v9467 = vmul.f32 %v9452, 1.442695
      %v9468 = vpow.pop %v9467
      %v9469 = vmax.f32 %v9437, %v9454
      %v9470 = vmax.f32 %v9438, %v9456
      %v9471 = vmax.f32 %v9439, %v9458
      %v9472 = vmax.f32 %v9440, %v9460
      %v9473 = vmax.f32 %v9441, %v9462
      %v9474 = vmax.f32 %v9442, %v9464
      %v9475 = vmax.f32 %v9443, %v9466
      %v9476 = vmax.f32 %v9444, %v9468
      %v9478 = vsel %vm1285, %v9405, 0
      %v9481 = vsel %vm1285, %v9406, 0
      %v9484 = vsel %vm1285, %v9407, 0
      %v9487 = vsel %vm1285, %v9408, 0
      %v9490 = vsel %vm1285, %v9409, 0
      %v9493 = vsel %vm1285, %v9410, 0
      %v9496 = vsel %vm1285, %v9411, 0
      %v9499 = vsel %vm1285, %v9412, 0
      %9501 = vmatprep.subr.mxu0 0.0
      %9502 = vmatpush1.msra.mxu0 %v3032
      %9503 = vmatprep.subr.mxu0 0.0
      %9504 = vmatpush1.msra.mxu0 %v3037
      %9505 = vmatprep.subr.mxu0 0.0
      %9506 = vmatpush1.msra.mxu0 %v3042
      %9507 = vmatprep.subr.mxu0 0.0
      %9508 = vmatpush1.msra.mxu0 %v3047
      %9509 = vmatprep.subr.mxu0 0.0
      %9510 = vmatpush1.msra.mxu0 %v3052
      %9511 = vmatprep.subr.mxu0 0.0
      %9512 = vmatpush1.msra.mxu0 %v3057
      %9513 = vmatprep.subr.mxu0 0.0
      %9514 = vmatpush1.msra.mxu0 %v3062
      %9515 = vmatprep.subr.mxu0 0.0
      %9516 = vmatpush1.msra.mxu0 %v3067
      %9517 = vmatprep.subr.mxu0 0.0
      %9518 = vmatpush1.msra.mxu0 0.0
      %9519 = vmatprep.subr.mxu0 0.0
      %9520 = vmatpush1.msra.mxu0 0.0
      %9521 = vmatprep.subr.mxu0 0.0
      %9522 = vmatpush1.msra.mxu0 0.0
      %9523 = vmatprep.subr.mxu0 0.0
      %9524 = vmatpush1.msra.mxu0 0.0
      %9525 = vmatprep.subr.mxu0 0.0
      %9526 = vmatpush1.msra.mxu0 0.0
      %9527 = vmatprep.subr.mxu0 0.0
      %9528 = vmatpush1.msra.mxu0 0.0
      %9529 = vmatprep.subr.mxu0 0.0
      %9530 = vmatpush1.msra.mxu0 0.0
      %9531 = vmatprep.subr.mxu0 0.0
      %9532 = vmatpush1.msra.mxu0 0.0
      %9533 = vmatprep.subr.mxu0 0.0
      %9534 = vmatpush1.msra.mxu0 0.0
      %9535 = vmatprep.subr.mxu0 0.0
      %9536 = vmatpush1.msra.mxu0 0.0
      %9537 = vmatprep.subr.mxu0 0.0
      %9538 = vmatpush1.msra.mxu0 0.0
      %9539 = vmatprep.subr.mxu0 0.0
      %9540 = vmatpush1.msra.mxu0 0.0
      %9541 = vmatprep.subr.mxu0 0.0
      %9542 = vmatpush1.msra.mxu0 0.0
      %9543 = vmatprep.subr.mxu0 0.0
      %9544 = vmatpush1.msra.mxu0 0.0
      %9545 = vmatprep.subr.mxu0 0.0
      %9546 = vmatpush1.msra.mxu0 0.0
      %9547 = vmatprep.subr.mxu0 0.0
      %9548 = vmatpush1.msra.mxu0 0.0
      %9549 = vmatprep.subr.mxu0 0.0
      %9550 = vmatpush1.msra.mxu0 0.0
      %9551 = vmatprep.subr.mxu0 0.0
      %9552 = vmatpush1.msra.mxu0 0.0
      %9553 = vmatprep.subr.mxu0 0.0
      %9554 = vmatpush1.msra.mxu0 0.0
      %9555 = vmatprep.subr.mxu0 0.0
      %9556 = vmatpush1.msra.mxu0 0.0
      %9557 = vmatprep.subr.mxu0 0.0
      %9558 = vmatpush1.msra.mxu0 0.0
      %9559 = vmatprep.subr.mxu0 0.0
      %9560 = vmatpush1.msra.mxu0 0.0
      %9561 = vmatprep.subr.mxu0 0.0
      %9562 = vmatpush1.msra.mxu0 0.0
      %9563 = vmatprep.subr.mxu0 0.0
      %9564 = vmatpush1.msra.mxu0 0.0
      %9565 = vmatprep.mubr.f32.mxu0 0.0
      %9566 = vmatmul.mubr.f32.gmra.mrb[0].mxu0 %v9478
      %v9567 = vpop.f32.mrb[0].mxu0
      %v9568 = vadd.f32 0.0, %v9567
      %v9569 = vpop.f32.mrb[0].mxu0
      %9570 = vmatprep.mubr.f32.mxu0 0.0
      %9571 = vmatmul.mubr.f32.gmra.mrb[0].mxu0 %v9481
      %v9572 = vpop.f32.mrb[0].mxu0
      %v9573 = vadd.f32 0.0, %v9572
      %v9574 = vpop.f32.mrb[0].mxu0
      %9575 = vmatprep.mubr.f32.mxu0 0.0
      %9576 = vmatmul.mubr.f32.gmra.mrb[0].mxu0 %v9484
      %v9577 = vpop.f32.mrb[0].mxu0
      %v9578 = vadd.f32 0.0, %v9577
      %v9579 = vpop.f32.mrb[0].mxu0
      %9580 = vmatprep.mubr.f32.mxu0 0.0
      %9581 = vmatmul.mubr.f32.gmra.mrb[0].mxu0 %v9487
      %v9582 = vpop.f32.mrb[0].mxu0
      %v9583 = vadd.f32 0.0, %v9582
      %v9584 = vpop.f32.mrb[0].mxu0
      %9585 = vmatprep.mubr.f32.mxu0 0.0
      %9586 = vmatmul.mubr.f32.gmra.mrb[0].mxu0 %v9490
      %v9587 = vpop.f32.mrb[0].mxu0
      %v9588 = vadd.f32 0.0, %v9587
      %v9589 = vpop.f32.mrb[0].mxu0
      %9590 = vmatprep.mubr.f32.mxu0 0.0
      %9591 = vmatmul.mubr.f32.gmra.mrb[0].mxu0 %v9493
      %v9592 = vpop.f32.mrb[0].mxu0
      %v9593 = vadd.f32 0.0, %v9592
      %v9594 = vpop.f32.mrb[0].mxu0
      %9595 = vmatprep.mubr.f32.mxu0 0.0
      %9596 = vmatmul.mubr.f32.gmra.mrb[0].mxu0 %v9496
      %v9597 = vpop.f32.mrb[0].mxu0
      %v9598 = vadd.f32 0.0, %v9597
      %v9599 = vpop.f32.mrb[0].mxu0
      %9600 = vmatprep.mubr.f32.mxu0 0.0
      %9601 = vmatmul.mubr.f32.gmra.mrb[0].mxu0 %v9499
      %v9602 = vpop.f32.mrb[0].mxu0
      %v9603 = vadd.f32 0.0, %v9602
      %v9604 = vpop.f32.mrb[0].mxu0
      %9605 = vdwg.mxu0
      %v9606 = vadd.f32 %v9469, 1e-06
      %v9607 = vadd.f32 %v9470, 1e-06
      %v9608 = vadd.f32 %v9471, 1e-06
      %v9609 = vadd.f32 %v9472, 1e-06
      %v9610 = vadd.f32 %v9473, 1e-06
      %v9611 = vadd.f32 %v9474, 1e-06
      %v9612 = vadd.f32 %v9475, 1e-06
      %v9613 = vadd.f32 %v9476, 1e-06
      %v9614 = vrcp.pop %v9606
      %v9615 = vmul.f32 %v9568, %v9614
      %v9616 = vrcp.pop %v9607
      %v9617 = vmul.f32 %v9573, %v9616
      %v9618 = vrcp.pop %v9608
      %v9619 = vmul.f32 %v9578, %v9618
      %v9620 = vrcp.pop %v9609
      %v9621 = vmul.f32 %v9583, %v9620
      %v9622 = vrcp.pop %v9610
      %v9623 = vmul.f32 %v9588, %v9622
      %v9624 = vrcp.pop %v9611
      %v9625 = vmul.f32 %v9593, %v9624
      %v9626 = vrcp.pop %v9612
      %v9627 = vmul.f32 %v9598, %v9626
      %v9628 = vrcp.pop %v9613
      %v9629 = vmul.f32 %v9603, %v9628
      %v9630 = vsel %vm3901, %v9615, 0.0
      %9631 = vadd.xlane.f32.xlu0 %v9630
      %v9632 = vpop.xlane.xlu0 %9631
      %v9633 = vsel %vm3901, %v9617, 0.0
      %9634 = vadd.xlane.f32.xlu0 %v9633
      %v9635 = vpop.xlane.xlu0 %9634
      %v9636 = vsel %vm3901, %v9619, 0.0
      %9637 = vadd.xlane.f32.xlu0 %v9636
      %v9638 = vpop.xlane.xlu0 %9637
      %v9639 = vsel %vm3901, %v9621, 0.0
      %9640 = vadd.xlane.f32.xlu0 %v9639
      %v9641 = vpop.xlane.xlu0 %9640
      %v9642 = vsel %vm3901, %v9623, 0.0
      %9643 = vadd.xlane.f32.xlu0 %v9642
      %v9644 = vpop.xlane.xlu0 %9643
      %v9645 = vsel %vm3901, %v9625, 0.0
      %9646 = vadd.xlane.f32.xlu0 %v9645
      %v9647 = vpop.xlane.xlu0 %9646
      %v9648 = vsel %vm3901, %v9627, 0.0
      %9649 = vadd.xlane.f32.xlu0 %v9648
      %v9650 = vpop.xlane.xlu0 %9649
      %v9651 = vsel %vm3901, %v9629, 0.0
      %9652 = vadd.xlane.f32.xlu0 %v9651
      %v9653 = vpop.xlane.xlu0 %9652
      %v9654 = vmul.f32 %v9632, %v3926
      %v9655 = vmul.f32 %v9635, %v3926
      %v9656 = vmul.f32 %v9638, %v3926
      %v9657 = vmul.f32 %v9641, %v3926
      %v9658 = vmul.f32 %v9644, %v3926
      %v9659 = vmul.f32 %v9647, %v3926
      %v9660 = vmul.f32 %v9650, %v3926
      %v9661 = vmul.f32 %v9653, %v3926
      %v9662 = vsub.f32 %v9615, %v9654
      %v9663 = vsub.f32 %v9617, %v9655
      %v9664 = vsub.f32 %v9619, %v9656
      %v9665 = vsub.f32 %v9621, %v9657
      %v9666 = vsub.f32 %v9623, %v9658
      %v9667 = vsub.f32 %v9625, %v9659
      %v9668 = vsub.f32 %v9627, %v9660
      %v9669 = vsub.f32 %v9629, %v9661
      %v9670 = vmul.f32 %v9662, %v9662
      %v9671 = vmul.f32 %v9663, %v9663
      %v9672 = vmul.f32 %v9664, %v9664
      %v9673 = vmul.f32 %v9665, %v9665
      %v9674 = vmul.f32 %v9666, %v9666
      %v9675 = vmul.f32 %v9667, %v9667
      %v9676 = vmul.f32 %v9668, %v9668
      %v9677 = vmul.f32 %v9669, %v9669
      %v9678 = vsel %vm3901, %v9670, 0.0
      %9679 = vadd.xlane.f32.xlu0 %v9678
      %v9680 = vpop.xlane.xlu0 %9679
      %v9681 = vsel %vm3901, %v9671, 0.0
      %9682 = vadd.xlane.f32.xlu0 %v9681
      %v9683 = vpop.xlane.xlu0 %9682
      %v9684 = vsel %vm3901, %v9672, 0.0
      %9685 = vadd.xlane.f32.xlu0 %v9684
      %v9686 = vpop.xlane.xlu0 %9685
      %v9687 = vsel %vm3901, %v9673, 0.0
      %9688 = vadd.xlane.f32.xlu0 %v9687
      %v9689 = vpop.xlane.xlu0 %9688
      %v9690 = vsel %vm3901, %v9674, 0.0
      %9691 = vadd.xlane.f32.xlu0 %v9690
      %v9692 = vpop.xlane.xlu0 %9691
      %v9693 = vsel %vm3901, %v9675, 0.0
      %9694 = vadd.xlane.f32.xlu0 %v9693
      %v9695 = vpop.xlane.xlu0 %9694
      %v9696 = vsel %vm3901, %v9676, 0.0
      %9697 = vadd.xlane.f32.xlu0 %v9696
      %v9698 = vpop.xlane.xlu0 %9697
      %v9699 = vsel %vm3901, %v9677, 0.0
      %9700 = vadd.xlane.f32.xlu0 %v9699
      %v9701 = vpop.xlane.xlu0 %9700
      %v9702 = vmul.f32 %v9680, %v3926
      %v9703 = vmul.f32 %v9683, %v3926
      %v9704 = vmul.f32 %v9686, %v3926
      %v9705 = vmul.f32 %v9689, %v3926
      %v9706 = vmul.f32 %v9692, %v3926
      %v9707 = vmul.f32 %v9695, %v3926
      %v9708 = vmul.f32 %v9698, %v3926
      %v9709 = vmul.f32 %v9701, %v3926
      %v9710 = vadd.f32 %v9702, 1e-06
      %v9711 = vadd.f32 %v9703, 1e-06
      %v9712 = vadd.f32 %v9704, 1e-06
      %v9713 = vadd.f32 %v9705, 1e-06
      %v9714 = vadd.f32 %v9706, 1e-06
      %v9715 = vadd.f32 %v9707, 1e-06
      %v9716 = vadd.f32 %v9708, 1e-06
      %v9717 = vadd.f32 %v9709, 1e-06
      %v9718 = vrsqrt.pop %v9710
      %v9719 = vrsqrt.pop %v9711
      %v9720 = vrsqrt.pop %v9712
      %v9721 = vrsqrt.pop %v9713
      %v9722 = vrsqrt.pop %v9714
      %v9723 = vrsqrt.pop %v9715
      %v9724 = vrsqrt.pop %v9716
      %v9725 = vrsqrt.pop %v9717
      %v9726 = vmul.f32 %v9662, %v9718
      %v9727 = vmul.f32 %v9663, %v9719
      %v9728 = vmul.f32 %v9664, %v9720
      %v9729 = vmul.f32 %v9665, %v9721
      %v9730 = vmul.f32 %v9666, %v9722
      %v9731 = vmul.f32 %v9667, %v9723
      %v9732 = vmul.f32 %v9668, %v9724
      %v9733 = vmul.f32 %v9669, %v9725
      %v9734 = vmul.f32 %v9726, %v4010
      %v9735 = vmul.f32 %v9727, %v4010
      %v9736 = vmul.f32 %v9728, %v4010
      %v9737 = vmul.f32 %v9729, %v4010
      %v9738 = vmul.f32 %v9730, %v4010
      %v9739 = vmul.f32 %v9731, %v4010
      %v9740 = vmul.f32 %v9732, %v4010
      %v9741 = vmul.f32 %v9733, %v4010
      %v9742 = vxor.u32 %v3032, 2147483648
      %v9743 = vxor.u32 %v3037, 2147483648
      %v9744 = vxor.u32 %v3042, 2147483648
      %v9745 = vxor.u32 %v3047, 2147483648
      %v9746 = vxor.u32 %v3052, 2147483648
      %v9747 = vxor.u32 %v3057, 2147483648
      %v9748 = vxor.u32 %v3062, 2147483648
      %v9749 = vxor.u32 %v3067, 2147483648
      %v9750 = vmul.f32 %v9742, 1.442695
      %v9751 = vpow.pop %v9750
      %v9752 = vmul.f32 %v9743, 1.442695
      %v9753 = vpow.pop %v9752
      %v9754 = vmul.f32 %v9744, 1.442695
      %v9755 = vpow.pop %v9754
      %v9756 = vmul.f32 %v9745, 1.442695
      %v9757 = vpow.pop %v9756
      %v9758 = vmul.f32 %v9746, 1.442695
      %v9759 = vpow.pop %v9758
      %v9760 = vmul.f32 %v9747, 1.442695
      %v9761 = vpow.pop %v9760
      %v9762 = vmul.f32 %v9748, 1.442695
      %v9763 = vpow.pop %v9762
      %v9764 = vmul.f32 %v9749, 1.442695
      %v9765 = vpow.pop %v9764
      %v9766 = vadd.f32 %v9751, 1.0
      %v9767 = vadd.f32 %v9753, 1.0
      %v9768 = vadd.f32 %v9755, 1.0
      %v9769 = vadd.f32 %v9757, 1.0
      %v9770 = vadd.f32 %v9759, 1.0
      %v9771 = vadd.f32 %v9761, 1.0
      %v9772 = vadd.f32 %v9763, 1.0
      %v9773 = vadd.f32 %v9765, 1.0
      %v9774 = vrcp.pop %v9766
      %v9775 = vmul.f32 1.0, %v9774
      %v9776 = vrcp.pop %v9767
      %v9777 = vmul.f32 1.0, %v9776
      %v9778 = vrcp.pop %v9768
      %v9779 = vmul.f32 1.0, %v9778
      %v9780 = vrcp.pop %v9769
      %v9781 = vmul.f32 1.0, %v9780
      %v9782 = vrcp.pop %v9770
      %v9783 = vmul.f32 1.0, %v9782
      %v9784 = vrcp.pop %v9771
      %v9785 = vmul.f32 1.0, %v9784
      %v9786 = vrcp.pop %v9772
      %v9787 = vmul.f32 1.0, %v9786
      %v9788 = vrcp.pop %v9773
      %v9789 = vmul.f32 1.0, %v9788
      %9798 = vrot.lane.b32.xlu0 %v9734, 32
      %v9799 = vpop.permute.xlu0 %9798
      %9800 = vrot.lane.b32.xlu0 %v9735, 32
      %v9801 = vpop.permute.xlu0 %9800
      %9802 = vrot.lane.b32.xlu0 %v9736, 32
      %v9803 = vpop.permute.xlu0 %9802
      %9804 = vrot.lane.b32.xlu0 %v9737, 32
      %v9805 = vpop.permute.xlu0 %9804
      %9806 = vrot.lane.b32.xlu0 %v9738, 32
      %v9807 = vpop.permute.xlu0 %9806
      %9808 = vrot.lane.b32.xlu0 %v9739, 32
      %v9809 = vpop.permute.xlu0 %9808
      %9810 = vrot.lane.b32.xlu0 %v9740, 32
      %v9811 = vpop.permute.xlu0 %9810
      %9812 = vrot.lane.b32.xlu0 %v9741, 32
      %v9813 = vpop.permute.xlu0 %9812
      %v9822 = vmul.f32 %v9775, %v9799
      %v9823 = vmul.f32 %v9777, %v9801
      %v9824 = vmul.f32 %v9779, %v9803
      %v9825 = vmul.f32 %v9781, %v9805
      %v9826 = vmul.f32 %v9783, %v9807
      %v9827 = vmul.f32 %v9785, %v9809
      %v9828 = vmul.f32 %v9787, %v9811
      %v9829 = vmul.f32 %v9789, %v9813
      %9830 = vset.pattern.permute.xlu0 3
      %9831 = vperm.xlu0 %9830, %v8982
      %v9832 = vpop.permute.xlu0 %9831
      %9834 = vset.pattern.permute.xlu0 3
      %9835 = vperm.xlu0 %9834, %v8987
      %v9836 = vpop.permute.xlu0 %9835
      %9838 = vset.pattern.permute.xlu0 3
      %9839 = vperm.xlu0 %9838, %v8992
      %v9840 = vpop.permute.xlu0 %9839
      %9842 = vset.pattern.permute.xlu0 3
      %9843 = vperm.xlu0 %9842, %v8997
      %v9844 = vpop.permute.xlu0 %9843
      %9846 = vset.pattern.permute.xlu0 3
      %9847 = vperm.xlu0 %9846, %v9002
      %v9848 = vpop.permute.xlu0 %9847
      %9850 = vset.pattern.permute.xlu0 3
      %9851 = vperm.xlu0 %9850, %v9007
      %v9852 = vpop.permute.xlu0 %9851
      %9854 = vset.pattern.permute.xlu0 3
      %9855 = vperm.xlu0 %9854, %v9012
      %v9856 = vpop.permute.xlu0 %9855
      %9858 = vset.pattern.permute.xlu0 3
      %9859 = vperm.xlu0 %9858, %v9017
      %v9860 = vpop.permute.xlu0 %9859
      %v9862 = vlaneseq
      %v9863 = vshrl.u32 %v9862, 7
      %v9864 = vsub.s32 1, %v9863
      %v9865 = vrot.slane %v9095, %v9864
      %v9866 = vadd.f32 %v9832, %v9865
      %v9867 = vadd.f32 %v9836, %v9865
      %v9868 = vadd.f32 %v9840, %v9865
      %v9869 = vadd.f32 %v9844, %v9865
      %v9870 = vadd.f32 %v9848, %v9865
      %v9871 = vadd.f32 %v9852, %v9865
      %v9872 = vadd.f32 %v9856, %v9865
      %v9873 = vadd.f32 %v9860, %v9865
      %v9874 = vadd.f32 %v9866, %v5337
      %v9875 = vadd.f32 %v9867, %v5339
      %v9876 = vadd.f32 %v9868, %v5341
      %v9877 = vadd.f32 %v9869, %v5343
      %v9878 = vadd.f32 %v9870, %v5345
      %v9879 = vadd.f32 %v9871, %v5347
      %v9880 = vadd.f32 %v9872, %v5349
      %v9881 = vadd.f32 %v9873, %v5351
      %v9882 = vsel %vm5368, %v9874, -inf
      %9883 = vmax.xlane.f32.xlu0 %v9882
      %v9884 = vpop.xlane.xlu0 %9883
      %v9885 = vsel %vm5368, %v9875, -inf
      %9886 = vmax.xlane.f32.xlu0 %v9885
      %v9887 = vpop.xlane.xlu0 %9886
      %v9888 = vsel %vm5368, %v9876, -inf
      %9889 = vmax.xlane.f32.xlu0 %v9888
      %v9890 = vpop.xlane.xlu0 %9889
      %v9891 = vsel %vm5368, %v9877, -inf
      %9892 = vmax.xlane.f32.xlu0 %v9891
      %v9893 = vpop.xlane.xlu0 %9892
      %v9894 = vsel %vm5368, %v9878, -inf
      %9895 = vmax.xlane.f32.xlu0 %v9894
      %v9896 = vpop.xlane.xlu0 %9895
      %v9897 = vsel %vm5368, %v9879, -inf
      %9898 = vmax.xlane.f32.xlu0 %v9897
      %v9899 = vpop.xlane.xlu0 %9898
      %v9900 = vsel %vm5368, %v9880, -inf
      %9901 = vmax.xlane.f32.xlu0 %v9900
      %v9902 = vpop.xlane.xlu0 %9901
      %v9903 = vsel %vm5368, %v9881, -inf
      %9904 = vmax.xlane.f32.xlu0 %v9903
      %v9905 = vpop.xlane.xlu0 %9904
      %v9906 = vsub.f32 %v9874, %v9884
      %v9907 = vsub.f32 %v9875, %v9887
      %v9908 = vsub.f32 %v9876, %v9890
      %v9909 = vsub.f32 %v9877, %v9893
      %v9910 = vsub.f32 %v9878, %v9896
      %v9911 = vsub.f32 %v9879, %v9899
      %v9912 = vsub.f32 %v9880, %v9902
      %v9913 = vsub.f32 %v9881, %v9905
      %v9914 = vmul.f32 %v9906, 1.442695
      %v9915 = vpow.pop %v9914
      %v9916 = vmul.f32 %v9907, 1.442695
      %v9917 = vpow.pop %v9916
      %v9918 = vmul.f32 %v9908, 1.442695
      %v9919 = vpow.pop %v9918
      %v9920 = vmul.f32 %v9909, 1.442695
      %v9921 = vpow.pop %v9920
      %v9922 = vmul.f32 %v9910, 1.442695
      %v9923 = vpow.pop %v9922
      %v9924 = vmul.f32 %v9911, 1.442695
      %v9925 = vpow.pop %v9924
      %v9926 = vmul.f32 %v9912, 1.442695
      %v9927 = vpow.pop %v9926
      %v9928 = vmul.f32 %v9913, 1.442695
      %v9929 = vpow.pop %v9928
      %9930 = vrot.lane.b32.xlu0 %v2739, 120
      %v9931 = vpop.permute.xlu0 %9930
      %9932 = vrot.lane.b32.xlu0 %v2744, 120
      %v9933 = vpop.permute.xlu0 %9932
      %9934 = vrot.lane.b32.xlu0 %v2749, 120
      %v9935 = vpop.permute.xlu0 %9934
      %9936 = vrot.lane.b32.xlu0 %v2754, 120
      %v9937 = vpop.permute.xlu0 %9936
      %9938 = vrot.lane.b32.xlu0 %v2759, 120
      %v9939 = vpop.permute.xlu0 %9938
      %9940 = vrot.lane.b32.xlu0 %v2764, 120
      %v9941 = vpop.permute.xlu0 %9940
      %9942 = vrot.lane.b32.xlu0 %v2769, 120
      %v9943 = vpop.permute.xlu0 %9942
      %9944 = vrot.lane.b32.xlu0 %v2774, 120
      %v9945 = vpop.permute.xlu0 %9944
      %9946 = vrot.lane.b32.xlu0 %v2739, 104
      %v9947 = vpop.permute.xlu0 %9946
      %9948 = vrot.lane.b32.xlu0 %v2744, 104
      %v9949 = vpop.permute.xlu0 %9948
      %9950 = vrot.lane.b32.xlu0 %v2749, 104
      %v9951 = vpop.permute.xlu0 %9950
      %9952 = vrot.lane.b32.xlu0 %v2754, 104
      %v9953 = vpop.permute.xlu0 %9952
      %9954 = vrot.lane.b32.xlu0 %v2759, 104
      %v9955 = vpop.permute.xlu0 %9954
      %9956 = vrot.lane.b32.xlu0 %v2764, 104
      %v9957 = vpop.permute.xlu0 %9956
      %9958 = vrot.lane.b32.xlu0 %v2769, 104
      %v9959 = vpop.permute.xlu0 %9958
      %9960 = vrot.lane.b32.xlu0 %v2774, 104
      %v9961 = vpop.permute.xlu0 %9960
      %v9962 = vsel %vm3530, %v9931, 0
      %v9964 = vsel %vm3530, %v9933, 0
      %v9966 = vsel %vm3530, %v9935, 0
      %v9968 = vsel %vm3530, %v9937, 0
      %v9970 = vsel %vm3530, %v9939, 0
      %v9972 = vsel %vm3530, %v9941, 0
      %v9974 = vsel %vm3530, %v9943, 0
      %v9976 = vsel %vm3530, %v9945, 0
      %v9978 = vsel %vm3530, %v9947, 0
      %v9980 = vsel %vm3530, %v9949, 0
      %v9982 = vsel %vm3530, %v9951, 0
      %v9984 = vsel %vm3530, %v9953, 0
      %v9986 = vsel %vm3530, %v9955, 0
      %v9988 = vsel %vm3530, %v9957, 0
      %v9990 = vsel %vm3530, %v9959, 0
      %v9992 = vsel %vm3530, %v9961, 0
      %9994 = vmatprep.subr.mxu0 0.0
      %9995 = vmatpush1.xpose.msra.mxu0 %v9978
      %9996 = vmatprep.subr.mxu0 0.0
      %9997 = vmatpush1.xpose.msra.mxu0 %v9980
      %9998 = vmatprep.subr.mxu0 0.0
      %9999 = vmatpush1.xpose.msra.mxu0 %v9982
      %10000 = vmatprep.subr.mxu0 0.0
      %10001 = vmatpush1.xpose.msra.mxu0 %v9984
      %10002 = vmatprep.subr.mxu0 0.0
      %10003 = vmatpush1.xpose.msra.mxu0 %v9986
      %10004 = vmatprep.subr.mxu0 0.0
      %10005 = vmatpush1.xpose.msra.mxu0 %v9988
      %10006 = vmatprep.subr.mxu0 0.0
      %10007 = vmatpush1.xpose.msra.mxu0 %v9990
      %10008 = vmatprep.subr.mxu0 0.0
      %10009 = vmatpush1.xpose.msra.mxu0 %v9992
      %10010 = vmatprep.subr.mxu0 0.0
      %10011 = vmatpush1.xpose.msra.mxu0 0.0
      %10012 = vmatprep.subr.mxu0 0.0
      %10013 = vmatpush1.xpose.msra.mxu0 0.0
      %10014 = vmatprep.subr.mxu0 0.0
      %10015 = vmatpush1.xpose.msra.mxu0 0.0
      %10016 = vmatprep.subr.mxu0 0.0
      %10017 = vmatpush1.xpose.msra.mxu0 0.0
      %10018 = vmatprep.subr.mxu0 0.0
      %10019 = vmatpush1.xpose.msra.mxu0 0.0
      %10020 = vmatprep.subr.mxu0 0.0
      %10021 = vmatpush1.xpose.msra.mxu0 0.0
      %10022 = vmatprep.subr.mxu0 0.0
      %10023 = vmatpush1.xpose.msra.mxu0 0.0
      %10024 = vmatprep.subr.mxu0 0.0
      %10025 = vmatpush1.xpose.msra.mxu0 0.0
      %10026 = vmatprep.subr.mxu0 0.0
      %10027 = vmatpush1.xpose.msra.mxu0 0.0
      %10028 = vmatprep.subr.mxu0 0.0
      %10029 = vmatpush1.xpose.msra.mxu0 0.0
      %10030 = vmatprep.subr.mxu0 0.0
      %10031 = vmatpush1.xpose.msra.mxu0 0.0
      %10032 = vmatprep.subr.mxu0 0.0
      %10033 = vmatpush1.xpose.msra.mxu0 0.0
      %10034 = vmatprep.subr.mxu0 0.0
      %10035 = vmatpush1.xpose.msra.mxu0 0.0
      %10036 = vmatprep.subr.mxu0 0.0
      %10037 = vmatpush1.xpose.msra.mxu0 0.0
      %10038 = vmatprep.subr.mxu0 0.0
      %10039 = vmatpush1.xpose.msra.mxu0 0.0
      %10040 = vmatprep.subr.mxu0 0.0
      %10041 = vmatpush1.xpose.msra.mxu0 0.0
      %10042 = vmatprep.subr.mxu0 0.0
      %10043 = vmatpush1.xpose.msra.mxu0 0.0
      %10044 = vmatprep.subr.mxu0 0.0
      %10045 = vmatpush1.xpose.msra.mxu0 0.0
      %10046 = vmatprep.subr.mxu0 0.0
      %10047 = vmatpush1.xpose.msra.mxu0 0.0
      %10048 = vmatprep.subr.mxu0 0.0
      %10049 = vmatpush1.xpose.msra.mxu0 0.0
      %10050 = vmatprep.subr.mxu0 0.0
      %10051 = vmatpush1.xpose.msra.mxu0 0.0
      %10052 = vmatprep.subr.mxu0 0.0
      %10053 = vmatpush1.xpose.msra.mxu0 0.0
      %10054 = vmatprep.subr.mxu0 0.0
      %10055 = vmatpush1.xpose.msra.mxu0 0.0
      %10056 = vmatprep.subr.mxu0 0.0
      %10057 = vmatpush1.xpose.msra.mxu0 0.0
      %10058 = vmatprep.mubr.f32.mxu0 0.0
      %10059 = vmatmul.mubr.f32.gmra.mrb[0].mxu0 %v9962
      %v10060 = vpop.f32.mrb[0].mxu0
      %v10061 = vadd.f32 0.0, %v10060
      %v10062 = vpop.f32.mrb[0].mxu0
      %10063 = vmatprep.mubr.f32.mxu0 0.0
      %10064 = vmatmul.mubr.f32.gmra.mrb[0].mxu0 %v9964
      %v10065 = vpop.f32.mrb[0].mxu0
      %v10066 = vadd.f32 0.0, %v10065
      %v10067 = vpop.f32.mrb[0].mxu0
      %10068 = vmatprep.mubr.f32.mxu0 0.0
      %10069 = vmatmul.mubr.f32.gmra.mrb[0].mxu0 %v9966
      %v10070 = vpop.f32.mrb[0].mxu0
      %v10071 = vadd.f32 0.0, %v10070
      %v10072 = vpop.f32.mrb[0].mxu0
      %10073 = vmatprep.mubr.f32.mxu0 0.0
      %10074 = vmatmul.mubr.f32.gmra.mrb[0].mxu0 %v9968
      %v10075 = vpop.f32.mrb[0].mxu0
      %v10076 = vadd.f32 0.0, %v10075
      %v10077 = vpop.f32.mrb[0].mxu0
      %10078 = vmatprep.mubr.f32.mxu0 0.0
      %10079 = vmatmul.mubr.f32.gmra.mrb[0].mxu0 %v9970
      %v10080 = vpop.f32.mrb[0].mxu0
      %v10081 = vadd.f32 0.0, %v10080
      %v10082 = vpop.f32.mrb[0].mxu0
      %10083 = vmatprep.mubr.f32.mxu0 0.0
      %10084 = vmatmul.mubr.f32.gmra.mrb[0].mxu0 %v9972
      %v10085 = vpop.f32.mrb[0].mxu0
      %v10086 = vadd.f32 0.0, %v10085
      %v10087 = vpop.f32.mrb[0].mxu0
      %10088 = vmatprep.mubr.f32.mxu0 0.0
      %10089 = vmatmul.mubr.f32.gmra.mrb[0].mxu0 %v9974
      %v10090 = vpop.f32.mrb[0].mxu0
      %v10091 = vadd.f32 0.0, %v10090
      %v10092 = vpop.f32.mrb[0].mxu0
      %10093 = vmatprep.mubr.f32.mxu0 0.0
      %10094 = vmatmul.mubr.f32.gmra.mrb[0].mxu0 %v9976
      %v10095 = vpop.f32.mrb[0].mxu0
      %v10096 = vadd.f32 0.0, %v10095
      %v10097 = vpop.f32.mrb[0].mxu0
      %10098 = vdwg.mxu0
      %v10099 = vmul.f32 %v10061, 0.35355338
      %v10100 = vmul.f32 %v10066, 0.35355338
      %v10101 = vmul.f32 %v10071, 0.35355338
      %v10102 = vmul.f32 %v10076, 0.35355338
      %v10103 = vmul.f32 %v10081, 0.35355338
      %v10104 = vmul.f32 %v10086, 0.35355338
      %v10105 = vmul.f32 %v10091, 0.35355338
      %v10106 = vmul.f32 %v10096, 0.35355338
      %10115 = vrot.lane.b32.xlu0 %v9915, 64
      %v10116 = vpop.permute.xlu0 %10115
      %10117 = vrot.lane.b32.xlu0 %v9917, 64
      %v10118 = vpop.permute.xlu0 %10117
      %10119 = vrot.lane.b32.xlu0 %v9919, 64
      %v10120 = vpop.permute.xlu0 %10119
      %10121 = vrot.lane.b32.xlu0 %v9921, 64
      %v10122 = vpop.permute.xlu0 %10121
      %10123 = vrot.lane.b32.xlu0 %v9923, 64
      %v10124 = vpop.permute.xlu0 %10123
      %10125 = vrot.lane.b32.xlu0 %v9925, 64
      %v10126 = vpop.permute.xlu0 %10125
      %10127 = vrot.lane.b32.xlu0 %v9927, 64
      %v10128 = vpop.permute.xlu0 %10127
      %10129 = vrot.lane.b32.xlu0 %v9929, 64
      %v10130 = vpop.permute.xlu0 %10129
      %v10139 = vmul.f32 %v10099, %v10116
      %v10140 = vmul.f32 %v10100, %v10118
      %v10141 = vmul.f32 %v10101, %v10120
      %v10142 = vmul.f32 %v10102, %v10122
      %v10143 = vmul.f32 %v10103, %v10124
      %v10144 = vmul.f32 %v10104, %v10126
      %v10145 = vmul.f32 %v10105, %v10128
      %v10146 = vmul.f32 %v10106, %v10130
      %v10147 = vsel %vm1285, %v10139, 0.0
      %10148 = vadd.xlane.f32.xlu0 %v10147
      %v10149 = vpop.xlane.xlu0 %10148
      %v10150 = vsel %vm1285, %v10140, 0.0
      %10151 = vadd.xlane.f32.xlu0 %v10150
      %v10152 = vpop.xlane.xlu0 %10151
      %v10153 = vsel %vm1285, %v10141, 0.0
      %10154 = vadd.xlane.f32.xlu0 %v10153
      %v10155 = vpop.xlane.xlu0 %10154
      %v10156 = vsel %vm1285, %v10142, 0.0
      %10157 = vadd.xlane.f32.xlu0 %v10156
      %v10158 = vpop.xlane.xlu0 %10157
      %v10159 = vsel %vm1285, %v10143, 0.0
      %10160 = vadd.xlane.f32.xlu0 %v10159
      %v10161 = vpop.xlane.xlu0 %10160
      %v10162 = vsel %vm1285, %v10144, 0.0
      %10163 = vadd.xlane.f32.xlu0 %v10162
      %v10164 = vpop.xlane.xlu0 %10163
      %v10165 = vsel %vm1285, %v10145, 0.0
      %10166 = vadd.xlane.f32.xlu0 %v10165
      %v10167 = vpop.xlane.xlu0 %10166
      %v10168 = vsel %vm1285, %v10146, 0.0
      %10169 = vadd.xlane.f32.xlu0 %v10168
      %v10170 = vpop.xlane.xlu0 %10169
      %v10171 = vand.u32 2147483647, %v10149
      %v10172 = vand.u32 2147483647, %v10152
      %v10173 = vand.u32 2147483647, %v10155
      %v10174 = vand.u32 2147483647, %v10158
      %v10175 = vand.u32 2147483647, %v10161
      %v10176 = vand.u32 2147483647, %v10164
      %v10177 = vand.u32 2147483647, %v10167
      %v10178 = vand.u32 2147483647, %v10170
      %v10179 = vsub.f32 0.0, %v9884
      %v10180 = vsub.f32 0.0, %v9887
      %v10181 = vsub.f32 0.0, %v9890
      %v10182 = vsub.f32 0.0, %v9893
      %v10183 = vsub.f32 0.0, %v9896
      %v10184 = vsub.f32 0.0, %v9899
      %v10185 = vsub.f32 0.0, %v9902
      %v10186 = vsub.f32 0.0, %v9905
      %v10187 = vmul.f32 %v10179, 1.442695
      %v10188 = vpow.pop %v10187
      %v10189 = vmul.f32 %v10180, 1.442695
      %v10190 = vpow.pop %v10189
      %v10191 = vmul.f32 %v10181, 1.442695
      %v10192 = vpow.pop %v10191
      %v10193 = vmul.f32 %v10182, 1.442695
      %v10194 = vpow.pop %v10193
      %v10195 = vmul.f32 %v10183, 1.442695
      %v10196 = vpow.pop %v10195
      %v10197 = vmul.f32 %v10184, 1.442695
      %v10198 = vpow.pop %v10197
      %v10199 = vmul.f32 %v10185, 1.442695
      %v10200 = vpow.pop %v10199
      %v10201 = vmul.f32 %v10186, 1.442695
      %v10202 = vpow.pop %v10201
      %v10203 = vmax.f32 %v10171, %v10188
      %v10204 = vmax.f32 %v10172, %v10190
      %v10205 = vmax.f32 %v10173, %v10192
      %v10206 = vmax.f32 %v10174, %v10194
      %v10207 = vmax.f32 %v10175, %v10196
      %v10208 = vmax.f32 %v10176, %v10198
      %v10209 = vmax.f32 %v10177, %v10200
      %v10210 = vmax.f32 %v10178, %v10202
      %10219 = vrot.lane.b32.xlu0 %v3032, 112
      %v10220 = vpop.permute.xlu0 %10219
      %10221 = vrot.lane.b32.xlu0 %v3037, 112
      %v10222 = vpop.permute.xlu0 %10221
      %10223 = vrot.lane.b32.xlu0 %v3042, 112
      %v10224 = vpop.permute.xlu0 %10223
      %10225 = vrot.lane.b32.xlu0 %v3047, 112
      %v10226 = vpop.permute.xlu0 %10225
      %10227 = vrot.lane.b32.xlu0 %v3052, 112
      %v10228 = vpop.permute.xlu0 %10227
      %10229 = vrot.lane.b32.xlu0 %v3057, 112
      %v10230 = vpop.permute.xlu0 %10229
      %10231 = vrot.lane.b32.xlu0 %v3062, 112
      %v10232 = vpop.permute.xlu0 %10231
      %10233 = vrot.lane.b32.xlu0 %v3067, 112
      %v10234 = vpop.permute.xlu0 %10233
      %v10244 = vsel %vm1285, %v10139, 0
      %v10247 = vsel %vm1285, %v10140, 0
      %v10250 = vsel %vm1285, %v10141, 0
      %v10253 = vsel %vm1285, %v10142, 0
      %v10256 = vsel %vm1285, %v10143, 0
      %v10259 = vsel %vm1285, %v10144, 0
      %v10262 = vsel %vm1285, %v10145, 0
      %v10265 = vsel %vm1285, %v10146, 0
      %10267 = vmatprep.subr.mxu0 0.0
      %10268 = vmatpush1.msra.mxu0 %v10220
      %10269 = vmatprep.subr.mxu0 0.0
      %10270 = vmatpush1.msra.mxu0 %v10222
      %10271 = vmatprep.subr.mxu0 0.0
      %10272 = vmatpush1.msra.mxu0 %v10224
      %10273 = vmatprep.subr.mxu0 0.0
      %10274 = vmatpush1.msra.mxu0 %v10226
      %10275 = vmatprep.subr.mxu0 0.0
      %10276 = vmatpush1.msra.mxu0 %v10228
      %10277 = vmatprep.subr.mxu0 0.0
      %10278 = vmatpush1.msra.mxu0 %v10230
      %10279 = vmatprep.subr.mxu0 0.0
      %10280 = vmatpush1.msra.mxu0 %v10232
      %10281 = vmatprep.subr.mxu0 0.0
      %10282 = vmatpush1.msra.mxu0 %v10234
      %10283 = vmatprep.subr.mxu0 0.0
      %10284 = vmatpush1.msra.mxu0 0.0
      %10285 = vmatprep.subr.mxu0 0.0
      %10286 = vmatpush1.msra.mxu0 0.0
      %10287 = vmatprep.subr.mxu0 0.0
      %10288 = vmatpush1.msra.mxu0 0.0
      %10289 = vmatprep.subr.mxu0 0.0
      %10290 = vmatpush1.msra.mxu0 0.0
      %10291 = vmatprep.subr.mxu0 0.0
      %10292 = vmatpush1.msra.mxu0 0.0
      %10293 = vmatprep.subr.mxu0 0.0
      %10294 = vmatpush1.msra.mxu0 0.0
      %10295 = vmatprep.subr.mxu0 0.0
      %10296 = vmatpush1.msra.mxu0 0.0
      %10297 = vmatprep.subr.mxu0 0.0
      %10298 = vmatpush1.msra.mxu0 0.0
      %10299 = vmatprep.subr.mxu0 0.0
      %10300 = vmatpush1.msra.mxu0 0.0
      %10301 = vmatprep.subr.mxu0 0.0
      %10302 = vmatpush1.msra.mxu0 0.0
      %10303 = vmatprep.subr.mxu0 0.0
      %10304 = vmatpush1.msra.mxu0 0.0
      %10305 = vmatprep.subr.mxu0 0.0
      %10306 = vmatpush1.msra.mxu0 0.0
      %10307 = vmatprep.subr.mxu0 0.0
      %10308 = vmatpush1.msra.mxu0 0.0
      %10309 = vmatprep.subr.mxu0 0.0
      %10310 = vmatpush1.msra.mxu0 0.0
      %10311 = vmatprep.subr.mxu0 0.0
      %10312 = vmatpush1.msra.mxu0 0.0
      %10313 = vmatprep.subr.mxu0 0.0
      %10314 = vmatpush1.msra.mxu0 0.0
      %10315 = vmatprep.subr.mxu0 0.0
      %10316 = vmatpush1.msra.mxu0 0.0
      %10317 = vmatprep.subr.mxu0 0.0
      %10318 = vmatpush1.msra.mxu0 0.0
      %10319 = vmatprep.subr.mxu0 0.0
      %10320 = vmatpush1.msra.mxu0 0.0
      %10321 = vmatprep.subr.mxu0 0.0
      %10322 = vmatpush1.msra.mxu0 0.0
      %10323 = vmatprep.subr.mxu0 0.0
      %10324 = vmatpush1.msra.mxu0 0.0
      %10325 = vmatprep.subr.mxu0 0.0
      %10326 = vmatpush1.msra.mxu0 0.0
      %10327 = vmatprep.subr.mxu0 0.0
      %10328 = vmatpush1.msra.mxu0 0.0
      %10329 = vmatprep.subr.mxu0 0.0
      %10330 = vmatpush1.msra.mxu0 0.0
      %10331 = vmatprep.mubr.f32.mxu0 0.0
      %10332 = vmatmul.mubr.f32.gmra.mrb[0].mxu0 %v10244
      %v10333 = vpop.f32.mrb[0].mxu0
      %v10334 = vadd.f32 0.0, %v10333
      %v10335 = vpop.f32.mrb[0].mxu0
      %10336 = vmatprep.mubr.f32.mxu0 0.0
      %10337 = vmatmul.mubr.f32.gmra.mrb[0].mxu0 %v10247
      %v10338 = vpop.f32.mrb[0].mxu0
      %v10339 = vadd.f32 0.0, %v10338
      %v10340 = vpop.f32.mrb[0].mxu0
      %10341 = vmatprep.mubr.f32.mxu0 0.0
      %10342 = vmatmul.mubr.f32.gmra.mrb[0].mxu0 %v10250
      %v10343 = vpop.f32.mrb[0].mxu0
      %v10344 = vadd.f32 0.0, %v10343
      %v10345 = vpop.f32.mrb[0].mxu0
      %10346 = vmatprep.mubr.f32.mxu0 0.0
      %10347 = vmatmul.mubr.f32.gmra.mrb[0].mxu0 %v10253
      %v10348 = vpop.f32.mrb[0].mxu0
      %v10349 = vadd.f32 0.0, %v10348
      %v10350 = vpop.f32.mrb[0].mxu0
      %10351 = vmatprep.mubr.f32.mxu0 0.0
      %10352 = vmatmul.mubr.f32.gmra.mrb[0].mxu0 %v10256
      %v10353 = vpop.f32.mrb[0].mxu0
      %v10354 = vadd.f32 0.0, %v10353
      %v10355 = vpop.f32.mrb[0].mxu0
      %10356 = vmatprep.mubr.f32.mxu0 0.0
      %10357 = vmatmul.mubr.f32.gmra.mrb[0].mxu0 %v10259
      %v10358 = vpop.f32.mrb[0].mxu0
      %v10359 = vadd.f32 0.0, %v10358
      %v10360 = vpop.f32.mrb[0].mxu0
      %10361 = vmatprep.mubr.f32.mxu0 0.0
      %10362 = vmatmul.mubr.f32.gmra.mrb[0].mxu0 %v10262
      %v10363 = vpop.f32.mrb[0].mxu0
      %v10364 = vadd.f32 0.0, %v10363
      %v10365 = vpop.f32.mrb[0].mxu0
      %10366 = vmatprep.mubr.f32.mxu0 0.0
      %10367 = vmatmul.mubr.f32.gmra.mrb[0].mxu0 %v10265
      %v10368 = vpop.f32.mrb[0].mxu0
      %v10369 = vadd.f32 0.0, %v10368
      %v10370 = vpop.f32.mrb[0].mxu0
      %10371 = vdwg.mxu0
      %v10372 = vadd.f32 %v10203, 1e-06
      %v10373 = vadd.f32 %v10204, 1e-06
      %v10374 = vadd.f32 %v10205, 1e-06
      %v10375 = vadd.f32 %v10206, 1e-06
      %v10376 = vadd.f32 %v10207, 1e-06
      %v10377 = vadd.f32 %v10208, 1e-06
      %v10378 = vadd.f32 %v10209, 1e-06
      %v10379 = vadd.f32 %v10210, 1e-06
      %v10380 = vrcp.pop %v10372
      %v10381 = vmul.f32 %v10334, %v10380
      %v10382 = vrcp.pop %v10373
      %v10383 = vmul.f32 %v10339, %v10382
      %v10384 = vrcp.pop %v10374
      %v10385 = vmul.f32 %v10344, %v10384
      %v10386 = vrcp.pop %v10375
      %v10387 = vmul.f32 %v10349, %v10386
      %v10388 = vrcp.pop %v10376
      %v10389 = vmul.f32 %v10354, %v10388
      %v10390 = vrcp.pop %v10377
      %v10391 = vmul.f32 %v10359, %v10390
      %v10392 = vrcp.pop %v10378
      %v10393 = vmul.f32 %v10364, %v10392
      %v10394 = vrcp.pop %v10379
      %v10395 = vmul.f32 %v10369, %v10394
      %v10396 = vsel %vm3901, %v10381, 0.0
      %10397 = vadd.xlane.f32.xlu0 %v10396
      %v10398 = vpop.xlane.xlu0 %10397
      %v10399 = vsel %vm3901, %v10383, 0.0
      %10400 = vadd.xlane.f32.xlu0 %v10399
      %v10401 = vpop.xlane.xlu0 %10400
      %v10402 = vsel %vm3901, %v10385, 0.0
      %10403 = vadd.xlane.f32.xlu0 %v10402
      %v10404 = vpop.xlane.xlu0 %10403
      %v10405 = vsel %vm3901, %v10387, 0.0
      %10406 = vadd.xlane.f32.xlu0 %v10405
      %v10407 = vpop.xlane.xlu0 %10406
      %v10408 = vsel %vm3901, %v10389, 0.0
      %10409 = vadd.xlane.f32.xlu0 %v10408
      %v10410 = vpop.xlane.xlu0 %10409
      %v10411 = vsel %vm3901, %v10391, 0.0
      %10412 = vadd.xlane.f32.xlu0 %v10411
      %v10413 = vpop.xlane.xlu0 %10412
      %v10414 = vsel %vm3901, %v10393, 0.0
      %10415 = vadd.xlane.f32.xlu0 %v10414
      %v10416 = vpop.xlane.xlu0 %10415
      %v10417 = vsel %vm3901, %v10395, 0.0
      %10418 = vadd.xlane.f32.xlu0 %v10417
      %v10419 = vpop.xlane.xlu0 %10418
      %v10420 = vmul.f32 %v10398, %v3926
      %v10421 = vmul.f32 %v10401, %v3926
      %v10422 = vmul.f32 %v10404, %v3926
      %v10423 = vmul.f32 %v10407, %v3926
      %v10424 = vmul.f32 %v10410, %v3926
      %v10425 = vmul.f32 %v10413, %v3926
      %v10426 = vmul.f32 %v10416, %v3926
      %v10427 = vmul.f32 %v10419, %v3926
      %v10428 = vsub.f32 %v10381, %v10420
      %v10429 = vsub.f32 %v10383, %v10421
      %v10430 = vsub.f32 %v10385, %v10422
      %v10431 = vsub.f32 %v10387, %v10423
      %v10432 = vsub.f32 %v10389, %v10424
      %v10433 = vsub.f32 %v10391, %v10425
      %v10434 = vsub.f32 %v10393, %v10426
      %v10435 = vsub.f32 %v10395, %v10427
      %v10436 = vmul.f32 %v10428, %v10428
      %v10437 = vmul.f32 %v10429, %v10429
      %v10438 = vmul.f32 %v10430, %v10430
      %v10439 = vmul.f32 %v10431, %v10431
      %v10440 = vmul.f32 %v10432, %v10432
      %v10441 = vmul.f32 %v10433, %v10433
      %v10442 = vmul.f32 %v10434, %v10434
      %v10443 = vmul.f32 %v10435, %v10435
      %v10444 = vsel %vm3901, %v10436, 0.0
      %10445 = vadd.xlane.f32.xlu0 %v10444
      %v10446 = vpop.xlane.xlu0 %10445
      %v10447 = vsel %vm3901, %v10437, 0.0
      %10448 = vadd.xlane.f32.xlu0 %v10447
      %v10449 = vpop.xlane.xlu0 %10448
      %v10450 = vsel %vm3901, %v10438, 0.0
      %10451 = vadd.xlane.f32.xlu0 %v10450
      %v10452 = vpop.xlane.xlu0 %10451
      %v10453 = vsel %vm3901, %v10439, 0.0
      %10454 = vadd.xlane.f32.xlu0 %v10453
      %v10455 = vpop.xlane.xlu0 %10454
      %v10456 = vsel %vm3901, %v10440, 0.0
      %10457 = vadd.xlane.f32.xlu0 %v10456
      %v10458 = vpop.xlane.xlu0 %10457
      %v10459 = vsel %vm3901, %v10441, 0.0
      %10460 = vadd.xlane.f32.xlu0 %v10459
      %v10461 = vpop.xlane.xlu0 %10460
      %v10462 = vsel %vm3901, %v10442, 0.0
      %10463 = vadd.xlane.f32.xlu0 %v10462
      %v10464 = vpop.xlane.xlu0 %10463
      %v10465 = vsel %vm3901, %v10443, 0.0
      %10466 = vadd.xlane.f32.xlu0 %v10465
      %v10467 = vpop.xlane.xlu0 %10466
      %v10468 = vmul.f32 %v10446, %v3926
      %v10469 = vmul.f32 %v10449, %v3926
      %v10470 = vmul.f32 %v10452, %v3926
      %v10471 = vmul.f32 %v10455, %v3926
      %v10472 = vmul.f32 %v10458, %v3926
      %v10473 = vmul.f32 %v10461, %v3926
      %v10474 = vmul.f32 %v10464, %v3926
      %v10475 = vmul.f32 %v10467, %v3926
      %v10476 = vadd.f32 %v10468, 1e-06
      %v10477 = vadd.f32 %v10469, 1e-06
      %v10478 = vadd.f32 %v10470, 1e-06
      %v10479 = vadd.f32 %v10471, 1e-06
      %v10480 = vadd.f32 %v10472, 1e-06
      %v10481 = vadd.f32 %v10473, 1e-06
      %v10482 = vadd.f32 %v10474, 1e-06
      %v10483 = vadd.f32 %v10475, 1e-06
      %v10484 = vrsqrt.pop %v10476
      %v10485 = vrsqrt.pop %v10477
      %v10486 = vrsqrt.pop %v10478
      %v10487 = vrsqrt.pop %v10479
      %v10488 = vrsqrt.pop %v10480
      %v10489 = vrsqrt.pop %v10481
      %v10490 = vrsqrt.pop %v10482
      %v10491 = vrsqrt.pop %v10483
      %v10492 = vmul.f32 %v10428, %v10484
      %v10493 = vmul.f32 %v10429, %v10485
      %v10494 = vmul.f32 %v10430, %v10486
      %v10495 = vmul.f32 %v10431, %v10487
      %v10496 = vmul.f32 %v10432, %v10488
      %v10497 = vmul.f32 %v10433, %v10489
      %v10498 = vmul.f32 %v10434, %v10490
      %v10499 = vmul.f32 %v10435, %v10491
      %v10500 = vmul.f32 %v10492, %v4750
      %v10501 = vmul.f32 %v10493, %v4750
      %v10502 = vmul.f32 %v10494, %v4750
      %v10503 = vmul.f32 %v10495, %v4750
      %v10504 = vmul.f32 %v10496, %v4750
      %v10505 = vmul.f32 %v10497, %v4750
      %v10506 = vmul.f32 %v10498, %v4750
      %v10507 = vmul.f32 %v10499, %v4750
      %10516 = vrot.lane.b32.xlu0 %v10500, 48
      %v10517 = vpop.permute.xlu0 %10516
      %10518 = vrot.lane.b32.xlu0 %v10501, 48
      %v10519 = vpop.permute.xlu0 %10518
      %10520 = vrot.lane.b32.xlu0 %v10502, 48
      %v10521 = vpop.permute.xlu0 %10520
      %10522 = vrot.lane.b32.xlu0 %v10503, 48
      %v10523 = vpop.permute.xlu0 %10522
      %10524 = vrot.lane.b32.xlu0 %v10504, 48
      %v10525 = vpop.permute.xlu0 %10524
      %10526 = vrot.lane.b32.xlu0 %v10505, 48
      %v10527 = vpop.permute.xlu0 %10526
      %10528 = vrot.lane.b32.xlu0 %v10506, 48
      %v10529 = vpop.permute.xlu0 %10528
      %10530 = vrot.lane.b32.xlu0 %v10507, 48
      %v10531 = vpop.permute.xlu0 %10530
      %v10540 = vmul.f32 %v9775, %v10517
      %v10541 = vmul.f32 %v9777, %v10519
      %v10542 = vmul.f32 %v9779, %v10521
      %v10543 = vmul.f32 %v9781, %v10523
      %v10544 = vmul.f32 %v9783, %v10525
      %v10545 = vmul.f32 %v9785, %v10527
      %v10546 = vmul.f32 %v9787, %v10529
      %v10547 = vmul.f32 %v9789, %v10531
      %10556 = vrot.lane.b32.xlu0 %v10540, 80
      %v10557 = vpop.permute.xlu0 %10556
      %10558 = vrot.lane.b32.xlu0 %v10541, 80
      %v10559 = vpop.permute.xlu0 %10558
      %10560 = vrot.lane.b32.xlu0 %v10542, 80
      %v10561 = vpop.permute.xlu0 %10560
      %10562 = vrot.lane.b32.xlu0 %v10543, 80
      %v10563 = vpop.permute.xlu0 %10562
      %10564 = vrot.lane.b32.xlu0 %v10544, 80
      %v10565 = vpop.permute.xlu0 %10564
      %10566 = vrot.lane.b32.xlu0 %v10545, 80
      %v10567 = vpop.permute.xlu0 %10566
      %10568 = vrot.lane.b32.xlu0 %v10546, 80
      %v10569 = vpop.permute.xlu0 %10568
      %10570 = vrot.lane.b32.xlu0 %v10547, 80
      %v10571 = vpop.permute.xlu0 %10570
      %v10572 = vsel %vm3901, %v10557, 0
      %v10574 = vsel %vm3901, %v10559, 0
      %v10576 = vsel %vm3901, %v10561, 0
      %v10578 = vsel %vm3901, %v10563, 0
      %v10580 = vsel %vm3901, %v10565, 0
      %v10582 = vsel %vm3901, %v10567, 0
      %v10584 = vsel %vm3901, %v10569, 0
      %v10586 = vsel %vm3901, %v10571, 0
      %10588 = vmatprep.subr.mxu0 0.0
      %10589 = vmatpush1.msra.mxu0 %v4799
      %10590 = vmatprep.subr.mxu0 0.0
      %10591 = vmatpush1.msra.mxu0 %v4800
      %10592 = vmatprep.subr.mxu0 0.0
      %10593 = vmatpush1.msra.mxu0 0.0
      %10594 = vmatprep.subr.mxu0 0.0
      %10595 = vmatpush1.msra.mxu0 0.0
      %10596 = vmatprep.subr.mxu0 0.0
      %10597 = vmatpush1.msra.mxu0 0.0
      %10598 = vmatprep.subr.mxu0 0.0
      %10599 = vmatpush1.msra.mxu0 0.0
      %10600 = vmatprep.subr.mxu0 0.0
      %10601 = vmatpush1.msra.mxu0 0.0
      %10602 = vmatprep.subr.mxu0 0.0
      %10603 = vmatpush1.msra.mxu0 0.0
      %10604 = vmatprep.subr.mxu0 0.0
      %10605 = vmatpush1.msra.mxu0 0.0
      %10606 = vmatprep.subr.mxu0 0.0
      %10607 = vmatpush1.msra.mxu0 0.0
      %10608 = vmatprep.subr.mxu0 0.0
      %10609 = vmatpush1.msra.mxu0 0.0
      %10610 = vmatprep.subr.mxu0 0.0
      %10611 = vmatpush1.msra.mxu0 0.0
      %10612 = vmatprep.subr.mxu0 0.0
      %10613 = vmatpush1.msra.mxu0 0.0
      %10614 = vmatprep.subr.mxu0 0.0
      %10615 = vmatpush1.msra.mxu0 0.0
      %10616 = vmatprep.subr.mxu0 0.0
      %10617 = vmatpush1.msra.mxu0 0.0
      %10618 = vmatprep.subr.mxu0 0.0
      %10619 = vmatpush1.msra.mxu0 0.0
      %10620 = vmatprep.subr.mxu0 0.0
      %10621 = vmatpush1.msra.mxu0 0.0
      %10622 = vmatprep.subr.mxu0 0.0
      %10623 = vmatpush1.msra.mxu0 0.0
      %10624 = vmatprep.subr.mxu0 0.0
      %10625 = vmatpush1.msra.mxu0 0.0
      %10626 = vmatprep.subr.mxu0 0.0
      %10627 = vmatpush1.msra.mxu0 0.0
      %10628 = vmatprep.subr.mxu0 0.0
      %10629 = vmatpush1.msra.mxu0 0.0
      %10630 = vmatprep.subr.mxu0 0.0
      %10631 = vmatpush1.msra.mxu0 0.0
      %10632 = vmatprep.subr.mxu0 0.0
      %10633 = vmatpush1.msra.mxu0 0.0
      %10634 = vmatprep.subr.mxu0 0.0
      %10635 = vmatpush1.msra.mxu0 0.0
      %10636 = vmatprep.subr.mxu0 0.0
      %10637 = vmatpush1.msra.mxu0 0.0
      %10638 = vmatprep.subr.mxu0 0.0
      %10639 = vmatpush1.msra.mxu0 0.0
      %10640 = vmatprep.subr.mxu0 0.0
      %10641 = vmatpush1.msra.mxu0 0.0
      %10642 = vmatprep.subr.mxu0 0.0
      %10643 = vmatpush1.msra.mxu0 0.0
      %10644 = vmatprep.subr.mxu0 0.0
      %10645 = vmatpush1.msra.mxu0 0.0
      %10646 = vmatprep.subr.mxu0 0.0
      %10647 = vmatpush1.msra.mxu0 0.0
      %10648 = vmatprep.subr.mxu0 0.0
      %10649 = vmatpush1.msra.mxu0 0.0
      %10650 = vmatprep.subr.mxu0 0.0
      %10651 = vmatpush1.msra.mxu0 0.0
      %10652 = vmatprep.mubr.f32.mxu0 0.0
      %10653 = vmatmul.mubr.f32.gmra.mrb[0].mxu0 %v10572
      %v10654 = vpop.f32.mrb[0].mxu0
      %v10655 = vadd.f32 0.0, %v10654
      %v10656 = vpop.f32.mrb[0].mxu0
      %10657 = vmatprep.mubr.f32.mxu0 0.0
      %10658 = vmatmul.mubr.f32.gmra.mrb[0].mxu0 %v10574
      %v10659 = vpop.f32.mrb[0].mxu0
      %v10660 = vadd.f32 0.0, %v10659
      %v10661 = vpop.f32.mrb[0].mxu0
      %10662 = vmatprep.mubr.f32.mxu0 0.0
      %10663 = vmatmul.mubr.f32.gmra.mrb[0].mxu0 %v10576
      %v10664 = vpop.f32.mrb[0].mxu0
      %v10665 = vadd.f32 0.0, %v10664
      %v10666 = vpop.f32.mrb[0].mxu0
      %10667 = vmatprep.mubr.f32.mxu0 0.0
      %10668 = vmatmul.mubr.f32.gmra.mrb[0].mxu0 %v10578
      %v10669 = vpop.f32.mrb[0].mxu0
      %v10670 = vadd.f32 0.0, %v10669
      %v10671 = vpop.f32.mrb[0].mxu0
      %10672 = vmatprep.mubr.f32.mxu0 0.0
      %10673 = vmatmul.mubr.f32.gmra.mrb[0].mxu0 %v10580
      %v10674 = vpop.f32.mrb[0].mxu0
      %v10675 = vadd.f32 0.0, %v10674
      %v10676 = vpop.f32.mrb[0].mxu0
      %10677 = vmatprep.mubr.f32.mxu0 0.0
      %10678 = vmatmul.mubr.f32.gmra.mrb[0].mxu0 %v10582
      %v10679 = vpop.f32.mrb[0].mxu0
      %v10680 = vadd.f32 0.0, %v10679
      %v10681 = vpop.f32.mrb[0].mxu0
      %10682 = vmatprep.mubr.f32.mxu0 0.0
      %10683 = vmatmul.mubr.f32.gmra.mrb[0].mxu0 %v10584
      %v10684 = vpop.f32.mrb[0].mxu0
      %v10685 = vadd.f32 0.0, %v10684
      %v10686 = vpop.f32.mrb[0].mxu0
      %10687 = vmatprep.mubr.f32.mxu0 0.0
      %10688 = vmatmul.mubr.f32.gmra.mrb[0].mxu0 %v10586
      %v10689 = vpop.f32.mrb[0].mxu0
      %v10690 = vadd.f32 0.0, %v10689
      %v10691 = vpop.f32.mrb[0].mxu0
      %10692 = vdwg.mxu0
      %10701 = vrot.lane.b32.xlu0 %v9822, 96
      %v10702 = vpop.permute.xlu0 %10701
      %10703 = vrot.lane.b32.xlu0 %v9823, 96
      %v10704 = vpop.permute.xlu0 %10703
      %10705 = vrot.lane.b32.xlu0 %v9824, 96
      %v10706 = vpop.permute.xlu0 %10705
      %10707 = vrot.lane.b32.xlu0 %v9825, 96
      %v10708 = vpop.permute.xlu0 %10707
      %10709 = vrot.lane.b32.xlu0 %v9826, 96
      %v10710 = vpop.permute.xlu0 %10709
      %10711 = vrot.lane.b32.xlu0 %v9827, 96
      %v10712 = vpop.permute.xlu0 %10711
      %10713 = vrot.lane.b32.xlu0 %v9828, 96
      %v10714 = vpop.permute.xlu0 %10713
      %10715 = vrot.lane.b32.xlu0 %v9829, 96
      %v10716 = vpop.permute.xlu0 %10715
      %v10717 = vsel %vm3901, %v10702, 0
      %v10719 = vsel %vm3901, %v10704, 0
      %v10721 = vsel %vm3901, %v10706, 0
      %v10723 = vsel %vm3901, %v10708, 0
      %v10725 = vsel %vm3901, %v10710, 0
      %v10727 = vsel %vm3901, %v10712, 0
      %v10729 = vsel %vm3901, %v10714, 0
      %v10731 = vsel %vm3901, %v10716, 0
      %10733 = vmatprep.subr.mxu0 0.0
      %10734 = vmatpush1.msra.mxu0 %v4107
      %10735 = vmatprep.subr.mxu0 0.0
      %10736 = vmatpush1.msra.mxu0 %v4108
      %10737 = vmatprep.subr.mxu0 0.0
      %10738 = vmatpush1.msra.mxu0 0.0
      %10739 = vmatprep.subr.mxu0 0.0
      %10740 = vmatpush1.msra.mxu0 0.0
      %10741 = vmatprep.subr.mxu0 0.0
      %10742 = vmatpush1.msra.mxu0 0.0
      %10743 = vmatprep.subr.mxu0 0.0
      %10744 = vmatpush1.msra.mxu0 0.0
      %10745 = vmatprep.subr.mxu0 0.0
      %10746 = vmatpush1.msra.mxu0 0.0
      %10747 = vmatprep.subr.mxu0 0.0
      %10748 = vmatpush1.msra.mxu0 0.0
      %10749 = vmatprep.subr.mxu0 0.0
      %10750 = vmatpush1.msra.mxu0 0.0
      %10751 = vmatprep.subr.mxu0 0.0
      %10752 = vmatpush1.msra.mxu0 0.0
      %10753 = vmatprep.subr.mxu0 0.0
      %10754 = vmatpush1.msra.mxu0 0.0
      %10755 = vmatprep.subr.mxu0 0.0
      %10756 = vmatpush1.msra.mxu0 0.0
      %10757 = vmatprep.subr.mxu0 0.0
      %10758 = vmatpush1.msra.mxu0 0.0
      %10759 = vmatprep.subr.mxu0 0.0
      %10760 = vmatpush1.msra.mxu0 0.0
      %10761 = vmatprep.subr.mxu0 0.0
      %10762 = vmatpush1.msra.mxu0 0.0
      %10763 = vmatprep.subr.mxu0 0.0
      %10764 = vmatpush1.msra.mxu0 0.0
      %10765 = vmatprep.subr.mxu0 0.0
      %10766 = vmatpush1.msra.mxu0 0.0
      %10767 = vmatprep.subr.mxu0 0.0
      %10768 = vmatpush1.msra.mxu0 0.0
      %10769 = vmatprep.subr.mxu0 0.0
      %10770 = vmatpush1.msra.mxu0 0.0
      %10771 = vmatprep.subr.mxu0 0.0
      %10772 = vmatpush1.msra.mxu0 0.0
      %10773 = vmatprep.subr.mxu0 0.0
      %10774 = vmatpush1.msra.mxu0 0.0
      %10775 = vmatprep.subr.mxu0 0.0
      %10776 = vmatpush1.msra.mxu0 0.0
      %10777 = vmatprep.subr.mxu0 0.0
      %10778 = vmatpush1.msra.mxu0 0.0
      %10779 = vmatprep.subr.mxu0 0.0
      %10780 = vmatpush1.msra.mxu0 0.0
      %10781 = vmatprep.subr.mxu0 0.0
      %10782 = vmatpush1.msra.mxu0 0.0
      %10783 = vmatprep.subr.mxu0 0.0
      %10784 = vmatpush1.msra.mxu0 0.0
      %10785 = vmatprep.subr.mxu0 0.0
      %10786 = vmatpush1.msra.mxu0 0.0
      %10787 = vmatprep.subr.mxu0 0.0
      %10788 = vmatpush1.msra.mxu0 0.0
      %10789 = vmatprep.subr.mxu0 0.0
      %10790 = vmatpush1.msra.mxu0 0.0
      %10791 = vmatprep.subr.mxu0 0.0
      %10792 = vmatpush1.msra.mxu0 0.0
      %10793 = vmatprep.subr.mxu0 0.0
      %10794 = vmatpush1.msra.mxu0 0.0
      %10795 = vmatprep.subr.mxu0 0.0
      %10796 = vmatpush1.msra.mxu0 0.0
      %10797 = vmatprep.mubr.f32.mxu0 0.0
      %10798 = vmatmul.mubr.f32.gmra.mrb[0].mxu0 %v10717
      %v10799 = vpop.f32.mrb[0].mxu0
      %v10800 = vadd.f32 %v10655, %v10799
      %v10801 = vpop.f32.mrb[0].mxu0
      %10802 = vmatprep.mubr.f32.mxu0 0.0
      %10803 = vmatmul.mubr.f32.gmra.mrb[0].mxu0 %v10719
      %v10804 = vpop.f32.mrb[0].mxu0
      %v10805 = vadd.f32 %v10660, %v10804
      %v10806 = vpop.f32.mrb[0].mxu0
      %10807 = vmatprep.mubr.f32.mxu0 0.0
      %10808 = vmatmul.mubr.f32.gmra.mrb[0].mxu0 %v10721
      %v10809 = vpop.f32.mrb[0].mxu0
      %v10810 = vadd.f32 %v10665, %v10809
      %v10811 = vpop.f32.mrb[0].mxu0
      %10812 = vmatprep.mubr.f32.mxu0 0.0
      %10813 = vmatmul.mubr.f32.gmra.mrb[0].mxu0 %v10723
      %v10814 = vpop.f32.mrb[0].mxu0
      %v10815 = vadd.f32 %v10670, %v10814
      %v10816 = vpop.f32.mrb[0].mxu0
      %10817 = vmatprep.mubr.f32.mxu0 0.0
      %10818 = vmatmul.mubr.f32.gmra.mrb[0].mxu0 %v10725
      %v10819 = vpop.f32.mrb[0].mxu0
      %v10820 = vadd.f32 %v10675, %v10819
      %v10821 = vpop.f32.mrb[0].mxu0
      %10822 = vmatprep.mubr.f32.mxu0 0.0
      %10823 = vmatmul.mubr.f32.gmra.mrb[0].mxu0 %v10727
      %v10824 = vpop.f32.mrb[0].mxu0
      %v10825 = vadd.f32 %v10680, %v10824
      %v10826 = vpop.f32.mrb[0].mxu0
      %10827 = vmatprep.mubr.f32.mxu0 0.0
      %10828 = vmatmul.mubr.f32.gmra.mrb[0].mxu0 %v10729
      %v10829 = vpop.f32.mrb[0].mxu0
      %v10830 = vadd.f32 %v10685, %v10829
      %v10831 = vpop.f32.mrb[0].mxu0
      %10832 = vmatprep.mubr.f32.mxu0 0.0
      %10833 = vmatmul.mubr.f32.gmra.mrb[0].mxu0 %v10731
      %v10834 = vpop.f32.mrb[0].mxu0
      %v10835 = vadd.f32 %v10690, %v10834
      %v10836 = vpop.f32.mrb[0].mxu0
      %10837 = vdwg.mxu0
      %10846 = vrot.lane.b32.xlu0 %v7013, 32
      %v10847 = vpop.permute.xlu0 %10846
      %10848 = vrot.lane.b32.xlu0 %v7018, 32
      %v10849 = vpop.permute.xlu0 %10848
      %10850 = vrot.lane.b32.xlu0 %v7023, 32
      %v10851 = vpop.permute.xlu0 %10850
      %10852 = vrot.lane.b32.xlu0 %v7028, 32
      %v10853 = vpop.permute.xlu0 %10852
      %10854 = vrot.lane.b32.xlu0 %v7033, 32
      %v10855 = vpop.permute.xlu0 %10854
      %10856 = vrot.lane.b32.xlu0 %v7038, 32
      %v10857 = vpop.permute.xlu0 %10856
      %10858 = vrot.lane.b32.xlu0 %v7043, 32
      %v10859 = vpop.permute.xlu0 %10858
      %10860 = vrot.lane.b32.xlu0 %v7048, 32
      %v10861 = vpop.permute.xlu0 %10860
      %10878 = vrot.lane.b32.xlu0 %v8873, 64
      %v10879 = vpop.permute.xlu0 %10878
      %10880 = vrot.lane.b32.xlu0 %v8878, 64
      %v10881 = vpop.permute.xlu0 %10880
      %10882 = vrot.lane.b32.xlu0 %v8883, 64
      %v10883 = vpop.permute.xlu0 %10882
      %10884 = vrot.lane.b32.xlu0 %v8888, 64
      %v10885 = vpop.permute.xlu0 %10884
      %10886 = vrot.lane.b32.xlu0 %v8893, 64
      %v10887 = vpop.permute.xlu0 %10886
      %10888 = vrot.lane.b32.xlu0 %v8898, 64
      %v10889 = vpop.permute.xlu0 %10888
      %10890 = vrot.lane.b32.xlu0 %v8903, 64
      %v10891 = vpop.permute.xlu0 %10890
      %10892 = vrot.lane.b32.xlu0 %v8908, 64
      %v10893 = vpop.permute.xlu0 %10892
      %10910 = vrot.lane.b32.xlu0 %v10800, 96
      %v10911 = vpop.permute.xlu0 %10910
      %10912 = vrot.lane.b32.xlu0 %v10805, 96
      %v10913 = vpop.permute.xlu0 %10912
      %10914 = vrot.lane.b32.xlu0 %v10810, 96
      %v10915 = vpop.permute.xlu0 %10914
      %10916 = vrot.lane.b32.xlu0 %v10815, 96
      %v10917 = vpop.permute.xlu0 %10916
      %10918 = vrot.lane.b32.xlu0 %v10820, 96
      %v10919 = vpop.permute.xlu0 %10918
      %10920 = vrot.lane.b32.xlu0 %v10825, 96
      %v10921 = vpop.permute.xlu0 %10920
      %10922 = vrot.lane.b32.xlu0 %v10830, 96
      %v10923 = vpop.permute.xlu0 %10922
      %10924 = vrot.lane.b32.xlu0 %v10835, 96
      %v10925 = vpop.permute.xlu0 %10924
      %v10934 = vsel %vm1252, %v5053, %v10847
      %v10935 = vsel %vm1252, %v5058, %v10849
      %v10936 = vsel %vm1252, %v5063, %v10851
      %v10937 = vsel %vm1252, %v5068, %v10853
      %v10938 = vsel %vm1252, %v5073, %v10855
      %v10939 = vsel %vm1252, %v5078, %v10857
      %v10940 = vsel %vm1252, %v5083, %v10859
      %v10941 = vsel %vm1252, %v5088, %v10861
      %v10942 = vsel %vm1285, %v10934, %v10879
      %v10943 = vsel %vm1285, %v10935, %v10881
      %v10944 = vsel %vm1285, %v10936, %v10883
      %v10945 = vsel %vm1285, %v10937, %v10885
      %v10946 = vsel %vm1285, %v10938, %v10887
      %v10947 = vsel %vm1285, %v10939, %v10889
      %v10948 = vsel %vm1285, %v10940, %v10891
      %v10949 = vsel %vm1285, %v10941, %v10893
      %v10950 = vsel %vm1318, %v10942, %v10911
      %v10951 = vsel %vm1318, %v10943, %v10913
      %v10952 = vsel %vm1318, %v10944, %v10915
      %v10953 = vsel %vm1318, %v10945, %v10917
      %v10954 = vsel %vm1318, %v10946, %v10919
      %v10955 = vsel %vm1318, %v10947, %v10921
      %v10956 = vsel %vm1318, %v10948, %v10923
      %v10957 = vsel %vm1318, %v10949, %v10925
      %10958 = vst [vmem:[%s415] sm:$0xff] %v10950
      %10959 = vst [vmem:[%s415 + $0x8] sm:$0xff] %v10951
      %10960 = vst [vmem:[%s415 + $0x10] sm:$0xff] %v10952
      %10961 = vst [vmem:[%s415 + $0x18] sm:$0xff] %v10953
      %10962 = vst [vmem:[%s415 + $0x20] sm:$0xff] %v10954
      %10963 = vst [vmem:[%s415 + $0x28] sm:$0xff] %v10955
      %10964 = vst [vmem:[%s415 + $0x30] sm:$0xff] %v10956
      %10965 = vst [vmem:[%s415 + $0x38] sm:$0xff] %v10957
      %p10966 = scmp.lt.s32.totalorder %s23, 1
      %s10967 = scalar_select %p10966, %s23, 1
      %s10968 = smul.addr %s10967, 8
      %s10969 = smul.addr %s10968, 8
      %s10970 = scalar_lea.vmem %s12, %s10969
      // Predicated region
      $region69: #{mlstm_layer_vision_forward.1} parent=67 // pred_check
        %p10971 = pneg %p298
      $region70: #{mlstm_layer_vision_forward.1} parent=67 // pred_check_branch
        %10973 = sbr.rel (%p10971) target = $region72
      $region71: #{mlstm_layer_vision_forward.1} parent=67 // pred_region
        _
      $region72: #{mlstm_layer_vision_forward.1} parent=67 // pred_fallthru
        _
    $region68: #{mlstm_layer_vision_forward.1} parent=5 // pred_fallthru
      _
    %p10974 = scmp.le.s32.totalorder 2, %s18
    // Predicated region
    $region73: #{mlstm_layer_vision_forward.1} parent=5 // pred_check
      %p10975 = pneg %p10974
    $region74: #{mlstm_layer_vision_forward.1} parent=5 // pred_check_branch
      %10977 = sbr.rel (%p10975) target = $region76
    $region75: #{mlstm_layer_vision_forward.1} parent=5 // pred_region
      %s10978 = ssub.s32 %s18, 2
      // Predicated region
      $region77: #{mlstm_layer_vision_forward.1} parent=75 // pred_check
        %p10979 = pneg %p304
      $region78: #{mlstm_layer_vision_forward.1} parent=75 // pred_check_branch
        %10981 = sbr.rel (%p10979) target = $region80
      $region79: #{mlstm_layer_vision_forward.1} parent=75 // pred_region
        %p10982 = scmp.lt.s32.totalorder %s24, 1
        %s10983 = scalar_select %p10982, %s24, 1
        %s10984 = smul.addr %s10983, 8
        %s10985 = smul.addr %s10984, 8
        %s10986 = scalar_lea.vmem %s12, %s10985
      $region80: #{mlstm_layer_vision_forward.1} parent=75 // pred_fallthru
        _
    $region76: #{mlstm_layer_vision_forward.1} parent=5 // pred_fallthru
      _
  $region6: #{mlstm_layer_vision_forward.1} parent=0 // loop_footer
    %s22 = sadd.s32 1, %s18
  $region7: #{mlstm_layer_vision_forward.1} parent=0 // loop_footer_branch
    %17 = sbr.rel target = $region3
  $region8: #{mlstm_layer_vision_forward.1} parent=0 // loop_exit
    _

</llo_original>
